<compile_context>
chip_gen: v5e
topology: v5e:2x2
jax: 0.10.0
libtpu: 0.0.40
codegen_flags: <defaults>
</compile_context>

<pallas_src>
import jax
import jax.numpy as jnp
from jax.experimental import pallas as pl
from jax.experimental.pallas import tpu as pltpu

# ----------------------------- hyper-parameters -----------------------------
B = 2                        # batch
IMG = 32                     # image height/width
PATCH = 8                    # patch size (stride == kernel)
GRID = IMG // PATCH          # 4
N_PATCH = GRID * GRID        # 16 patches
C_TOK = N_PATCH + 1          # 17 tokens (CLS + patches)   (real model: 257)
T_PAD = 24                   # tokens padded to a sublane multiple of 8
PATCH_DIM = 3 * PATCH * PATCH   # 192

D_VIS = 64                   # vision / mapper width        (real model: 1024)
VIS_LAYERS = 2               # vision encoder depth         (real model: 24)
VIS_HEADS = 4
VIS_DH = D_VIS // VIS_HEADS  # 16
VIS_FF = 4 * D_VIS           # 256

MAP_LAYERS = 3               # mapper = Transformer(1, D, 3, 1)
MAP_FF = 4 * D_VIS

D_OUT = 48                   # proj_out width               (real model: 768)
D_OUT_PAD = 128              # lane-padded output width
EPS = 1e-5
NEG_INF = -1e30


# ------------------------------ kernel helpers ------------------------------
def _layernorm(x, g, b):
    mu = jnp.mean(x, axis=-1, keepdims=True)
    xc = x - mu
    var = jnp.mean(xc * xc, axis=-1, keepdims=True)
    return xc * jax.lax.rsqrt(var + EPS) * g + b


def _softmax_lastdim(s):
    s = s - jnp.max(s, axis=-1, keepdims=True)
    p = jnp.exp(s)
    return p * pl.reciprocal(jnp.sum(p, axis=-1, keepdims=True), approx=True)


def _quick_gelu(x):                       # HF CLIP hidden_act="quick_gelu"
    return x * jax.nn.sigmoid(1.702 * x)


def _erf_poly(x):
    # Abramowitz & Stegun 7.1.26 (max abs err 1.5e-7); only exp/mul/add/select.
    p_, a1, a2, a3, a4, a5 = (0.3275911, 0.254829592, -0.284496736,
                              1.421413741, -1.453152027, 1.061405429)
    ax = jnp.abs(x)
    t = 1.0 / (1.0 + p_ * ax)
    poly = ((((a5 * t + a4) * t + a3) * t + a2) * t + a1) * t
    y = 1.0 - poly * jnp.exp(-ax * ax)
    return jnp.where(x >= 0.0, y, -y)


def _erf_gelu(x):                         # xf.py MLP uses nn.GELU() (exact erf)
    return 0.5 * x * (1.0 + _erf_poly(x * 0.7071067811865476))


def _mlp(x2d, w1, b1, w2, b2, act):
    h = jnp.dot(x2d.astype(jnp.bfloat16), w1,
                preferred_element_type=jnp.float32) + b1
    h = act(h)                                    # element-wise stays f32
    return jnp.dot(h.astype(jnp.bfloat16), w2,
                   preferred_element_type=jnp.float32) + b2


def _vision_attn(x2d, wqkv, bqkv, wo, bo, key_mask):
    """Self-attention on a pre-normed (T_PAD, D) slab (one image).

    One fused (T, D) @ (D, 3D) QKV matmul; per-head outputs concatenated
    lane-dense in registers (no scratch, no masked stores); pad keys are
    masked to -inf via `key_mask` (shape (1, T_PAD), additive).
    """
    xb = x2d.astype(jnp.bfloat16)
    qkv = jnp.dot(xb, wqkv, preferred_element_type=jnp.float32) + bqkv  # (T,3D)
    scale = VIS_DH ** -0.5
    heads = []
    for h in range(VIS_HEADS):                    # tiny static per-head einsums
        lo = h * VIS_DH
        q = (qkv[:, lo:lo + VIS_DH] * scale).astype(jnp.bfloat16)
        k = qkv[:, D_VIS + lo:D_VIS + lo + VIS_DH].astype(jnp.bfloat16)
        v = qkv[:, 2 * D_VIS + lo:2 * D_VIS + lo + VIS_DH].astype(jnp.bfloat16)
        s = jax.lax.dot_general(q, k, dimension_numbers=(((1,), (1,)), ((), ())),
                                preferred_element_type=jnp.float32)      # (T,T)
        p = _softmax_lastdim(s + key_mask)
        heads.append(jnp.dot(p.astype(jnp.bfloat16), v,
                             preferred_element_type=jnp.float32))        # (T,dh)
    o = jnp.concatenate(heads, axis=-1).astype(jnp.bfloat16)             # (T,D)
    return jnp.dot(o, wo, preferred_element_type=jnp.float32) + bo


# --------------------------------- kernel -----------------------------------
def clip_image_embedder_kernel(
        # CLIP vision embeddings
        patches_ref, w_patch_ref, tok_bias_ref, pre_ln_ref,
        # CLIP vision encoder layers (stacked on a leading layer axis)
        v_ln_ref, v_wqkv_ref, v_bqkv_ref, v_wo_ref, v_bo_ref,
        v_w1_ref, v_b1_ref, v_w2_ref, v_b2_ref,
        # conv2 (token-mixing 1x1 conv), padded to T_PAD lanes
        conv_w_ref, conv_b_ref,
        # mapper Transformer layers (stacked); only V/O of attention needed
        m_ln_ref, m_wv_ref, m_bv_ref, m_wo_ref, m_bo_ref,
        m_w1_ref, m_b1_ref, m_w2_ref, m_b2_ref,
        # final LayerNorm + proj_out (lane-padded)
        fin_ln_ref, proj_w_ref, proj_b_ref,
        # output
        out_ref):
    # ---- patch embed + CLS/pos: one matmul + one add (row 0 / pad rows of
    #      `patches` are zero, tok_bias carries CLS+pos / pos / zeros) ----
    x = jnp.dot(patches_ref[0], w_patch_ref[...],
                preferred_element_type=jnp.float32) + tok_bias_ref[...]  # (T,D)

    # additive key mask: pad tokens (>= C_TOK) never attended to
    key_mask = jnp.where(
        jax.lax.broadcasted_iota(jnp.int32, (1, T_PAD), 1) < C_TOK,
        0.0, NEG_INF).astype(jnp.float32)

    # ---- pre_layrnorm + CLIP encoder layers (pre-LN residual blocks) ----
    x = _layernorm(x, pre_ln_ref[0:1], pre_ln_ref[1:2])
    for l in range(VIS_LAYERS):
        ln = v_ln_ref[l]                                  # (4, D): g1,b1,g2,b2
        h = _layernorm(x, ln[0:1], ln[1:2])
        x = x + _vision_attn(h, v_wqkv_ref[l], v_bqkv_ref[l],
                             v_wo_ref[l], v_bo_ref[l], key_mask)
        h = _layernorm(x, ln[2:3], ln[3:4])
        x = x + _mlp(h, v_w1_ref[l], v_b1_ref[l], v_w2_ref[l], v_b2_ref[l],
                     act=_quick_gelu)
    # x == transformer(pixel_values).last_hidden_state (padded to T_PAD rows)

    # ---- conv2 = Conv2d(C_TOK, 1, 1): 1x1 conv never mixes positions ->
    #      weighted sum over the token axis == (1, T_PAD) @ (T_PAD, D) matmul
    #      (pad tokens carry zero weight) ----
    z = jnp.dot(conv_w_ref[...], x.astype(jnp.bfloat16),
                preferred_element_type=jnp.float32) + conv_b_ref[...]    # (1,D)

    # ---- mapper = Transformer(n_ctx=1, width=D, layers=3, heads=1) ----
    # n_ctx == 1 -> softmax over a single key is identically 1, so attention
    # collapses exactly to  (LN(z) @ Wv + bv) @ Wo + bo .
    for l in range(MAP_LAYERS):
        ln = m_ln_ref[l]
        h = _layernorm(z, ln[0:1], ln[1:2])
        a = jnp.dot(h.astype(jnp.bfloat16), m_wv_ref[l],
                    preferred_element_type=jnp.float32) + m_bv_ref[l]
        z = z + (jnp.dot(a.astype(jnp.bfloat16), m_wo_ref[l],
                         preferred_element_type=jnp.float32) + m_bo_ref[l])
        h = _layernorm(z, ln[2:3], ln[3:4])
        z = z + _mlp(h, m_w1_ref[l], m_b1_ref[l], m_w2_ref[l], m_b2_ref[l],
                     act=_erf_gelu)

    # ---- final_ln + proj_out (lane-padded to 128; sliced host-side) ----
    z = _layernorm(z, fin_ln_ref[0:1], fin_ln_ref[1:2])
    out_ref[0] = (jnp.dot(z.astype(jnp.bfloat16), proj_w_ref[...],
                          preferred_element_type=jnp.float32)
                  + proj_b_ref[...])


# ------------------------------ host wrapper --------------------------------
def frozen_clip_image_embedder_forward(image, params):
    # --- host-side layout prep (pure packing; no compute hoisted) ---
    # im2col for the stride==kernel patch conv; CLS row + pad rows stay zero.
    p = image.reshape(B, 3, GRID, PATCH, GRID, PATCH)
    p = p.transpose(0, 2, 4, 1, 3, 5).reshape(B, N_PATCH, PATCH_DIM)
    patches = jnp.zeros((B, T_PAD, PATCH_DIM), jnp.bfloat16)
    patches = patches.at[:, 1:C_TOK, :].set(p.astype(jnp.bfloat16))

    # CLS + positional embedding, token-padded to T_PAD rows.
    tok_bias = jnp.zeros((T_PAD, D_VIS), jnp.float32)
    tok_bias = tok_bias.at[0:1].set(params["cls"] + params["pos"][0:1])
    tok_bias = tok_bias.at[1:C_TOK].set(params["pos"][1:C_TOK])

    # Fused QKV weight/bias (one (D, 3D) matmul per encoder layer).
    v_wqkv = jnp.concatenate(
        [params["v_wq"], params["v_wk"], params["v_wv"]], axis=-1)
    v_bqkv = jnp.concatenate(
        [params["v_bq"], params["v_bk"], params["v_bv"]], axis=-1)

    # conv2 weight as a token-padded (1, T_PAD) row (pad tokens weighted 0).
    conv_w = jnp.zeros((1, T_PAD), jnp.bfloat16)
    conv_w = conv_w.at[:, :C_TOK].set(
        params["conv_w"].reshape(1, C_TOK).astype(jnp.bfloat16))

    # proj_out padded to a lane multiple (48 -> 128).
    proj_w = jnp.zeros((D_VIS, D_OUT_PAD), jnp.bfloat16)
    proj_w = proj_w.at[:, :D_OUT].set(params["proj_w"])
    proj_b = jnp.zeros((1, D_OUT_PAD), jnp.float32)
    proj_b = proj_b.at[:, :D_OUT].set(params["proj_b"])

    args = (patches, params["w_patch"], tok_bias, params["pre_ln"],
            params["v_ln"], v_wqkv, v_bqkv, params["v_wo"], params["v_bo"],
            params["v_w1"], params["v_b1"], params["v_w2"], params["v_b2"],
            conv_w, params["conv_b"],
            params["m_ln"], params["m_wv"], params["m_bv"],
            params["m_wo"], params["m_bo"],
            params["m_w1"], params["m_b1"], params["m_w2"], params["m_b2"],
            params["fin_ln"], proj_w, proj_b)

    def _const_spec(a):                  # full array resident in VMEM, revisited
        nd = a.ndim
        return pl.BlockSpec(a.shape, lambda b, _n=nd: (0,) * _n)

    in_specs = [pl.BlockSpec((1, T_PAD, PATCH_DIM), lambda b: (b, 0, 0))]
    in_specs += [_const_spec(a) for a in args[1:]]

    out = pl.pallas_call(
        clip_image_embedder_kernel,
        out_shape=jax.ShapeDtypeStruct((B, 1, D_OUT_PAD), jnp.float32),
        grid=(B,),
        in_specs=in_specs,
        out_specs=pl.BlockSpec((1, 1, D_OUT_PAD), lambda b: (b, 0, 0)),
        compiler_params=pltpu.CompilerParams(
            dimension_semantics=("parallel",)),
    )(*args)
    return out[:, :, :D_OUT]             # (B, 1, D_OUT), matches proj_out


# --------------------------------- params -----------------------------------
def init_params(key):
    keys = jax.random.split(key, 40)
    it = iter(keys)

    def nrm(shape, dtype=jnp.float32, std=0.02):
        return (jax.random.normal(next(it), shape, jnp.float32) * std).astype(dtype)

    def ln_rows(n_pairs, lead=()):       # rows [gamma; beta] * n_pairs, stacked
        g = jnp.ones((1, D_VIS), jnp.float32)
        b_ = jnp.zeros((1, D_VIS), jnp.float32)
        base = jnp.concatenate([g, b_] * n_pairs, axis=0)
        if lead:
            base = jnp.tile(base[None], lead + (1, 1))
        return base

    return dict(
        # CLIP vision embeddings (patch conv weight flattened to (3*P*P, D))
        w_patch=nrm((PATCH_DIM, D_VIS), jnp.bfloat16),
        cls=nrm((1, D_VIS)),
        pos=nrm((C_TOK, D_VIS)),
        pre_ln=ln_rows(1),                                   # (2, D)
        # CLIP vision encoder layers, stacked on a leading layer axis
        v_ln=ln_rows(2, (VIS_LAYERS,)),                      # (L, 4, D)
        v_wq=nrm((VIS_LAYERS, D_VIS, D_VIS), jnp.bfloat16),
        v_wk=nrm((VIS_LAYERS, D_VIS, D_VIS), jnp.bfloat16),
        v_wv=nrm((VIS_LAYERS, D_VIS, D_VIS), jnp.bfloat16),
        v_bq=nrm((VIS_LAYERS, 1, D_VIS)),
        v_bk=nrm((VIS_LAYERS, 1, D_VIS)),
        v_bv=nrm((VIS_LAYERS, 1, D_VIS)),
        v_wo=nrm((VIS_LAYERS, D_VIS, D_VIS), jnp.bfloat16),
        v_bo=nrm((VIS_LAYERS, 1, D_VIS)),
        v_w1=nrm((VIS_LAYERS, D_VIS, VIS_FF), jnp.bfloat16),
        v_b1=nrm((VIS_LAYERS, 1, VIS_FF)),
        v_w2=nrm((VIS_LAYERS, VIS_FF, D_VIS), jnp.bfloat16),
        v_b2=nrm((VIS_LAYERS, 1, D_VIS)),
        # conv2 = Conv2d(C_TOK, 1, 1)
        conv_w=nrm((C_TOK, 1)),
        conv_b=nrm((1, 1)),
        # mapper Transformer layers (n_ctx=1 => only V/O of attention matter;
        # these correspond to the V-slice of c_qkv and c_proj in xf.py)
        m_ln=ln_rows(2, (MAP_LAYERS,)),                      # (ML, 4, D)
        m_wv=nrm((MAP_LAYERS, D_VIS, D_VIS), jnp.bfloat16),
        m_bv=nrm((MAP_LAYERS, 1, D_VIS)),
        m_wo=nrm((MAP_LAYERS, D_VIS, D_VIS), jnp.bfloat16),
        m_bo=nrm((MAP_LAYERS, 1, D_VIS)),
        m_w1=nrm((MAP_LAYERS, D_VIS, MAP_FF), jnp.bfloat16),
        m_b1=nrm((MAP_LAYERS, 1, MAP_FF)),
        m_w2=nrm((MAP_LAYERS, MAP_FF, D_VIS), jnp.bfloat16),
        m_b2=nrm((MAP_LAYERS, 1, D_VIS)),
        # final LayerNorm + proj_out
        fin_ln=ln_rows(1),
        proj_w=nrm((D_VIS, D_OUT), jnp.bfloat16),
        proj_b=nrm((1, D_OUT)),
    )


if __name__ == "__main__":
    key = jax.random.PRNGKey(0)
    k_img, k_par = jax.random.split(key)
    image = jax.random.normal(k_img, (B, 3, IMG, IMG), jnp.float32)
    params = init_params(k_par)

    z = frozen_clip_image_embedder_forward(image, params)
    jax.block_until_ready(z)
    assert z.shape == (B, 1, D_OUT) and z.dtype == jnp.float32
    assert bool(jnp.all(jnp.isfinite(z)))
    print("KERNEL_OK")
</pallas_src>

<mosaic_0001>
module attributes {stable_mosaic.version = 11 : i64} {
  func.func @clip_image_embedder_kernel(%arg0: i32, %arg1: memref<1x24x192xbf16, #tpu.memory_space<vmem>>, %arg2: memref<192x64xbf16, #tpu.memory_space<vmem>>, %arg3: memref<24x64xf32, #tpu.memory_space<vmem>>, %arg4: memref<2x64xf32, #tpu.memory_space<vmem>>, %arg5: memref<2x4x64xf32, #tpu.memory_space<vmem>>, %arg6: memref<2x64x192xbf16, #tpu.memory_space<vmem>>, %arg7: memref<2x1x192xf32, #tpu.memory_space<vmem>>, %arg8: memref<2x64x64xbf16, #tpu.memory_space<vmem>>, %arg9: memref<2x1x64xf32, #tpu.memory_space<vmem>>, %arg10: memref<2x64x256xbf16, #tpu.memory_space<vmem>>, %arg11: memref<2x1x256xf32, #tpu.memory_space<vmem>>, %arg12: memref<2x256x64xbf16, #tpu.memory_space<vmem>>, %arg13: memref<2x1x64xf32, #tpu.memory_space<vmem>>, %arg14: memref<1x24xbf16, #tpu.memory_space<vmem>>, %arg15: memref<1x1xf32, #tpu.memory_space<vmem>>, %arg16: memref<3x4x64xf32, #tpu.memory_space<vmem>>, %arg17: memref<3x64x64xbf16, #tpu.memory_space<vmem>>, %arg18: memref<3x1x64xf32, #tpu.memory_space<vmem>>, %arg19: memref<3x64x64xbf16, #tpu.memory_space<vmem>>, %arg20: memref<3x1x64xf32, #tpu.memory_space<vmem>>, %arg21: memref<3x64x256xbf16, #tpu.memory_space<vmem>>, %arg22: memref<3x1x256xf32, #tpu.memory_space<vmem>>, %arg23: memref<3x256x64xbf16, #tpu.memory_space<vmem>>, %arg24: memref<3x1x64xf32, #tpu.memory_space<vmem>>, %arg25: memref<2x64xf32, #tpu.memory_space<vmem>>, %arg26: memref<64x128xbf16, #tpu.memory_space<vmem>>, %arg27: memref<1x128xf32, #tpu.memory_space<vmem>>, %arg28: memref<1x1x128xf32, #tpu.memory_space<vmem>>) attributes {dimension_semantics = [#tpu.dimension_semantics<parallel>], iteration_bounds = array<i64: 2>, scalar_prefetch = 0 : i64, scratch_operands = 0 : i64, tpu.core_type = #tpu.core_type<tc>, window_params = [{transform_indices = @transform_0, window_bounds = array<i64: 1, 24, 192>}, {pipeline_mode = #tpu.pipeline_mode<synchronous>, transform_indices = @transform_1, window_bounds = array<i64: 192, 64>}, {pipeline_mode = #tpu.pipeline_mode<synchronous>, transform_indices = @transform_2, window_bounds = array<i64: 24, 64>}, {pipeline_mode = #tpu.pipeline_mode<synchronous>, transform_indices = @transform_3, window_bounds = array<i64: 2, 64>}, {pipeline_mode = #tpu.pipeline_mode<synchronous>, transform_indices = @transform_4, window_bounds = array<i64: 2, 4, 64>}, {pipeline_mode = #tpu.pipeline_mode<synchronous>, transform_indices = @transform_5, window_bounds = array<i64: 2, 64, 192>}, {pipeline_mode = #tpu.pipeline_mode<synchronous>, transform_indices = @transform_6, window_bounds = array<i64: 2, 1, 192>}, {pipeline_mode = #tpu.pipeline_mode<synchronous>, transform_indices = @transform_7, window_bounds = array<i64: 2, 64, 64>}, {pipeline_mode = #tpu.pipeline_mode<synchronous>, transform_indices = @transform_8, window_bounds = array<i64: 2, 1, 64>}, {pipeline_mode = #tpu.pipeline_mode<synchronous>, transform_indices = @transform_9, window_bounds = array<i64: 2, 64, 256>}, {pipeline_mode = #tpu.pipeline_mode<synchronous>, transform_indices = @transform_10, window_bounds = array<i64: 2, 1, 256>}, {pipeline_mode = #tpu.pipeline_mode<synchronous>, transform_indices = @transform_11, window_bounds = array<i64: 2, 256, 64>}, {pipeline_mode = #tpu.pipeline_mode<synchronous>, transform_indices = @transform_12, window_bounds = array<i64: 2, 1, 64>}, {pipeline_mode = #tpu.pipeline_mode<synchronous>, transform_indices = @transform_13, window_bounds = array<i64: 1, 24>}, {pipeline_mode = #tpu.pipeline_mode<synchronous>, transform_indices = @transform_14, window_bounds = array<i64: 1, 1>}, {pipeline_mode = #tpu.pipeline_mode<synchronous>, transform_indices = @transform_15, window_bounds = array<i64: 3, 4, 64>}, {pipeline_mode = #tpu.pipeline_mode<synchronous>, transform_indices = @transform_16, window_bounds = array<i64: 3, 64, 64>}, {pipeline_mode = #tpu.pipeline_mode<synchronous>, transform_indices = @transform_17, window_bounds = array<i64: 3, 1, 64>}, {pipeline_mode = #tpu.pipeline_mode<synchronous>, transform_indices = @transform_18, window_bounds = array<i64: 3, 64, 64>}, {pipeline_mode = #tpu.pipeline_mode<synchronous>, transform_indices = @transform_19, window_bounds = array<i64: 3, 1, 64>}, {pipeline_mode = #tpu.pipeline_mode<synchronous>, transform_indices = @transform_20, window_bounds = array<i64: 3, 64, 256>}, {pipeline_mode = #tpu.pipeline_mode<synchronous>, transform_indices = @transform_21, window_bounds = array<i64: 3, 1, 256>}, {pipeline_mode = #tpu.pipeline_mode<synchronous>, transform_indices = @transform_22, window_bounds = array<i64: 3, 256, 64>}, {pipeline_mode = #tpu.pipeline_mode<synchronous>, transform_indices = @transform_23, window_bounds = array<i64: 3, 1, 64>}, {pipeline_mode = #tpu.pipeline_mode<synchronous>, transform_indices = @transform_24, window_bounds = array<i64: 2, 64>}, {pipeline_mode = #tpu.pipeline_mode<synchronous>, transform_indices = @transform_25, window_bounds = array<i64: 64, 128>}, {pipeline_mode = #tpu.pipeline_mode<synchronous>, transform_indices = @transform_26, window_bounds = array<i64: 1, 128>}, {transform_indices = @transform_27, window_bounds = array<i64: 1, 1, 128>}]} {
    %c0 = arith.constant 0 : index
    %c0_0 = arith.constant 0 : index
    %c0_1 = arith.constant 0 : index
    %0 = vector.load %arg1[%c0, %c0_0, %c0_1] : memref<1x24x192xbf16, #tpu.memory_space<vmem>>, vector<1x24x192xbf16>
    %1 = vector.shape_cast %0 : vector<1x24x192xbf16> to vector<24x192xbf16>
    %c0_2 = arith.constant 0 : index
    %c0_3 = arith.constant 0 : index
    %2 = vector.load %arg2[%c0_2, %c0_3] : memref<192x64xbf16, #tpu.memory_space<vmem>>, vector<192x64xbf16>
    %cst = arith.constant dense<0.000000e+00> : vector<24x64xf32>
    %3 = tpu.matmul %1, %2, %cst {dimension_numbers = #tpu.dot_dimension_numbers<[1], [0], [0], [1], [0, 0, 1, 1], [], []>} : vector<24x192xbf16>, vector<192x64xbf16>, vector<24x64xf32> -> vector<24x64xf32>
    %c0_4 = arith.constant 0 : index
    %c0_5 = arith.constant 0 : index
    %4 = vector.load %arg3[%c0_4, %c0_5] : memref<24x64xf32, #tpu.memory_space<vmem>>, vector<24x64xf32>
    %5 = arith.addf %3, %4 : vector<24x64xf32>
    %6 = tpu.iota {dimensions = array<i32: 1>} : vector<1x24xi32>
    %c17_i32 = arith.constant 17 : i32
    %7 = vector.broadcast %c17_i32 : i32 to vector<1x24xi32>
    %8 = arith.cmpi slt, %6, %7 : vector<1x24xi32>
    %cst_6 = arith.constant 0.000000e+00 : f32
    %cst_7 = arith.constant -1.000000e+30 : f32
    %9 = vector.broadcast %cst_6 : f32 to vector<1x24xf32>
    %10 = vector.broadcast %cst_7 : f32 to vector<1x24xf32>
    %11 = arith.select %8, %9, %10 : vector<1x24xi1>, vector<1x24xf32>
    %c0_8 = arith.constant 0 : index
    %c0_9 = arith.constant 0 : index
    %12 = vector.load %arg4[%c0_8, %c0_9] : memref<2x64xf32, #tpu.memory_space<vmem>>, vector<1x64xf32>
    %c1 = arith.constant 1 : index
    %c0_10 = arith.constant 0 : index
    %13 = vector.load %arg4[%c1, %c0_10] : memref<2x64xf32, #tpu.memory_space<vmem>>, vector<1x64xf32>
    %cst_11 = arith.constant dense<0.000000e+00> : vector<24xf32>
    %14 = vector.multi_reduction <add>, %5, %cst_11 [1] : vector<24x64xf32> to vector<24xf32>
    %15 = vector.shape_cast %14 : vector<24xf32> to vector<24x1xf32>
    %cst_12 = arith.constant 6.400000e+01 : f32
    %16 = vector.broadcast %cst_12 : f32 to vector<24x1xf32>
    %17 = arith.divf %15, %16 : vector<24x1xf32>
    %18 = vector.broadcast %17 : vector<24x1xf32> to vector<24x64xf32>
    %19 = arith.subf %5, %18 : vector<24x64xf32>
    %20 = arith.mulf %19, %19 : vector<24x64xf32>
    %cst_13 = arith.constant dense<0.000000e+00> : vector<24xf32>
    %21 = vector.multi_reduction <add>, %20, %cst_13 [1] : vector<24x64xf32> to vector<24xf32>
    %22 = vector.shape_cast %21 : vector<24xf32> to vector<24x1xf32>
    %cst_14 = arith.constant 6.400000e+01 : f32
    %23 = vector.broadcast %cst_14 : f32 to vector<24x1xf32>
    %24 = arith.divf %22, %23 : vector<24x1xf32>
    %cst_15 = arith.constant 9.99999974E-6 : f32
    %25 = vector.broadcast %cst_15 : f32 to vector<24x1xf32>
    %26 = arith.addf %24, %25 : vector<24x1xf32>
    %27 = math.rsqrt %26 : vector<24x1xf32>
    %28 = vector.broadcast %27 : vector<24x1xf32> to vector<24x64xf32>
    %29 = arith.mulf %19, %28 : vector<24x64xf32>
    %30 = vector.broadcast %12 : vector<1x64xf32> to vector<24x64xf32>
    %31 = arith.mulf %29, %30 : vector<24x64xf32>
    %32 = vector.broadcast %13 : vector<1x64xf32> to vector<24x64xf32>
    %33 = arith.addf %31, %32 : vector<24x64xf32>
    %c0_16 = arith.constant 0 : index
    %c0_17 = arith.constant 0 : index
    %c0_18 = arith.constant 0 : index
    %34 = vector.load %arg5[%c0_16, %c0_17, %c0_18] : memref<2x4x64xf32, #tpu.memory_space<vmem>>, vector<1x4x64xf32>
    %35 = vector.shape_cast %34 : vector<1x4x64xf32> to vector<4x64xf32>
    %36 = vector.extract_strided_slice %35 {offsets = [0, 0], sizes = [1, 64], strides = [1, 1]} : vector<4x64xf32> to vector<1x64xf32>
    %37 = vector.extract_strided_slice %35 {offsets = [1, 0], sizes = [1, 64], strides = [1, 1]} : vector<4x64xf32> to vector<1x64xf32>
    %cst_19 = arith.constant dense<0.000000e+00> : vector<24xf32>
    %38 = vector.multi_reduction <add>, %33, %cst_19 [1] : vector<24x64xf32> to vector<24xf32>
    %39 = vector.shape_cast %38 : vector<24xf32> to vector<24x1xf32>
    %cst_20 = arith.constant 6.400000e+01 : f32
    %40 = vector.broadcast %cst_20 : f32 to vector<24x1xf32>
    %41 = arith.divf %39, %40 : vector<24x1xf32>
    %42 = vector.broadcast %41 : vector<24x1xf32> to vector<24x64xf32>
    %43 = arith.subf %33, %42 : vector<24x64xf32>
    %44 = arith.mulf %43, %43 : vector<24x64xf32>
    %cst_21 = arith.constant dense<0.000000e+00> : vector<24xf32>
    %45 = vector.multi_reduction <add>, %44, %cst_21 [1] : vector<24x64xf32> to vector<24xf32>
    %46 = vector.shape_cast %45 : vector<24xf32> to vector<24x1xf32>
    %cst_22 = arith.constant 6.400000e+01 : f32
    %47 = vector.broadcast %cst_22 : f32 to vector<24x1xf32>
    %48 = arith.divf %46, %47 : vector<24x1xf32>
    %cst_23 = arith.constant 9.99999974E-6 : f32
    %49 = vector.broadcast %cst_23 : f32 to vector<24x1xf32>
    %50 = arith.addf %48, %49 : vector<24x1xf32>
    %51 = math.rsqrt %50 : vector<24x1xf32>
    %52 = vector.broadcast %51 : vector<24x1xf32> to vector<24x64xf32>
    %53 = arith.mulf %43, %52 : vector<24x64xf32>
    %54 = vector.broadcast %36 : vector<1x64xf32> to vector<24x64xf32>
    %55 = arith.mulf %53, %54 : vector<24x64xf32>
    %56 = vector.broadcast %37 : vector<1x64xf32> to vector<24x64xf32>
    %57 = arith.addf %55, %56 : vector<24x64xf32>
    %c0_24 = arith.constant 0 : index
    %c0_25 = arith.constant 0 : index
    %c0_26 = arith.constant 0 : index
    %58 = vector.load %arg6[%c0_24, %c0_25, %c0_26] : memref<2x64x192xbf16, #tpu.memory_space<vmem>>, vector<1x64x192xbf16>
    %59 = vector.shape_cast %58 : vector<1x64x192xbf16> to vector<64x192xbf16>
    %c0_27 = arith.constant 0 : index
    %c0_28 = arith.constant 0 : index
    %c0_29 = arith.constant 0 : index
    %60 = vector.load %arg7[%c0_27, %c0_28, %c0_29] : memref<2x1x192xf32, #tpu.memory_space<vmem>>, vector<1x1x192xf32>
    %61 = vector.shape_cast %60 : vector<1x1x192xf32> to vector<1x192xf32>
    %c0_30 = arith.constant 0 : index
    %c0_31 = arith.constant 0 : index
    %c0_32 = arith.constant 0 : index
    %62 = vector.load %arg8[%c0_30, %c0_31, %c0_32] : memref<2x64x64xbf16, #tpu.memory_space<vmem>>, vector<1x64x64xbf16>
    %63 = vector.shape_cast %62 : vector<1x64x64xbf16> to vector<64x64xbf16>
    %c0_33 = arith.constant 0 : index
    %c0_34 = arith.constant 0 : index
    %c0_35 = arith.constant 0 : index
    %64 = vector.load %arg9[%c0_33, %c0_34, %c0_35] : memref<2x1x64xf32, #tpu.memory_space<vmem>>, vector<1x1x64xf32>
    %65 = vector.shape_cast %64 : vector<1x1x64xf32> to vector<1x64xf32>
    %66 = arith.truncf %57 : vector<24x64xf32> to vector<24x64xbf16>
    %cst_36 = arith.constant dense<0.000000e+00> : vector<24x192xf32>
    %67 = tpu.matmul %66, %59, %cst_36 {dimension_numbers = #tpu.dot_dimension_numbers<[1], [0], [0], [1], [0, 0, 1, 1], [], []>} : vector<24x64xbf16>, vector<64x192xbf16>, vector<24x192xf32> -> vector<24x192xf32>
    %68 = vector.broadcast %61 : vector<1x192xf32> to vector<24x192xf32>
    %69 = arith.addf %67, %68 : vector<24x192xf32>
    %70 = vector.extract_strided_slice %69 {offsets = [0, 0], sizes = [24, 16], strides = [1, 1]} : vector<24x192xf32> to vector<24x16xf32>
    %cst_37 = arith.constant 2.500000e-01 : f32
    %71 = vector.broadcast %cst_37 : f32 to vector<24x16xf32>
    %72 = arith.mulf %70, %71 : vector<24x16xf32>
    %73 = arith.truncf %72 : vector<24x16xf32> to vector<24x16xbf16>
    %74 = vector.extract_strided_slice %69 {offsets = [0, 64], sizes = [24, 16], strides = [1, 1]} : vector<24x192xf32> to vector<24x16xf32>
    %75 = arith.truncf %74 : vector<24x16xf32> to vector<24x16xbf16>
    %76 = vector.extract_strided_slice %69 {offsets = [0, 128], sizes = [24, 16], strides = [1, 1]} : vector<24x192xf32> to vector<24x16xf32>
    %77 = arith.truncf %76 : vector<24x16xf32> to vector<24x16xbf16>
    %cst_38 = arith.constant dense<0.000000e+00> : vector<24x24xf32>
    %78 = tpu.matmul %73, %75, %cst_38 {dimension_numbers = #tpu.dot_dimension_numbers<[1], [1], [0], [0], [0, 0, 1, 0], [], []>} : vector<24x16xbf16>, vector<24x16xbf16>, vector<24x24xf32> -> vector<24x24xf32>
    %79 = vector.broadcast %11 : vector<1x24xf32> to vector<24x24xf32>
    %80 = arith.addf %78, %79 : vector<24x24xf32>
    %cst_39 = arith.constant dense<0xFF800000> : vector<24xf32>
    %81 = vector.multi_reduction <maximumf>, %80, %cst_39 [1] : vector<24x24xf32> to vector<24xf32>
    %82 = vector.shape_cast %81 : vector<24xf32> to vector<24x1xf32>
    %83 = vector.broadcast %82 : vector<24x1xf32> to vector<24x24xf32>
    %84 = arith.subf %80, %83 : vector<24x24xf32>
    %85 = math.exp %84 : vector<24x24xf32>
    %cst_40 = arith.constant dense<0.000000e+00> : vector<24xf32>
    %86 = vector.multi_reduction <add>, %85, %cst_40 [1] : vector<24x24xf32> to vector<24xf32>
    %87 = vector.shape_cast %86 : vector<24xf32> to vector<24x1xf32>
    %88 = tpu.reciprocal %87 {approx = true} : vector<24x1xf32> -> vector<24x1xf32>
    %89 = vector.broadcast %88 : vector<24x1xf32> to vector<24x24xf32>
    %90 = arith.mulf %85, %89 : vector<24x24xf32>
    %91 = arith.truncf %90 : vector<24x24xf32> to vector<24x24xbf16>
    %cst_41 = arith.constant dense<0.000000e+00> : vector<24x16xf32>
    %92 = tpu.matmul %91, %77, %cst_41 {dimension_numbers = #tpu.dot_dimension_numbers<[1], [0], [0], [1], [0, 0, 1, 1], [], []>} : vector<24x24xbf16>, vector<24x16xbf16>, vector<24x16xf32> -> vector<24x16xf32>
    %93 = vector.extract_strided_slice %69 {offsets = [0, 16], sizes = [24, 16], strides = [1, 1]} : vector<24x192xf32> to vector<24x16xf32>
    %cst_42 = arith.constant 2.500000e-01 : f32
    %94 = vector.broadcast %cst_42 : f32 to vector<24x16xf32>
    %95 = arith.mulf %93, %94 : vector<24x16xf32>
    %96 = arith.truncf %95 : vector<24x16xf32> to vector<24x16xbf16>
    %97 = vector.extract_strided_slice %69 {offsets = [0, 80], sizes = [24, 16], strides = [1, 1]} : vector<24x192xf32> to vector<24x16xf32>
    %98 = arith.truncf %97 : vector<24x16xf32> to vector<24x16xbf16>
    %99 = vector.extract_strided_slice %69 {offsets = [0, 144], sizes = [24, 16], strides = [1, 1]} : vector<24x192xf32> to vector<24x16xf32>
    %100 = arith.truncf %99 : vector<24x16xf32> to vector<24x16xbf16>
    %cst_43 = arith.constant dense<0.000000e+00> : vector<24x24xf32>
    %101 = tpu.matmul %96, %98, %cst_43 {dimension_numbers = #tpu.dot_dimension_numbers<[1], [1], [0], [0], [0, 0, 1, 0], [], []>} : vector<24x16xbf16>, vector<24x16xbf16>, vector<24x24xf32> -> vector<24x24xf32>
    %102 = vector.broadcast %11 : vector<1x24xf32> to vector<24x24xf32>
    %103 = arith.addf %101, %102 : vector<24x24xf32>
    %cst_44 = arith.constant dense<0xFF800000> : vector<24xf32>
    %104 = vector.multi_reduction <maximumf>, %103, %cst_44 [1] : vector<24x24xf32> to vector<24xf32>
    %105 = vector.shape_cast %104 : vector<24xf32> to vector<24x1xf32>
    %106 = vector.broadcast %105 : vector<24x1xf32> to vector<24x24xf32>
    %107 = arith.subf %103, %106 : vector<24x24xf32>
    %108 = math.exp %107 : vector<24x24xf32>
    %cst_45 = arith.constant dense<0.000000e+00> : vector<24xf32>
    %109 = vector.multi_reduction <add>, %108, %cst_45 [1] : vector<24x24xf32> to vector<24xf32>
    %110 = vector.shape_cast %109 : vector<24xf32> to vector<24x1xf32>
    %111 = tpu.reciprocal %110 {approx = true} : vector<24x1xf32> -> vector<24x1xf32>
    %112 = vector.broadcast %111 : vector<24x1xf32> to vector<24x24xf32>
    %113 = arith.mulf %108, %112 : vector<24x24xf32>
    %114 = arith.truncf %113 : vector<24x24xf32> to vector<24x24xbf16>
    %cst_46 = arith.constant dense<0.000000e+00> : vector<24x16xf32>
    %115 = tpu.matmul %114, %100, %cst_46 {dimension_numbers = #tpu.dot_dimension_numbers<[1], [0], [0], [1], [0, 0, 1, 1], [], []>} : vector<24x24xbf16>, vector<24x16xbf16>, vector<24x16xf32> -> vector<24x16xf32>
    %116 = vector.extract_strided_slice %69 {offsets = [0, 32], sizes = [24, 16], strides = [1, 1]} : vector<24x192xf32> to vector<24x16xf32>
    %cst_47 = arith.constant 2.500000e-01 : f32
    %117 = vector.broadcast %cst_47 : f32 to vector<24x16xf32>
    %118 = arith.mulf %116, %117 : vector<24x16xf32>
    %119 = arith.truncf %118 : vector<24x16xf32> to vector<24x16xbf16>
    %120 = vector.extract_strided_slice %69 {offsets = [0, 96], sizes = [24, 16], strides = [1, 1]} : vector<24x192xf32> to vector<24x16xf32>
    %121 = arith.truncf %120 : vector<24x16xf32> to vector<24x16xbf16>
    %122 = vector.extract_strided_slice %69 {offsets = [0, 160], sizes = [24, 16], strides = [1, 1]} : vector<24x192xf32> to vector<24x16xf32>
    %123 = arith.truncf %122 : vector<24x16xf32> to vector<24x16xbf16>
    %cst_48 = arith.constant dense<0.000000e+00> : vector<24x24xf32>
    %124 = tpu.matmul %119, %121, %cst_48 {dimension_numbers = #tpu.dot_dimension_numbers<[1], [1], [0], [0], [0, 0, 1, 0], [], []>} : vector<24x16xbf16>, vector<24x16xbf16>, vector<24x24xf32> -> vector<24x24xf32>
    %125 = vector.broadcast %11 : vector<1x24xf32> to vector<24x24xf32>
    %126 = arith.addf %124, %125 : vector<24x24xf32>
    %cst_49 = arith.constant dense<0xFF800000> : vector<24xf32>
    %127 = vector.multi_reduction <maximumf>, %126, %cst_49 [1] : vector<24x24xf32> to vector<24xf32>
    %128 = vector.shape_cast %127 : vector<24xf32> to vector<24x1xf32>
    %129 = vector.broadcast %128 : vector<24x1xf32> to vector<24x24xf32>
    %130 = arith.subf %126, %129 : vector<24x24xf32>
    %131 = math.exp %130 : vector<24x24xf32>
    %cst_50 = arith.constant dense<0.000000e+00> : vector<24xf32>
    %132 = vector.multi_reduction <add>, %131, %cst_50 [1] : vector<24x24xf32> to vector<24xf32>
    %133 = vector.shape_cast %132 : vector<24xf32> to vector<24x1xf32>
    %134 = tpu.reciprocal %133 {approx = true} : vector<24x1xf32> -> vector<24x1xf32>
    %135 = vector.broadcast %134 : vector<24x1xf32> to vector<24x24xf32>
    %136 = arith.mulf %131, %135 : vector<24x24xf32>
    %137 = arith.truncf %136 : vector<24x24xf32> to vector<24x24xbf16>
    %cst_51 = arith.constant dense<0.000000e+00> : vector<24x16xf32>
    %138 = tpu.matmul %137, %123, %cst_51 {dimension_numbers = #tpu.dot_dimension_numbers<[1], [0], [0], [1], [0, 0, 1, 1], [], []>} : vector<24x24xbf16>, vector<24x16xbf16>, vector<24x16xf32> -> vector<24x16xf32>
    %139 = vector.extract_strided_slice %69 {offsets = [0, 48], sizes = [24, 16], strides = [1, 1]} : vector<24x192xf32> to vector<24x16xf32>
    %cst_52 = arith.constant 2.500000e-01 : f32
    %140 = vector.broadcast %cst_52 : f32 to vector<24x16xf32>
    %141 = arith.mulf %139, %140 : vector<24x16xf32>
    %142 = arith.truncf %141 : vector<24x16xf32> to vector<24x16xbf16>
    %143 = vector.extract_strided_slice %69 {offsets = [0, 112], sizes = [24, 16], strides = [1, 1]} : vector<24x192xf32> to vector<24x16xf32>
    %144 = arith.truncf %143 : vector<24x16xf32> to vector<24x16xbf16>
    %145 = vector.extract_strided_slice %69 {offsets = [0, 176], sizes = [24, 16], strides = [1, 1]} : vector<24x192xf32> to vector<24x16xf32>
    %146 = arith.truncf %145 : vector<24x16xf32> to vector<24x16xbf16>
    %cst_53 = arith.constant dense<0.000000e+00> : vector<24x24xf32>
    %147 = tpu.matmul %142, %144, %cst_53 {dimension_numbers = #tpu.dot_dimension_numbers<[1], [1], [0], [0], [0, 0, 1, 0], [], []>} : vector<24x16xbf16>, vector<24x16xbf16>, vector<24x24xf32> -> vector<24x24xf32>
    %148 = vector.broadcast %11 : vector<1x24xf32> to vector<24x24xf32>
    %149 = arith.addf %147, %148 : vector<24x24xf32>
    %cst_54 = arith.constant dense<0xFF800000> : vector<24xf32>
    %150 = vector.multi_reduction <maximumf>, %149, %cst_54 [1] : vector<24x24xf32> to vector<24xf32>
    %151 = vector.shape_cast %150 : vector<24xf32> to vector<24x1xf32>
    %152 = vector.broadcast %151 : vector<24x1xf32> to vector<24x24xf32>
    %153 = arith.subf %149, %152 : vector<24x24xf32>
    %154 = math.exp %153 : vector<24x24xf32>
    %cst_55 = arith.constant dense<0.000000e+00> : vector<24xf32>
    %155 = vector.multi_reduction <add>, %154, %cst_55 [1] : vector<24x24xf32> to vector<24xf32>
    %156 = vector.shape_cast %155 : vector<24xf32> to vector<24x1xf32>
    %157 = tpu.reciprocal %156 {approx = true} : vector<24x1xf32> -> vector<24x1xf32>
    %158 = vector.broadcast %157 : vector<24x1xf32> to vector<24x24xf32>
    %159 = arith.mulf %154, %158 : vector<24x24xf32>
    %160 = arith.truncf %159 : vector<24x24xf32> to vector<24x24xbf16>
    %cst_56 = arith.constant dense<0.000000e+00> : vector<24x16xf32>
    %161 = tpu.matmul %160, %146, %cst_56 {dimension_numbers = #tpu.dot_dimension_numbers<[1], [0], [0], [1], [0, 0, 1, 1], [], []>} : vector<24x24xbf16>, vector<24x16xbf16>, vector<24x16xf32> -> vector<24x16xf32>
    %162 = tpu.concatenate %92, %115, %138, %161 in 1 : vector<24x16xf32>, vector<24x16xf32>, vector<24x16xf32>, vector<24x16xf32> -> vector<24x64xf32>
    %163 = arith.truncf %162 : vector<24x64xf32> to vector<24x64xbf16>
    %cst_57 = arith.constant dense<0.000000e+00> : vector<24x64xf32>
    %164 = tpu.matmul %163, %63, %cst_57 {dimension_numbers = #tpu.dot_dimension_numbers<[1], [0], [0], [1], [0, 0, 1, 1], [], []>} : vector<24x64xbf16>, vector<64x64xbf16>, vector<24x64xf32> -> vector<24x64xf32>
    %165 = vector.broadcast %65 : vector<1x64xf32> to vector<24x64xf32>
    %166 = arith.addf %164, %165 : vector<24x64xf32>
    %167 = arith.addf %33, %166 : vector<24x64xf32>
    %168 = vector.extract_strided_slice %35 {offsets = [2, 0], sizes = [1, 64], strides = [1, 1]} : vector<4x64xf32> to vector<1x64xf32>
    %169 = vector.extract_strided_slice %35 {offsets = [3, 0], sizes = [1, 64], strides = [1, 1]} : vector<4x64xf32> to vector<1x64xf32>
    %cst_58 = arith.constant dense<0.000000e+00> : vector<24xf32>
    %170 = vector.multi_reduction <add>, %167, %cst_58 [1] : vector<24x64xf32> to vector<24xf32>
    %171 = vector.shape_cast %170 : vector<24xf32> to vector<24x1xf32>
    %cst_59 = arith.constant 6.400000e+01 : f32
    %172 = vector.broadcast %cst_59 : f32 to vector<24x1xf32>
    %173 = arith.divf %171, %172 : vector<24x1xf32>
    %174 = vector.broadcast %173 : vector<24x1xf32> to vector<24x64xf32>
    %175 = arith.subf %167, %174 : vector<24x64xf32>
    %176 = arith.mulf %175, %175 : vector<24x64xf32>
    %cst_60 = arith.constant dense<0.000000e+00> : vector<24xf32>
    %177 = vector.multi_reduction <add>, %176, %cst_60 [1] : vector<24x64xf32> to vector<24xf32>
    %178 = vector.shape_cast %177 : vector<24xf32> to vector<24x1xf32>
    %cst_61 = arith.constant 6.400000e+01 : f32
    %179 = vector.broadcast %cst_61 : f32 to vector<24x1xf32>
    %180 = arith.divf %178, %179 : vector<24x1xf32>
    %cst_62 = arith.constant 9.99999974E-6 : f32
    %181 = vector.broadcast %cst_62 : f32 to vector<24x1xf32>
    %182 = arith.addf %180, %181 : vector<24x1xf32>
    %183 = math.rsqrt %182 : vector<24x1xf32>
    %184 = vector.broadcast %183 : vector<24x1xf32> to vector<24x64xf32>
    %185 = arith.mulf %175, %184 : vector<24x64xf32>
    %186 = vector.broadcast %168 : vector<1x64xf32> to vector<24x64xf32>
    %187 = arith.mulf %185, %186 : vector<24x64xf32>
    %188 = vector.broadcast %169 : vector<1x64xf32> to vector<24x64xf32>
    %189 = arith.addf %187, %188 : vector<24x64xf32>
    %c0_63 = arith.constant 0 : index
    %c0_64 = arith.constant 0 : index
    %c0_65 = arith.constant 0 : index
    %190 = vector.load %arg10[%c0_63, %c0_64, %c0_65] : memref<2x64x256xbf16, #tpu.memory_space<vmem>>, vector<1x64x256xbf16>
    %191 = vector.shape_cast %190 : vector<1x64x256xbf16> to vector<64x256xbf16>
    %c0_66 = arith.constant 0 : index
    %c0_67 = arith.constant 0 : index
    %c0_68 = arith.constant 0 : index
    %192 = vector.load %arg11[%c0_66, %c0_67, %c0_68] : memref<2x1x256xf32, #tpu.memory_space<vmem>>, vector<1x1x256xf32>
    %193 = vector.shape_cast %192 : vector<1x1x256xf32> to vector<1x256xf32>
    %c0_69 = arith.constant 0 : index
    %c0_70 = arith.constant 0 : index
    %c0_71 = arith.constant 0 : index
    %194 = vector.load %arg12[%c0_69, %c0_70, %c0_71] : memref<2x256x64xbf16, #tpu.memory_space<vmem>>, vector<1x256x64xbf16>
    %195 = vector.shape_cast %194 : vector<1x256x64xbf16> to vector<256x64xbf16>
    %c0_72 = arith.constant 0 : index
    %c0_73 = arith.constant 0 : index
    %c0_74 = arith.constant 0 : index
    %196 = vector.load %arg13[%c0_72, %c0_73, %c0_74] : memref<2x1x64xf32, #tpu.memory_space<vmem>>, vector<1x1x64xf32>
    %197 = vector.shape_cast %196 : vector<1x1x64xf32> to vector<1x64xf32>
    %198 = arith.truncf %189 : vector<24x64xf32> to vector<24x64xbf16>
    %cst_75 = arith.constant dense<0.000000e+00> : vector<24x256xf32>
    %199 = tpu.matmul %198, %191, %cst_75 {dimension_numbers = #tpu.dot_dimension_numbers<[1], [0], [0], [1], [0, 0, 1, 1], [], []>} : vector<24x64xbf16>, vector<64x256xbf16>, vector<24x256xf32> -> vector<24x256xf32>
    %200 = vector.broadcast %193 : vector<1x256xf32> to vector<24x256xf32>
    %201 = arith.addf %199, %200 : vector<24x256xf32>
    %cst_76 = arith.constant 1.702000e+00 : f32
    %202 = vector.broadcast %cst_76 : f32 to vector<24x256xf32>
    %203 = arith.mulf %202, %201 : vector<24x256xf32>
    %204 = arith.negf %203 : vector<24x256xf32>
    %205 = math.exp %204 : vector<24x256xf32>
    %cst_77 = arith.constant 1.000000e+00 : f32
    %206 = vector.broadcast %cst_77 : f32 to vector<24x256xf32>
    %207 = arith.addf %206, %205 : vector<24x256xf32>
    %208 = arith.divf %206, %207 : vector<24x256xf32>
    %209 = arith.mulf %201, %208 : vector<24x256xf32>
    %210 = arith.truncf %209 : vector<24x256xf32> to vector<24x256xbf16>
    %cst_78 = arith.constant dense<0.000000e+00> : vector<24x64xf32>
    %211 = tpu.matmul %210, %195, %cst_78 {dimension_numbers = #tpu.dot_dimension_numbers<[1], [0], [0], [1], [0, 0, 1, 1], [], []>} : vector<24x256xbf16>, vector<256x64xbf16>, vector<24x64xf32> -> vector<24x64xf32>
    %212 = vector.broadcast %197 : vector<1x64xf32> to vector<24x64xf32>
    %213 = arith.addf %211, %212 : vector<24x64xf32>
    %214 = arith.addf %167, %213 : vector<24x64xf32>
    %c1_79 = arith.constant 1 : index
    %c0_80 = arith.constant 0 : index
    %c0_81 = arith.constant 0 : index
    %215 = vector.load %arg5[%c1_79, %c0_80, %c0_81] : memref<2x4x64xf32, #tpu.memory_space<vmem>>, vector<1x4x64xf32>
    %216 = vector.shape_cast %215 : vector<1x4x64xf32> to vector<4x64xf32>
    %217 = vector.extract_strided_slice %216 {offsets = [0, 0], sizes = [1, 64], strides = [1, 1]} : vector<4x64xf32> to vector<1x64xf32>
    %218 = vector.extract_strided_slice %216 {offsets = [1, 0], sizes = [1, 64], strides = [1, 1]} : vector<4x64xf32> to vector<1x64xf32>
    %cst_82 = arith.constant dense<0.000000e+00> : vector<24xf32>
    %219 = vector.multi_reduction <add>, %214, %cst_82 [1] : vector<24x64xf32> to vector<24xf32>
    %220 = vector.shape_cast %219 : vector<24xf32> to vector<24x1xf32>
    %cst_83 = arith.constant 6.400000e+01 : f32
    %221 = vector.broadcast %cst_83 : f32 to vector<24x1xf32>
    %222 = arith.divf %220, %221 : vector<24x1xf32>
    %223 = vector.broadcast %222 : vector<24x1xf32> to vector<24x64xf32>
    %224 = arith.subf %214, %223 : vector<24x64xf32>
    %225 = arith.mulf %224, %224 : vector<24x64xf32>
    %cst_84 = arith.constant dense<0.000000e+00> : vector<24xf32>
    %226 = vector.multi_reduction <add>, %225, %cst_84 [1] : vector<24x64xf32> to vector<24xf32>
    %227 = vector.shape_cast %226 : vector<24xf32> to vector<24x1xf32>
    %cst_85 = arith.constant 6.400000e+01 : f32
    %228 = vector.broadcast %cst_85 : f32 to vector<24x1xf32>
    %229 = arith.divf %227, %228 : vector<24x1xf32>
    %cst_86 = arith.constant 9.99999974E-6 : f32
    %230 = vector.broadcast %cst_86 : f32 to vector<24x1xf32>
    %231 = arith.addf %229, %230 : vector<24x1xf32>
    %232 = math.rsqrt %231 : vector<24x1xf32>
    %233 = vector.broadcast %232 : vector<24x1xf32> to vector<24x64xf32>
    %234 = arith.mulf %224, %233 : vector<24x64xf32>
    %235 = vector.broadcast %217 : vector<1x64xf32> to vector<24x64xf32>
    %236 = arith.mulf %234, %235 : vector<24x64xf32>
    %237 = vector.broadcast %218 : vector<1x64xf32> to vector<24x64xf32>
    %238 = arith.addf %236, %237 : vector<24x64xf32>
    %c1_87 = arith.constant 1 : index
    %c0_88 = arith.constant 0 : index
    %c0_89 = arith.constant 0 : index
    %239 = vector.load %arg6[%c1_87, %c0_88, %c0_89] : memref<2x64x192xbf16, #tpu.memory_space<vmem>>, vector<1x64x192xbf16>
    %240 = vector.shape_cast %239 : vector<1x64x192xbf16> to vector<64x192xbf16>
    %c1_90 = arith.constant 1 : index
    %c0_91 = arith.constant 0 : index
    %c0_92 = arith.constant 0 : index
    %241 = vector.load %arg7[%c1_90, %c0_91, %c0_92] : memref<2x1x192xf32, #tpu.memory_space<vmem>>, vector<1x1x192xf32>
    %242 = vector.shape_cast %241 : vector<1x1x192xf32> to vector<1x192xf32>
    %c1_93 = arith.constant 1 : index
    %c0_94 = arith.constant 0 : index
    %c0_95 = arith.constant 0 : index
    %243 = vector.load %arg8[%c1_93, %c0_94, %c0_95] : memref<2x64x64xbf16, #tpu.memory_space<vmem>>, vector<1x64x64xbf16>
    %244 = vector.shape_cast %243 : vector<1x64x64xbf16> to vector<64x64xbf16>
    %c1_96 = arith.constant 1 : index
    %c0_97 = arith.constant 0 : index
    %c0_98 = arith.constant 0 : index
    %245 = vector.load %arg9[%c1_96, %c0_97, %c0_98] : memref<2x1x64xf32, #tpu.memory_space<vmem>>, vector<1x1x64xf32>
    %246 = vector.shape_cast %245 : vector<1x1x64xf32> to vector<1x64xf32>
    %247 = arith.truncf %238 : vector<24x64xf32> to vector<24x64xbf16>
    %cst_99 = arith.constant dense<0.000000e+00> : vector<24x192xf32>
    %248 = tpu.matmul %247, %240, %cst_99 {dimension_numbers = #tpu.dot_dimension_numbers<[1], [0], [0], [1], [0, 0, 1, 1], [], []>} : vector<24x64xbf16>, vector<64x192xbf16>, vector<24x192xf32> -> vector<24x192xf32>
    %249 = vector.broadcast %242 : vector<1x192xf32> to vector<24x192xf32>
    %250 = arith.addf %248, %249 : vector<24x192xf32>
    %251 = vector.extract_strided_slice %250 {offsets = [0, 0], sizes = [24, 16], strides = [1, 1]} : vector<24x192xf32> to vector<24x16xf32>
    %cst_100 = arith.constant 2.500000e-01 : f32
    %252 = vector.broadcast %cst_100 : f32 to vector<24x16xf32>
    %253 = arith.mulf %251, %252 : vector<24x16xf32>
    %254 = arith.truncf %253 : vector<24x16xf32> to vector<24x16xbf16>
    %255 = vector.extract_strided_slice %250 {offsets = [0, 64], sizes = [24, 16], strides = [1, 1]} : vector<24x192xf32> to vector<24x16xf32>
    %256 = arith.truncf %255 : vector<24x16xf32> to vector<24x16xbf16>
    %257 = vector.extract_strided_slice %250 {offsets = [0, 128], sizes = [24, 16], strides = [1, 1]} : vector<24x192xf32> to vector<24x16xf32>
    %258 = arith.truncf %257 : vector<24x16xf32> to vector<24x16xbf16>
    %cst_101 = arith.constant dense<0.000000e+00> : vector<24x24xf32>
    %259 = tpu.matmul %254, %256, %cst_101 {dimension_numbers = #tpu.dot_dimension_numbers<[1], [1], [0], [0], [0, 0, 1, 0], [], []>} : vector<24x16xbf16>, vector<24x16xbf16>, vector<24x24xf32> -> vector<24x24xf32>
    %260 = vector.broadcast %11 : vector<1x24xf32> to vector<24x24xf32>
    %261 = arith.addf %259, %260 : vector<24x24xf32>
    %cst_102 = arith.constant dense<0xFF800000> : vector<24xf32>
    %262 = vector.multi_reduction <maximumf>, %261, %cst_102 [1] : vector<24x24xf32> to vector<24xf32>
    %263 = vector.shape_cast %262 : vector<24xf32> to vector<24x1xf32>
    %264 = vector.broadcast %263 : vector<24x1xf32> to vector<24x24xf32>
    %265 = arith.subf %261, %264 : vector<24x24xf32>
    %266 = math.exp %265 : vector<24x24xf32>
    %cst_103 = arith.constant dense<0.000000e+00> : vector<24xf32>
    %267 = vector.multi_reduction <add>, %266, %cst_103 [1] : vector<24x24xf32> to vector<24xf32>
    %268 = vector.shape_cast %267 : vector<24xf32> to vector<24x1xf32>
    %269 = tpu.reciprocal %268 {approx = true} : vector<24x1xf32> -> vector<24x1xf32>
    %270 = vector.broadcast %269 : vector<24x1xf32> to vector<24x24xf32>
    %271 = arith.mulf %266, %270 : vector<24x24xf32>
    %272 = arith.truncf %271 : vector<24x24xf32> to vector<24x24xbf16>
    %cst_104 = arith.constant dense<0.000000e+00> : vector<24x16xf32>
    %273 = tpu.matmul %272, %258, %cst_104 {dimension_numbers = #tpu.dot_dimension_numbers<[1], [0], [0], [1], [0, 0, 1, 1], [], []>} : vector<24x24xbf16>, vector<24x16xbf16>, vector<24x16xf32> -> vector<24x16xf32>
    %274 = vector.extract_strided_slice %250 {offsets = [0, 16], sizes = [24, 16], strides = [1, 1]} : vector<24x192xf32> to vector<24x16xf32>
    %cst_105 = arith.constant 2.500000e-01 : f32
    %275 = vector.broadcast %cst_105 : f32 to vector<24x16xf32>
    %276 = arith.mulf %274, %275 : vector<24x16xf32>
    %277 = arith.truncf %276 : vector<24x16xf32> to vector<24x16xbf16>
    %278 = vector.extract_strided_slice %250 {offsets = [0, 80], sizes = [24, 16], strides = [1, 1]} : vector<24x192xf32> to vector<24x16xf32>
    %279 = arith.truncf %278 : vector<24x16xf32> to vector<24x16xbf16>
    %280 = vector.extract_strided_slice %250 {offsets = [0, 144], sizes = [24, 16], strides = [1, 1]} : vector<24x192xf32> to vector<24x16xf32>
    %281 = arith.truncf %280 : vector<24x16xf32> to vector<24x16xbf16>
    %cst_106 = arith.constant dense<0.000000e+00> : vector<24x24xf32>
    %282 = tpu.matmul %277, %279, %cst_106 {dimension_numbers = #tpu.dot_dimension_numbers<[1], [1], [0], [0], [0, 0, 1, 0], [], []>} : vector<24x16xbf16>, vector<24x16xbf16>, vector<24x24xf32> -> vector<24x24xf32>
    %283 = vector.broadcast %11 : vector<1x24xf32> to vector<24x24xf32>
    %284 = arith.addf %282, %283 : vector<24x24xf32>
    %cst_107 = arith.constant dense<0xFF800000> : vector<24xf32>
    %285 = vector.multi_reduction <maximumf>, %284, %cst_107 [1] : vector<24x24xf32> to vector<24xf32>
    %286 = vector.shape_cast %285 : vector<24xf32> to vector<24x1xf32>
    %287 = vector.broadcast %286 : vector<24x1xf32> to vector<24x24xf32>
    %288 = arith.subf %284, %287 : vector<24x24xf32>
    %289 = math.exp %288 : vector<24x24xf32>
    %cst_108 = arith.constant dense<0.000000e+00> : vector<24xf32>
    %290 = vector.multi_reduction <add>, %289, %cst_108 [1] : vector<24x24xf32> to vector<24xf32>
    %291 = vector.shape_cast %290 : vector<24xf32> to vector<24x1xf32>
    %292 = tpu.reciprocal %291 {approx = true} : vector<24x1xf32> -> vector<24x1xf32>
    %293 = vector.broadcast %292 : vector<24x1xf32> to vector<24x24xf32>
    %294 = arith.mulf %289, %293 : vector<24x24xf32>
    %295 = arith.truncf %294 : vector<24x24xf32> to vector<24x24xbf16>
    %cst_109 = arith.constant dense<0.000000e+00> : vector<24x16xf32>
    %296 = tpu.matmul %295, %281, %cst_109 {dimension_numbers = #tpu.dot_dimension_numbers<[1], [0], [0], [1], [0, 0, 1, 1], [], []>} : vector<24x24xbf16>, vector<24x16xbf16>, vector<24x16xf32> -> vector<24x16xf32>
    %297 = vector.extract_strided_slice %250 {offsets = [0, 32], sizes = [24, 16], strides = [1, 1]} : vector<24x192xf32> to vector<24x16xf32>
    %cst_110 = arith.constant 2.500000e-01 : f32
    %298 = vector.broadcast %cst_110 : f32 to vector<24x16xf32>
    %299 = arith.mulf %297, %298 : vector<24x16xf32>
    %300 = arith.truncf %299 : vector<24x16xf32> to vector<24x16xbf16>
    %301 = vector.extract_strided_slice %250 {offsets = [0, 96], sizes = [24, 16], strides = [1, 1]} : vector<24x192xf32> to vector<24x16xf32>
    %302 = arith.truncf %301 : vector<24x16xf32> to vector<24x16xbf16>
    %303 = vector.extract_strided_slice %250 {offsets = [0, 160], sizes = [24, 16], strides = [1, 1]} : vector<24x192xf32> to vector<24x16xf32>
    %304 = arith.truncf %303 : vector<24x16xf32> to vector<24x16xbf16>
    %cst_111 = arith.constant dense<0.000000e+00> : vector<24x24xf32>
    %305 = tpu.matmul %300, %302, %cst_111 {dimension_numbers = #tpu.dot_dimension_numbers<[1], [1], [0], [0], [0, 0, 1, 0], [], []>} : vector<24x16xbf16>, vector<24x16xbf16>, vector<24x24xf32> -> vector<24x24xf32>
    %306 = vector.broadcast %11 : vector<1x24xf32> to vector<24x24xf32>
    %307 = arith.addf %305, %306 : vector<24x24xf32>
    %cst_112 = arith.constant dense<0xFF800000> : vector<24xf32>
    %308 = vector.multi_reduction <maximumf>, %307, %cst_112 [1] : vector<24x24xf32> to vector<24xf32>
    %309 = vector.shape_cast %308 : vector<24xf32> to vector<24x1xf32>
    %310 = vector.broadcast %309 : vector<24x1xf32> to vector<24x24xf32>
    %311 = arith.subf %307, %310 : vector<24x24xf32>
    %312 = math.exp %311 : vector<24x24xf32>
    %cst_113 = arith.constant dense<0.000000e+00> : vector<24xf32>
    %313 = vector.multi_reduction <add>, %312, %cst_113 [1] : vector<24x24xf32> to vector<24xf32>
    %314 = vector.shape_cast %313 : vector<24xf32> to vector<24x1xf32>
    %315 = tpu.reciprocal %314 {approx = true} : vector<24x1xf32> -> vector<24x1xf32>
    %316 = vector.broadcast %315 : vector<24x1xf32> to vector<24x24xf32>
    %317 = arith.mulf %312, %316 : vector<24x24xf32>
    %318 = arith.truncf %317 : vector<24x24xf32> to vector<24x24xbf16>
    %cst_114 = arith.constant dense<0.000000e+00> : vector<24x16xf32>
    %319 = tpu.matmul %318, %304, %cst_114 {dimension_numbers = #tpu.dot_dimension_numbers<[1], [0], [0], [1], [0, 0, 1, 1], [], []>} : vector<24x24xbf16>, vector<24x16xbf16>, vector<24x16xf32> -> vector<24x16xf32>
    %320 = vector.extract_strided_slice %250 {offsets = [0, 48], sizes = [24, 16], strides = [1, 1]} : vector<24x192xf32> to vector<24x16xf32>
    %cst_115 = arith.constant 2.500000e-01 : f32
    %321 = vector.broadcast %cst_115 : f32 to vector<24x16xf32>
    %322 = arith.mulf %320, %321 : vector<24x16xf32>
    %323 = arith.truncf %322 : vector<24x16xf32> to vector<24x16xbf16>
    %324 = vector.extract_strided_slice %250 {offsets = [0, 112], sizes = [24, 16], strides = [1, 1]} : vector<24x192xf32> to vector<24x16xf32>
    %325 = arith.truncf %324 : vector<24x16xf32> to vector<24x16xbf16>
    %326 = vector.extract_strided_slice %250 {offsets = [0, 176], sizes = [24, 16], strides = [1, 1]} : vector<24x192xf32> to vector<24x16xf32>
    %327 = arith.truncf %326 : vector<24x16xf32> to vector<24x16xbf16>
    %cst_116 = arith.constant dense<0.000000e+00> : vector<24x24xf32>
    %328 = tpu.matmul %323, %325, %cst_116 {dimension_numbers = #tpu.dot_dimension_numbers<[1], [1], [0], [0], [0, 0, 1, 0], [], []>} : vector<24x16xbf16>, vector<24x16xbf16>, vector<24x24xf32> -> vector<24x24xf32>
    %329 = vector.broadcast %11 : vector<1x24xf32> to vector<24x24xf32>
    %330 = arith.addf %328, %329 : vector<24x24xf32>
    %cst_117 = arith.constant dense<0xFF800000> : vector<24xf32>
    %331 = vector.multi_reduction <maximumf>, %330, %cst_117 [1] : vector<24x24xf32> to vector<24xf32>
    %332 = vector.shape_cast %331 : vector<24xf32> to vector<24x1xf32>
    %333 = vector.broadcast %332 : vector<24x1xf32> to vector<24x24xf32>
    %334 = arith.subf %330, %333 : vector<24x24xf32>
    %335 = math.exp %334 : vector<24x24xf32>
    %cst_118 = arith.constant dense<0.000000e+00> : vector<24xf32>
    %336 = vector.multi_reduction <add>, %335, %cst_118 [1] : vector<24x24xf32> to vector<24xf32>
    %337 = vector.shape_cast %336 : vector<24xf32> to vector<24x1xf32>
    %338 = tpu.reciprocal %337 {approx = true} : vector<24x1xf32> -> vector<24x1xf32>
    %339 = vector.broadcast %338 : vector<24x1xf32> to vector<24x24xf32>
    %340 = arith.mulf %335, %339 : vector<24x24xf32>
    %341 = arith.truncf %340 : vector<24x24xf32> to vector<24x24xbf16>
    %cst_119 = arith.constant dense<0.000000e+00> : vector<24x16xf32>
    %342 = tpu.matmul %341, %327, %cst_119 {dimension_numbers = #tpu.dot_dimension_numbers<[1], [0], [0], [1], [0, 0, 1, 1], [], []>} : vector<24x24xbf16>, vector<24x16xbf16>, vector<24x16xf32> -> vector<24x16xf32>
    %343 = tpu.concatenate %273, %296, %319, %342 in 1 : vector<24x16xf32>, vector<24x16xf32>, vector<24x16xf32>, vector<24x16xf32> -> vector<24x64xf32>
    %344 = arith.truncf %343 : vector<24x64xf32> to vector<24x64xbf16>
    %cst_120 = arith.constant dense<0.000000e+00> : vector<24x64xf32>
    %345 = tpu.matmul %344, %244, %cst_120 {dimension_numbers = #tpu.dot_dimension_numbers<[1], [0], [0], [1], [0, 0, 1, 1], [], []>} : vector<24x64xbf16>, vector<64x64xbf16>, vector<24x64xf32> -> vector<24x64xf32>
    %346 = vector.broadcast %246 : vector<1x64xf32> to vector<24x64xf32>
    %347 = arith.addf %345, %346 : vector<24x64xf32>
    %348 = arith.addf %214, %347 : vector<24x64xf32>
    %349 = vector.extract_strided_slice %216 {offsets = [2, 0], sizes = [1, 64], strides = [1, 1]} : vector<4x64xf32> to vector<1x64xf32>
    %350 = vector.extract_strided_slice %216 {offsets = [3, 0], sizes = [1, 64], strides = [1, 1]} : vector<4x64xf32> to vector<1x64xf32>
    %cst_121 = arith.constant dense<0.000000e+00> : vector<24xf32>
    %351 = vector.multi_reduction <add>, %348, %cst_121 [1] : vector<24x64xf32> to vector<24xf32>
    %352 = vector.shape_cast %351 : vector<24xf32> to vector<24x1xf32>
    %cst_122 = arith.constant 6.400000e+01 : f32
    %353 = vector.broadcast %cst_122 : f32 to vector<24x1xf32>
    %354 = arith.divf %352, %353 : vector<24x1xf32>
    %355 = vector.broadcast %354 : vector<24x1xf32> to vector<24x64xf32>
    %356 = arith.subf %348, %355 : vector<24x64xf32>
    %357 = arith.mulf %356, %356 : vector<24x64xf32>
    %cst_123 = arith.constant dense<0.000000e+00> : vector<24xf32>
    %358 = vector.multi_reduction <add>, %357, %cst_123 [1] : vector<24x64xf32> to vector<24xf32>
    %359 = vector.shape_cast %358 : vector<24xf32> to vector<24x1xf32>
    %cst_124 = arith.constant 6.400000e+01 : f32
    %360 = vector.broadcast %cst_124 : f32 to vector<24x1xf32>
    %361 = arith.divf %359, %360 : vector<24x1xf32>
    %cst_125 = arith.constant 9.99999974E-6 : f32
    %362 = vector.broadcast %cst_125 : f32 to vector<24x1xf32>
    %363 = arith.addf %361, %362 : vector<24x1xf32>
    %364 = math.rsqrt %363 : vector<24x1xf32>
    %365 = vector.broadcast %364 : vector<24x1xf32> to vector<24x64xf32>
    %366 = arith.mulf %356, %365 : vector<24x64xf32>
    %367 = vector.broadcast %349 : vector<1x64xf32> to vector<24x64xf32>
    %368 = arith.mulf %366, %367 : vector<24x64xf32>
    %369 = vector.broadcast %350 : vector<1x64xf32> to vector<24x64xf32>
    %370 = arith.addf %368, %369 : vector<24x64xf32>
    %c1_126 = arith.constant 1 : index
    %c0_127 = arith.constant 0 : index
    %c0_128 = arith.constant 0 : index
    %371 = vector.load %arg10[%c1_126, %c0_127, %c0_128] : memref<2x64x256xbf16, #tpu.memory_space<vmem>>, vector<1x64x256xbf16>
    %372 = vector.shape_cast %371 : vector<1x64x256xbf16> to vector<64x256xbf16>
    %c1_129 = arith.constant 1 : index
    %c0_130 = arith.constant 0 : index
    %c0_131 = arith.constant 0 : index
    %373 = vector.load %arg11[%c1_129, %c0_130, %c0_131] : memref<2x1x256xf32, #tpu.memory_space<vmem>>, vector<1x1x256xf32>
    %374 = vector.shape_cast %373 : vector<1x1x256xf32> to vector<1x256xf32>
    %c1_132 = arith.constant 1 : index
    %c0_133 = arith.constant 0 : index
    %c0_134 = arith.constant 0 : index
    %375 = vector.load %arg12[%c1_132, %c0_133, %c0_134] : memref<2x256x64xbf16, #tpu.memory_space<vmem>>, vector<1x256x64xbf16>
    %376 = vector.shape_cast %375 : vector<1x256x64xbf16> to vector<256x64xbf16>
    %c1_135 = arith.constant 1 : index
    %c0_136 = arith.constant 0 : index
    %c0_137 = arith.constant 0 : index
    %377 = vector.load %arg13[%c1_135, %c0_136, %c0_137] : memref<2x1x64xf32, #tpu.memory_space<vmem>>, vector<1x1x64xf32>
    %378 = vector.shape_cast %377 : vector<1x1x64xf32> to vector<1x64xf32>
    %379 = arith.truncf %370 : vector<24x64xf32> to vector<24x64xbf16>
    %cst_138 = arith.constant dense<0.000000e+00> : vector<24x256xf32>
    %380 = tpu.matmul %379, %372, %cst_138 {dimension_numbers = #tpu.dot_dimension_numbers<[1], [0], [0], [1], [0, 0, 1, 1], [], []>} : vector<24x64xbf16>, vector<64x256xbf16>, vector<24x256xf32> -> vector<24x256xf32>
    %381 = vector.broadcast %374 : vector<1x256xf32> to vector<24x256xf32>
    %382 = arith.addf %380, %381 : vector<24x256xf32>
    %cst_139 = arith.constant 1.702000e+00 : f32
    %383 = vector.broadcast %cst_139 : f32 to vector<24x256xf32>
    %384 = arith.mulf %383, %382 : vector<24x256xf32>
    %385 = arith.negf %384 : vector<24x256xf32>
    %386 = math.exp %385 : vector<24x256xf32>
    %cst_140 = arith.constant 1.000000e+00 : f32
    %387 = vector.broadcast %cst_140 : f32 to vector<24x256xf32>
    %388 = arith.addf %387, %386 : vector<24x256xf32>
    %389 = arith.divf %387, %388 : vector<24x256xf32>
    %390 = arith.mulf %382, %389 : vector<24x256xf32>
    %391 = arith.truncf %390 : vector<24x256xf32> to vector<24x256xbf16>
    %cst_141 = arith.constant dense<0.000000e+00> : vector<24x64xf32>
    %392 = tpu.matmul %391, %376, %cst_141 {dimension_numbers = #tpu.dot_dimension_numbers<[1], [0], [0], [1], [0, 0, 1, 1], [], []>} : vector<24x256xbf16>, vector<256x64xbf16>, vector<24x64xf32> -> vector<24x64xf32>
    %393 = vector.broadcast %378 : vector<1x64xf32> to vector<24x64xf32>
    %394 = arith.addf %392, %393 : vector<24x64xf32>
    %395 = arith.addf %348, %394 : vector<24x64xf32>
    %c0_142 = arith.constant 0 : index
    %c0_143 = arith.constant 0 : index
    %396 = vector.load %arg14[%c0_142, %c0_143] : memref<1x24xbf16, #tpu.memory_space<vmem>>, vector<1x24xbf16>
    %397 = arith.truncf %395 : vector<24x64xf32> to vector<24x64xbf16>
    %cst_144 = arith.constant dense<0.000000e+00> : vector<1x64xf32>
    %398 = tpu.matmul %396, %397, %cst_144 {dimension_numbers = #tpu.dot_dimension_numbers<[1], [0], [0], [1], [0, 0, 1, 1], [], []>} : vector<1x24xbf16>, vector<24x64xbf16>, vector<1x64xf32> -> vector<1x64xf32>
    %c0_145 = arith.constant 0 : index
    %c0_146 = arith.constant 0 : index
    %399 = vector.load %arg15[%c0_145, %c0_146] : memref<1x1xf32, #tpu.memory_space<vmem>>, vector<1x1xf32>
    %400 = vector.broadcast %399 : vector<1x1xf32> to vector<1x64xf32>
    %401 = arith.addf %398, %400 : vector<1x64xf32>
    %c0_147 = arith.constant 0 : index
    %c0_148 = arith.constant 0 : index
    %c0_149 = arith.constant 0 : index
    %402 = vector.load %arg16[%c0_147, %c0_148, %c0_149] : memref<3x4x64xf32, #tpu.memory_space<vmem>>, vector<1x4x64xf32>
    %403 = vector.shape_cast %402 : vector<1x4x64xf32> to vector<4x64xf32>
    %404 = vector.extract_strided_slice %403 {offsets = [0, 0], sizes = [1, 64], strides = [1, 1]} : vector<4x64xf32> to vector<1x64xf32>
    %405 = vector.extract_strided_slice %403 {offsets = [1, 0], sizes = [1, 64], strides = [1, 1]} : vector<4x64xf32> to vector<1x64xf32>
    %cst_150 = arith.constant dense<0.000000e+00> : vector<1xf32>
    %406 = vector.multi_reduction <add>, %401, %cst_150 [1] : vector<1x64xf32> to vector<1xf32>
    %407 = vector.shape_cast %406 : vector<1xf32> to vector<1x1xf32>
    %cst_151 = arith.constant 6.400000e+01 : f32
    %408 = vector.broadcast %cst_151 : f32 to vector<1x1xf32>
    %409 = arith.divf %407, %408 : vector<1x1xf32>
    %410 = vector.broadcast %409 : vector<1x1xf32> to vector<1x64xf32>
    %411 = arith.subf %401, %410 : vector<1x64xf32>
    %412 = arith.mulf %411, %411 : vector<1x64xf32>
    %cst_152 = arith.constant dense<0.000000e+00> : vector<1xf32>
    %413 = vector.multi_reduction <add>, %412, %cst_152 [1] : vector<1x64xf32> to vector<1xf32>
    %414 = vector.shape_cast %413 : vector<1xf32> to vector<1x1xf32>
    %cst_153 = arith.constant 6.400000e+01 : f32
    %415 = vector.broadcast %cst_153 : f32 to vector<1x1xf32>
    %416 = arith.divf %414, %415 : vector<1x1xf32>
    %cst_154 = arith.constant 9.99999974E-6 : f32
    %417 = vector.broadcast %cst_154 : f32 to vector<1x1xf32>
    %418 = arith.addf %416, %417 : vector<1x1xf32>
    %419 = math.rsqrt %418 : vector<1x1xf32>
    %420 = vector.broadcast %419 : vector<1x1xf32> to vector<1x64xf32>
    %421 = arith.mulf %411, %420 : vector<1x64xf32>
    %422 = arith.mulf %421, %404 : vector<1x64xf32>
    %423 = arith.addf %422, %405 : vector<1x64xf32>
    %424 = arith.truncf %423 : vector<1x64xf32> to vector<1x64xbf16>
    %c0_155 = arith.constant 0 : index
    %c0_156 = arith.constant 0 : index
    %c0_157 = arith.constant 0 : index
    %425 = vector.load %arg17[%c0_155, %c0_156, %c0_157] : memref<3x64x64xbf16, #tpu.memory_space<vmem>>, vector<1x64x64xbf16>
    %426 = vector.shape_cast %425 : vector<1x64x64xbf16> to vector<64x64xbf16>
    %cst_158 = arith.constant dense<0.000000e+00> : vector<1x64xf32>
    %427 = tpu.matmul %424, %426, %cst_158 {dimension_numbers = #tpu.dot_dimension_numbers<[1], [0], [0], [1], [0, 0, 1, 1], [], []>} : vector<1x64xbf16>, vector<64x64xbf16>, vector<1x64xf32> -> vector<1x64xf32>
    %c0_159 = arith.constant 0 : index
    %c0_160 = arith.constant 0 : index
    %c0_161 = arith.constant 0 : index
    %428 = vector.load %arg18[%c0_159, %c0_160, %c0_161] : memref<3x1x64xf32, #tpu.memory_space<vmem>>, vector<1x1x64xf32>
    %429 = vector.shape_cast %428 : vector<1x1x64xf32> to vector<1x64xf32>
    %430 = arith.addf %427, %429 : vector<1x64xf32>
    %431 = arith.truncf %430 : vector<1x64xf32> to vector<1x64xbf16>
    %c0_162 = arith.constant 0 : index
    %c0_163 = arith.constant 0 : index
    %c0_164 = arith.constant 0 : index
    %432 = vector.load %arg19[%c0_162, %c0_163, %c0_164] : memref<3x64x64xbf16, #tpu.memory_space<vmem>>, vector<1x64x64xbf16>
    %433 = vector.shape_cast %432 : vector<1x64x64xbf16> to vector<64x64xbf16>
    %cst_165 = arith.constant dense<0.000000e+00> : vector<1x64xf32>
    %434 = tpu.matmul %431, %433, %cst_165 {dimension_numbers = #tpu.dot_dimension_numbers<[1], [0], [0], [1], [0, 0, 1, 1], [], []>} : vector<1x64xbf16>, vector<64x64xbf16>, vector<1x64xf32> -> vector<1x64xf32>
    %c0_166 = arith.constant 0 : index
    %c0_167 = arith.constant 0 : index
    %c0_168 = arith.constant 0 : index
    %435 = vector.load %arg20[%c0_166, %c0_167, %c0_168] : memref<3x1x64xf32, #tpu.memory_space<vmem>>, vector<1x1x64xf32>
    %436 = vector.shape_cast %435 : vector<1x1x64xf32> to vector<1x64xf32>
    %437 = arith.addf %434, %436 : vector<1x64xf32>
    %438 = arith.addf %401, %437 : vector<1x64xf32>
    %439 = vector.extract_strided_slice %403 {offsets = [2, 0], sizes = [1, 64], strides = [1, 1]} : vector<4x64xf32> to vector<1x64xf32>
    %440 = vector.extract_strided_slice %403 {offsets = [3, 0], sizes = [1, 64], strides = [1, 1]} : vector<4x64xf32> to vector<1x64xf32>
    %cst_169 = arith.constant dense<0.000000e+00> : vector<1xf32>
    %441 = vector.multi_reduction <add>, %438, %cst_169 [1] : vector<1x64xf32> to vector<1xf32>
    %442 = vector.shape_cast %441 : vector<1xf32> to vector<1x1xf32>
    %cst_170 = arith.constant 6.400000e+01 : f32
    %443 = vector.broadcast %cst_170 : f32 to vector<1x1xf32>
    %444 = arith.divf %442, %443 : vector<1x1xf32>
    %445 = vector.broadcast %444 : vector<1x1xf32> to vector<1x64xf32>
    %446 = arith.subf %438, %445 : vector<1x64xf32>
    %447 = arith.mulf %446, %446 : vector<1x64xf32>
    %cst_171 = arith.constant dense<0.000000e+00> : vector<1xf32>
    %448 = vector.multi_reduction <add>, %447, %cst_171 [1] : vector<1x64xf32> to vector<1xf32>
    %449 = vector.shape_cast %448 : vector<1xf32> to vector<1x1xf32>
    %cst_172 = arith.constant 6.400000e+01 : f32
    %450 = vector.broadcast %cst_172 : f32 to vector<1x1xf32>
    %451 = arith.divf %449, %450 : vector<1x1xf32>
    %cst_173 = arith.constant 9.99999974E-6 : f32
    %452 = vector.broadcast %cst_173 : f32 to vector<1x1xf32>
    %453 = arith.addf %451, %452 : vector<1x1xf32>
    %454 = math.rsqrt %453 : vector<1x1xf32>
    %455 = vector.broadcast %454 : vector<1x1xf32> to vector<1x64xf32>
    %456 = arith.mulf %446, %455 : vector<1x64xf32>
    %457 = arith.mulf %456, %439 : vector<1x64xf32>
    %458 = arith.addf %457, %440 : vector<1x64xf32>
    %c0_174 = arith.constant 0 : index
    %c0_175 = arith.constant 0 : index
    %c0_176 = arith.constant 0 : index
    %459 = vector.load %arg21[%c0_174, %c0_175, %c0_176] : memref<3x64x256xbf16, #tpu.memory_space<vmem>>, vector<1x64x256xbf16>
    %460 = vector.shape_cast %459 : vector<1x64x256xbf16> to vector<64x256xbf16>
    %c0_177 = arith.constant 0 : index
    %c0_178 = arith.constant 0 : index
    %c0_179 = arith.constant 0 : index
    %461 = vector.load %arg22[%c0_177, %c0_178, %c0_179] : memref<3x1x256xf32, #tpu.memory_space<vmem>>, vector<1x1x256xf32>
    %462 = vector.shape_cast %461 : vector<1x1x256xf32> to vector<1x256xf32>
    %c0_180 = arith.constant 0 : index
    %c0_181 = arith.constant 0 : index
    %c0_182 = arith.constant 0 : index
    %463 = vector.load %arg23[%c0_180, %c0_181, %c0_182] : memref<3x256x64xbf16, #tpu.memory_space<vmem>>, vector<1x256x64xbf16>
    %464 = vector.shape_cast %463 : vector<1x256x64xbf16> to vector<256x64xbf16>
    %c0_183 = arith.constant 0 : index
    %c0_184 = arith.constant 0 : index
    %c0_185 = arith.constant 0 : index
    %465 = vector.load %arg24[%c0_183, %c0_184, %c0_185] : memref<3x1x64xf32, #tpu.memory_space<vmem>>, vector<1x1x64xf32>
    %466 = vector.shape_cast %465 : vector<1x1x64xf32> to vector<1x64xf32>
    %467 = arith.truncf %458 : vector<1x64xf32> to vector<1x64xbf16>
    %cst_186 = arith.constant dense<0.000000e+00> : vector<1x256xf32>
    %468 = tpu.matmul %467, %460, %cst_186 {dimension_numbers = #tpu.dot_dimension_numbers<[1], [0], [0], [1], [0, 0, 1, 1], [], []>} : vector<1x64xbf16>, vector<64x256xbf16>, vector<1x256xf32> -> vector<1x256xf32>
    %469 = arith.addf %468, %462 : vector<1x256xf32>
    %cst_187 = arith.constant 5.000000e-01 : f32
    %470 = vector.broadcast %cst_187 : f32 to vector<1x256xf32>
    %471 = arith.mulf %470, %469 : vector<1x256xf32>
    %cst_188 = arith.constant 0.707106769 : f32
    %472 = vector.broadcast %cst_188 : f32 to vector<1x256xf32>
    %473 = arith.mulf %469, %472 : vector<1x256xf32>
    %474 = math.absf %473 : vector<1x256xf32>
    %cst_189 = arith.constant 0.327591091 : f32
    %475 = vector.broadcast %cst_189 : f32 to vector<1x256xf32>
    %476 = arith.mulf %475, %474 : vector<1x256xf32>
    %cst_190 = arith.constant 1.000000e+00 : f32
    %477 = vector.broadcast %cst_190 : f32 to vector<1x256xf32>
    %478 = arith.addf %477, %476 : vector<1x256xf32>
    %cst_191 = arith.constant 1.000000e+00 : f32
    %479 = vector.broadcast %cst_191 : f32 to vector<1x256xf32>
    %480 = arith.divf %479, %478 : vector<1x256xf32>
    %cst_192 = arith.constant 1.06140542 : f32
    %481 = vector.broadcast %cst_192 : f32 to vector<1x256xf32>
    %482 = arith.mulf %481, %480 : vector<1x256xf32>
    %cst_193 = arith.constant -1.45315206 : f32
    %483 = vector.broadcast %cst_193 : f32 to vector<1x256xf32>
    %484 = arith.addf %482, %483 : vector<1x256xf32>
    %485 = arith.mulf %484, %480 : vector<1x256xf32>
    %cst_194 = arith.constant 1.42141378 : f32
    %486 = vector.broadcast %cst_194 : f32 to vector<1x256xf32>
    %487 = arith.addf %485, %486 : vector<1x256xf32>
    %488 = arith.mulf %487, %480 : vector<1x256xf32>
    %cst_195 = arith.constant -0.284496725 : f32
    %489 = vector.broadcast %cst_195 : f32 to vector<1x256xf32>
    %490 = arith.addf %488, %489 : vector<1x256xf32>
    %491 = arith.mulf %490, %480 : vector<1x256xf32>
    %cst_196 = arith.constant 0.254829586 : f32
    %492 = vector.broadcast %cst_196 : f32 to vector<1x256xf32>
    %493 = arith.addf %491, %492 : vector<1x256xf32>
    %494 = arith.mulf %493, %480 : vector<1x256xf32>
    %cst_197 = arith.constant 0.000000e+00 : f32
    %495 = vector.broadcast %cst_197 : f32 to vector<1x256xf32>
    %496 = arith.subf %495, %474 : vector<1x256xf32>
    %497 = arith.mulf %496, %474 : vector<1x256xf32>
    %498 = math.exp %497 : vector<1x256xf32>
    %499 = arith.mulf %494, %498 : vector<1x256xf32>
    %cst_198 = arith.constant 1.000000e+00 : f32
    %500 = vector.broadcast %cst_198 : f32 to vector<1x256xf32>
    %501 = arith.subf %500, %499 : vector<1x256xf32>
    %cst_199 = arith.constant 0.000000e+00 : f32
    %502 = vector.broadcast %cst_199 : f32 to vector<1x256xf32>
    %503 = arith.cmpf oge, %473, %502 : vector<1x256xf32>
    %cst_200 = arith.constant 0.000000e+00 : f32
    %504 = vector.broadcast %cst_200 : f32 to vector<1x256xf32>
    %505 = arith.subf %504, %501 : vector<1x256xf32>
    %506 = arith.select %503, %501, %505 : vector<1x256xi1>, vector<1x256xf32>
    %cst_201 = arith.constant 1.000000e+00 : f32
    %507 = vector.broadcast %cst_201 : f32 to vector<1x256xf32>
    %508 = arith.addf %507, %506 : vector<1x256xf32>
    %509 = arith.mulf %471, %508 : vector<1x256xf32>
    %510 = arith.truncf %509 : vector<1x256xf32> to vector<1x256xbf16>
    %cst_202 = arith.constant dense<0.000000e+00> : vector<1x64xf32>
    %511 = tpu.matmul %510, %464, %cst_202 {dimension_numbers = #tpu.dot_dimension_numbers<[1], [0], [0], [1], [0, 0, 1, 1], [], []>} : vector<1x256xbf16>, vector<256x64xbf16>, vector<1x64xf32> -> vector<1x64xf32>
    %512 = arith.addf %511, %466 : vector<1x64xf32>
    %513 = arith.addf %438, %512 : vector<1x64xf32>
    %c1_203 = arith.constant 1 : index
    %c0_204 = arith.constant 0 : index
    %c0_205 = arith.constant 0 : index
    %514 = vector.load %arg16[%c1_203, %c0_204, %c0_205] : memref<3x4x64xf32, #tpu.memory_space<vmem>>, vector<1x4x64xf32>
    %515 = vector.shape_cast %514 : vector<1x4x64xf32> to vector<4x64xf32>
    %516 = vector.extract_strided_slice %515 {offsets = [0, 0], sizes = [1, 64], strides = [1, 1]} : vector<4x64xf32> to vector<1x64xf32>
    %517 = vector.extract_strided_slice %515 {offsets = [1, 0], sizes = [1, 64], strides = [1, 1]} : vector<4x64xf32> to vector<1x64xf32>
    %cst_206 = arith.constant dense<0.000000e+00> : vector<1xf32>
    %518 = vector.multi_reduction <add>, %513, %cst_206 [1] : vector<1x64xf32> to vector<1xf32>
    %519 = vector.shape_cast %518 : vector<1xf32> to vector<1x1xf32>
    %cst_207 = arith.constant 6.400000e+01 : f32
    %520 = vector.broadcast %cst_207 : f32 to vector<1x1xf32>
    %521 = arith.divf %519, %520 : vector<1x1xf32>
    %522 = vector.broadcast %521 : vector<1x1xf32> to vector<1x64xf32>
    %523 = arith.subf %513, %522 : vector<1x64xf32>
    %524 = arith.mulf %523, %523 : vector<1x64xf32>
    %cst_208 = arith.constant dense<0.000000e+00> : vector<1xf32>
    %525 = vector.multi_reduction <add>, %524, %cst_208 [1] : vector<1x64xf32> to vector<1xf32>
    %526 = vector.shape_cast %525 : vector<1xf32> to vector<1x1xf32>
    %cst_209 = arith.constant 6.400000e+01 : f32
    %527 = vector.broadcast %cst_209 : f32 to vector<1x1xf32>
    %528 = arith.divf %526, %527 : vector<1x1xf32>
    %cst_210 = arith.constant 9.99999974E-6 : f32
    %529 = vector.broadcast %cst_210 : f32 to vector<1x1xf32>
    %530 = arith.addf %528, %529 : vector<1x1xf32>
    %531 = math.rsqrt %530 : vector<1x1xf32>
    %532 = vector.broadcast %531 : vector<1x1xf32> to vector<1x64xf32>
    %533 = arith.mulf %523, %532 : vector<1x64xf32>
    %534 = arith.mulf %533, %516 : vector<1x64xf32>
    %535 = arith.addf %534, %517 : vector<1x64xf32>
    %536 = arith.truncf %535 : vector<1x64xf32> to vector<1x64xbf16>
    %c1_211 = arith.constant 1 : index
    %c0_212 = arith.constant 0 : index
    %c0_213 = arith.constant 0 : index
    %537 = vector.load %arg17[%c1_211, %c0_212, %c0_213] : memref<3x64x64xbf16, #tpu.memory_space<vmem>>, vector<1x64x64xbf16>
    %538 = vector.shape_cast %537 : vector<1x64x64xbf16> to vector<64x64xbf16>
    %cst_214 = arith.constant dense<0.000000e+00> : vector<1x64xf32>
    %539 = tpu.matmul %536, %538, %cst_214 {dimension_numbers = #tpu.dot_dimension_numbers<[1], [0], [0], [1], [0, 0, 1, 1], [], []>} : vector<1x64xbf16>, vector<64x64xbf16>, vector<1x64xf32> -> vector<1x64xf32>
    %c1_215 = arith.constant 1 : index
    %c0_216 = arith.constant 0 : index
    %c0_217 = arith.constant 0 : index
    %540 = vector.load %arg18[%c1_215, %c0_216, %c0_217] : memref<3x1x64xf32, #tpu.memory_space<vmem>>, vector<1x1x64xf32>
    %541 = vector.shape_cast %540 : vector<1x1x64xf32> to vector<1x64xf32>
    %542 = arith.addf %539, %541 : vector<1x64xf32>
    %543 = arith.truncf %542 : vector<1x64xf32> to vector<1x64xbf16>
    %c1_218 = arith.constant 1 : index
    %c0_219 = arith.constant 0 : index
    %c0_220 = arith.constant 0 : index
    %544 = vector.load %arg19[%c1_218, %c0_219, %c0_220] : memref<3x64x64xbf16, #tpu.memory_space<vmem>>, vector<1x64x64xbf16>
    %545 = vector.shape_cast %544 : vector<1x64x64xbf16> to vector<64x64xbf16>
    %cst_221 = arith.constant dense<0.000000e+00> : vector<1x64xf32>
    %546 = tpu.matmul %543, %545, %cst_221 {dimension_numbers = #tpu.dot_dimension_numbers<[1], [0], [0], [1], [0, 0, 1, 1], [], []>} : vector<1x64xbf16>, vector<64x64xbf16>, vector<1x64xf32> -> vector<1x64xf32>
    %c1_222 = arith.constant 1 : index
    %c0_223 = arith.constant 0 : index
    %c0_224 = arith.constant 0 : index
    %547 = vector.load %arg20[%c1_222, %c0_223, %c0_224] : memref<3x1x64xf32, #tpu.memory_space<vmem>>, vector<1x1x64xf32>
    %548 = vector.shape_cast %547 : vector<1x1x64xf32> to vector<1x64xf32>
    %549 = arith.addf %546, %548 : vector<1x64xf32>
    %550 = arith.addf %513, %549 : vector<1x64xf32>
    %551 = vector.extract_strided_slice %515 {offsets = [2, 0], sizes = [1, 64], strides = [1, 1]} : vector<4x64xf32> to vector<1x64xf32>
    %552 = vector.extract_strided_slice %515 {offsets = [3, 0], sizes = [1, 64], strides = [1, 1]} : vector<4x64xf32> to vector<1x64xf32>
    %cst_225 = arith.constant dense<0.000000e+00> : vector<1xf32>
    %553 = vector.multi_reduction <add>, %550, %cst_225 [1] : vector<1x64xf32> to vector<1xf32>
    %554 = vector.shape_cast %553 : vector<1xf32> to vector<1x1xf32>
    %cst_226 = arith.constant 6.400000e+01 : f32
    %555 = vector.broadcast %cst_226 : f32 to vector<1x1xf32>
    %556 = arith.divf %554, %555 : vector<1x1xf32>
    %557 = vector.broadcast %556 : vector<1x1xf32> to vector<1x64xf32>
    %558 = arith.subf %550, %557 : vector<1x64xf32>
    %559 = arith.mulf %558, %558 : vector<1x64xf32>
    %cst_227 = arith.constant dense<0.000000e+00> : vector<1xf32>
    %560 = vector.multi_reduction <add>, %559, %cst_227 [1] : vector<1x64xf32> to vector<1xf32>
    %561 = vector.shape_cast %560 : vector<1xf32> to vector<1x1xf32>
    %cst_228 = arith.constant 6.400000e+01 : f32
    %562 = vector.broadcast %cst_228 : f32 to vector<1x1xf32>
    %563 = arith.divf %561, %562 : vector<1x1xf32>
    %cst_229 = arith.constant 9.99999974E-6 : f32
    %564 = vector.broadcast %cst_229 : f32 to vector<1x1xf32>
    %565 = arith.addf %563, %564 : vector<1x1xf32>
    %566 = math.rsqrt %565 : vector<1x1xf32>
    %567 = vector.broadcast %566 : vector<1x1xf32> to vector<1x64xf32>
    %568 = arith.mulf %558, %567 : vector<1x64xf32>
    %569 = arith.mulf %568, %551 : vector<1x64xf32>
    %570 = arith.addf %569, %552 : vector<1x64xf32>
    %c1_230 = arith.constant 1 : index
    %c0_231 = arith.constant 0 : index
    %c0_232 = arith.constant 0 : index
    %571 = vector.load %arg21[%c1_230, %c0_231, %c0_232] : memref<3x64x256xbf16, #tpu.memory_space<vmem>>, vector<1x64x256xbf16>
    %572 = vector.shape_cast %571 : vector<1x64x256xbf16> to vector<64x256xbf16>
    %c1_233 = arith.constant 1 : index
    %c0_234 = arith.constant 0 : index
    %c0_235 = arith.constant 0 : index
    %573 = vector.load %arg22[%c1_233, %c0_234, %c0_235] : memref<3x1x256xf32, #tpu.memory_space<vmem>>, vector<1x1x256xf32>
    %574 = vector.shape_cast %573 : vector<1x1x256xf32> to vector<1x256xf32>
    %c1_236 = arith.constant 1 : index
    %c0_237 = arith.constant 0 : index
    %c0_238 = arith.constant 0 : index
    %575 = vector.load %arg23[%c1_236, %c0_237, %c0_238] : memref<3x256x64xbf16, #tpu.memory_space<vmem>>, vector<1x256x64xbf16>
    %576 = vector.shape_cast %575 : vector<1x256x64xbf16> to vector<256x64xbf16>
    %c1_239 = arith.constant 1 : index
    %c0_240 = arith.constant 0 : index
    %c0_241 = arith.constant 0 : index
    %577 = vector.load %arg24[%c1_239, %c0_240, %c0_241] : memref<3x1x64xf32, #tpu.memory_space<vmem>>, vector<1x1x64xf32>
    %578 = vector.shape_cast %577 : vector<1x1x64xf32> to vector<1x64xf32>
    %579 = arith.truncf %570 : vector<1x64xf32> to vector<1x64xbf16>
    %cst_242 = arith.constant dense<0.000000e+00> : vector<1x256xf32>
    %580 = tpu.matmul %579, %572, %cst_242 {dimension_numbers = #tpu.dot_dimension_numbers<[1], [0], [0], [1], [0, 0, 1, 1], [], []>} : vector<1x64xbf16>, vector<64x256xbf16>, vector<1x256xf32> -> vector<1x256xf32>
    %581 = arith.addf %580, %574 : vector<1x256xf32>
    %cst_243 = arith.constant 5.000000e-01 : f32
    %582 = vector.broadcast %cst_243 : f32 to vector<1x256xf32>
    %583 = arith.mulf %582, %581 : vector<1x256xf32>
    %cst_244 = arith.constant 0.707106769 : f32
    %584 = vector.broadcast %cst_244 : f32 to vector<1x256xf32>
    %585 = arith.mulf %581, %584 : vector<1x256xf32>
    %586 = math.absf %585 : vector<1x256xf32>
    %cst_245 = arith.constant 0.327591091 : f32
    %587 = vector.broadcast %cst_245 : f32 to vector<1x256xf32>
    %588 = arith.mulf %587, %586 : vector<1x256xf32>
    %cst_246 = arith.constant 1.000000e+00 : f32
    %589 = vector.broadcast %cst_246 : f32 to vector<1x256xf32>
    %590 = arith.addf %589, %588 : vector<1x256xf32>
    %cst_247 = arith.constant 1.000000e+00 : f32
    %591 = vector.broadcast %cst_247 : f32 to vector<1x256xf32>
    %592 = arith.divf %591, %590 : vector<1x256xf32>
    %cst_248 = arith.constant 1.06140542 : f32
    %593 = vector.broadcast %cst_248 : f32 to vector<1x256xf32>
    %594 = arith.mulf %593, %592 : vector<1x256xf32>
    %cst_249 = arith.constant -1.45315206 : f32
    %595 = vector.broadcast %cst_249 : f32 to vector<1x256xf32>
    %596 = arith.addf %594, %595 : vector<1x256xf32>
    %597 = arith.mulf %596, %592 : vector<1x256xf32>
    %cst_250 = arith.constant 1.42141378 : f32
    %598 = vector.broadcast %cst_250 : f32 to vector<1x256xf32>
    %599 = arith.addf %597, %598 : vector<1x256xf32>
    %600 = arith.mulf %599, %592 : vector<1x256xf32>
    %cst_251 = arith.constant -0.284496725 : f32
    %601 = vector.broadcast %cst_251 : f32 to vector<1x256xf32>
    %602 = arith.addf %600, %601 : vector<1x256xf32>
    %603 = arith.mulf %602, %592 : vector<1x256xf32>
    %cst_252 = arith.constant 0.254829586 : f32
    %604 = vector.broadcast %cst_252 : f32 to vector<1x256xf32>
    %605 = arith.addf %603, %604 : vector<1x256xf32>
    %606 = arith.mulf %605, %592 : vector<1x256xf32>
    %cst_253 = arith.constant 0.000000e+00 : f32
    %607 = vector.broadcast %cst_253 : f32 to vector<1x256xf32>
    %608 = arith.subf %607, %586 : vector<1x256xf32>
    %609 = arith.mulf %608, %586 : vector<1x256xf32>
    %610 = math.exp %609 : vector<1x256xf32>
    %611 = arith.mulf %606, %610 : vector<1x256xf32>
    %cst_254 = arith.constant 1.000000e+00 : f32
    %612 = vector.broadcast %cst_254 : f32 to vector<1x256xf32>
    %613 = arith.subf %612, %611 : vector<1x256xf32>
    %cst_255 = arith.constant 0.000000e+00 : f32
    %614 = vector.broadcast %cst_255 : f32 to vector<1x256xf32>
    %615 = arith.cmpf oge, %585, %614 : vector<1x256xf32>
    %cst_256 = arith.constant 0.000000e+00 : f32
    %616 = vector.broadcast %cst_256 : f32 to vector<1x256xf32>
    %617 = arith.subf %616, %613 : vector<1x256xf32>
    %618 = arith.select %615, %613, %617 : vector<1x256xi1>, vector<1x256xf32>
    %cst_257 = arith.constant 1.000000e+00 : f32
    %619 = vector.broadcast %cst_257 : f32 to vector<1x256xf32>
    %620 = arith.addf %619, %618 : vector<1x256xf32>
    %621 = arith.mulf %583, %620 : vector<1x256xf32>
    %622 = arith.truncf %621 : vector<1x256xf32> to vector<1x256xbf16>
    %cst_258 = arith.constant dense<0.000000e+00> : vector<1x64xf32>
    %623 = tpu.matmul %622, %576, %cst_258 {dimension_numbers = #tpu.dot_dimension_numbers<[1], [0], [0], [1], [0, 0, 1, 1], [], []>} : vector<1x256xbf16>, vector<256x64xbf16>, vector<1x64xf32> -> vector<1x64xf32>
    %624 = arith.addf %623, %578 : vector<1x64xf32>
    %625 = arith.addf %550, %624 : vector<1x64xf32>
    %c2 = arith.constant 2 : index
    %c0_259 = arith.constant 0 : index
    %c0_260 = arith.constant 0 : index
    %626 = vector.load %arg16[%c2, %c0_259, %c0_260] : memref<3x4x64xf32, #tpu.memory_space<vmem>>, vector<1x4x64xf32>
    %627 = vector.shape_cast %626 : vector<1x4x64xf32> to vector<4x64xf32>
    %628 = vector.extract_strided_slice %627 {offsets = [0, 0], sizes = [1, 64], strides = [1, 1]} : vector<4x64xf32> to vector<1x64xf32>
    %629 = vector.extract_strided_slice %627 {offsets = [1, 0], sizes = [1, 64], strides = [1, 1]} : vector<4x64xf32> to vector<1x64xf32>
    %cst_261 = arith.constant dense<0.000000e+00> : vector<1xf32>
    %630 = vector.multi_reduction <add>, %625, %cst_261 [1] : vector<1x64xf32> to vector<1xf32>
    %631 = vector.shape_cast %630 : vector<1xf32> to vector<1x1xf32>
    %cst_262 = arith.constant 6.400000e+01 : f32
    %632 = vector.broadcast %cst_262 : f32 to vector<1x1xf32>
    %633 = arith.divf %631, %632 : vector<1x1xf32>
    %634 = vector.broadcast %633 : vector<1x1xf32> to vector<1x64xf32>
    %635 = arith.subf %625, %634 : vector<1x64xf32>
    %636 = arith.mulf %635, %635 : vector<1x64xf32>
    %cst_263 = arith.constant dense<0.000000e+00> : vector<1xf32>
    %637 = vector.multi_reduction <add>, %636, %cst_263 [1] : vector<1x64xf32> to vector<1xf32>
    %638 = vector.shape_cast %637 : vector<1xf32> to vector<1x1xf32>
    %cst_264 = arith.constant 6.400000e+01 : f32
    %639 = vector.broadcast %cst_264 : f32 to vector<1x1xf32>
    %640 = arith.divf %638, %639 : vector<1x1xf32>
    %cst_265 = arith.constant 9.99999974E-6 : f32
    %641 = vector.broadcast %cst_265 : f32 to vector<1x1xf32>
    %642 = arith.addf %640, %641 : vector<1x1xf32>
    %643 = math.rsqrt %642 : vector<1x1xf32>
    %644 = vector.broadcast %643 : vector<1x1xf32> to vector<1x64xf32>
    %645 = arith.mulf %635, %644 : vector<1x64xf32>
    %646 = arith.mulf %645, %628 : vector<1x64xf32>
    %647 = arith.addf %646, %629 : vector<1x64xf32>
    %648 = arith.truncf %647 : vector<1x64xf32> to vector<1x64xbf16>
    %c2_266 = arith.constant 2 : index
    %c0_267 = arith.constant 0 : index
    %c0_268 = arith.constant 0 : index
    %649 = vector.load %arg17[%c2_266, %c0_267, %c0_268] : memref<3x64x64xbf16, #tpu.memory_space<vmem>>, vector<1x64x64xbf16>
    %650 = vector.shape_cast %649 : vector<1x64x64xbf16> to vector<64x64xbf16>
    %cst_269 = arith.constant dense<0.000000e+00> : vector<1x64xf32>
    %651 = tpu.matmul %648, %650, %cst_269 {dimension_numbers = #tpu.dot_dimension_numbers<[1], [0], [0], [1], [0, 0, 1, 1], [], []>} : vector<1x64xbf16>, vector<64x64xbf16>, vector<1x64xf32> -> vector<1x64xf32>
    %c2_270 = arith.constant 2 : index
    %c0_271 = arith.constant 0 : index
    %c0_272 = arith.constant 0 : index
    %652 = vector.load %arg18[%c2_270, %c0_271, %c0_272] : memref<3x1x64xf32, #tpu.memory_space<vmem>>, vector<1x1x64xf32>
    %653 = vector.shape_cast %652 : vector<1x1x64xf32> to vector<1x64xf32>
    %654 = arith.addf %651, %653 : vector<1x64xf32>
    %655 = arith.truncf %654 : vector<1x64xf32> to vector<1x64xbf16>
    %c2_273 = arith.constant 2 : index
    %c0_274 = arith.constant 0 : index
    %c0_275 = arith.constant 0 : index
    %656 = vector.load %arg19[%c2_273, %c0_274, %c0_275] : memref<3x64x64xbf16, #tpu.memory_space<vmem>>, vector<1x64x64xbf16>
    %657 = vector.shape_cast %656 : vector<1x64x64xbf16> to vector<64x64xbf16>
    %cst_276 = arith.constant dense<0.000000e+00> : vector<1x64xf32>
    %658 = tpu.matmul %655, %657, %cst_276 {dimension_numbers = #tpu.dot_dimension_numbers<[1], [0], [0], [1], [0, 0, 1, 1], [], []>} : vector<1x64xbf16>, vector<64x64xbf16>, vector<1x64xf32> -> vector<1x64xf32>
    %c2_277 = arith.constant 2 : index
    %c0_278 = arith.constant 0 : index
    %c0_279 = arith.constant 0 : index
    %659 = vector.load %arg20[%c2_277, %c0_278, %c0_279] : memref<3x1x64xf32, #tpu.memory_space<vmem>>, vector<1x1x64xf32>
    %660 = vector.shape_cast %659 : vector<1x1x64xf32> to vector<1x64xf32>
    %661 = arith.addf %658, %660 : vector<1x64xf32>
    %662 = arith.addf %625, %661 : vector<1x64xf32>
    %663 = vector.extract_strided_slice %627 {offsets = [2, 0], sizes = [1, 64], strides = [1, 1]} : vector<4x64xf32> to vector<1x64xf32>
    %664 = vector.extract_strided_slice %627 {offsets = [3, 0], sizes = [1, 64], strides = [1, 1]} : vector<4x64xf32> to vector<1x64xf32>
    %cst_280 = arith.constant dense<0.000000e+00> : vector<1xf32>
    %665 = vector.multi_reduction <add>, %662, %cst_280 [1] : vector<1x64xf32> to vector<1xf32>
    %666 = vector.shape_cast %665 : vector<1xf32> to vector<1x1xf32>
    %cst_281 = arith.constant 6.400000e+01 : f32
    %667 = vector.broadcast %cst_281 : f32 to vector<1x1xf32>
    %668 = arith.divf %666, %667 : vector<1x1xf32>
    %669 = vector.broadcast %668 : vector<1x1xf32> to vector<1x64xf32>
    %670 = arith.subf %662, %669 : vector<1x64xf32>
    %671 = arith.mulf %670, %670 : vector<1x64xf32>
    %cst_282 = arith.constant dense<0.000000e+00> : vector<1xf32>
    %672 = vector.multi_reduction <add>, %671, %cst_282 [1] : vector<1x64xf32> to vector<1xf32>
    %673 = vector.shape_cast %672 : vector<1xf32> to vector<1x1xf32>
    %cst_283 = arith.constant 6.400000e+01 : f32
    %674 = vector.broadcast %cst_283 : f32 to vector<1x1xf32>
    %675 = arith.divf %673, %674 : vector<1x1xf32>
    %cst_284 = arith.constant 9.99999974E-6 : f32
    %676 = vector.broadcast %cst_284 : f32 to vector<1x1xf32>
    %677 = arith.addf %675, %676 : vector<1x1xf32>
    %678 = math.rsqrt %677 : vector<1x1xf32>
    %679 = vector.broadcast %678 : vector<1x1xf32> to vector<1x64xf32>
    %680 = arith.mulf %670, %679 : vector<1x64xf32>
    %681 = arith.mulf %680, %663 : vector<1x64xf32>
    %682 = arith.addf %681, %664 : vector<1x64xf32>
    %c2_285 = arith.constant 2 : index
    %c0_286 = arith.constant 0 : index
    %c0_287 = arith.constant 0 : index
    %683 = vector.load %arg21[%c2_285, %c0_286, %c0_287] : memref<3x64x256xbf16, #tpu.memory_space<vmem>>, vector<1x64x256xbf16>
    %684 = vector.shape_cast %683 : vector<1x64x256xbf16> to vector<64x256xbf16>
    %c2_288 = arith.constant 2 : index
    %c0_289 = arith.constant 0 : index
    %c0_290 = arith.constant 0 : index
    %685 = vector.load %arg22[%c2_288, %c0_289, %c0_290] : memref<3x1x256xf32, #tpu.memory_space<vmem>>, vector<1x1x256xf32>
    %686 = vector.shape_cast %685 : vector<1x1x256xf32> to vector<1x256xf32>
    %c2_291 = arith.constant 2 : index
    %c0_292 = arith.constant 0 : index
    %c0_293 = arith.constant 0 : index
    %687 = vector.load %arg23[%c2_291, %c0_292, %c0_293] : memref<3x256x64xbf16, #tpu.memory_space<vmem>>, vector<1x256x64xbf16>
    %688 = vector.shape_cast %687 : vector<1x256x64xbf16> to vector<256x64xbf16>
    %c2_294 = arith.constant 2 : index
    %c0_295 = arith.constant 0 : index
    %c0_296 = arith.constant 0 : index
    %689 = vector.load %arg24[%c2_294, %c0_295, %c0_296] : memref<3x1x64xf32, #tpu.memory_space<vmem>>, vector<1x1x64xf32>
    %690 = vector.shape_cast %689 : vector<1x1x64xf32> to vector<1x64xf32>
    %691 = arith.truncf %682 : vector<1x64xf32> to vector<1x64xbf16>
    %cst_297 = arith.constant dense<0.000000e+00> : vector<1x256xf32>
    %692 = tpu.matmul %691, %684, %cst_297 {dimension_numbers = #tpu.dot_dimension_numbers<[1], [0], [0], [1], [0, 0, 1, 1], [], []>} : vector<1x64xbf16>, vector<64x256xbf16>, vector<1x256xf32> -> vector<1x256xf32>
    %693 = arith.addf %692, %686 : vector<1x256xf32>
    %cst_298 = arith.constant 5.000000e-01 : f32
    %694 = vector.broadcast %cst_298 : f32 to vector<1x256xf32>
    %695 = arith.mulf %694, %693 : vector<1x256xf32>
    %cst_299 = arith.constant 0.707106769 : f32
    %696 = vector.broadcast %cst_299 : f32 to vector<1x256xf32>
    %697 = arith.mulf %693, %696 : vector<1x256xf32>
    %698 = math.absf %697 : vector<1x256xf32>
    %cst_300 = arith.constant 0.327591091 : f32
    %699 = vector.broadcast %cst_300 : f32 to vector<1x256xf32>
    %700 = arith.mulf %699, %698 : vector<1x256xf32>
    %cst_301 = arith.constant 1.000000e+00 : f32
    %701 = vector.broadcast %cst_301 : f32 to vector<1x256xf32>
    %702 = arith.addf %701, %700 : vector<1x256xf32>
    %cst_302 = arith.constant 1.000000e+00 : f32
    %703 = vector.broadcast %cst_302 : f32 to vector<1x256xf32>
    %704 = arith.divf %703, %702 : vector<1x256xf32>
    %cst_303 = arith.constant 1.06140542 : f32
    %705 = vector.broadcast %cst_303 : f32 to vector<1x256xf32>
    %706 = arith.mulf %705, %704 : vector<1x256xf32>
    %cst_304 = arith.constant -1.45315206 : f32
    %707 = vector.broadcast %cst_304 : f32 to vector<1x256xf32>
    %708 = arith.addf %706, %707 : vector<1x256xf32>
    %709 = arith.mulf %708, %704 : vector<1x256xf32>
    %cst_305 = arith.constant 1.42141378 : f32
    %710 = vector.broadcast %cst_305 : f32 to vector<1x256xf32>
    %711 = arith.addf %709, %710 : vector<1x256xf32>
    %712 = arith.mulf %711, %704 : vector<1x256xf32>
    %cst_306 = arith.constant -0.284496725 : f32
    %713 = vector.broadcast %cst_306 : f32 to vector<1x256xf32>
    %714 = arith.addf %712, %713 : vector<1x256xf32>
    %715 = arith.mulf %714, %704 : vector<1x256xf32>
    %cst_307 = arith.constant 0.254829586 : f32
    %716 = vector.broadcast %cst_307 : f32 to vector<1x256xf32>
    %717 = arith.addf %715, %716 : vector<1x256xf32>
    %718 = arith.mulf %717, %704 : vector<1x256xf32>
    %cst_308 = arith.constant 0.000000e+00 : f32
    %719 = vector.broadcast %cst_308 : f32 to vector<1x256xf32>
    %720 = arith.subf %719, %698 : vector<1x256xf32>
    %721 = arith.mulf %720, %698 : vector<1x256xf32>
    %722 = math.exp %721 : vector<1x256xf32>
    %723 = arith.mulf %718, %722 : vector<1x256xf32>
    %cst_309 = arith.constant 1.000000e+00 : f32
    %724 = vector.broadcast %cst_309 : f32 to vector<1x256xf32>
    %725 = arith.subf %724, %723 : vector<1x256xf32>
    %cst_310 = arith.constant 0.000000e+00 : f32
    %726 = vector.broadcast %cst_310 : f32 to vector<1x256xf32>
    %727 = arith.cmpf oge, %697, %726 : vector<1x256xf32>
    %cst_311 = arith.constant 0.000000e+00 : f32
    %728 = vector.broadcast %cst_311 : f32 to vector<1x256xf32>
    %729 = arith.subf %728, %725 : vector<1x256xf32>
    %730 = arith.select %727, %725, %729 : vector<1x256xi1>, vector<1x256xf32>
    %cst_312 = arith.constant 1.000000e+00 : f32
    %731 = vector.broadcast %cst_312 : f32 to vector<1x256xf32>
    %732 = arith.addf %731, %730 : vector<1x256xf32>
    %733 = arith.mulf %695, %732 : vector<1x256xf32>
    %734 = arith.truncf %733 : vector<1x256xf32> to vector<1x256xbf16>
    %cst_313 = arith.constant dense<0.000000e+00> : vector<1x64xf32>
    %735 = tpu.matmul %734, %688, %cst_313 {dimension_numbers = #tpu.dot_dimension_numbers<[1], [0], [0], [1], [0, 0, 1, 1], [], []>} : vector<1x256xbf16>, vector<256x64xbf16>, vector<1x64xf32> -> vector<1x64xf32>
    %736 = arith.addf %735, %690 : vector<1x64xf32>
    %737 = arith.addf %662, %736 : vector<1x64xf32>
    %c0_314 = arith.constant 0 : index
    %c0_315 = arith.constant 0 : index
    %738 = vector.load %arg25[%c0_314, %c0_315] : memref<2x64xf32, #tpu.memory_space<vmem>>, vector<1x64xf32>
    %c1_316 = arith.constant 1 : index
    %c0_317 = arith.constant 0 : index
    %739 = vector.load %arg25[%c1_316, %c0_317] : memref<2x64xf32, #tpu.memory_space<vmem>>, vector<1x64xf32>
    %cst_318 = arith.constant dense<0.000000e+00> : vector<1xf32>
    %740 = vector.multi_reduction <add>, %737, %cst_318 [1] : vector<1x64xf32> to vector<1xf32>
    %741 = vector.shape_cast %740 : vector<1xf32> to vector<1x1xf32>
    %cst_319 = arith.constant 6.400000e+01 : f32
    %742 = vector.broadcast %cst_319 : f32 to vector<1x1xf32>
    %743 = arith.divf %741, %742 : vector<1x1xf32>
    %744 = vector.broadcast %743 : vector<1x1xf32> to vector<1x64xf32>
    %745 = arith.subf %737, %744 : vector<1x64xf32>
    %746 = arith.mulf %745, %745 : vector<1x64xf32>
    %cst_320 = arith.constant dense<0.000000e+00> : vector<1xf32>
    %747 = vector.multi_reduction <add>, %746, %cst_320 [1] : vector<1x64xf32> to vector<1xf32>
    %748 = vector.shape_cast %747 : vector<1xf32> to vector<1x1xf32>
    %cst_321 = arith.constant 6.400000e+01 : f32
    %749 = vector.broadcast %cst_321 : f32 to vector<1x1xf32>
    %750 = arith.divf %748, %749 : vector<1x1xf32>
    %cst_322 = arith.constant 9.99999974E-6 : f32
    %751 = vector.broadcast %cst_322 : f32 to vector<1x1xf32>
    %752 = arith.addf %750, %751 : vector<1x1xf32>
    %753 = math.rsqrt %752 : vector<1x1xf32>
    %754 = vector.broadcast %753 : vector<1x1xf32> to vector<1x64xf32>
    %755 = arith.mulf %745, %754 : vector<1x64xf32>
    %756 = arith.mulf %755, %738 : vector<1x64xf32>
    %757 = arith.addf %756, %739 : vector<1x64xf32>
    %758 = arith.truncf %757 : vector<1x64xf32> to vector<1x64xbf16>
    %c0_323 = arith.constant 0 : index
    %c0_324 = arith.constant 0 : index
    %759 = vector.load %arg26[%c0_323, %c0_324] : memref<64x128xbf16, #tpu.memory_space<vmem>>, vector<64x128xbf16>
    %cst_325 = arith.constant dense<0.000000e+00> : vector<1x128xf32>
    %760 = tpu.matmul %758, %759, %cst_325 {dimension_numbers = #tpu.dot_dimension_numbers<[1], [0], [0], [1], [0, 0, 1, 1], [], []>} : vector<1x64xbf16>, vector<64x128xbf16>, vector<1x128xf32> -> vector<1x128xf32>
    %c0_326 = arith.constant 0 : index
    %c0_327 = arith.constant 0 : index
    %761 = vector.load %arg27[%c0_326, %c0_327] : memref<1x128xf32, #tpu.memory_space<vmem>>, vector<1x128xf32>
    %762 = arith.addf %760, %761 : vector<1x128xf32>
    %c0_328 = arith.constant 0 : index
    %c0_329 = arith.constant 0 : index
    %c0_330 = arith.constant 0 : index
    %763 = vector.load %arg28[%c0_328, %c0_329, %c0_330] : memref<1x1x128xf32, #tpu.memory_space<vmem>>, vector<1x1x128xf32>
    %764 = vector.shape_cast %763 : vector<1x1x128xf32> to vector<1x128xf32>
    %765 = vector.shape_cast %762 : vector<1x128xf32> to vector<1x1x128xf32>
    tpu.vector_store %arg28[%c0_328, %c0_329, %c0_330], %765 {strides = array<i32>} : memref<1x1x128xf32, #tpu.memory_space<vmem>>, vector<1x1x128xf32>,
    return
  }
  func.func @transform_0(%arg0: i32) -> (i32, i32, i32) {
    %c0_i32 = arith.constant 0 : i32
    %c0_i32_0 = arith.constant 0 : i32
    %c0_i32_1 = arith.constant 0 : i32
    return %arg0, %c0_i32, %c0_i32_0 : i32, i32, i32
  }
  func.func @transform_1(%arg0: i32) -> (i32, i32) {
    %c0_i32 = arith.constant 0 : i32
    %c0_i32_0 = arith.constant 0 : i32
    %c0_i32_1 = arith.constant 0 : i32
    return %c0_i32, %c0_i32_0 : i32, i32
  }
  func.func @transform_2(%arg0: i32) -> (i32, i32) {
    %c0_i32 = arith.constant 0 : i32
    %c0_i32_0 = arith.constant 0 : i32
    %c0_i32_1 = arith.constant 0 : i32
    return %c0_i32, %c0_i32_0 : i32, i32
  }
  func.func @transform_3(%arg0: i32) -> (i32, i32) {
    %c0_i32 = arith.constant 0 : i32
    %c0_i32_0 = arith.constant 0 : i32
    %c0_i32_1 = arith.constant 0 : i32
    return %c0_i32, %c0_i32_0 : i32, i32
  }
  func.func @transform_4(%arg0: i32) -> (i32, i32, i32) {
    %c0_i32 = arith.constant 0 : i32
    %c0_i32_0 = arith.constant 0 : i32
    %c0_i32_1 = arith.constant 0 : i32
    %c0_i32_2 = arith.constant 0 : i32
    return %c0_i32, %c0_i32_0, %c0_i32_1 : i32, i32, i32
  }
  func.func @transform_5(%arg0: i32) -> (i32, i32, i32) {
    %c0_i32 = arith.constant 0 : i32
    %c0_i32_0 = arith.constant 0 : i32
    %c0_i32_1 = arith.constant 0 : i32
    %c0_i32_2 = arith.constant 0 : i32
    return %c0_i32, %c0_i32_0, %c0_i32_1 : i32, i32, i32
  }
  func.func @transform_6(%arg0: i32) -> (i32, i32, i32) {
    %c0_i32 = arith.constant 0 : i32
    %c0_i32_0 = arith.constant 0 : i32
    %c0_i32_1 = arith.constant 0 : i32
    %c0_i32_2 = arith.constant 0 : i32
    return %c0_i32, %c0_i32_0, %c0_i32_1 : i32, i32, i32
  }
  func.func @transform_7(%arg0: i32) -> (i32, i32, i32) {
    %c0_i32 = arith.constant 0 : i32
    %c0_i32_0 = arith.constant 0 : i32
    %c0_i32_1 = arith.constant 0 : i32
    %c0_i32_2 = arith.constant 0 : i32
    return %c0_i32, %c0_i32_0, %c0_i32_1 : i32, i32, i32
  }
  func.func @transform_8(%arg0: i32) -> (i32, i32, i32) {
    %c0_i32 = arith.constant 0 : i32
    %c0_i32_0 = arith.constant 0 : i32
    %c0_i32_1 = arith.constant 0 : i32
    %c0_i32_2 = arith.constant 0 : i32
    return %c0_i32, %c0_i32_0, %c0_i32_1 : i32, i32, i32
  }
  func.func @transform_9(%arg0: i32) -> (i32, i32, i32) {
    %c0_i32 = arith.constant 0 : i32
    %c0_i32_0 = arith.constant 0 : i32
    %c0_i32_1 = arith.constant 0 : i32
    %c0_i32_2 = arith.constant 0 : i32
    return %c0_i32, %c0_i32_0, %c0_i32_1 : i32, i32, i32
  }
  func.func @transform_10(%arg0: i32) -> (i32, i32, i32) {
    %c0_i32 = arith.constant 0 : i32
    %c0_i32_0 = arith.constant 0 : i32
    %c0_i32_1 = arith.constant 0 : i32
    %c0_i32_2 = arith.constant 0 : i32
    return %c0_i32, %c0_i32_0, %c0_i32_1 : i32, i32, i32
  }
  func.func @transform_11(%arg0: i32) -> (i32, i32, i32) {
    %c0_i32 = arith.constant 0 : i32
    %c0_i32_0 = arith.constant 0 : i32
    %c0_i32_1 = arith.constant 0 : i32
    %c0_i32_2 = arith.constant 0 : i32
    return %c0_i32, %c0_i32_0, %c0_i32_1 : i32, i32, i32
  }
  func.func @transform_12(%arg0: i32) -> (i32, i32, i32) {
    %c0_i32 = arith.constant 0 : i32
    %c0_i32_0 = arith.constant 0 : i32
    %c0_i32_1 = arith.constant 0 : i32
    %c0_i32_2 = arith.constant 0 : i32
    return %c0_i32, %c0_i32_0, %c0_i32_1 : i32, i32, i32
  }
  func.func @transform_13(%arg0: i32) -> (i32, i32) {
    %c0_i32 = arith.constant 0 : i32
    %c0_i32_0 = arith.constant 0 : i32
    %c0_i32_1 = arith.constant 0 : i32
    return %c0_i32, %c0_i32_0 : i32, i32
  }
  func.func @transform_14(%arg0: i32) -> (i32, i32) {
    %c0_i32 = arith.constant 0 : i32
    %c0_i32_0 = arith.constant 0 : i32
    %c0_i32_1 = arith.constant 0 : i32
    return %c0_i32, %c0_i32_0 : i32, i32
  }
  func.func @transform_15(%arg0: i32) -> (i32, i32, i32) {
    %c0_i32 = arith.constant 0 : i32
    %c0_i32_0 = arith.constant 0 : i32
    %c0_i32_1 = arith.constant 0 : i32
    %c0_i32_2 = arith.constant 0 : i32
    return %c0_i32, %c0_i32_0, %c0_i32_1 : i32, i32, i32
  }
  func.func @transform_16(%arg0: i32) -> (i32, i32, i32) {
    %c0_i32 = arith.constant 0 : i32
    %c0_i32_0 = arith.constant 0 : i32
    %c0_i32_1 = arith.constant 0 : i32
    %c0_i32_2 = arith.constant 0 : i32
    return %c0_i32, %c0_i32_0, %c0_i32_1 : i32, i32, i32
  }
  func.func @transform_17(%arg0: i32) -> (i32, i32, i32) {
    %c0_i32 = arith.constant 0 : i32
    %c0_i32_0 = arith.constant 0 : i32
    %c0_i32_1 = arith.constant 0 : i32
    %c0_i32_2 = arith.constant 0 : i32
    return %c0_i32, %c0_i32_0, %c0_i32_1 : i32, i32, i32
  }
  func.func @transform_18(%arg0: i32) -> (i32, i32, i32) {
    %c0_i32 = arith.constant 0 : i32
    %c0_i32_0 = arith.constant 0 : i32
    %c0_i32_1 = arith.constant 0 : i32
    %c0_i32_2 = arith.constant 0 : i32
    return %c0_i32, %c0_i32_0, %c0_i32_1 : i32, i32, i32
  }
  func.func @transform_19(%arg0: i32) -> (i32, i32, i32) {
    %c0_i32 = arith.constant 0 : i32
    %c0_i32_0 = arith.constant 0 : i32
    %c0_i32_1 = arith.constant 0 : i32
    %c0_i32_2 = arith.constant 0 : i32
    return %c0_i32, %c0_i32_0, %c0_i32_1 : i32, i32, i32
  }
  func.func @transform_20(%arg0: i32) -> (i32, i32, i32) {
    %c0_i32 = arith.constant 0 : i32
    %c0_i32_0 = arith.constant 0 : i32
    %c0_i32_1 = arith.constant 0 : i32
    %c0_i32_2 = arith.constant 0 : i32
    return %c0_i32, %c0_i32_0, %c0_i32_1 : i32, i32, i32
  }
  func.func @transform_21(%arg0: i32) -> (i32, i32, i32) {
    %c0_i32 = arith.constant 0 : i32
    %c0_i32_0 = arith.constant 0 : i32
    %c0_i32_1 = arith.constant 0 : i32
    %c0_i32_2 = arith.constant 0 : i32
    return %c0_i32, %c0_i32_0, %c0_i32_1 : i32, i32, i32
  }
  func.func @transform_22(%arg0: i32) -> (i32, i32, i32) {
    %c0_i32 = arith.constant 0 : i32
    %c0_i32_0 = arith.constant 0 : i32
    %c0_i32_1 = arith.constant 0 : i32
    %c0_i32_2 = arith.constant 0 : i32
    return %c0_i32, %c0_i32_0, %c0_i32_1 : i32, i32, i32
  }
  func.func @transform_23(%arg0: i32) -> (i32, i32, i32) {
    %c0_i32 = arith.constant 0 : i32
    %c0_i32_0 = arith.constant 0 : i32
    %c0_i32_1 = arith.constant 0 : i32
    %c0_i32_2 = arith.constant 0 : i32
    return %c0_i32, %c0_i32_0, %c0_i32_1 : i32, i32, i32
  }
  func.func @transform_24(%arg0: i32) -> (i32, i32) {
    %c0_i32 = arith.constant 0 : i32
    %c0_i32_0 = arith.constant 0 : i32
    %c0_i32_1 = arith.constant 0 : i32
    return %c0_i32, %c0_i32_0 : i32, i32
  }
  func.func @transform_25(%arg0: i32) -> (i32, i32) {
    %c0_i32 = arith.constant 0 : i32
    %c0_i32_0 = arith.constant 0 : i32
    %c0_i32_1 = arith.constant 0 : i32
    return %c0_i32, %c0_i32_0 : i32, i32
  }
  func.func @transform_26(%arg0: i32) -> (i32, i32) {
    %c0_i32 = arith.constant 0 : i32
    %c0_i32_0 = arith.constant 0 : i32
    %c0_i32_1 = arith.constant 0 : i32
    return %c0_i32, %c0_i32_0 : i32, i32
  }
  func.func @transform_27(%arg0: i32) -> (i32, i32, i32) {
    %c0_i32 = arith.constant 0 : i32
    %c0_i32_0 = arith.constant 0 : i32
    %c0_i32_1 = arith.constant 0 : i32
    return %arg0, %c0_i32, %c0_i32_0 : i32, i32, i32
  }
}

</mosaic_0001>

<llo_original>
// kernel: tpu_custom_call.1
$region0: #{tpu_custom_call.1}
  #allocation0 [shape = 'u32[]', space=smem, size = 0x4, offset = 0x4, fixed_abs, tag = 'smem constant byte address 0x4 - core index']
  #allocation1 [shape = 'u32[72,128]{1,0:T(1,128)}', space=vmem, size = 0x9000, scoped, tag = 'internal scratch']
  #allocation2 [shape = 'f32[1,1]{1,0:T(1,128)S(1)}', space=vmem, size = 0x200, scoped, tag = 'scoped memory for tpu_custom_call.1']
  %s0 = inlined_call_operand.vmem [shape: bf16[2,24,192], index: 0, kind: input, shape index: {}]
  %s1 = inlined_call_operand.vmem [shape: bf16[192,64], index: 1, kind: input, shape index: {}]
  %s2 = inlined_call_operand.vmem [shape: f32[24,64], index: 2, kind: input, shape index: {}]
  %s3 = inlined_call_operand.hbm [shape: f32[2,64], index: 3, kind: input, shape index: {}]
  %s4 = inlined_call_operand.hbm [shape: f32[2,4,64], index: 4, kind: input, shape index: {}]
  %s5 = inlined_call_operand.vmem [shape: bf16[2,64,192], index: 5, kind: input, shape index: {}]
  %s6 = inlined_call_operand.vmem [shape: f32[2,1,192], index: 6, kind: input, shape index: {}]
  %s7 = inlined_call_operand.vmem [shape: bf16[2,64,64], index: 7, kind: input, shape index: {}]
  %s8 = inlined_call_operand.hbm [shape: f32[2,1,64], index: 8, kind: input, shape index: {}]
  %s9 = inlined_call_operand.vmem [shape: bf16[2,64,256], index: 9, kind: input, shape index: {}]
  %s10 = inlined_call_operand.hbm [shape: f32[2,1,256], index: 10, kind: input, shape index: {}]
  %s11 = inlined_call_operand.vmem [shape: bf16[2,256,64], index: 11, kind: input, shape index: {}]
  %s12 = inlined_call_operand.hbm [shape: f32[2,1,64], index: 12, kind: input, shape index: {}]
  %s13 = inlined_call_operand.hbm [shape: bf16[1,24], index: 13, kind: input, shape index: {}]
  %s14 = inlined_call_operand.<no memory space> [shape: f32[1,1], index: 14, kind: input, shape index: {}]
  %s15 = inlined_call_operand.hbm [shape: f32[3,4,64], index: 15, kind: input, shape index: {}]
  %s16 = inlined_call_operand.vmem [shape: bf16[3,64,64], index: 16, kind: input, shape index: {}]
  %s17 = inlined_call_operand.hbm [shape: f32[3,1,64], index: 17, kind: input, shape index: {}]
  %s18 = inlined_call_operand.vmem [shape: bf16[3,64,64], index: 18, kind: input, shape index: {}]
  %s19 = inlined_call_operand.hbm [shape: f32[3,1,64], index: 19, kind: input, shape index: {}]
  %s20 = inlined_call_operand.vmem [shape: bf16[3,64,256], index: 20, kind: input, shape index: {}]
  %s21 = inlined_call_operand.hbm [shape: f32[3,1,256], index: 21, kind: input, shape index: {}]
  %s22 = inlined_call_operand.vmem [shape: bf16[3,256,64], index: 22, kind: input, shape index: {}]
  %s23 = inlined_call_operand.vmem [shape: f32[3,1,64], index: 23, kind: input, shape index: {}]
  %s24 = inlined_call_operand.vmem [shape: f32[2,64], index: 24, kind: input, shape index: {}]
  %s25 = inlined_call_operand.vmem [shape: bf16[64,128], index: 25, kind: input, shape index: {}]
  %s26 = inlined_call_operand.vmem [shape: f32[1,128], index: 26, kind: input, shape index: {}]
  %s27 = inlined_call_operand.hbm [shape: f32[2,1,128], index: 27, kind: output, shape index: {}]
  %s28 = sld [smem:[#allocation0]]
  $region181: #{tpu_custom_call.1} parent=0
    _
  %s30 = ssub.s32 1, %s28
  %s31 = scalar_select 0, %s30, %s28
  %v32 = vstv %s14
  %33 = vst [vmem:[#allocation2] sm:$0x1] %v32
  $region1: #{tpu_custom_call.1} parent=0
    #allocation3 [shape = 'u8[1024]{0}', space=vmem, size = 0x400, scoped, tag = 'input window, operand 3, single buffered']
    #allocation4 [shape = 's32[2]{0}', space=sflag, size = 0x8, scoped, tag = 'scoped memory for tpu_custom_call.1']
    #allocation5 [shape = 's32[2]{0}', space=sflag, size = 0x8, scoped, tag = 'scoped memory for tpu_custom_call.1']
    #allocation6 [shape = 'u8[4096]{0}', space=vmem, size = 0x1000, scoped, tag = 'input window, operand 4, single buffered']
    #allocation7 [shape = 's32[1]{0}', space=sflag, size = 0x4, scoped, tag = 'scoped memory for tpu_custom_call.1']
    #allocation8 [shape = 'u8[1024]{0}', space=vmem, size = 0x400, scoped, tag = 'input window, operand 8, single buffered']
    #allocation9 [shape = 'u8[2048]{0}', space=vmem, size = 0x800, scoped, tag = 'input window, operand 10, single buffered']
    #allocation10 [shape = 's32[1]{0}', space=sflag, size = 0x4, scoped, tag = 'scoped memory for tpu_custom_call.1']
    #allocation11 [shape = 'u8[1024]{0}', space=vmem, size = 0x400, scoped, tag = 'input window, operand 12, single buffered']
    #allocation12 [shape = 'u8[512]{0}', space=vmem, size = 0x400, scoped, tag = 'input window, operand 13, single buffered']
    #allocation13 [shape = 's32[1]{0}', space=sflag, size = 0x4, scoped, tag = 'scoped memory for tpu_custom_call.1']
    #allocation14 [shape = 'u8[6144]{0}', space=vmem, size = 0x1800, scoped, tag = 'input window, operand 15, single buffered']
    #allocation15 [shape = 'u8[1536]{0}', space=vmem, size = 0x800, scoped, tag = 'input window, operand 17, single buffered']
    #allocation16 [shape = 's32[1]{0}', space=sflag, size = 0x4, scoped, tag = 'scoped memory for tpu_custom_call.1']
    #allocation17 [shape = 'u8[1536]{0}', space=vmem, size = 0x800, scoped, tag = 'input window, operand 19, single buffered']
    #allocation18 [shape = 'u8[3072]{0}', space=vmem, size = 0xc00, scoped, tag = 'input window, operand 21, single buffered']
    #allocation19 [shape = 's32[1]{0}', space=sflag, size = 0x4, scoped, tag = 'scoped memory for tpu_custom_call.1']
    #allocation20 [shape = 'u8[1024]{0}', space=vmem, size = 0x400, scoped, tag = 'output window, operand 0']
    %34 = vsyncpa [#allocation4], 0
    %35 = vsyncpa [#allocation7], 0
    %36 = vsyncpa [#allocation10], 0
    %37 = vsyncpa [#allocation13], 0
    %38 = vsyncpa [#allocation16], 0
    %39 = vsyncpa [#allocation19], 0
    %40 = vsyncpa [#allocation5], 0
    %s41 = scalar_lea.sflag [#allocation5], 1
    %42 = vsyncpa %s41, 0
    loop: start=0, step=1, limit=4
    $region2: #{tpu_custom_call.1} parent=1 // loop_pre_header
      _
    $region3: #{tpu_custom_call.1} parent=1 // loop_header
      %s44 = sphi 0, %s48
      %p45 = scmp.ge.s32.totalorder %s44, 4
      %s54 = sphi 0, %s56
      %s57 = sphi 0, %s54
      %s58 = sphi 0, %s57
      %s74 = sphi 0, %s58
      %s78 = sphi 0, %s78
      %s80 = sphi 0, %s78
      %s81 = sphi 0, %s80
      %s95 = sphi 0, %s81
      %s99 = sphi 0, %s99
      %s101 = sphi 0, %s99
      %s102 = sphi 0, %s101
      %s116 = sphi 0, %s102
      %s120 = sphi 0, %s120
      %s122 = sphi 0, %s120
      %s123 = sphi 0, %s122
      %s137 = sphi 0, %s123
      %s141 = sphi 0, %s141
      %s143 = sphi 0, %s141
      %s144 = sphi 0, %s143
      %s158 = sphi 0, %s144
      %s162 = sphi 0, %s162
      %s164 = sphi 0, %s162
      %s165 = sphi 0, %s164
      %s179 = sphi 0, %s165
      %s183 = sphi 0, %s183
      %s185 = sphi 0, %s183
      %s186 = sphi 0, %s185
      %s200 = sphi 0, %s186
      %s204 = sphi 0, %s204
      %s206 = sphi 0, %s204
      %s207 = sphi 0, %s206
      %s221 = sphi 0, %s207
      %s225 = sphi 0, %s225
      %s227 = sphi 0, %s225
      %s228 = sphi 0, %s227
      %s242 = sphi 0, %s228
      %s246 = sphi 0, %s246
      %s248 = sphi 0, %s246
      %s249 = sphi 0, %s248
      %s263 = sphi 0, %s249
      %s267 = sphi 0, %s267
      %s269 = sphi 0, %s267
      %s270 = sphi 0, %s269
      %s284 = sphi 0, %s270
      %s288 = sphi 0, %s288
      %s290 = sphi 0, %s288
      %s291 = sphi 0, %s290
      %s305 = sphi 0, %s291
      %s309 = sphi 0, %s309
      %s311 = sphi 0, %s309
      %s312 = sphi 0, %s311
      %s326 = sphi 0, %s312
      %s330 = sphi 0, %s330
      %s332 = sphi 0, %s330
      %s333 = sphi 0, %s332
      %s347 = sphi 0, %s333
      %s351 = sphi 0, %s351
      %s353 = sphi 0, %s351
      %s354 = sphi 0, %s353
      %s368 = sphi 0, %s354
      %s372 = sphi 0, %s372
      %s374 = sphi 0, %s372
      %s375 = sphi 0, %s374
      %s389 = sphi 0, %s375
      %s393 = sphi 0, %s393
      %s395 = sphi 0, %s393
      %s396 = sphi 0, %s395
      %s410 = sphi 0, %s396
      %s414 = sphi 0, %s414
      %s416 = sphi 0, %s414
      %s417 = sphi 0, %s416
      %s431 = sphi 0, %s417
      %s435 = sphi 0, %s435
      %s437 = sphi 0, %s435
      %s438 = sphi 0, %s437
      %s452 = sphi 0, %s438
      %s456 = sphi 0, %s456
      %s458 = sphi 0, %s456
      %s459 = sphi 0, %s458
      %s473 = sphi 0, %s459
      %s477 = sphi 0, %s477
      %s479 = sphi 0, %s477
      %s480 = sphi 0, %s479
      %s494 = sphi 0, %s480
      %s498 = sphi 0, %s498
      %s500 = sphi 0, %s498
      %s501 = sphi 0, %s500
      %s515 = sphi 0, %s501
      %s519 = sphi 0, %s519
      %s521 = sphi 0, %s519
      %s522 = sphi 0, %s521
      %s536 = sphi 0, %s522
      %s540 = sphi 0, %s540
      %s542 = sphi 0, %s540
      %s543 = sphi 0, %s542
      %s557 = sphi 0, %s543
      %s561 = sphi 0, %s561
      %s563 = sphi 0, %s561
      %s564 = sphi 0, %s563
      %s578 = sphi 0, %s564
      %s582 = sphi 0, %s582
      %s584 = sphi 0, %s582
      %s585 = sphi 0, %s584
      %s599 = sphi 0, %s585
      %s603 = sphi 0, %s603
      %s605 = sphi 0, %s603
      %s606 = sphi 0, %s605
      %s620 = sphi 0, %s606
      %s626 = sphi 0, %s628
      %s629 = sphi 0, %s626
      %s630 = sphi 0, %s629
      %s646 = sphi 0, %s630
    $region4: #{tpu_custom_call.1} parent=1 // loop_header_branch
      %47 = sbr.rel (%p45) target = $region8
    $region5: #{tpu_custom_call.1} parent=1 // loop_body
      %s49 = ssub.s32 %s44, 1
      %s50 = ssub.s32 %s44, 2
      %s51 = sadd.s32 %s44, 1
      %s52 = ssub.s32 %s44, %s51
      %p53 = scmp.eq.s32.totalorder %s52, 0
      %s55 = sadd.s32 %s54, 1
      %s56 = scalar_select %p53, %s54, %s55
      %p59 = pneg %p53
      %p60 = scmp.eq.s32.totalorder %s44, 1
      %p61 = por %p59, %p60
      %p62 = scmp.ne.s32.totalorder %s54, %s57
      %p63 = scmp.eq.s32.totalorder %s44, 0
      %p64 = por %p62, %p63
      %p65 = scmp.ne.s32.totalorder %s54, %s57
      %p66 = scmp.eq.s32.totalorder %s49, 1
      %p67 = por %p65, %p66
      %p68 = scmp.ne.s32.totalorder %s57, %s58
      %p69 = scmp.eq.s32.totalorder %s49, 0
      %p70 = por %p68, %p69
      %p71 = scmp.ne.s32.totalorder %s57, %s58
      %p72 = scmp.eq.s32.totalorder %s50, 1
      %p73 = por %p71, %p72
      %p75 = scmp.ne.s32.totalorder %s58, %s74
      %p76 = scmp.eq.s32.totalorder %s50, 0
      %p77 = por %p75, %p76
      %s79 = sadd.s32 %s78, 1
      %p82 = scmp.eq.s32.totalorder %s44, 1
      %p83 = scmp.ne.s32.totalorder %s78, %s80
      %p84 = scmp.eq.s32.totalorder %s44, 0
      %p85 = por %p83, %p84
      %p86 = scmp.ne.s32.totalorder %s78, %s80
      %p87 = scmp.eq.s32.totalorder %s49, 1
      %p88 = por %p86, %p87
      %p89 = scmp.ne.s32.totalorder %s80, %s81
      %p90 = scmp.eq.s32.totalorder %s49, 0
      %p91 = por %p89, %p90
      %p92 = scmp.ne.s32.totalorder %s80, %s81
      %p93 = scmp.eq.s32.totalorder %s50, 1
      %p94 = por %p92, %p93
      %p96 = scmp.ne.s32.totalorder %s81, %s95
      %p97 = scmp.eq.s32.totalorder %s50, 0
      %p98 = por %p96, %p97
      %s100 = sadd.s32 %s99, 1
      %p103 = scmp.eq.s32.totalorder %s44, 1
      %p104 = scmp.ne.s32.totalorder %s99, %s101
      %p105 = scmp.eq.s32.totalorder %s44, 0
      %p106 = por %p104, %p105
      %p107 = scmp.ne.s32.totalorder %s99, %s101
      %p108 = scmp.eq.s32.totalorder %s49, 1
      %p109 = por %p107, %p108
      %p110 = scmp.ne.s32.totalorder %s101, %s102
      %p111 = scmp.eq.s32.totalorder %s49, 0
      %p112 = por %p110, %p111
      %p113 = scmp.ne.s32.totalorder %s101, %s102
      %p114 = scmp.eq.s32.totalorder %s50, 1
      %p115 = por %p113, %p114
      %p117 = scmp.ne.s32.totalorder %s102, %s116
      %p118 = scmp.eq.s32.totalorder %s50, 0
      %p119 = por %p117, %p118
      %s121 = sadd.s32 %s120, 1
      %p124 = scmp.eq.s32.totalorder %s44, 1
      %p125 = scmp.ne.s32.totalorder %s120, %s122
      %p126 = scmp.eq.s32.totalorder %s44, 0
      %p127 = por %p125, %p126
      %p128 = scmp.ne.s32.totalorder %s120, %s122
      %p129 = scmp.eq.s32.totalorder %s49, 1
      %p130 = por %p128, %p129
      %p131 = scmp.ne.s32.totalorder %s122, %s123
      %p132 = scmp.eq.s32.totalorder %s49, 0
      %p133 = por %p131, %p132
      %p134 = scmp.ne.s32.totalorder %s122, %s123
      %p135 = scmp.eq.s32.totalorder %s50, 1
      %p136 = por %p134, %p135
      %p138 = scmp.ne.s32.totalorder %s123, %s137
      %p139 = scmp.eq.s32.totalorder %s50, 0
      %p140 = por %p138, %p139
      %s142 = sadd.s32 %s141, 1
      %p145 = scmp.eq.s32.totalorder %s44, 1
      %p146 = scmp.ne.s32.totalorder %s141, %s143
      %p147 = scmp.eq.s32.totalorder %s44, 0
      %p148 = por %p146, %p147
      %p149 = scmp.ne.s32.totalorder %s141, %s143
      %p150 = scmp.eq.s32.totalorder %s49, 1
      %p151 = por %p149, %p150
      %p152 = scmp.ne.s32.totalorder %s143, %s144
      %p153 = scmp.eq.s32.totalorder %s49, 0
      %p154 = por %p152, %p153
      %p155 = scmp.ne.s32.totalorder %s143, %s144
      %p156 = scmp.eq.s32.totalorder %s50, 1
      %p157 = por %p155, %p156
      %p159 = scmp.ne.s32.totalorder %s144, %s158
      %p160 = scmp.eq.s32.totalorder %s50, 0
      %p161 = por %p159, %p160
      %s163 = sadd.s32 %s162, 1
      %p166 = scmp.eq.s32.totalorder %s44, 1
      %p167 = scmp.ne.s32.totalorder %s162, %s164
      %p168 = scmp.eq.s32.totalorder %s44, 0
      %p169 = por %p167, %p168
      %p170 = scmp.ne.s32.totalorder %s162, %s164
      %p171 = scmp.eq.s32.totalorder %s49, 1
      %p172 = por %p170, %p171
      %p173 = scmp.ne.s32.totalorder %s164, %s165
      %p174 = scmp.eq.s32.totalorder %s49, 0
      %p175 = por %p173, %p174
      %p176 = scmp.ne.s32.totalorder %s164, %s165
      %p177 = scmp.eq.s32.totalorder %s50, 1
      %p178 = por %p176, %p177
      %p180 = scmp.ne.s32.totalorder %s165, %s179
      %p181 = scmp.eq.s32.totalorder %s50, 0
      %p182 = por %p180, %p181
      %s184 = sadd.s32 %s183, 1
      %p187 = scmp.eq.s32.totalorder %s44, 1
      %p188 = scmp.ne.s32.totalorder %s183, %s185
      %p189 = scmp.eq.s32.totalorder %s44, 0
      %p190 = por %p188, %p189
      %p191 = scmp.ne.s32.totalorder %s183, %s185
      %p192 = scmp.eq.s32.totalorder %s49, 1
      %p193 = por %p191, %p192
      %p194 = scmp.ne.s32.totalorder %s185, %s186
      %p195 = scmp.eq.s32.totalorder %s49, 0
      %p196 = por %p194, %p195
      %p197 = scmp.ne.s32.totalorder %s185, %s186
      %p198 = scmp.eq.s32.totalorder %s50, 1
      %p199 = por %p197, %p198
      %p201 = scmp.ne.s32.totalorder %s186, %s200
      %p202 = scmp.eq.s32.totalorder %s50, 0
      %p203 = por %p201, %p202
      %s205 = sadd.s32 %s204, 1
      %p208 = scmp.eq.s32.totalorder %s44, 1
      %p209 = scmp.ne.s32.totalorder %s204, %s206
      %p210 = scmp.eq.s32.totalorder %s44, 0
      %p211 = por %p209, %p210
      %p212 = scmp.ne.s32.totalorder %s204, %s206
      %p213 = scmp.eq.s32.totalorder %s49, 1
      %p214 = por %p212, %p213
      %p215 = scmp.ne.s32.totalorder %s206, %s207
      %p216 = scmp.eq.s32.totalorder %s49, 0
      %p217 = por %p215, %p216
      %p218 = scmp.ne.s32.totalorder %s206, %s207
      %p219 = scmp.eq.s32.totalorder %s50, 1
      %p220 = por %p218, %p219
      %p222 = scmp.ne.s32.totalorder %s207, %s221
      %p223 = scmp.eq.s32.totalorder %s50, 0
      %p224 = por %p222, %p223
      %s226 = sadd.s32 %s225, 1
      %p229 = scmp.eq.s32.totalorder %s44, 1
      %p230 = scmp.ne.s32.totalorder %s225, %s227
      %p231 = scmp.eq.s32.totalorder %s44, 0
      %p232 = por %p230, %p231
      %p233 = scmp.ne.s32.totalorder %s225, %s227
      %p234 = scmp.eq.s32.totalorder %s49, 1
      %p235 = por %p233, %p234
      %p236 = scmp.ne.s32.totalorder %s227, %s228
      %p237 = scmp.eq.s32.totalorder %s49, 0
      %p238 = por %p236, %p237
      %p239 = scmp.ne.s32.totalorder %s227, %s228
      %p240 = scmp.eq.s32.totalorder %s50, 1
      %p241 = por %p239, %p240
      %p243 = scmp.ne.s32.totalorder %s228, %s242
      %p244 = scmp.eq.s32.totalorder %s50, 0
      %p245 = por %p243, %p244
      %s247 = sadd.s32 %s246, 1
      %p250 = scmp.eq.s32.totalorder %s44, 1
      %p251 = scmp.ne.s32.totalorder %s246, %s248
      %p252 = scmp.eq.s32.totalorder %s44, 0
      %p253 = por %p251, %p252
      %p254 = scmp.ne.s32.totalorder %s246, %s248
      %p255 = scmp.eq.s32.totalorder %s49, 1
      %p256 = por %p254, %p255
      %p257 = scmp.ne.s32.totalorder %s248, %s249
      %p258 = scmp.eq.s32.totalorder %s49, 0
      %p259 = por %p257, %p258
      %p260 = scmp.ne.s32.totalorder %s248, %s249
      %p261 = scmp.eq.s32.totalorder %s50, 1
      %p262 = por %p260, %p261
      %p264 = scmp.ne.s32.totalorder %s249, %s263
      %p265 = scmp.eq.s32.totalorder %s50, 0
      %p266 = por %p264, %p265
      %s268 = sadd.s32 %s267, 1
      %p271 = scmp.eq.s32.totalorder %s44, 1
      %p272 = scmp.ne.s32.totalorder %s267, %s269
      %p273 = scmp.eq.s32.totalorder %s44, 0
      %p274 = por %p272, %p273
      %p275 = scmp.ne.s32.totalorder %s267, %s269
      %p276 = scmp.eq.s32.totalorder %s49, 1
      %p277 = por %p275, %p276
      %p278 = scmp.ne.s32.totalorder %s269, %s270
      %p279 = scmp.eq.s32.totalorder %s49, 0
      %p280 = por %p278, %p279
      %p281 = scmp.ne.s32.totalorder %s269, %s270
      %p282 = scmp.eq.s32.totalorder %s50, 1
      %p283 = por %p281, %p282
      %p285 = scmp.ne.s32.totalorder %s270, %s284
      %p286 = scmp.eq.s32.totalorder %s50, 0
      %p287 = por %p285, %p286
      %s289 = sadd.s32 %s288, 1
      %p292 = scmp.eq.s32.totalorder %s44, 1
      %p293 = scmp.ne.s32.totalorder %s288, %s290
      %p294 = scmp.eq.s32.totalorder %s44, 0
      %p295 = por %p293, %p294
      %p296 = scmp.ne.s32.totalorder %s288, %s290
      %p297 = scmp.eq.s32.totalorder %s49, 1
      %p298 = por %p296, %p297
      %p299 = scmp.ne.s32.totalorder %s290, %s291
      %p300 = scmp.eq.s32.totalorder %s49, 0
      %p301 = por %p299, %p300
      %p302 = scmp.ne.s32.totalorder %s290, %s291
      %p303 = scmp.eq.s32.totalorder %s50, 1
      %p304 = por %p302, %p303
      %p306 = scmp.ne.s32.totalorder %s291, %s305
      %p307 = scmp.eq.s32.totalorder %s50, 0
      %p308 = por %p306, %p307
      %s310 = sadd.s32 %s309, 1
      %p313 = scmp.eq.s32.totalorder %s44, 1
      %p314 = scmp.ne.s32.totalorder %s309, %s311
      %p315 = scmp.eq.s32.totalorder %s44, 0
      %p316 = por %p314, %p315
      %p317 = scmp.ne.s32.totalorder %s309, %s311
      %p318 = scmp.eq.s32.totalorder %s49, 1
      %p319 = por %p317, %p318
      %p320 = scmp.ne.s32.totalorder %s311, %s312
      %p321 = scmp.eq.s32.totalorder %s49, 0
      %p322 = por %p320, %p321
      %p323 = scmp.ne.s32.totalorder %s311, %s312
      %p324 = scmp.eq.s32.totalorder %s50, 1
      %p325 = por %p323, %p324
      %p327 = scmp.ne.s32.totalorder %s312, %s326
      %p328 = scmp.eq.s32.totalorder %s50, 0
      %p329 = por %p327, %p328
      %s331 = sadd.s32 %s330, 1
      %p334 = scmp.eq.s32.totalorder %s44, 1
      %p335 = scmp.ne.s32.totalorder %s330, %s332
      %p336 = scmp.eq.s32.totalorder %s44, 0
      %p337 = por %p335, %p336
      %p338 = scmp.ne.s32.totalorder %s330, %s332
      %p339 = scmp.eq.s32.totalorder %s49, 1
      %p340 = por %p338, %p339
      %p341 = scmp.ne.s32.totalorder %s332, %s333
      %p342 = scmp.eq.s32.totalorder %s49, 0
      %p343 = por %p341, %p342
      %p344 = scmp.ne.s32.totalorder %s332, %s333
      %p345 = scmp.eq.s32.totalorder %s50, 1
      %p346 = por %p344, %p345
      %p348 = scmp.ne.s32.totalorder %s333, %s347
      %p349 = scmp.eq.s32.totalorder %s50, 0
      %p350 = por %p348, %p349
      %s352 = sadd.s32 %s351, 1
      %p355 = scmp.eq.s32.totalorder %s44, 1
      %p356 = scmp.ne.s32.totalorder %s351, %s353
      %p357 = scmp.eq.s32.totalorder %s44, 0
      %p358 = por %p356, %p357
      %p359 = scmp.ne.s32.totalorder %s351, %s353
      %p360 = scmp.eq.s32.totalorder %s49, 1
      %p361 = por %p359, %p360
      %p362 = scmp.ne.s32.totalorder %s353, %s354
      %p363 = scmp.eq.s32.totalorder %s49, 0
      %p364 = por %p362, %p363
      %p365 = scmp.ne.s32.totalorder %s353, %s354
      %p366 = scmp.eq.s32.totalorder %s50, 1
      %p367 = por %p365, %p366
      %p369 = scmp.ne.s32.totalorder %s354, %s368
      %p370 = scmp.eq.s32.totalorder %s50, 0
      %p371 = por %p369, %p370
      %s373 = sadd.s32 %s372, 1
      %p376 = scmp.eq.s32.totalorder %s44, 1
      %p377 = scmp.ne.s32.totalorder %s372, %s374
      %p378 = scmp.eq.s32.totalorder %s44, 0
      %p379 = por %p377, %p378
      %p380 = scmp.ne.s32.totalorder %s372, %s374
      %p381 = scmp.eq.s32.totalorder %s49, 1
      %p382 = por %p380, %p381
      %p383 = scmp.ne.s32.totalorder %s374, %s375
      %p384 = scmp.eq.s32.totalorder %s49, 0
      %p385 = por %p383, %p384
      %p386 = scmp.ne.s32.totalorder %s374, %s375
      %p387 = scmp.eq.s32.totalorder %s50, 1
      %p388 = por %p386, %p387
      %p390 = scmp.ne.s32.totalorder %s375, %s389
      %p391 = scmp.eq.s32.totalorder %s50, 0
      %p392 = por %p390, %p391
      %s394 = sadd.s32 %s393, 1
      %p397 = scmp.eq.s32.totalorder %s44, 1
      %p398 = scmp.ne.s32.totalorder %s393, %s395
      %p399 = scmp.eq.s32.totalorder %s44, 0
      %p400 = por %p398, %p399
      %p401 = scmp.ne.s32.totalorder %s393, %s395
      %p402 = scmp.eq.s32.totalorder %s49, 1
      %p403 = por %p401, %p402
      %p404 = scmp.ne.s32.totalorder %s395, %s396
      %p405 = scmp.eq.s32.totalorder %s49, 0
      %p406 = por %p404, %p405
      %p407 = scmp.ne.s32.totalorder %s395, %s396
      %p408 = scmp.eq.s32.totalorder %s50, 1
      %p409 = por %p407, %p408
      %p411 = scmp.ne.s32.totalorder %s396, %s410
      %p412 = scmp.eq.s32.totalorder %s50, 0
      %p413 = por %p411, %p412
      %s415 = sadd.s32 %s414, 1
      %p418 = scmp.eq.s32.totalorder %s44, 1
      %p419 = scmp.ne.s32.totalorder %s414, %s416
      %p420 = scmp.eq.s32.totalorder %s44, 0
      %p421 = por %p419, %p420
      %p422 = scmp.ne.s32.totalorder %s414, %s416
      %p423 = scmp.eq.s32.totalorder %s49, 1
      %p424 = por %p422, %p423
      %p425 = scmp.ne.s32.totalorder %s416, %s417
      %p426 = scmp.eq.s32.totalorder %s49, 0
      %p427 = por %p425, %p426
      %p428 = scmp.ne.s32.totalorder %s416, %s417
      %p429 = scmp.eq.s32.totalorder %s50, 1
      %p430 = por %p428, %p429
      %p432 = scmp.ne.s32.totalorder %s417, %s431
      %p433 = scmp.eq.s32.totalorder %s50, 0
      %p434 = por %p432, %p433
      %s436 = sadd.s32 %s435, 1
      %p439 = scmp.eq.s32.totalorder %s44, 1
      %p440 = scmp.ne.s32.totalorder %s435, %s437
      %p441 = scmp.eq.s32.totalorder %s44, 0
      %p442 = por %p440, %p441
      %p443 = scmp.ne.s32.totalorder %s435, %s437
      %p444 = scmp.eq.s32.totalorder %s49, 1
      %p445 = por %p443, %p444
      %p446 = scmp.ne.s32.totalorder %s437, %s438
      %p447 = scmp.eq.s32.totalorder %s49, 0
      %p448 = por %p446, %p447
      %p449 = scmp.ne.s32.totalorder %s437, %s438
      %p450 = scmp.eq.s32.totalorder %s50, 1
      %p451 = por %p449, %p450
      %p453 = scmp.ne.s32.totalorder %s438, %s452
      %p454 = scmp.eq.s32.totalorder %s50, 0
      %p455 = por %p453, %p454
      %s457 = sadd.s32 %s456, 1
      %p460 = scmp.eq.s32.totalorder %s44, 1
      %p461 = scmp.ne.s32.totalorder %s456, %s458
      %p462 = scmp.eq.s32.totalorder %s44, 0
      %p463 = por %p461, %p462
      %p464 = scmp.ne.s32.totalorder %s456, %s458
      %p465 = scmp.eq.s32.totalorder %s49, 1
      %p466 = por %p464, %p465
      %p467 = scmp.ne.s32.totalorder %s458, %s459
      %p468 = scmp.eq.s32.totalorder %s49, 0
      %p469 = por %p467, %p468
      %p470 = scmp.ne.s32.totalorder %s458, %s459
      %p471 = scmp.eq.s32.totalorder %s50, 1
      %p472 = por %p470, %p471
      %p474 = scmp.ne.s32.totalorder %s459, %s473
      %p475 = scmp.eq.s32.totalorder %s50, 0
      %p476 = por %p474, %p475
      %s478 = sadd.s32 %s477, 1
      %p481 = scmp.eq.s32.totalorder %s44, 1
      %p482 = scmp.ne.s32.totalorder %s477, %s479
      %p483 = scmp.eq.s32.totalorder %s44, 0
      %p484 = por %p482, %p483
      %p485 = scmp.ne.s32.totalorder %s477, %s479
      %p486 = scmp.eq.s32.totalorder %s49, 1
      %p487 = por %p485, %p486
      %p488 = scmp.ne.s32.totalorder %s479, %s480
      %p489 = scmp.eq.s32.totalorder %s49, 0
      %p490 = por %p488, %p489
      %p491 = scmp.ne.s32.totalorder %s479, %s480
      %p492 = scmp.eq.s32.totalorder %s50, 1
      %p493 = por %p491, %p492
      %p495 = scmp.ne.s32.totalorder %s480, %s494
      %p496 = scmp.eq.s32.totalorder %s50, 0
      %p497 = por %p495, %p496
      %s499 = sadd.s32 %s498, 1
      %p502 = scmp.eq.s32.totalorder %s44, 1
      %p503 = scmp.ne.s32.totalorder %s498, %s500
      %p504 = scmp.eq.s32.totalorder %s44, 0
      %p505 = por %p503, %p504
      %p506 = scmp.ne.s32.totalorder %s498, %s500
      %p507 = scmp.eq.s32.totalorder %s49, 1
      %p508 = por %p506, %p507
      %p509 = scmp.ne.s32.totalorder %s500, %s501
      %p510 = scmp.eq.s32.totalorder %s49, 0
      %p511 = por %p509, %p510
      %p512 = scmp.ne.s32.totalorder %s500, %s501
      %p513 = scmp.eq.s32.totalorder %s50, 1
      %p514 = por %p512, %p513
      %p516 = scmp.ne.s32.totalorder %s501, %s515
      %p517 = scmp.eq.s32.totalorder %s50, 0
      %p518 = por %p516, %p517
      %s520 = sadd.s32 %s519, 1
      %p523 = scmp.eq.s32.totalorder %s44, 1
      %p524 = scmp.ne.s32.totalorder %s519, %s521
      %p525 = scmp.eq.s32.totalorder %s44, 0
      %p526 = por %p524, %p525
      %p527 = scmp.ne.s32.totalorder %s519, %s521
      %p528 = scmp.eq.s32.totalorder %s49, 1
      %p529 = por %p527, %p528
      %p530 = scmp.ne.s32.totalorder %s521, %s522
      %p531 = scmp.eq.s32.totalorder %s49, 0
      %p532 = por %p530, %p531
      %p533 = scmp.ne.s32.totalorder %s521, %s522
      %p534 = scmp.eq.s32.totalorder %s50, 1
      %p535 = por %p533, %p534
      %p537 = scmp.ne.s32.totalorder %s522, %s536
      %p538 = scmp.eq.s32.totalorder %s50, 0
      %p539 = por %p537, %p538
      %s541 = sadd.s32 %s540, 1
      %p544 = scmp.eq.s32.totalorder %s44, 1
      %p545 = scmp.ne.s32.totalorder %s540, %s542
      %p546 = scmp.eq.s32.totalorder %s44, 0
      %p547 = por %p545, %p546
      %p548 = scmp.ne.s32.totalorder %s540, %s542
      %p549 = scmp.eq.s32.totalorder %s49, 1
      %p550 = por %p548, %p549
      %p551 = scmp.ne.s32.totalorder %s542, %s543
      %p552 = scmp.eq.s32.totalorder %s49, 0
      %p553 = por %p551, %p552
      %p554 = scmp.ne.s32.totalorder %s542, %s543
      %p555 = scmp.eq.s32.totalorder %s50, 1
      %p556 = por %p554, %p555
      %p558 = scmp.ne.s32.totalorder %s543, %s557
      %p559 = scmp.eq.s32.totalorder %s50, 0
      %p560 = por %p558, %p559
      %s562 = sadd.s32 %s561, 1
      %p565 = scmp.eq.s32.totalorder %s44, 1
      %p566 = scmp.ne.s32.totalorder %s561, %s563
      %p567 = scmp.eq.s32.totalorder %s44, 0
      %p568 = por %p566, %p567
      %p569 = scmp.ne.s32.totalorder %s561, %s563
      %p570 = scmp.eq.s32.totalorder %s49, 1
      %p571 = por %p569, %p570
      %p572 = scmp.ne.s32.totalorder %s563, %s564
      %p573 = scmp.eq.s32.totalorder %s49, 0
      %p574 = por %p572, %p573
      %p575 = scmp.ne.s32.totalorder %s563, %s564
      %p576 = scmp.eq.s32.totalorder %s50, 1
      %p577 = por %p575, %p576
      %p579 = scmp.ne.s32.totalorder %s564, %s578
      %p580 = scmp.eq.s32.totalorder %s50, 0
      %p581 = por %p579, %p580
      %s583 = sadd.s32 %s582, 1
      %p586 = scmp.eq.s32.totalorder %s44, 1
      %p587 = scmp.ne.s32.totalorder %s582, %s584
      %p588 = scmp.eq.s32.totalorder %s44, 0
      %p589 = por %p587, %p588
      %p590 = scmp.ne.s32.totalorder %s582, %s584
      %p591 = scmp.eq.s32.totalorder %s49, 1
      %p592 = por %p590, %p591
      %p593 = scmp.ne.s32.totalorder %s584, %s585
      %p594 = scmp.eq.s32.totalorder %s49, 0
      %p595 = por %p593, %p594
      %p596 = scmp.ne.s32.totalorder %s584, %s585
      %p597 = scmp.eq.s32.totalorder %s50, 1
      %p598 = por %p596, %p597
      %p600 = scmp.ne.s32.totalorder %s585, %s599
      %p601 = scmp.eq.s32.totalorder %s50, 0
      %p602 = por %p600, %p601
      %s604 = sadd.s32 %s603, 1
      %p607 = scmp.eq.s32.totalorder %s44, 1
      %p608 = scmp.ne.s32.totalorder %s603, %s605
      %p609 = scmp.eq.s32.totalorder %s44, 0
      %p610 = por %p608, %p609
      %p611 = scmp.ne.s32.totalorder %s603, %s605
      %p612 = scmp.eq.s32.totalorder %s49, 1
      %p613 = por %p611, %p612
      %p614 = scmp.ne.s32.totalorder %s605, %s606
      %p615 = scmp.eq.s32.totalorder %s49, 0
      %p616 = por %p614, %p615
      %p617 = scmp.ne.s32.totalorder %s605, %s606
      %p618 = scmp.eq.s32.totalorder %s50, 1
      %p619 = por %p617, %p618
      %p621 = scmp.ne.s32.totalorder %s606, %s620
      %p622 = scmp.eq.s32.totalorder %s50, 0
      %p623 = por %p621, %p622
      %s624 = ssub.s32 %s44, %s51
      %p625 = scmp.eq.s32.totalorder %s624, 0
      %s627 = sadd.s32 %s626, 1
      %s628 = scalar_select %p625, %s626, %s627
      %p631 = pneg %p625
      %p632 = scmp.eq.s32.totalorder %s44, 1
      %p633 = por %p631, %p632
      %p634 = scmp.ne.s32.totalorder %s626, %s629
      %p635 = scmp.eq.s32.totalorder %s44, 0
      %p636 = por %p634, %p635
      %p637 = scmp.ne.s32.totalorder %s626, %s629
      %p638 = scmp.eq.s32.totalorder %s49, 1
      %p639 = por %p637, %p638
      %p640 = scmp.ne.s32.totalorder %s629, %s630
      %p641 = scmp.eq.s32.totalorder %s49, 0
      %p642 = por %p640, %p641
      %p643 = scmp.ne.s32.totalorder %s629, %s630
      %p644 = scmp.eq.s32.totalorder %s50, 1
      %p645 = por %p643, %p644
      %p647 = scmp.ne.s32.totalorder %s630, %s646
      %p648 = scmp.eq.s32.totalorder %s50, 0
      %p649 = por %p647, %p648
      %p650 = scmp.le.s32.totalorder 1, %s44
      %p651 = scmp.lt.s32.totalorder %s44, 3
      %p652 = pnand %p650, %p651
      %p653 = pneg %p652
      // Predicated region
      $region9: #{tpu_custom_call.1} parent=5 // pred_check
        _
      $region10: #{tpu_custom_call.1} parent=5 // pred_check_branch
        %655 = sbr.rel (%p652) target = $region12
      $region11: #{tpu_custom_call.1} parent=5 // pred_region
        %s656 = ssub.s32 %s44, 1
        // Predicated region
        $region13: #{tpu_custom_call.1} parent=11 // pred_check
          %p657 = pneg %p91
        $region14: #{tpu_custom_call.1} parent=11 // pred_check_branch
          %659 = sbr.rel (%p657) target = $region16
        $region15: #{tpu_custom_call.1} parent=11 // pred_region
          _
        $region16: #{tpu_custom_call.1} parent=11 // pred_fallthru
          _
        // Predicated region
        $region17: #{tpu_custom_call.1} parent=11 // pred_check
          %p660 = pneg %p112
        $region18: #{tpu_custom_call.1} parent=11 // pred_check_branch
          %662 = sbr.rel (%p660) target = $region20
        $region19: #{tpu_custom_call.1} parent=11 // pred_region
          _
        $region20: #{tpu_custom_call.1} parent=11 // pred_fallthru
          _
        // Predicated region
        $region21: #{tpu_custom_call.1} parent=11 // pred_check
          %p663 = pneg %p133
        $region22: #{tpu_custom_call.1} parent=11 // pred_check_branch
          %665 = sbr.rel (%p663) target = $region24
        $region23: #{tpu_custom_call.1} parent=11 // pred_region
          %667 = vsyncadd [#allocation4], 0
          %s669 = sshll.u32 %s3, 4
          %s670 = int_to_ptr.hbm [resolvable:$true] %s669
          %s671 = sshll.u32 [#allocation3], 4
          %s672 = int_to_ptr.vmem [resolvable:$true] %s671
          %674 = dma.hbm_to_vmem [thread:$0]  %s670, 32, %s672, [#allocation4]
        $region24: #{tpu_custom_call.1} parent=11 // pred_fallthru
          _
        // Predicated region
        $region25: #{tpu_custom_call.1} parent=11 // pred_check
          %p675 = pneg %p154
        $region26: #{tpu_custom_call.1} parent=11 // pred_check_branch
          %677 = sbr.rel (%p675) target = $region28
        $region27: #{tpu_custom_call.1} parent=11 // pred_region
          %679 = vsyncadd [#allocation7], 0
          %s680 = sshll.u32 %s4, 4
          %s681 = int_to_ptr.hbm [resolvable:$true] %s680
          %s682 = sshll.u32 [#allocation6], 4
          %s683 = int_to_ptr.vmem [resolvable:$true] %s682
          %688 = dma.hbm_to_vmem [thread:$0]  %s681, 128, %s683, [#allocation7], 64, 64, 4
        $region28: #{tpu_custom_call.1} parent=11 // pred_fallthru
          _
        // Predicated region
        $region29: #{tpu_custom_call.1} parent=11 // pred_check
          %p689 = pneg %p175
        $region30: #{tpu_custom_call.1} parent=11 // pred_check_branch
          %691 = sbr.rel (%p689) target = $region32
        $region31: #{tpu_custom_call.1} parent=11 // pred_region
          _
        $region32: #{tpu_custom_call.1} parent=11 // pred_fallthru
          _
        // Predicated region
        $region33: #{tpu_custom_call.1} parent=11 // pred_check
          %p692 = pneg %p196
        $region34: #{tpu_custom_call.1} parent=11 // pred_check_branch
          %694 = sbr.rel (%p692) target = $region36
        $region35: #{tpu_custom_call.1} parent=11 // pred_region
          _
        $region36: #{tpu_custom_call.1} parent=11 // pred_fallthru
          _
        // Predicated region
        $region37: #{tpu_custom_call.1} parent=11 // pred_check
          %p695 = pneg %p217
        $region38: #{tpu_custom_call.1} parent=11 // pred_check_branch
          %697 = sbr.rel (%p695) target = $region40
        $region39: #{tpu_custom_call.1} parent=11 // pred_region
          _
        $region40: #{tpu_custom_call.1} parent=11 // pred_fallthru
          _
        // Predicated region
        $region41: #{tpu_custom_call.1} parent=11 // pred_check
          %p698 = pneg %p238
        $region42: #{tpu_custom_call.1} parent=11 // pred_check_branch
          %700 = sbr.rel (%p698) target = $region44
        $region43: #{tpu_custom_call.1} parent=11 // pred_region
          %702 = vsyncadd [#allocation7], 0
          %s703 = sshll.u32 %s8, 4
          %s704 = int_to_ptr.hbm [resolvable:$true] %s703
          %s705 = sshll.u32 [#allocation8], 4
          %s706 = int_to_ptr.vmem [resolvable:$true] %s705
          %711 = dma.hbm_to_vmem [thread:$0]  %s704, 32, %s706, [#allocation7], 16, 16, 1
        $region44: #{tpu_custom_call.1} parent=11 // pred_fallthru
          _
        // Predicated region
        $region45: #{tpu_custom_call.1} parent=11 // pred_check
          %p712 = pneg %p259
        $region46: #{tpu_custom_call.1} parent=11 // pred_check_branch
          %714 = sbr.rel (%p712) target = $region48
        $region47: #{tpu_custom_call.1} parent=11 // pred_region
          _
        $region48: #{tpu_custom_call.1} parent=11 // pred_fallthru
          _
        // Predicated region
        $region49: #{tpu_custom_call.1} parent=11 // pred_check
          %p715 = pneg %p280
        $region50: #{tpu_custom_call.1} parent=11 // pred_check_branch
          %717 = sbr.rel (%p715) target = $region52
        $region51: #{tpu_custom_call.1} parent=11 // pred_region
          %719 = vsyncadd [#allocation10], 0
          %s720 = sshll.u32 %s10, 4
          %s721 = int_to_ptr.hbm [resolvable:$true] %s720
          %s722 = sshll.u32 [#allocation9], 4
          %s723 = int_to_ptr.vmem [resolvable:$true] %s722
          %728 = dma.hbm_to_vmem [thread:$0]  %s721, 64, %s723, [#allocation10], 32, 32, 2
        $region52: #{tpu_custom_call.1} parent=11 // pred_fallthru
          _
        // Predicated region
        $region53: #{tpu_custom_call.1} parent=11 // pred_check
          %p729 = pneg %p301
        $region54: #{tpu_custom_call.1} parent=11 // pred_check_branch
          %731 = sbr.rel (%p729) target = $region56
        $region55: #{tpu_custom_call.1} parent=11 // pred_region
          _
        $region56: #{tpu_custom_call.1} parent=11 // pred_fallthru
          _
        // Predicated region
        $region57: #{tpu_custom_call.1} parent=11 // pred_check
          %p732 = pneg %p322
        $region58: #{tpu_custom_call.1} parent=11 // pred_check_branch
          %734 = sbr.rel (%p732) target = $region60
        $region59: #{tpu_custom_call.1} parent=11 // pred_region
          %736 = vsyncadd [#allocation10], 0
          %s737 = sshll.u32 %s12, 4
          %s738 = int_to_ptr.hbm [resolvable:$true] %s737
          %s739 = sshll.u32 [#allocation11], 4
          %s740 = int_to_ptr.vmem [resolvable:$true] %s739
          %745 = dma.hbm_to_vmem [thread:$0]  %s738, 32, %s740, [#allocation10], 16, 16, 1
        $region60: #{tpu_custom_call.1} parent=11 // pred_fallthru
          _
        // Predicated region
        $region61: #{tpu_custom_call.1} parent=11 // pred_check
          %p746 = pneg %p343
        $region62: #{tpu_custom_call.1} parent=11 // pred_check_branch
          %748 = sbr.rel (%p746) target = $region64
        $region63: #{tpu_custom_call.1} parent=11 // pred_region
          %750 = vsyncadd [#allocation13], 0
          %s752 = sshll.u32 %s13, 4
          %s753 = int_to_ptr.hbm [resolvable:$true] %s752
          %s754 = sshll.u32 [#allocation12], 4
          %s755 = int_to_ptr.vmem [resolvable:$true] %s754
          %757 = dma.hbm_to_vmem [thread:$0]  %s753, 16, %s755, [#allocation13]
        $region64: #{tpu_custom_call.1} parent=11 // pred_fallthru
          _
        // Predicated region
        $region65: #{tpu_custom_call.1} parent=11 // pred_check
          %p758 = pneg %p364
        $region66: #{tpu_custom_call.1} parent=11 // pred_check_branch
          %760 = sbr.rel (%p758) target = $region68
        $region67: #{tpu_custom_call.1} parent=11 // pred_region
          _
        $region68: #{tpu_custom_call.1} parent=11 // pred_fallthru
          _
        // Predicated region
        $region69: #{tpu_custom_call.1} parent=11 // pred_check
          %p761 = pneg %p385
        $region70: #{tpu_custom_call.1} parent=11 // pred_check_branch
          %763 = sbr.rel (%p761) target = $region72
        $region71: #{tpu_custom_call.1} parent=11 // pred_region
          %765 = vsyncadd [#allocation13], 0
          %s766 = sshll.u32 %s15, 4
          %s767 = int_to_ptr.hbm [resolvable:$true] %s766
          %s768 = sshll.u32 [#allocation14], 4
          %s769 = int_to_ptr.vmem [resolvable:$true] %s768
          %774 = dma.hbm_to_vmem [thread:$0]  %s767, 192, %s769, [#allocation13], 64, 64, 4
        $region72: #{tpu_custom_call.1} parent=11 // pred_fallthru
          _
        // Predicated region
        $region73: #{tpu_custom_call.1} parent=11 // pred_check
          %p775 = pneg %p406
        $region74: #{tpu_custom_call.1} parent=11 // pred_check_branch
          %777 = sbr.rel (%p775) target = $region76
        $region75: #{tpu_custom_call.1} parent=11 // pred_region
          _
        $region76: #{tpu_custom_call.1} parent=11 // pred_fallthru
          _
        // Predicated region
        $region77: #{tpu_custom_call.1} parent=11 // pred_check
          %p778 = pneg %p427
        $region78: #{tpu_custom_call.1} parent=11 // pred_check_branch
          %780 = sbr.rel (%p778) target = $region80
        $region79: #{tpu_custom_call.1} parent=11 // pred_region
          %782 = vsyncadd [#allocation16], 0
          %s783 = sshll.u32 %s17, 4
          %s784 = int_to_ptr.hbm [resolvable:$true] %s783
          %s785 = sshll.u32 [#allocation15], 4
          %s786 = int_to_ptr.vmem [resolvable:$true] %s785
          %791 = dma.hbm_to_vmem [thread:$0]  %s784, 48, %s786, [#allocation16], 16, 16, 1
        $region80: #{tpu_custom_call.1} parent=11 // pred_fallthru
          _
        // Predicated region
        $region81: #{tpu_custom_call.1} parent=11 // pred_check
          %p792 = pneg %p448
        $region82: #{tpu_custom_call.1} parent=11 // pred_check_branch
          %794 = sbr.rel (%p792) target = $region84
        $region83: #{tpu_custom_call.1} parent=11 // pred_region
          _
        $region84: #{tpu_custom_call.1} parent=11 // pred_fallthru
          _
        // Predicated region
        $region85: #{tpu_custom_call.1} parent=11 // pred_check
          %p795 = pneg %p469
        $region86: #{tpu_custom_call.1} parent=11 // pred_check_branch
          %797 = sbr.rel (%p795) target = $region88
        $region87: #{tpu_custom_call.1} parent=11 // pred_region
          %799 = vsyncadd [#allocation16], 0
          %s800 = sshll.u32 %s19, 4
          %s801 = int_to_ptr.hbm [resolvable:$true] %s800
          %s802 = sshll.u32 [#allocation17], 4
          %s803 = int_to_ptr.vmem [resolvable:$true] %s802
          %808 = dma.hbm_to_vmem [thread:$0]  %s801, 48, %s803, [#allocation16], 16, 16, 1
        $region88: #{tpu_custom_call.1} parent=11 // pred_fallthru
          _
        // Predicated region
        $region89: #{tpu_custom_call.1} parent=11 // pred_check
          %p809 = pneg %p490
        $region90: #{tpu_custom_call.1} parent=11 // pred_check_branch
          %811 = sbr.rel (%p809) target = $region92
        $region91: #{tpu_custom_call.1} parent=11 // pred_region
          _
        $region92: #{tpu_custom_call.1} parent=11 // pred_fallthru
          _
        // Predicated region
        $region93: #{tpu_custom_call.1} parent=11 // pred_check
          %p812 = pneg %p511
        $region94: #{tpu_custom_call.1} parent=11 // pred_check_branch
          %814 = sbr.rel (%p812) target = $region96
        $region95: #{tpu_custom_call.1} parent=11 // pred_region
          %816 = vsyncadd [#allocation19], 0
          %s817 = sshll.u32 %s21, 4
          %s818 = int_to_ptr.hbm [resolvable:$true] %s817
          %s819 = sshll.u32 [#allocation18], 4
          %s820 = int_to_ptr.vmem [resolvable:$true] %s819
          %825 = dma.hbm_to_vmem [thread:$0]  %s818, 96, %s820, [#allocation19], 32, 32, 2
        $region96: #{tpu_custom_call.1} parent=11 // pred_fallthru
          _
        // Predicated region
        $region97: #{tpu_custom_call.1} parent=11 // pred_check
          %p826 = pneg %p532
        $region98: #{tpu_custom_call.1} parent=11 // pred_check_branch
          %828 = sbr.rel (%p826) target = $region100
        $region99: #{tpu_custom_call.1} parent=11 // pred_region
          _
        $region100: #{tpu_custom_call.1} parent=11 // pred_fallthru
          _
        // Predicated region
        $region101: #{tpu_custom_call.1} parent=11 // pred_check
          %p829 = pneg %p553
        $region102: #{tpu_custom_call.1} parent=11 // pred_check_branch
          %831 = sbr.rel (%p829) target = $region104
        $region103: #{tpu_custom_call.1} parent=11 // pred_region
          _
        $region104: #{tpu_custom_call.1} parent=11 // pred_fallthru
          _
        // Predicated region
        $region105: #{tpu_custom_call.1} parent=11 // pred_check
          %p832 = pneg %p574
        $region106: #{tpu_custom_call.1} parent=11 // pred_check_branch
          %834 = sbr.rel (%p832) target = $region108
        $region107: #{tpu_custom_call.1} parent=11 // pred_region
          _
        $region108: #{tpu_custom_call.1} parent=11 // pred_fallthru
          _
        // Predicated region
        $region109: #{tpu_custom_call.1} parent=11 // pred_check
          %p835 = pneg %p595
        $region110: #{tpu_custom_call.1} parent=11 // pred_check_branch
          %837 = sbr.rel (%p835) target = $region112
        $region111: #{tpu_custom_call.1} parent=11 // pred_region
          _
        $region112: #{tpu_custom_call.1} parent=11 // pred_fallthru
          _
        // Predicated region
        $region113: #{tpu_custom_call.1} parent=11 // pred_check
          %p838 = pneg %p616
        $region114: #{tpu_custom_call.1} parent=11 // pred_check_branch
          %840 = sbr.rel (%p838) target = $region116
        $region115: #{tpu_custom_call.1} parent=11 // pred_region
          _
        $region116: #{tpu_custom_call.1} parent=11 // pred_fallthru
          _
      $region12: #{tpu_custom_call.1} parent=5 // pred_fallthru
        _
      %p841 = scmp.lt.s32.totalorder %s44, 2
      // Predicated region
      $region117: #{tpu_custom_call.1} parent=5 // pred_check
        %p842 = pneg %p841
      $region118: #{tpu_custom_call.1} parent=5 // pred_check_branch
        %844 = sbr.rel (%p842) target = $region120
      $region119: #{tpu_custom_call.1} parent=5 // pred_region
        // Predicated region
        $region121: #{tpu_custom_call.1} parent=119 // pred_check
          %p845 = pneg %p64
        $region122: #{tpu_custom_call.1} parent=119 // pred_check_branch
          %847 = sbr.rel (%p845) target = $region124
        $region123: #{tpu_custom_call.1} parent=119 // pred_region
          %p848 = scmp.lt.s32.totalorder %s44, 1
          %s849 = scalar_select %p848, %s44, 1
          %s850 = smul.addr %s849, 6
          %s851 = smul.addr %s850, 4
          %s852 = scalar_lea.vmem %s0, %s851
        $region124: #{tpu_custom_call.1} parent=119 // pred_fallthru
          _
      $region120: #{tpu_custom_call.1} parent=5 // pred_fallthru
        _
      %p853 = scmp.le.s32.totalorder 1, %s44
      %p854 = scmp.lt.s32.totalorder %s44, 3
      %p855 = pnand %p853, %p854
      %p856 = pneg %p855
      // Predicated region
      $region125: #{tpu_custom_call.1} parent=5 // pred_check
        _
      $region126: #{tpu_custom_call.1} parent=5 // pred_check_branch
        %858 = sbr.rel (%p855) target = $region128
      $region127: #{tpu_custom_call.1} parent=5 // pred_region
        %s859 = ssub.s32 %s44, 1
        // Predicated region
        $region129: #{tpu_custom_call.1} parent=127 // pred_check
          %p860 = pneg %p133
        $region130: #{tpu_custom_call.1} parent=127 // pred_check_branch
          %862 = sbr.rel (%p860) target = $region132
        $region131: #{tpu_custom_call.1} parent=127 // pred_region
          %864 = dma.done [#allocation4], 32
        $region132: #{tpu_custom_call.1} parent=127 // pred_fallthru
          _
        // Predicated region
        $region133: #{tpu_custom_call.1} parent=127 // pred_check
          %p865 = pneg %p154
        $region134: #{tpu_custom_call.1} parent=127 // pred_check_branch
          %867 = sbr.rel (%p865) target = $region136
        $region135: #{tpu_custom_call.1} parent=127 // pred_region
          %869 = dma.done [#allocation7], 128
        $region136: #{tpu_custom_call.1} parent=127 // pred_fallthru
          _
        // Predicated region
        $region137: #{tpu_custom_call.1} parent=127 // pred_check
          %p870 = pneg %p238
        $region138: #{tpu_custom_call.1} parent=127 // pred_check_branch
          %872 = sbr.rel (%p870) target = $region140
        $region139: #{tpu_custom_call.1} parent=127 // pred_region
          %874 = dma.done [#allocation7], 32
        $region140: #{tpu_custom_call.1} parent=127 // pred_fallthru
          _
        // Predicated region
        $region141: #{tpu_custom_call.1} parent=127 // pred_check
          %p875 = pneg %p280
        $region142: #{tpu_custom_call.1} parent=127 // pred_check_branch
          %877 = sbr.rel (%p875) target = $region144
        $region143: #{tpu_custom_call.1} parent=127 // pred_region
          %879 = dma.done [#allocation10], 64
        $region144: #{tpu_custom_call.1} parent=127 // pred_fallthru
          _
        // Predicated region
        $region145: #{tpu_custom_call.1} parent=127 // pred_check
          %p880 = pneg %p322
        $region146: #{tpu_custom_call.1} parent=127 // pred_check_branch
          %882 = sbr.rel (%p880) target = $region148
        $region147: #{tpu_custom_call.1} parent=127 // pred_region
          %884 = dma.done [#allocation10], 32
        $region148: #{tpu_custom_call.1} parent=127 // pred_fallthru
          _
        // Predicated region
        $region149: #{tpu_custom_call.1} parent=127 // pred_check
          %p885 = pneg %p343
        $region150: #{tpu_custom_call.1} parent=127 // pred_check_branch
          %887 = sbr.rel (%p885) target = $region152
        $region151: #{tpu_custom_call.1} parent=127 // pred_region
          %889 = dma.done [#allocation13], 16
        $region152: #{tpu_custom_call.1} parent=127 // pred_fallthru
          _
        // Predicated region
        $region153: #{tpu_custom_call.1} parent=127 // pred_check
          %p890 = pneg %p385
        $region154: #{tpu_custom_call.1} parent=127 // pred_check_branch
          %892 = sbr.rel (%p890) target = $region156
        $region155: #{tpu_custom_call.1} parent=127 // pred_region
          %894 = dma.done [#allocation13], 192
        $region156: #{tpu_custom_call.1} parent=127 // pred_fallthru
          _
        // Predicated region
        $region157: #{tpu_custom_call.1} parent=127 // pred_check
          %p895 = pneg %p427
        $region158: #{tpu_custom_call.1} parent=127 // pred_check_branch
          %897 = sbr.rel (%p895) target = $region160
        $region159: #{tpu_custom_call.1} parent=127 // pred_region
          %899 = dma.done [#allocation16], 48
        $region160: #{tpu_custom_call.1} parent=127 // pred_fallthru
          _
        // Predicated region
        $region161: #{tpu_custom_call.1} parent=127 // pred_check
          %p900 = pneg %p469
        $region162: #{tpu_custom_call.1} parent=127 // pred_check_branch
          %902 = sbr.rel (%p900) target = $region164
        $region163: #{tpu_custom_call.1} parent=127 // pred_region
          %904 = dma.done [#allocation16], 48
        $region164: #{tpu_custom_call.1} parent=127 // pred_fallthru
          _
        // Predicated region
        $region165: #{tpu_custom_call.1} parent=127 // pred_check
          %p905 = pneg %p511
        $region166: #{tpu_custom_call.1} parent=127 // pred_check_branch
          %907 = sbr.rel (%p905) target = $region168
        $region167: #{tpu_custom_call.1} parent=127 // pred_region
          %909 = dma.done [#allocation19], 96
        $region168: #{tpu_custom_call.1} parent=127 // pred_fallthru
          _
        %p910 = scmp.lt.s32.totalorder %s49, 1
        %s911 = scalar_select %p910, %s49, 1
        %s912 = smul.addr %s911, 6
        %s913 = smul.addr %s912, 4
        %s914 = scalar_lea.vmem %s0, %s913
        %p915 = pneg %p70
        %p916 = pneg %p67
        %p917 = pneg %p91
        %p918 = pneg %p88
        %p919 = pneg %p112
        %p920 = pneg %p109
        %p921 = pneg %p133
        %p922 = pneg %p130
        %p923 = pneg %p154
        %p924 = pneg %p151
        %p925 = pneg %p175
        %p926 = pneg %p172
        %p927 = pneg %p196
        %p928 = pneg %p193
        %p929 = pneg %p217
        %p930 = pneg %p214
        %p931 = pneg %p238
        %p932 = pneg %p235
        %p933 = pneg %p259
        %p934 = pneg %p256
        %p935 = pneg %p280
        %p936 = pneg %p277
        %p937 = pneg %p301
        %p938 = pneg %p298
        %p939 = pneg %p322
        %p940 = pneg %p319
        %p941 = pneg %p343
        %p942 = pneg %p340
        %p943 = pneg %p364
        %p944 = pneg %p361
        %p945 = pneg %p385
        %p946 = pneg %p382
        %p947 = pneg %p406
        %p948 = pneg %p403
        %p949 = pneg %p427
        %p950 = pneg %p424
        %p951 = pneg %p448
        %p952 = pneg %p445
        %p953 = pneg %p469
        %p954 = pneg %p466
        %p955 = pneg %p490
        %p956 = pneg %p487
        %p957 = pneg %p511
        %p958 = pneg %p508
        %p959 = pneg %p532
        %p960 = pneg %p529
        %p961 = pneg %p553
        %p962 = pneg %p550
        %p963 = pneg %p574
        %p964 = pneg %p571
        %p965 = pneg %p595
        %p966 = pneg %p592
        %p967 = pneg %p616
        %p968 = pneg %p613
        %p969 = pneg %p642
        %p970 = pneg %p639
        %s971 = sand.u32 %s629, 1
        %s972 = scalar_lea.sflag [#allocation5], %s971
        %s973 = sand.u32 %s629, 1
        %s974 = scalar_lea.vmem [#allocation20], %s973
        %p975 = scmp.lt.s32.totalorder %s49, 1
        %s976 = scalar_select %p975, %s49, 1
        %s977 = smul.addr %s976, 6
        %s978 = smul.addr %s977, 4
        %s979 = scalar_lea.vmem %s0, %s978
        %v981 = vld [vmem:[%s979] sm:$0xff]
        %v982 = vld [vmem:[%s979 + $0x8] sm:$0xff]
        %v983 = vld [vmem:[%s979 + $0x10] sm:$0xff]
        %v984 = vld [vmem:[%s1] sm:$0xf]
        %v985 = vld [vmem:[%s1 + $0x4] sm:$0xf]
        %v986 = vld [vmem:[%s1 + $0x8] sm:$0xf]
        %v987 = vld [vmem:[%s1 + $0xc] sm:$0xf]
        %v988 = vld [vmem:[%s1 + $0x10] sm:$0xf]
        %v989 = vld [vmem:[%s1 + $0x14] sm:$0xf]
        %v990 = vld [vmem:[%s1 + $0x18] sm:$0xf]
        %v991 = vld [vmem:[%s1 + $0x1c] sm:$0xf]
        %v992 = vld [vmem:[%s1 + $0x20] sm:$0xf]
        %v993 = vld [vmem:[%s1 + $0x24] sm:$0xf]
        %v994 = vld [vmem:[%s1 + $0x28] sm:$0xf]
        %v995 = vld [vmem:[%s1 + $0x2c] sm:$0xf]
        %v996 = vld [vmem:[%s1 + $0x30] sm:$0xf]
        %v997 = vld [vmem:[%s1 + $0x34] sm:$0xf]
        %v998 = vld [vmem:[%s1 + $0x38] sm:$0xf]
        %v999 = vld [vmem:[%s1 + $0x3c] sm:$0xf]
        %v1000 = vld [vmem:[%s1 + $0x40] sm:$0xf]
        %v1001 = vld [vmem:[%s1 + $0x44] sm:$0xf]
        %v1002 = vld [vmem:[%s1 + $0x48] sm:$0xf]
        %v1003 = vld [vmem:[%s1 + $0x4c] sm:$0xf]
        %v1004 = vld [vmem:[%s1 + $0x50] sm:$0xf]
        %v1005 = vld [vmem:[%s1 + $0x54] sm:$0xf]
        %v1006 = vld [vmem:[%s1 + $0x58] sm:$0xf]
        %v1007 = vld [vmem:[%s1 + $0x5c] sm:$0xf]
        %v1008 = vld [vmem:[%s2] sm:$0xff]
        %v1009 = vld [vmem:[%s2 + $0x8] sm:$0xff]
        %v1010 = vld [vmem:[%s2 + $0x10] sm:$0xff]
        %v1014 = vunpack.c.l.b16 %v981
        %v1015 = vunpack.c.h.b16 %v981
        %v1016 = vunpack.c.l.b16 %v982
        %v1017 = vunpack.c.h.b16 %v982
        %v1018 = vunpack.c.l.b16 %v983
        %v1019 = vunpack.c.h.b16 %v983
        %v1020 = vpack.c.b16 %v1016, %v1014
        %v1021 = vpack.c.b16 %v1017, %v1015
        %v1022 = vpack.c.b16 %v1018, %v1018
        %v1023 = vpack.c.b16 %v1019, %v1019
        %v1050 = vunpack.c.l.b16 %v984
        %v1051 = vunpack.c.l.b16 %v985
        %v1052 = vunpack.c.l.b16 %v986
        %v1053 = vunpack.c.l.b16 %v987
        %v1054 = vunpack.c.l.b16 %v988
        %v1055 = vunpack.c.l.b16 %v989
        %v1056 = vunpack.c.l.b16 %v990
        %v1057 = vunpack.c.l.b16 %v991
        %v1058 = vunpack.c.l.b16 %v992
        %v1059 = vunpack.c.l.b16 %v993
        %v1060 = vunpack.c.l.b16 %v994
        %v1061 = vunpack.c.l.b16 %v995
        %v1062 = vunpack.c.l.b16 %v996
        %v1063 = vunpack.c.l.b16 %v997
        %v1064 = vunpack.c.l.b16 %v998
        %v1065 = vunpack.c.l.b16 %v999
        %v1066 = vunpack.c.l.b16 %v1000
        %v1067 = vunpack.c.l.b16 %v1001
        %v1068 = vunpack.c.l.b16 %v1002
        %v1069 = vunpack.c.l.b16 %v1003
        %v1070 = vunpack.c.l.b16 %v1004
        %v1071 = vunpack.c.l.b16 %v1005
        %v1072 = vunpack.c.l.b16 %v1006
        %v1073 = vunpack.c.l.b16 %v1007
        %v1074 = vpack.c.b16 %v1051, %v1050
        %v1075 = vpack.c.b16 %v1053, %v1052
        %v1076 = vpack.c.b16 %v1055, %v1054
        %v1077 = vpack.c.b16 %v1057, %v1056
        %v1078 = vpack.c.b16 %v1059, %v1058
        %v1079 = vpack.c.b16 %v1061, %v1060
        %v1080 = vpack.c.b16 %v1063, %v1062
        %v1081 = vpack.c.b16 %v1065, %v1064
        %v1082 = vpack.c.b16 %v1067, %v1066
        %v1083 = vpack.c.b16 %v1069, %v1068
        %v1084 = vpack.c.b16 %v1071, %v1070
        %v1085 = vpack.c.b16 %v1073, %v1072
        %vm1098 = vcmask 523264
        %v1100 = vsel %vm1098, %v1021, 0
        %v1103 = vsel %vm1098, %v1023, 0
        %1105 = vmatpush.bf16.msra.mxu0 %v1081
        %1106 = vmatpush.bf16.msra.mxu0 %v1080
        %1107 = vmatpush.bf16.msra.mxu0 %v1079
        %1108 = vmatpush.bf16.msra.mxu0 %v1078
        %1109 = vmatpush.bf16.msra.mxu0 %v1077
        %1110 = vmatpush.bf16.msra.mxu0 %v1076
        %1111 = vmatpush.bf16.msra.mxu0 %v1075
        %1112 = vmatpush.bf16.msra.mxu0 %v1074
        %1113 = vmatmul.bf16.gmra.mxu0 %v1020
        %v1114 = vpop.f32.mrf.mxu0
        %v1115 = vadd.f32 %v1008, %v1114
        %v1116 = vpop.f32.mrf.mxu0
        %v1117 = vadd.f32 %v1009, %v1116
        %1118 = vmatmul.bf16.gmra.mxu0 %v1022
        %v1119 = vpop.f32.mrf.mxu0
        %v1120 = vadd.f32 %v1010, %v1119
        %v1121 = vpop.f32.mrf.mxu0
        %1122 = vdwg.mxu0
        %1123 = vmatpush.bf16.msra.mxu0 0
        %1124 = vmatpush.bf16.msra.mxu0 0
        %1125 = vmatpush.bf16.msra.mxu0 0
        %1126 = vmatpush.bf16.msra.mxu0 0
        %1127 = vmatpush.bf16.msra.mxu0 %v1085
        %1128 = vmatpush.bf16.msra.mxu0 %v1084
        %1129 = vmatpush.bf16.msra.mxu0 %v1083
        %1130 = vmatpush.bf16.msra.mxu0 %v1082
        %1131 = vmatmul.bf16.gmra.mxu0 %v1100
        %v1132 = vpop.f32.mrf.mxu0
        %v1133 = vadd.f32 %v1115, %v1132
        %v1134 = vpop.f32.mrf.mxu0
        %v1135 = vadd.f32 %v1117, %v1134
        %1136 = vmatmul.bf16.gmra.mxu0 %v1103
        %v1137 = vpop.f32.mrf.mxu0
        %v1138 = vadd.f32 %v1120, %v1137
        %v1139 = vpop.f32.mrf.mxu0
        %1140 = vdwg.mxu0
        %v1141 = vlaneseq
        %v1142 = vand.u32 %v1141, 127
        %vm1143 = vcmp.lt.s32.totalorder %v1142, 17
        %v1144 = vsel %vm1143, 0.0, -1e+30
        %v1145 = vld [vmem:[#allocation3] sm:$0x1]
        %v1146 = vld [vmem:[#allocation3 + $0x1] sm:$0x1]
        %v1147 = vsel %vm1098, %v1133, 0.0
        %1148 = vadd.xlane.f32.xlu0 %v1147
        %v1149 = vpop.xlane.xlu0 %1148
        %v1150 = vsel %vm1098, %v1135, 0.0
        %1151 = vadd.xlane.f32.xlu0 %v1150
        %v1152 = vpop.xlane.xlu0 %1151
        %v1153 = vsel %vm1098, %v1138, 0.0
        %1154 = vadd.xlane.f32.xlu0 %v1153
        %v1155 = vpop.xlane.xlu0 %1154
        %v1156 = vrcp.pop 64.0
        %v1157 = vmul.f32 64.0, %v1156
        %v1158 = vsub.f32 1.0, %v1157
        %v1159 = vmul.f32 %v1156, %v1158
        %v1160 = vadd.f32 %v1156, %v1159
        %vm1161 = vweird.f32 %v1156
        %v1162 = vsel %vm1161, %v1156, %v1160
        %v1163 = vmul.f32 %v1149, %v1162
        %v1164 = vmul.f32 %v1152, %v1162
        %v1165 = vmul.f32 %v1155, %v1162
        %v1166 = vsub.f32 %v1133, %v1163
        %v1167 = vsub.f32 %v1135, %v1164
        %v1168 = vsub.f32 %v1138, %v1165
        %v1169 = vmul.f32 %v1166, %v1166
        %v1170 = vmul.f32 %v1167, %v1167
        %v1171 = vmul.f32 %v1168, %v1168
        %v1172 = vsel %vm1098, %v1169, 0.0
        %1173 = vadd.xlane.f32.xlu0 %v1172
        %v1174 = vpop.xlane.xlu0 %1173
        %v1175 = vsel %vm1098, %v1170, 0.0
        %1176 = vadd.xlane.f32.xlu0 %v1175
        %v1177 = vpop.xlane.xlu0 %1176
        %v1178 = vsel %vm1098, %v1171, 0.0
        %1179 = vadd.xlane.f32.xlu0 %v1178
        %v1180 = vpop.xlane.xlu0 %1179
        %v1181 = vmul.f32 %v1174, %v1162
        %v1182 = vmul.f32 %v1177, %v1162
        %v1183 = vmul.f32 %v1180, %v1162
        %v1184 = vadd.f32 %v1181, 1e-05
        %v1185 = vadd.f32 %v1182, 1e-05
        %v1186 = vadd.f32 %v1183, 1e-05
        %v1187 = vrsqrt.pop %v1184
        %v1188 = vmul.f32 %v1187, %v1184
        %v1189 = vmul.f32 %v1188, %v1187
        %v1190 = vmul.f32 0.5, %v1189
        %v1191 = vsub.f32 1.5, %v1190
        %v1192 = vmul.f32 %v1187, %v1191
        %vm1193 = vweird.f32 %v1184
        %vm1194 = vweird.f32 %v1187
        %vm1195 = vmor %vm1193, %vm1194
        %v1196 = vsel %vm1195, %v1187, %v1192
        %v1197 = vrsqrt.pop %v1185
        %v1198 = vmul.f32 %v1197, %v1185
        %v1199 = vmul.f32 %v1198, %v1197
        %v1200 = vmul.f32 0.5, %v1199
        %v1201 = vsub.f32 1.5, %v1200
        %v1202 = vmul.f32 %v1197, %v1201
        %vm1203 = vweird.f32 %v1185
        %vm1204 = vweird.f32 %v1197
        %vm1205 = vmor %vm1203, %vm1204
        %v1206 = vsel %vm1205, %v1197, %v1202
        %v1207 = vrsqrt.pop %v1186
        %v1208 = vmul.f32 %v1207, %v1186
        %v1209 = vmul.f32 %v1208, %v1207
        %v1210 = vmul.f32 0.5, %v1209
        %v1211 = vsub.f32 1.5, %v1210
        %v1212 = vmul.f32 %v1207, %v1211
        %vm1213 = vweird.f32 %v1186
        %vm1214 = vweird.f32 %v1207
        %vm1215 = vmor %vm1213, %vm1214
        %v1216 = vsel %vm1215, %v1207, %v1212
        %v1217 = vmul.f32 %v1166, %v1196
        %v1218 = vmul.f32 %v1167, %v1206
        %v1219 = vmul.f32 %v1168, %v1216
        %v1220 = vperm.slane %v1145, 0
        %v1221 = vmul.f32 %v1217, %v1220
        %v1222 = vmul.f32 %v1218, %v1220
        %v1223 = vmul.f32 %v1219, %v1220
        %v1224 = vperm.slane %v1146, 0
        %v1225 = vadd.f32 %v1221, %v1224
        %v1226 = vadd.f32 %v1222, %v1224
        %v1227 = vadd.f32 %v1223, %v1224
        %v1228 = vld [vmem:[#allocation6] sm:$0xf]
        %v1229 = vsel %vm1098, %v1225, 0.0
        %1230 = vadd.xlane.f32.xlu0 %v1229
        %v1231 = vpop.xlane.xlu0 %1230
        %v1232 = vsel %vm1098, %v1226, 0.0
        %1233 = vadd.xlane.f32.xlu0 %v1232
        %v1234 = vpop.xlane.xlu0 %1233
        %v1235 = vsel %vm1098, %v1227, 0.0
        %1236 = vadd.xlane.f32.xlu0 %v1235
        %v1237 = vpop.xlane.xlu0 %1236
        %v1238 = vmul.f32 %v1231, %v1162
        %v1239 = vmul.f32 %v1234, %v1162
        %v1240 = vmul.f32 %v1237, %v1162
        %v1241 = vsub.f32 %v1225, %v1238
        %v1242 = vsub.f32 %v1226, %v1239
        %v1243 = vsub.f32 %v1227, %v1240
        %v1244 = vmul.f32 %v1241, %v1241
        %v1245 = vmul.f32 %v1242, %v1242
        %v1246 = vmul.f32 %v1243, %v1243
        %v1247 = vsel %vm1098, %v1244, 0.0
        %1248 = vadd.xlane.f32.xlu0 %v1247
        %v1249 = vpop.xlane.xlu0 %1248
        %v1250 = vsel %vm1098, %v1245, 0.0
        %1251 = vadd.xlane.f32.xlu0 %v1250
        %v1252 = vpop.xlane.xlu0 %1251
        %v1253 = vsel %vm1098, %v1246, 0.0
        %1254 = vadd.xlane.f32.xlu0 %v1253
        %v1255 = vpop.xlane.xlu0 %1254
        %v1256 = vmul.f32 %v1249, %v1162
        %v1257 = vmul.f32 %v1252, %v1162
        %v1258 = vmul.f32 %v1255, %v1162
        %v1259 = vadd.f32 %v1256, 1e-05
        %v1260 = vadd.f32 %v1257, 1e-05
        %v1261 = vadd.f32 %v1258, 1e-05
        %v1262 = vrsqrt.pop %v1259
        %v1263 = vmul.f32 %v1262, %v1259
        %v1264 = vmul.f32 %v1263, %v1262
        %v1265 = vmul.f32 0.5, %v1264
        %v1266 = vsub.f32 1.5, %v1265
        %v1267 = vmul.f32 %v1262, %v1266
        %vm1268 = vweird.f32 %v1259
        %vm1269 = vweird.f32 %v1262
        %vm1270 = vmor %vm1268, %vm1269
        %v1271 = vsel %vm1270, %v1262, %v1267
        %v1272 = vrsqrt.pop %v1260
        %v1273 = vmul.f32 %v1272, %v1260
        %v1274 = vmul.f32 %v1273, %v1272
        %v1275 = vmul.f32 0.5, %v1274
        %v1276 = vsub.f32 1.5, %v1275
        %v1277 = vmul.f32 %v1272, %v1276
        %vm1278 = vweird.f32 %v1260
        %vm1279 = vweird.f32 %v1272
        %vm1280 = vmor %vm1278, %vm1279
        %v1281 = vsel %vm1280, %v1272, %v1277
        %v1282 = vrsqrt.pop %v1261
        %v1283 = vmul.f32 %v1282, %v1261
        %v1284 = vmul.f32 %v1283, %v1282
        %v1285 = vmul.f32 0.5, %v1284
        %v1286 = vsub.f32 1.5, %v1285
        %v1287 = vmul.f32 %v1282, %v1286
        %vm1288 = vweird.f32 %v1261
        %vm1289 = vweird.f32 %v1282
        %vm1290 = vmor %vm1288, %vm1289
        %v1291 = vsel %vm1290, %v1282, %v1287
        %v1292 = vmul.f32 %v1241, %v1271
        %v1293 = vmul.f32 %v1242, %v1281
        %v1294 = vmul.f32 %v1243, %v1291
        %v1295 = vperm.slane %v1228, 0
        %v1296 = vmul.f32 %v1292, %v1295
        %v1297 = vmul.f32 %v1293, %v1295
        %v1298 = vmul.f32 %v1294, %v1295
        %v1299 = vperm.slane %v1228, 1
        %v1300 = vadd.f32 %v1296, %v1299
        %v1301 = vadd.f32 %v1297, %v1299
        %v1302 = vadd.f32 %v1298, %v1299
        %v1303 = vld [vmem:[%s5] sm:$0xff]
        %v1304 = vld [vmem:[%s5 + $0x8] sm:$0xff]
        %v1305 = vld [vmem:[%s5 + $0x10] sm:$0xff]
        %v1306 = vld [vmem:[%s5 + $0x18] sm:$0xff]
        %v1307 = vld [vmem:[%s5 + $0x20] sm:$0xff]
        %v1308 = vld [vmem:[%s5 + $0x28] sm:$0xff]
        %v1309 = vld [vmem:[%s5 + $0x30] sm:$0xff]
        %v1310 = vld [vmem:[%s5 + $0x38] sm:$0xff]
        %v1311 = vld [vmem:[%s6] sm:$0x3]
        %v1312 = vld [vmem:[%s7] sm:$0xf]
        %v1313 = vld [vmem:[%s7 + $0x4] sm:$0xf]
        %v1314 = vld [vmem:[%s7 + $0x8] sm:$0xf]
        %v1315 = vld [vmem:[%s7 + $0xc] sm:$0xf]
        %v1316 = vld [vmem:[%s7 + $0x10] sm:$0xf]
        %v1317 = vld [vmem:[%s7 + $0x14] sm:$0xf]
        %v1318 = vld [vmem:[%s7 + $0x18] sm:$0xf]
        %v1319 = vld [vmem:[%s7 + $0x1c] sm:$0xf]
        %v1320 = vld [vmem:[#allocation8] sm:$0x1]
        %v1321 = vpack.c.bf16 %v1301, %v1300
        %v1322 = vpack.c.bf16 %v1302, %v1302
        %v1324 = vperm.slane %v1311, 0
        %v1325 = vperm.slane %v1311, 1
        %v1336 = vunpack.c.l.b16 %v1303
        %v1337 = vunpack.c.h.b16 %v1303
        %v1338 = vunpack.c.l.b16 %v1304
        %v1339 = vunpack.c.h.b16 %v1304
        %v1340 = vunpack.c.l.b16 %v1305
        %v1341 = vunpack.c.h.b16 %v1305
        %v1342 = vunpack.c.l.b16 %v1306
        %v1343 = vunpack.c.h.b16 %v1306
        %v1344 = vunpack.c.l.b16 %v1307
        %v1345 = vunpack.c.h.b16 %v1307
        %v1346 = vunpack.c.l.b16 %v1308
        %v1347 = vunpack.c.h.b16 %v1308
        %v1348 = vunpack.c.l.b16 %v1309
        %v1349 = vunpack.c.h.b16 %v1309
        %v1350 = vunpack.c.l.b16 %v1310
        %v1351 = vunpack.c.h.b16 %v1310
        %v1352 = vpack.c.b16 %v1338, %v1336
        %v1353 = vpack.c.b16 %v1339, %v1337
        %v1354 = vpack.c.b16 %v1342, %v1340
        %v1355 = vpack.c.b16 %v1343, %v1341
        %v1356 = vpack.c.b16 %v1346, %v1344
        %v1357 = vpack.c.b16 %v1347, %v1345
        %v1358 = vpack.c.b16 %v1350, %v1348
        %v1359 = vpack.c.b16 %v1351, %v1349
        %v1369 = vsel %vm1098, %v1321, 0
        %v1372 = vsel %vm1098, %v1322, 0
        %1374 = vmatpush.bf16.msra.mxu0 0
        %1375 = vmatpush.bf16.msra.mxu0 0
        %1376 = vmatpush.bf16.msra.mxu0 0
        %1377 = vmatpush.bf16.msra.mxu0 0
        %1378 = vmatpush.bf16.msra.mxu0 %v1358
        %1379 = vmatpush.bf16.msra.mxu0 %v1356
        %1380 = vmatpush.bf16.msra.mxu0 %v1354
        %1381 = vmatpush.bf16.msra.mxu0 %v1352
        %1382 = vmatmul.bf16.gmra.mxu0 %v1369
        %v1383 = vpop.f32.mrf.mxu0
        %v1384 = vadd.f32 %v1324, %v1383
        %v1385 = vpop.f32.mrf.mxu0
        %v1386 = vadd.f32 %v1324, %v1385
        %1387 = vmatmul.bf16.gmra.mxu0 %v1372
        %v1388 = vpop.f32.mrf.mxu0
        %v1389 = vadd.f32 %v1324, %v1388
        %v1390 = vpop.f32.mrf.mxu0
        %1391 = vdwg.mxu0
        %1392 = vmatpush.bf16.msra.mxu0 0
        %1393 = vmatpush.bf16.msra.mxu0 0
        %1394 = vmatpush.bf16.msra.mxu0 0
        %1395 = vmatpush.bf16.msra.mxu0 0
        %1396 = vmatpush.bf16.msra.mxu0 %v1359
        %1397 = vmatpush.bf16.msra.mxu0 %v1357
        %1398 = vmatpush.bf16.msra.mxu0 %v1355
        %1399 = vmatpush.bf16.msra.mxu0 %v1353
        %1400 = vmatmul.bf16.gmra.mxu0 %v1369
        %v1401 = vpop.f32.mrf.mxu0
        %v1402 = vadd.f32 %v1325, %v1401
        %v1403 = vpop.f32.mrf.mxu0
        %v1404 = vadd.f32 %v1325, %v1403
        %1405 = vmatmul.bf16.gmra.mxu0 %v1372
        %v1406 = vpop.f32.mrf.mxu0
        %v1407 = vadd.f32 %v1325, %v1406
        %v1408 = vpop.f32.mrf.mxu0
        %1409 = vdwg.mxu0
        %v1410 = vmul.f32 %v1384, 0.25
        %v1411 = vmul.f32 %v1386, 0.25
        %v1412 = vmul.f32 %v1389, 0.25
        %v1413 = vpack.c.bf16 %v1411, %v1410
        %v1414 = vpack.c.bf16 %v1412, %v1412
        %v1415 = vpack.c.bf16 %v1386, %v1384
        %v1416 = vpack.c.bf16 %v1389, %v1389
        %v1417 = vpack.c.bf16 %v1404, %v1402
        %v1418 = vpack.c.bf16 %v1407, %v1407
        %1421 = vrot.lane.b32.xlu0 %v1415, 64
        %v1422 = vpop.permute.xlu0 %1421
        %1423 = vrot.lane.b32.xlu0 %v1416, 64
        %v1424 = vpop.permute.xlu0 %1423
        %vm1425 = vcmask 130048
        %v1427 = vsel %vm1425, %v1413, 0
        %v1430 = vsel %vm1425, %v1414, 0
        %v1433 = vsel %vm1425, %v1422, 0
        %v1436 = vsel %vm1425, %v1424, 0
        %1438 = vmatpush.bf16.xpose.msra.mxu0 0
        %1439 = vmatpush.bf16.xpose.msra.mxu0 0
        %1440 = vmatpush.bf16.xpose.msra.mxu0 0
        %1441 = vmatpush.bf16.xpose.msra.mxu0 0
        %1442 = vmatpush.bf16.xpose.msra.mxu0 0
        %1443 = vmatpush.bf16.xpose.msra.mxu0 0
        %1444 = vmatpush.bf16.xpose.msra.mxu0 %v1436
        %1445 = vmatpush.bf16.xpose.msra.mxu0 %v1433
        %1446 = vmatmul.bf16.gmra.mxu0 %v1427
        %v1447 = vpop.f32.mrf.mxu0
        %v1448 = vadd.f32 %v1144, %v1447
        %v1449 = vpop.f32.mrf.mxu0
        %v1450 = vadd.f32 %v1144, %v1449
        %1451 = vmatmul.bf16.gmra.mxu0 %v1430
        %v1452 = vpop.f32.mrf.mxu0
        %v1453 = vadd.f32 %v1144, %v1452
        %v1454 = vpop.f32.mrf.mxu0
        %1455 = vdwg.mxu0
        %vm1456 = vcmask 195584
        %v1457 = vsel %vm1456, %v1448, -inf
        %1458 = vmax.xlane.f32.xlu0 %v1457
        %v1459 = vpop.xlane.xlu0 %1458
        %v1460 = vsel %vm1456, %v1450, -inf
        %1461 = vmax.xlane.f32.xlu0 %v1460
        %v1462 = vpop.xlane.xlu0 %1461
        %v1463 = vsel %vm1456, %v1453, -inf
        %1464 = vmax.xlane.f32.xlu0 %v1463
        %v1465 = vpop.xlane.xlu0 %1464
        %v1466 = vsub.f32 %v1448, %v1459
        %v1467 = vsub.f32 %v1450, %v1462
        %v1468 = vsub.f32 %v1453, %v1465
        %v1469 = vmul.f32 %v1466, 1.442695
        %v1470 = vpow.pop %v1469
        %v1471 = vmul.f32 %v1467, 1.442695
        %v1472 = vpow.pop %v1471
        %v1473 = vmul.f32 %v1468, 1.442695
        %v1474 = vpow.pop %v1473
        %v1475 = vsel %vm1456, %v1470, 0.0
        %1476 = vadd.xlane.f32.xlu0 %v1475
        %v1477 = vpop.xlane.xlu0 %1476
        %v1478 = vsel %vm1456, %v1472, 0.0
        %1479 = vadd.xlane.f32.xlu0 %v1478
        %v1480 = vpop.xlane.xlu0 %1479
        %v1481 = vsel %vm1456, %v1474, 0.0
        %1482 = vadd.xlane.f32.xlu0 %v1481
        %v1483 = vpop.xlane.xlu0 %1482
        %v1484 = vrcp.pop %v1477
        %v1485 = vrcp.pop %v1480
        %v1486 = vrcp.pop %v1483
        %v1487 = vmul.f32 %v1470, %v1484
        %v1488 = vmul.f32 %v1472, %v1485
        %v1489 = vmul.f32 %v1474, %v1486
        %v1490 = vpack.c.bf16 %v1488, %v1487
        %v1491 = vpack.c.bf16 %v1489, %v1489
        %v1493 = vsel %vm1456, %v1490, 0
        %v1496 = vsel %vm1456, %v1491, 0
        %vm1498 = vcmask 1043456
        %v1500 = vsel %vm1498, %v1418, 0
        %1502 = vmatpush.bf16.msra.mxu0 0
        %1503 = vmatpush.bf16.msra.mxu0 0
        %1504 = vmatpush.bf16.msra.mxu0 0
        %1505 = vmatpush.bf16.msra.mxu0 0
        %1506 = vmatpush.bf16.msra.mxu0 0
        %1507 = vmatpush.bf16.msra.mxu0 0
        %1508 = vmatpush.bf16.msra.mxu0 %v1500
        %1509 = vmatpush.bf16.msra.mxu0 %v1417
        %1510 = vmatmul.bf16.gmra.mxu0 %v1493
        %v1511 = vpop.f32.mrf.mxu0
        %v1512 = vadd.f32 0.0, %v1511
        %v1513 = vpop.f32.mrf.mxu0
        %v1514 = vadd.f32 0.0, %v1513
        %1515 = vmatmul.bf16.gmra.mxu0 %v1496
        %v1516 = vpop.f32.mrf.mxu0
        %v1517 = vadd.f32 0.0, %v1516
        %v1518 = vpop.f32.mrf.mxu0
        %1519 = vdwg.mxu0
        %1522 = vrot.lane.b32.xlu0 %v1413, 112
        %v1523 = vpop.permute.xlu0 %1522
        %1524 = vrot.lane.b32.xlu0 %v1414, 112
        %v1525 = vpop.permute.xlu0 %1524
        %1526 = vrot.lane.b32.xlu0 %v1415, 48
        %v1527 = vpop.permute.xlu0 %1526
        %1528 = vrot.lane.b32.xlu0 %v1416, 48
        %v1529 = vpop.permute.xlu0 %1528
        %v1531 = vsel %vm1425, %v1523, 0
        %v1534 = vsel %vm1425, %v1525, 0
        %v1537 = vsel %vm1425, %v1527, 0
        %v1540 = vsel %vm1425, %v1529, 0
        %1542 = vmatpush.bf16.xpose.msra.mxu0 0
        %1543 = vmatpush.bf16.xpose.msra.mxu0 0
        %1544 = vmatpush.bf16.xpose.msra.mxu0 0
        %1545 = vmatpush.bf16.xpose.msra.mxu0 0
        %1546 = vmatpush.bf16.xpose.msra.mxu0 0
        %1547 = vmatpush.bf16.xpose.msra.mxu0 0
        %1548 = vmatpush.bf16.xpose.msra.mxu0 %v1540
        %1549 = vmatpush.bf16.xpose.msra.mxu0 %v1537
        %1550 = vmatmul.bf16.gmra.mxu0 %v1531
        %v1551 = vpop.f32.mrf.mxu0
        %v1552 = vadd.f32 %v1144, %v1551
        %v1553 = vpop.f32.mrf.mxu0
        %v1554 = vadd.f32 %v1144, %v1553
        %1555 = vmatmul.bf16.gmra.mxu0 %v1534
        %v1556 = vpop.f32.mrf.mxu0
        %v1557 = vadd.f32 %v1144, %v1556
        %v1558 = vpop.f32.mrf.mxu0
        %1559 = vdwg.mxu0
        %v1560 = vsel %vm1456, %v1552, -inf
        %1561 = vmax.xlane.f32.xlu0 %v1560
        %v1562 = vpop.xlane.xlu0 %1561
        %v1563 = vsel %vm1456, %v1554, -inf
        %1564 = vmax.xlane.f32.xlu0 %v1563
        %v1565 = vpop.xlane.xlu0 %1564
        %v1566 = vsel %vm1456, %v1557, -inf
        %1567 = vmax.xlane.f32.xlu0 %v1566
        %v1568 = vpop.xlane.xlu0 %1567
        %v1569 = vsub.f32 %v1552, %v1562
        %v1570 = vsub.f32 %v1554, %v1565
        %v1571 = vsub.f32 %v1557, %v1568
        %v1572 = vmul.f32 %v1569, 1.442695
        %v1573 = vpow.pop %v1572
        %v1574 = vmul.f32 %v1570, 1.442695
        %v1575 = vpow.pop %v1574
        %v1576 = vmul.f32 %v1571, 1.442695
        %v1577 = vpow.pop %v1576
        %v1578 = vsel %vm1456, %v1573, 0.0
        %1579 = vadd.xlane.f32.xlu0 %v1578
        %v1580 = vpop.xlane.xlu0 %1579
        %v1581 = vsel %vm1456, %v1575, 0.0
        %1582 = vadd.xlane.f32.xlu0 %v1581
        %v1583 = vpop.xlane.xlu0 %1582
        %v1584 = vsel %vm1456, %v1577, 0.0
        %1585 = vadd.xlane.f32.xlu0 %v1584
        %v1586 = vpop.xlane.xlu0 %1585
        %v1587 = vrcp.pop %v1580
        %v1588 = vrcp.pop %v1583
        %v1589 = vrcp.pop %v1586
        %v1590 = vmul.f32 %v1573, %v1587
        %v1591 = vmul.f32 %v1575, %v1588
        %v1592 = vmul.f32 %v1577, %v1589
        %v1593 = vpack.c.bf16 %v1591, %v1590
        %v1594 = vpack.c.bf16 %v1592, %v1592
        %1597 = vrot.lane.b32.xlu0 %v1417, 112
        %v1598 = vpop.permute.xlu0 %1597
        %1599 = vrot.lane.b32.xlu0 %v1418, 112
        %v1600 = vpop.permute.xlu0 %1599
        %v1603 = vsel %vm1456, %v1593, 0
        %v1606 = vsel %vm1456, %v1594, 0
        %v1609 = vsel %vm1498, %v1600, 0
        %1611 = vmatpush.bf16.msra.mxu0 0
        %1612 = vmatpush.bf16.msra.mxu0 0
        %1613 = vmatpush.bf16.msra.mxu0 0
        %1614 = vmatpush.bf16.msra.mxu0 0
        %1615 = vmatpush.bf16.msra.mxu0 0
        %1616 = vmatpush.bf16.msra.mxu0 0
        %1617 = vmatpush.bf16.msra.mxu0 %v1609
        %1618 = vmatpush.bf16.msra.mxu0 %v1598
        %1619 = vmatmul.bf16.gmra.mxu0 %v1603
        %v1620 = vpop.f32.mrf.mxu0
        %v1621 = vadd.f32 0.0, %v1620
        %v1622 = vpop.f32.mrf.mxu0
        %v1623 = vadd.f32 0.0, %v1622
        %1624 = vmatmul.bf16.gmra.mxu0 %v1606
        %v1625 = vpop.f32.mrf.mxu0
        %v1626 = vadd.f32 0.0, %v1625
        %v1627 = vpop.f32.mrf.mxu0
        %1628 = vdwg.mxu0
        %1629 = vrot.lane.b32.xlu0 %v1413, 96
        %v1630 = vpop.permute.xlu0 %1629
        %1631 = vrot.lane.b32.xlu0 %v1414, 96
        %v1632 = vpop.permute.xlu0 %1631
        %1633 = vrot.lane.b32.xlu0 %v1415, 32
        %v1634 = vpop.permute.xlu0 %1633
        %1635 = vrot.lane.b32.xlu0 %v1416, 32
        %v1636 = vpop.permute.xlu0 %1635
        %v1638 = vsel %vm1425, %v1630, 0
        %v1641 = vsel %vm1425, %v1632, 0
        %v1644 = vsel %vm1425, %v1634, 0
        %v1647 = vsel %vm1425, %v1636, 0
        %1649 = vmatpush.bf16.xpose.msra.mxu0 0
        %1650 = vmatpush.bf16.xpose.msra.mxu0 0
        %1651 = vmatpush.bf16.xpose.msra.mxu0 0
        %1652 = vmatpush.bf16.xpose.msra.mxu0 0
        %1653 = vmatpush.bf16.xpose.msra.mxu0 0
        %1654 = vmatpush.bf16.xpose.msra.mxu0 0
        %1655 = vmatpush.bf16.xpose.msra.mxu0 %v1647
        %1656 = vmatpush.bf16.xpose.msra.mxu0 %v1644
        %1657 = vmatmul.bf16.gmra.mxu0 %v1638
        %v1658 = vpop.f32.mrf.mxu0
        %v1659 = vadd.f32 %v1144, %v1658
        %v1660 = vpop.f32.mrf.mxu0
        %v1661 = vadd.f32 %v1144, %v1660
        %1662 = vmatmul.bf16.gmra.mxu0 %v1641
        %v1663 = vpop.f32.mrf.mxu0
        %v1664 = vadd.f32 %v1144, %v1663
        %v1665 = vpop.f32.mrf.mxu0
        %1666 = vdwg.mxu0
        %v1667 = vsel %vm1456, %v1659, -inf
        %1668 = vmax.xlane.f32.xlu0 %v1667
        %v1669 = vpop.xlane.xlu0 %1668
        %v1670 = vsel %vm1456, %v1661, -inf
        %1671 = vmax.xlane.f32.xlu0 %v1670
        %v1672 = vpop.xlane.xlu0 %1671
        %v1673 = vsel %vm1456, %v1664, -inf
        %1674 = vmax.xlane.f32.xlu0 %v1673
        %v1675 = vpop.xlane.xlu0 %1674
        %v1676 = vsub.f32 %v1659, %v1669
        %v1677 = vsub.f32 %v1661, %v1672
        %v1678 = vsub.f32 %v1664, %v1675
        %v1679 = vmul.f32 %v1676, 1.442695
        %v1680 = vpow.pop %v1679
        %v1681 = vmul.f32 %v1677, 1.442695
        %v1682 = vpow.pop %v1681
        %v1683 = vmul.f32 %v1678, 1.442695
        %v1684 = vpow.pop %v1683
        %v1685 = vsel %vm1456, %v1680, 0.0
        %1686 = vadd.xlane.f32.xlu0 %v1685
        %v1687 = vpop.xlane.xlu0 %1686
        %v1688 = vsel %vm1456, %v1682, 0.0
        %1689 = vadd.xlane.f32.xlu0 %v1688
        %v1690 = vpop.xlane.xlu0 %1689
        %v1691 = vsel %vm1456, %v1684, 0.0
        %1692 = vadd.xlane.f32.xlu0 %v1691
        %v1693 = vpop.xlane.xlu0 %1692
        %v1694 = vrcp.pop %v1687
        %v1695 = vrcp.pop %v1690
        %v1696 = vrcp.pop %v1693
        %v1697 = vmul.f32 %v1680, %v1694
        %v1698 = vmul.f32 %v1682, %v1695
        %v1699 = vmul.f32 %v1684, %v1696
        %v1700 = vpack.c.bf16 %v1698, %v1697
        %v1701 = vpack.c.bf16 %v1699, %v1699
        %1702 = vrot.lane.b32.xlu0 %v1417, 96
        %v1703 = vpop.permute.xlu0 %1702
        %1704 = vrot.lane.b32.xlu0 %v1418, 96
        %v1705 = vpop.permute.xlu0 %1704
        %v1708 = vsel %vm1456, %v1700, 0
        %v1711 = vsel %vm1456, %v1701, 0
        %v1714 = vsel %vm1498, %v1705, 0
        %1716 = vmatpush.bf16.msra.mxu0 0
        %1717 = vmatpush.bf16.msra.mxu0 0
        %1718 = vmatpush.bf16.msra.mxu0 0
        %1719 = vmatpush.bf16.msra.mxu0 0
        %1720 = vmatpush.bf16.msra.mxu0 0
        %1721 = vmatpush.bf16.msra.mxu0 0
        %1722 = vmatpush.bf16.msra.mxu0 %v1714
        %1723 = vmatpush.bf16.msra.mxu0 %v1703
        %1724 = vmatmul.bf16.gmra.mxu0 %v1708
        %v1725 = vpop.f32.mrf.mxu0
        %v1726 = vadd.f32 0.0, %v1725
        %v1727 = vpop.f32.mrf.mxu0
        %v1728 = vadd.f32 0.0, %v1727
        %1729 = vmatmul.bf16.gmra.mxu0 %v1711
        %v1730 = vpop.f32.mrf.mxu0
        %v1731 = vadd.f32 0.0, %v1730
        %v1732 = vpop.f32.mrf.mxu0
        %1733 = vdwg.mxu0
        %1734 = vrot.lane.b32.xlu0 %v1413, 80
        %v1735 = vpop.permute.xlu0 %1734
        %1736 = vrot.lane.b32.xlu0 %v1414, 80
        %v1737 = vpop.permute.xlu0 %1736
        %1738 = vrot.lane.b32.xlu0 %v1415, 16
        %v1739 = vpop.permute.xlu0 %1738
        %1740 = vrot.lane.b32.xlu0 %v1416, 16
        %v1741 = vpop.permute.xlu0 %1740
        %v1743 = vsel %vm1425, %v1735, 0
        %v1746 = vsel %vm1425, %v1737, 0
        %v1749 = vsel %vm1425, %v1739, 0
        %v1752 = vsel %vm1425, %v1741, 0
        %1754 = vmatpush.bf16.xpose.msra.mxu0 0
        %1755 = vmatpush.bf16.xpose.msra.mxu0 0
        %1756 = vmatpush.bf16.xpose.msra.mxu0 0
        %1757 = vmatpush.bf16.xpose.msra.mxu0 0
        %1758 = vmatpush.bf16.xpose.msra.mxu0 0
        %1759 = vmatpush.bf16.xpose.msra.mxu0 0
        %1760 = vmatpush.bf16.xpose.msra.mxu0 %v1752
        %1761 = vmatpush.bf16.xpose.msra.mxu0 %v1749
        %1762 = vmatmul.bf16.gmra.mxu0 %v1743
        %v1763 = vpop.f32.mrf.mxu0
        %v1764 = vadd.f32 %v1144, %v1763
        %v1765 = vpop.f32.mrf.mxu0
        %v1766 = vadd.f32 %v1144, %v1765
        %1767 = vmatmul.bf16.gmra.mxu0 %v1746
        %v1768 = vpop.f32.mrf.mxu0
        %v1769 = vadd.f32 %v1144, %v1768
        %v1770 = vpop.f32.mrf.mxu0
        %1771 = vdwg.mxu0
        %v1772 = vsel %vm1456, %v1764, -inf
        %1773 = vmax.xlane.f32.xlu0 %v1772
        %v1774 = vpop.xlane.xlu0 %1773
        %v1775 = vsel %vm1456, %v1766, -inf
        %1776 = vmax.xlane.f32.xlu0 %v1775
        %v1777 = vpop.xlane.xlu0 %1776
        %v1778 = vsel %vm1456, %v1769, -inf
        %1779 = vmax.xlane.f32.xlu0 %v1778
        %v1780 = vpop.xlane.xlu0 %1779
        %v1781 = vsub.f32 %v1764, %v1774
        %v1782 = vsub.f32 %v1766, %v1777
        %v1783 = vsub.f32 %v1769, %v1780
        %v1784 = vmul.f32 %v1781, 1.442695
        %v1785 = vpow.pop %v1784
        %v1786 = vmul.f32 %v1782, 1.442695
        %v1787 = vpow.pop %v1786
        %v1788 = vmul.f32 %v1783, 1.442695
        %v1789 = vpow.pop %v1788
        %v1790 = vsel %vm1456, %v1785, 0.0
        %1791 = vadd.xlane.f32.xlu0 %v1790
        %v1792 = vpop.xlane.xlu0 %1791
        %v1793 = vsel %vm1456, %v1787, 0.0
        %1794 = vadd.xlane.f32.xlu0 %v1793
        %v1795 = vpop.xlane.xlu0 %1794
        %v1796 = vsel %vm1456, %v1789, 0.0
        %1797 = vadd.xlane.f32.xlu0 %v1796
        %v1798 = vpop.xlane.xlu0 %1797
        %v1799 = vrcp.pop %v1792
        %v1800 = vrcp.pop %v1795
        %v1801 = vrcp.pop %v1798
        %v1802 = vmul.f32 %v1785, %v1799
        %v1803 = vmul.f32 %v1787, %v1800
        %v1804 = vmul.f32 %v1789, %v1801
        %v1805 = vpack.c.bf16 %v1803, %v1802
        %v1806 = vpack.c.bf16 %v1804, %v1804
        %1807 = vrot.lane.b32.xlu0 %v1417, 80
        %v1808 = vpop.permute.xlu0 %1807
        %1809 = vrot.lane.b32.xlu0 %v1418, 80
        %v1810 = vpop.permute.xlu0 %1809
        %v1813 = vsel %vm1456, %v1805, 0
        %v1816 = vsel %vm1456, %v1806, 0
        %v1819 = vsel %vm1498, %v1810, 0
        %1821 = vmatpush.bf16.msra.mxu0 0
        %1822 = vmatpush.bf16.msra.mxu0 0
        %1823 = vmatpush.bf16.msra.mxu0 0
        %1824 = vmatpush.bf16.msra.mxu0 0
        %1825 = vmatpush.bf16.msra.mxu0 0
        %1826 = vmatpush.bf16.msra.mxu0 0
        %1827 = vmatpush.bf16.msra.mxu0 %v1819
        %1828 = vmatpush.bf16.msra.mxu0 %v1808
        %1829 = vmatmul.bf16.gmra.mxu0 %v1813
        %v1830 = vpop.f32.mrf.mxu0
        %v1831 = vadd.f32 0.0, %v1830
        %v1832 = vpop.f32.mrf.mxu0
        %v1833 = vadd.f32 0.0, %v1832
        %1834 = vmatmul.bf16.gmra.mxu0 %v1816
        %v1835 = vpop.f32.mrf.mxu0
        %v1836 = vadd.f32 0.0, %v1835
        %v1837 = vpop.f32.mrf.mxu0
        %1838 = vdwg.mxu0
        %1842 = vrot.lane.b32.xlu0 %v1621, 16
        %v1843 = vpop.permute.xlu0 %1842
        %1844 = vrot.lane.b32.xlu0 %v1623, 16
        %v1845 = vpop.permute.xlu0 %1844
        %1846 = vrot.lane.b32.xlu0 %v1626, 16
        %v1847 = vpop.permute.xlu0 %1846
        %1854 = vrot.lane.b32.xlu0 %v1726, 32
        %v1855 = vpop.permute.xlu0 %1854
        %1856 = vrot.lane.b32.xlu0 %v1728, 32
        %v1857 = vpop.permute.xlu0 %1856
        %1858 = vrot.lane.b32.xlu0 %v1731, 32
        %v1859 = vpop.permute.xlu0 %1858
        %1866 = vrot.lane.b32.xlu0 %v1831, 48
        %v1867 = vpop.permute.xlu0 %1866
        %1868 = vrot.lane.b32.xlu0 %v1833, 48
        %v1869 = vpop.permute.xlu0 %1868
        %1870 = vrot.lane.b32.xlu0 %v1836, 48
        %v1871 = vpop.permute.xlu0 %1870
        %v1875 = vsel %vm1425, %v1512, %v1843
        %v1876 = vsel %vm1425, %v1514, %v1845
        %v1877 = vsel %vm1425, %v1517, %v1847
        %vm1878 = vcmask 261120
        %v1879 = vsel %vm1878, %v1875, %v1855
        %v1880 = vsel %vm1878, %v1876, %v1857
        %v1881 = vsel %vm1878, %v1877, %v1859
        %vm1882 = vcmask 392192
        %v1883 = vsel %vm1882, %v1879, %v1867
        %v1884 = vsel %vm1882, %v1880, %v1869
        %v1885 = vsel %vm1882, %v1881, %v1871
        %v1886 = vpack.c.bf16 %v1884, %v1883
        %v1887 = vpack.c.bf16 %v1885, %v1885
        %v1889 = vperm.slane %v1320, 0
        %v1899 = vunpack.c.l.b16 %v1312
        %v1900 = vunpack.c.l.b16 %v1313
        %v1901 = vunpack.c.l.b16 %v1314
        %v1902 = vunpack.c.l.b16 %v1315
        %v1903 = vunpack.c.l.b16 %v1316
        %v1904 = vunpack.c.l.b16 %v1317
        %v1905 = vunpack.c.l.b16 %v1318
        %v1906 = vunpack.c.l.b16 %v1319
        %v1907 = vpack.c.b16 %v1900, %v1899
        %v1908 = vpack.c.b16 %v1902, %v1901
        %v1909 = vpack.c.b16 %v1904, %v1903
        %v1910 = vpack.c.b16 %v1906, %v1905
        %v1916 = vsel %vm1098, %v1886, 0
        %v1919 = vsel %vm1098, %v1887, 0
        %1921 = vmatpush.bf16.msra.mxu0 0
        %1922 = vmatpush.bf16.msra.mxu0 0
        %1923 = vmatpush.bf16.msra.mxu0 0
        %1924 = vmatpush.bf16.msra.mxu0 0
        %1925 = vmatpush.bf16.msra.mxu0 %v1910
        %1926 = vmatpush.bf16.msra.mxu0 %v1909
        %1927 = vmatpush.bf16.msra.mxu0 %v1908
        %1928 = vmatpush.bf16.msra.mxu0 %v1907
        %1929 = vmatmul.bf16.gmra.mxu0 %v1916
        %v1930 = vpop.f32.mrf.mxu0
        %v1931 = vadd.f32 %v1889, %v1930
        %v1932 = vpop.f32.mrf.mxu0
        %v1933 = vadd.f32 %v1889, %v1932
        %1934 = vmatmul.bf16.gmra.mxu0 %v1919
        %v1935 = vpop.f32.mrf.mxu0
        %v1936 = vadd.f32 %v1889, %v1935
        %v1937 = vpop.f32.mrf.mxu0
        %1938 = vdwg.mxu0
        %v1939 = vadd.f32 %v1225, %v1931
        %v1940 = vadd.f32 %v1226, %v1933
        %v1941 = vadd.f32 %v1227, %v1936
        %v1942 = vsel %vm1098, %v1939, 0.0
        %1943 = vadd.xlane.f32.xlu0 %v1942
        %v1944 = vpop.xlane.xlu0 %1943
        %v1945 = vsel %vm1098, %v1940, 0.0
        %1946 = vadd.xlane.f32.xlu0 %v1945
        %v1947 = vpop.xlane.xlu0 %1946
        %v1948 = vsel %vm1098, %v1941, 0.0
        %1949 = vadd.xlane.f32.xlu0 %v1948
        %v1950 = vpop.xlane.xlu0 %1949
        %v1951 = vmul.f32 %v1944, %v1162
        %v1952 = vmul.f32 %v1947, %v1162
        %v1953 = vmul.f32 %v1950, %v1162
        %v1954 = vsub.f32 %v1939, %v1951
        %v1955 = vsub.f32 %v1940, %v1952
        %v1956 = vsub.f32 %v1941, %v1953
        %v1957 = vmul.f32 %v1954, %v1954
        %v1958 = vmul.f32 %v1955, %v1955
        %v1959 = vmul.f32 %v1956, %v1956
        %v1960 = vsel %vm1098, %v1957, 0.0
        %1961 = vadd.xlane.f32.xlu0 %v1960
        %v1962 = vpop.xlane.xlu0 %1961
        %v1963 = vsel %vm1098, %v1958, 0.0
        %1964 = vadd.xlane.f32.xlu0 %v1963
        %v1965 = vpop.xlane.xlu0 %1964
        %v1966 = vsel %vm1098, %v1959, 0.0
        %1967 = vadd.xlane.f32.xlu0 %v1966
        %v1968 = vpop.xlane.xlu0 %1967
        %v1969 = vmul.f32 %v1962, %v1162
        %v1970 = vmul.f32 %v1965, %v1162
        %v1971 = vmul.f32 %v1968, %v1162
        %v1972 = vadd.f32 %v1969, 1e-05
        %v1973 = vadd.f32 %v1970, 1e-05
        %v1974 = vadd.f32 %v1971, 1e-05
        %v1975 = vrsqrt.pop %v1972
        %v1976 = vmul.f32 %v1975, %v1972
        %v1977 = vmul.f32 %v1976, %v1975
        %v1978 = vmul.f32 0.5, %v1977
        %v1979 = vsub.f32 1.5, %v1978
        %v1980 = vmul.f32 %v1975, %v1979
        %vm1981 = vweird.f32 %v1972
        %vm1982 = vweird.f32 %v1975
        %vm1983 = vmor %vm1981, %vm1982
        %v1984 = vsel %vm1983, %v1975, %v1980
        %v1985 = vrsqrt.pop %v1973
        %v1986 = vmul.f32 %v1985, %v1973
        %v1987 = vmul.f32 %v1986, %v1985
        %v1988 = vmul.f32 0.5, %v1987
        %v1989 = vsub.f32 1.5, %v1988
        %v1990 = vmul.f32 %v1985, %v1989
        %vm1991 = vweird.f32 %v1973
        %vm1992 = vweird.f32 %v1985
        %vm1993 = vmor %vm1991, %vm1992
        %v1994 = vsel %vm1993, %v1985, %v1990
        %v1995 = vrsqrt.pop %v1974
        %v1996 = vmul.f32 %v1995, %v1974
        %v1997 = vmul.f32 %v1996, %v1995
        %v1998 = vmul.f32 0.5, %v1997
        %v1999 = vsub.f32 1.5, %v1998
        %v2000 = vmul.f32 %v1995, %v1999
        %vm2001 = vweird.f32 %v1974
        %vm2002 = vweird.f32 %v1995
        %vm2003 = vmor %vm2001, %vm2002
        %v2004 = vsel %vm2003, %v1995, %v2000
        %v2005 = vmul.f32 %v1954, %v1984
        %v2006 = vmul.f32 %v1955, %v1994
        %v2007 = vmul.f32 %v1956, %v2004
        %v2008 = vperm.slane %v1228, 2
        %v2009 = vmul.f32 %v2005, %v2008
        %v2010 = vmul.f32 %v2006, %v2008
        %v2011 = vmul.f32 %v2007, %v2008
        %v2012 = vperm.slane %v1228, 3
        %v2013 = vadd.f32 %v2009, %v2012
        %v2014 = vadd.f32 %v2010, %v2012
        %v2015 = vadd.f32 %v2011, %v2012
        %v2016 = vld [vmem:[%s9] sm:$0xff]
        %v2017 = vld [vmem:[%s9 + $0x8] sm:$0xff]
        %v2018 = vld [vmem:[%s9 + $0x10] sm:$0xff]
        %v2019 = vld [vmem:[%s9 + $0x18] sm:$0xff]
        %v2020 = vld [vmem:[%s9 + $0x20] sm:$0xff]
        %v2021 = vld [vmem:[%s9 + $0x28] sm:$0xff]
        %v2022 = vld [vmem:[%s9 + $0x30] sm:$0xff]
        %v2023 = vld [vmem:[%s9 + $0x38] sm:$0xff]
        %v2024 = vld [vmem:[#allocation9] sm:$0x3]
        %v2025 = vld [vmem:[%s11] sm:$0xf]
        %v2026 = vld [vmem:[%s11 + $0x4] sm:$0xf]
        %v2027 = vld [vmem:[%s11 + $0x8] sm:$0xf]
        %v2028 = vld [vmem:[%s11 + $0xc] sm:$0xf]
        %v2029 = vld [vmem:[%s11 + $0x10] sm:$0xf]
        %v2030 = vld [vmem:[%s11 + $0x14] sm:$0xf]
        %v2031 = vld [vmem:[%s11 + $0x18] sm:$0xf]
        %v2032 = vld [vmem:[%s11 + $0x1c] sm:$0xf]
        %v2033 = vld [vmem:[%s11 + $0x20] sm:$0xf]
        %v2034 = vld [vmem:[%s11 + $0x24] sm:$0xf]
        %v2035 = vld [vmem:[%s11 + $0x28] sm:$0xf]
        %v2036 = vld [vmem:[%s11 + $0x2c] sm:$0xf]
        %v2037 = vld [vmem:[%s11 + $0x30] sm:$0xf]
        %v2038 = vld [vmem:[%s11 + $0x34] sm:$0xf]
        %v2039 = vld [vmem:[%s11 + $0x38] sm:$0xf]
        %v2040 = vld [vmem:[%s11 + $0x3c] sm:$0xf]
        %v2041 = vld [vmem:[%s11 + $0x40] sm:$0xf]
        %v2042 = vld [vmem:[%s11 + $0x44] sm:$0xf]
        %v2043 = vld [vmem:[%s11 + $0x48] sm:$0xf]
        %v2044 = vld [vmem:[%s11 + $0x4c] sm:$0xf]
        %v2045 = vld [vmem:[%s11 + $0x50] sm:$0xf]
        %v2046 = vld [vmem:[%s11 + $0x54] sm:$0xf]
        %v2047 = vld [vmem:[%s11 + $0x58] sm:$0xf]
        %v2048 = vld [vmem:[%s11 + $0x5c] sm:$0xf]
        %v2049 = vld [vmem:[%s11 + $0x60] sm:$0xf]
        %v2050 = vld [vmem:[%s11 + $0x64] sm:$0xf]
        %v2051 = vld [vmem:[%s11 + $0x68] sm:$0xf]
        %v2052 = vld [vmem:[%s11 + $0x6c] sm:$0xf]
        %v2053 = vld [vmem:[%s11 + $0x70] sm:$0xf]
        %v2054 = vld [vmem:[%s11 + $0x74] sm:$0xf]
        %v2055 = vld [vmem:[%s11 + $0x78] sm:$0xf]
        %v2056 = vld [vmem:[%s11 + $0x7c] sm:$0xf]
        %v2057 = vld [vmem:[#allocation11] sm:$0x1]
        %v2058 = vpack.c.bf16 %v2014, %v2013
        %v2059 = vpack.c.bf16 %v2015, %v2015
        %v2061 = vperm.slane %v2024, 0
        %v2062 = vperm.slane %v2024, 1
        %v2073 = vunpack.c.l.b16 %v2016
        %v2074 = vunpack.c.h.b16 %v2016
        %v2075 = vunpack.c.l.b16 %v2017
        %v2076 = vunpack.c.h.b16 %v2017
        %v2077 = vunpack.c.l.b16 %v2018
        %v2078 = vunpack.c.h.b16 %v2018
        %v2079 = vunpack.c.l.b16 %v2019
        %v2080 = vunpack.c.h.b16 %v2019
        %v2081 = vunpack.c.l.b16 %v2020
        %v2082 = vunpack.c.h.b16 %v2020
        %v2083 = vunpack.c.l.b16 %v2021
        %v2084 = vunpack.c.h.b16 %v2021
        %v2085 = vunpack.c.l.b16 %v2022
        %v2086 = vunpack.c.h.b16 %v2022
        %v2087 = vunpack.c.l.b16 %v2023
        %v2088 = vunpack.c.h.b16 %v2023
        %v2089 = vpack.c.b16 %v2075, %v2073
        %v2090 = vpack.c.b16 %v2076, %v2074
        %v2091 = vpack.c.b16 %v2079, %v2077
        %v2092 = vpack.c.b16 %v2080, %v2078
        %v2093 = vpack.c.b16 %v2083, %v2081
        %v2094 = vpack.c.b16 %v2084, %v2082
        %v2095 = vpack.c.b16 %v2087, %v2085
        %v2096 = vpack.c.b16 %v2088, %v2086
        %v2106 = vsel %vm1098, %v2058, 0
        %v2109 = vsel %vm1098, %v2059, 0
        %2111 = vmatpush.bf16.msra.mxu0 0
        %2112 = vmatpush.bf16.msra.mxu0 0
        %2113 = vmatpush.bf16.msra.mxu0 0
        %2114 = vmatpush.bf16.msra.mxu0 0
        %2115 = vmatpush.bf16.msra.mxu0 %v2095
        %2116 = vmatpush.bf16.msra.mxu0 %v2093
        %2117 = vmatpush.bf16.msra.mxu0 %v2091
        %2118 = vmatpush.bf16.msra.mxu0 %v2089
        %2119 = vmatmul.bf16.gmra.mxu0 %v2106
        %v2120 = vpop.f32.mrf.mxu0
        %v2121 = vadd.f32 %v2061, %v2120
        %v2122 = vpop.f32.mrf.mxu0
        %v2123 = vadd.f32 %v2061, %v2122
        %2124 = vmatmul.bf16.gmra.mxu0 %v2109
        %v2125 = vpop.f32.mrf.mxu0
        %v2126 = vadd.f32 %v2061, %v2125
        %v2127 = vpop.f32.mrf.mxu0
        %2128 = vdwg.mxu0
        %2129 = vmatpush.bf16.msra.mxu0 0
        %2130 = vmatpush.bf16.msra.mxu0 0
        %2131 = vmatpush.bf16.msra.mxu0 0
        %2132 = vmatpush.bf16.msra.mxu0 0
        %2133 = vmatpush.bf16.msra.mxu0 %v2096
        %2134 = vmatpush.bf16.msra.mxu0 %v2094
        %2135 = vmatpush.bf16.msra.mxu0 %v2092
        %2136 = vmatpush.bf16.msra.mxu0 %v2090
        %2137 = vmatmul.bf16.gmra.mxu0 %v2106
        %v2138 = vpop.f32.mrf.mxu0
        %v2139 = vadd.f32 %v2062, %v2138
        %v2140 = vpop.f32.mrf.mxu0
        %v2141 = vadd.f32 %v2062, %v2140
        %2142 = vmatmul.bf16.gmra.mxu0 %v2109
        %v2143 = vpop.f32.mrf.mxu0
        %v2144 = vadd.f32 %v2062, %v2143
        %v2145 = vpop.f32.mrf.mxu0
        %2146 = vdwg.mxu0
        %v2147 = vmul.f32 %v2121, 1.702
        %v2148 = vmul.f32 %v2139, 1.702
        %v2149 = vmul.f32 %v2123, 1.702
        %v2150 = vmul.f32 %v2141, 1.702
        %v2151 = vmul.f32 %v2126, 1.702
        %v2152 = vmul.f32 %v2144, 1.702
        %v2153 = vxor.u32 %v2147, 2147483648
        %v2154 = vxor.u32 %v2148, 2147483648
        %v2155 = vxor.u32 %v2149, 2147483648
        %v2156 = vxor.u32 %v2150, 2147483648
        %v2157 = vxor.u32 %v2151, 2147483648
        %v2158 = vxor.u32 %v2152, 2147483648
        %v2159 = vmul.f32 %v2153, 1.442695
        %v2160 = vpow.pop %v2159
        %v2161 = vmul.f32 %v2154, 1.442695
        %v2162 = vpow.pop %v2161
        %v2163 = vmul.f32 %v2155, 1.442695
        %v2164 = vpow.pop %v2163
        %v2165 = vmul.f32 %v2156, 1.442695
        %v2166 = vpow.pop %v2165
        %v2167 = vmul.f32 %v2157, 1.442695
        %v2168 = vpow.pop %v2167
        %v2169 = vmul.f32 %v2158, 1.442695
        %v2170 = vpow.pop %v2169
        %v2171 = vadd.f32 %v2160, 1.0
        %v2172 = vadd.f32 %v2162, 1.0
        %v2173 = vadd.f32 %v2164, 1.0
        %v2174 = vadd.f32 %v2166, 1.0
        %v2175 = vadd.f32 %v2168, 1.0
        %v2176 = vadd.f32 %v2170, 1.0
        %v2177 = vrcp.pop %v2171
        %v2178 = vmul.f32 %v2171, %v2177
        %v2179 = vsub.f32 1.0, %v2178
        %v2180 = vmul.f32 %v2177, %v2179
        %v2181 = vadd.f32 %v2177, %v2180
        %vm2182 = vweird.f32 %v2171
        %vm2183 = vweird.f32 %v2177
        %vm2184 = vmor %vm2182, %vm2183
        %v2185 = vsel %vm2184, %v2177, %v2181
        %v2186 = vand.u32 2147483647, %v2171
        %vm2187 = vcmp.eq.f32.partialorder %v2186, 8.507059e+37
        %v2188 = vand.u32 %v2171, 2147483648
        %v2189 = vor.u32 1.1754944e-38, %v2188
        %v2190 = vsel %vm2187, %v2189, %v2185
        %v2191 = vmul.f32 1.0, %v2190
        %v2192 = vrcp.pop %v2172
        %v2193 = vmul.f32 %v2172, %v2192
        %v2194 = vsub.f32 1.0, %v2193
        %v2195 = vmul.f32 %v2192, %v2194
        %v2196 = vadd.f32 %v2192, %v2195
        %vm2197 = vweird.f32 %v2172
        %vm2198 = vweird.f32 %v2192
        %vm2199 = vmor %vm2197, %vm2198
        %v2200 = vsel %vm2199, %v2192, %v2196
        %v2201 = vand.u32 2147483647, %v2172
        %vm2202 = vcmp.eq.f32.partialorder %v2201, 8.507059e+37
        %v2203 = vand.u32 %v2172, 2147483648
        %v2204 = vor.u32 1.1754944e-38, %v2203
        %v2205 = vsel %vm2202, %v2204, %v2200
        %v2206 = vmul.f32 1.0, %v2205
        %v2207 = vrcp.pop %v2173
        %v2208 = vmul.f32 %v2173, %v2207
        %v2209 = vsub.f32 1.0, %v2208
        %v2210 = vmul.f32 %v2207, %v2209
        %v2211 = vadd.f32 %v2207, %v2210
        %vm2212 = vweird.f32 %v2173
        %vm2213 = vweird.f32 %v2207
        %vm2214 = vmor %vm2212, %vm2213
        %v2215 = vsel %vm2214, %v2207, %v2211
        %v2216 = vand.u32 2147483647, %v2173
        %vm2217 = vcmp.eq.f32.partialorder %v2216, 8.507059e+37
        %v2218 = vand.u32 %v2173, 2147483648
        %v2219 = vor.u32 1.1754944e-38, %v2218
        %v2220 = vsel %vm2217, %v2219, %v2215
        %v2221 = vmul.f32 1.0, %v2220
        %v2222 = vrcp.pop %v2174
        %v2223 = vmul.f32 %v2174, %v2222
        %v2224 = vsub.f32 1.0, %v2223
        %v2225 = vmul.f32 %v2222, %v2224
        %v2226 = vadd.f32 %v2222, %v2225
        %vm2227 = vweird.f32 %v2174
        %vm2228 = vweird.f32 %v2222
        %vm2229 = vmor %vm2227, %vm2228
        %v2230 = vsel %vm2229, %v2222, %v2226
        %v2231 = vand.u32 2147483647, %v2174
        %vm2232 = vcmp.eq.f32.partialorder %v2231, 8.507059e+37
        %v2233 = vand.u32 %v2174, 2147483648
        %v2234 = vor.u32 1.1754944e-38, %v2233
        %v2235 = vsel %vm2232, %v2234, %v2230
        %v2236 = vmul.f32 1.0, %v2235
        %v2237 = vrcp.pop %v2175
        %v2238 = vmul.f32 %v2175, %v2237
        %v2239 = vsub.f32 1.0, %v2238
        %v2240 = vmul.f32 %v2237, %v2239
        %v2241 = vadd.f32 %v2237, %v2240
        %vm2242 = vweird.f32 %v2175
        %vm2243 = vweird.f32 %v2237
        %vm2244 = vmor %vm2242, %vm2243
        %v2245 = vsel %vm2244, %v2237, %v2241
        %v2246 = vand.u32 2147483647, %v2175
        %vm2247 = vcmp.eq.f32.partialorder %v2246, 8.507059e+37
        %v2248 = vand.u32 %v2175, 2147483648
        %v2249 = vor.u32 1.1754944e-38, %v2248
        %v2250 = vsel %vm2247, %v2249, %v2245
        %v2251 = vmul.f32 1.0, %v2250
        %v2252 = vrcp.pop %v2176
        %v2253 = vmul.f32 %v2176, %v2252
        %v2254 = vsub.f32 1.0, %v2253
        %v2255 = vmul.f32 %v2252, %v2254
        %v2256 = vadd.f32 %v2252, %v2255
        %vm2257 = vweird.f32 %v2176
        %vm2258 = vweird.f32 %v2252
        %vm2259 = vmor %vm2257, %vm2258
        %v2260 = vsel %vm2259, %v2252, %v2256
        %v2261 = vand.u32 2147483647, %v2176
        %vm2262 = vcmp.eq.f32.partialorder %v2261, 8.507059e+37
        %v2263 = vand.u32 %v2176, 2147483648
        %v2264 = vor.u32 1.1754944e-38, %v2263
        %v2265 = vsel %vm2262, %v2264, %v2260
        %v2266 = vmul.f32 1.0, %v2265
        %v2267 = vmul.f32 %v2121, %v2191
        %v2268 = vmul.f32 %v2139, %v2206
        %v2269 = vmul.f32 %v2123, %v2221
        %v2270 = vmul.f32 %v2141, %v2236
        %v2271 = vmul.f32 %v2126, %v2251
        %v2272 = vmul.f32 %v2144, %v2266
        %v2273 = vpack.c.bf16 %v2269, %v2267
        %v2274 = vpack.c.bf16 %v2270, %v2268
        %v2275 = vpack.c.bf16 %v2271, %v2271
        %v2276 = vpack.c.bf16 %v2272, %v2272
        %v2278 = vperm.slane %v2057, 0
        %v2312 = vunpack.c.l.b16 %v2025
        %v2313 = vunpack.c.l.b16 %v2026
        %v2314 = vunpack.c.l.b16 %v2027
        %v2315 = vunpack.c.l.b16 %v2028
        %v2316 = vunpack.c.l.b16 %v2029
        %v2317 = vunpack.c.l.b16 %v2030
        %v2318 = vunpack.c.l.b16 %v2031
        %v2319 = vunpack.c.l.b16 %v2032
        %v2320 = vunpack.c.l.b16 %v2033
        %v2321 = vunpack.c.l.b16 %v2034
        %v2322 = vunpack.c.l.b16 %v2035
        %v2323 = vunpack.c.l.b16 %v2036
        %v2324 = vunpack.c.l.b16 %v2037
        %v2325 = vunpack.c.l.b16 %v2038
        %v2326 = vunpack.c.l.b16 %v2039
        %v2327 = vunpack.c.l.b16 %v2040
        %v2328 = vunpack.c.l.b16 %v2041
        %v2329 = vunpack.c.l.b16 %v2042
        %v2330 = vunpack.c.l.b16 %v2043
        %v2331 = vunpack.c.l.b16 %v2044
        %v2332 = vunpack.c.l.b16 %v2045
        %v2333 = vunpack.c.l.b16 %v2046
        %v2334 = vunpack.c.l.b16 %v2047
        %v2335 = vunpack.c.l.b16 %v2048
        %v2336 = vunpack.c.l.b16 %v2049
        %v2337 = vunpack.c.l.b16 %v2050
        %v2338 = vunpack.c.l.b16 %v2051
        %v2339 = vunpack.c.l.b16 %v2052
        %v2340 = vunpack.c.l.b16 %v2053
        %v2341 = vunpack.c.l.b16 %v2054
        %v2342 = vunpack.c.l.b16 %v2055
        %v2343 = vunpack.c.l.b16 %v2056
        %v2344 = vpack.c.b16 %v2313, %v2312
        %v2345 = vpack.c.b16 %v2315, %v2314
        %v2346 = vpack.c.b16 %v2317, %v2316
        %v2347 = vpack.c.b16 %v2319, %v2318
        %v2348 = vpack.c.b16 %v2321, %v2320
        %v2349 = vpack.c.b16 %v2323, %v2322
        %v2350 = vpack.c.b16 %v2325, %v2324
        %v2351 = vpack.c.b16 %v2327, %v2326
        %v2352 = vpack.c.b16 %v2329, %v2328
        %v2353 = vpack.c.b16 %v2331, %v2330
        %v2354 = vpack.c.b16 %v2333, %v2332
        %v2355 = vpack.c.b16 %v2335, %v2334
        %v2356 = vpack.c.b16 %v2337, %v2336
        %v2357 = vpack.c.b16 %v2339, %v2338
        %v2358 = vpack.c.b16 %v2341, %v2340
        %v2359 = vpack.c.b16 %v2343, %v2342
        %2376 = vmatpush.bf16.msra.mxu0 %v2351
        %2377 = vmatpush.bf16.msra.mxu0 %v2350
        %2378 = vmatpush.bf16.msra.mxu0 %v2349
        %2379 = vmatpush.bf16.msra.mxu0 %v2348
        %2380 = vmatpush.bf16.msra.mxu0 %v2347
        %2381 = vmatpush.bf16.msra.mxu0 %v2346
        %2382 = vmatpush.bf16.msra.mxu0 %v2345
        %2383 = vmatpush.bf16.msra.mxu0 %v2344
        %2384 = vmatmul.bf16.gmra.mxu0 %v2273
        %v2385 = vpop.f32.mrf.mxu0
        %v2386 = vadd.f32 %v2278, %v2385
        %v2387 = vpop.f32.mrf.mxu0
        %v2388 = vadd.f32 %v2278, %v2387
        %2389 = vmatmul.bf16.gmra.mxu0 %v2275
        %v2390 = vpop.f32.mrf.mxu0
        %v2391 = vadd.f32 %v2278, %v2390
        %v2392 = vpop.f32.mrf.mxu0
        %2393 = vdwg.mxu0
        %2394 = vmatpush.bf16.msra.mxu0 %v2359
        %2395 = vmatpush.bf16.msra.mxu0 %v2358
        %2396 = vmatpush.bf16.msra.mxu0 %v2357
        %2397 = vmatpush.bf16.msra.mxu0 %v2356
        %2398 = vmatpush.bf16.msra.mxu0 %v2355
        %2399 = vmatpush.bf16.msra.mxu0 %v2354
        %2400 = vmatpush.bf16.msra.mxu0 %v2353
        %2401 = vmatpush.bf16.msra.mxu0 %v2352
        %2402 = vmatmul.bf16.gmra.mxu0 %v2274
        %v2403 = vpop.f32.mrf.mxu0
        %v2404 = vadd.f32 %v2386, %v2403
        %v2405 = vpop.f32.mrf.mxu0
        %v2406 = vadd.f32 %v2388, %v2405
        %2407 = vmatmul.bf16.gmra.mxu0 %v2276
        %v2408 = vpop.f32.mrf.mxu0
        %v2409 = vadd.f32 %v2391, %v2408
        %v2410 = vpop.f32.mrf.mxu0
        %2411 = vdwg.mxu0
        %v2412 = vadd.f32 %v1939, %v2404
        %v2413 = vadd.f32 %v1940, %v2406
        %v2414 = vadd.f32 %v1941, %v2409
        %s2415 = scalar_lea.vmem [#allocation6], 4
        %v2416 = vld [vmem:[%s2415] sm:$0xf]
        %v2417 = vsel %vm1098, %v2412, 0.0
        %2418 = vadd.xlane.f32.xlu0 %v2417
        %v2419 = vpop.xlane.xlu0 %2418
        %v2420 = vsel %vm1098, %v2413, 0.0
        %2421 = vadd.xlane.f32.xlu0 %v2420
        %v2422 = vpop.xlane.xlu0 %2421
        %v2423 = vsel %vm1098, %v2414, 0.0
        %2424 = vadd.xlane.f32.xlu0 %v2423
        %v2425 = vpop.xlane.xlu0 %2424
        %v2426 = vmul.f32 %v2419, %v1162
        %v2427 = vmul.f32 %v2422, %v1162
        %v2428 = vmul.f32 %v2425, %v1162
        %v2429 = vsub.f32 %v2412, %v2426
        %v2430 = vsub.f32 %v2413, %v2427
        %v2431 = vsub.f32 %v2414, %v2428
        %v2432 = vmul.f32 %v2429, %v2429
        %v2433 = vmul.f32 %v2430, %v2430
        %v2434 = vmul.f32 %v2431, %v2431
        %v2435 = vsel %vm1098, %v2432, 0.0
        %2436 = vadd.xlane.f32.xlu0 %v2435
        %v2437 = vpop.xlane.xlu0 %2436
        %v2438 = vsel %vm1098, %v2433, 0.0
        %2439 = vadd.xlane.f32.xlu0 %v2438
        %v2440 = vpop.xlane.xlu0 %2439
        %v2441 = vsel %vm1098, %v2434, 0.0
        %2442 = vadd.xlane.f32.xlu0 %v2441
        %v2443 = vpop.xlane.xlu0 %2442
        %v2444 = vmul.f32 %v2437, %v1162
        %v2445 = vmul.f32 %v2440, %v1162
        %v2446 = vmul.f32 %v2443, %v1162
        %v2447 = vadd.f32 %v2444, 1e-05
        %v2448 = vadd.f32 %v2445, 1e-05
        %v2449 = vadd.f32 %v2446, 1e-05
        %v2450 = vrsqrt.pop %v2447
        %v2451 = vmul.f32 %v2450, %v2447
        %v2452 = vmul.f32 %v2451, %v2450
        %v2453 = vmul.f32 0.5, %v2452
        %v2454 = vsub.f32 1.5, %v2453
        %v2455 = vmul.f32 %v2450, %v2454
        %vm2456 = vweird.f32 %v2447
        %vm2457 = vweird.f32 %v2450
        %vm2458 = vmor %vm2456, %vm2457
        %v2459 = vsel %vm2458, %v2450, %v2455
        %v2460 = vrsqrt.pop %v2448
        %v2461 = vmul.f32 %v2460, %v2448
        %v2462 = vmul.f32 %v2461, %v2460
        %v2463 = vmul.f32 0.5, %v2462
        %v2464 = vsub.f32 1.5, %v2463
        %v2465 = vmul.f32 %v2460, %v2464
        %vm2466 = vweird.f32 %v2448
        %vm2467 = vweird.f32 %v2460
        %vm2468 = vmor %vm2466, %vm2467
        %v2469 = vsel %vm2468, %v2460, %v2465
        %v2470 = vrsqrt.pop %v2449
        %v2471 = vmul.f32 %v2470, %v2449
        %v2472 = vmul.f32 %v2471, %v2470
        %v2473 = vmul.f32 0.5, %v2472
        %v2474 = vsub.f32 1.5, %v2473
        %v2475 = vmul.f32 %v2470, %v2474
        %vm2476 = vweird.f32 %v2449
        %vm2477 = vweird.f32 %v2470
        %vm2478 = vmor %vm2476, %vm2477
        %v2479 = vsel %vm2478, %v2470, %v2475
        %v2480 = vmul.f32 %v2429, %v2459
        %v2481 = vmul.f32 %v2430, %v2469
        %v2482 = vmul.f32 %v2431, %v2479
        %v2483 = vperm.slane %v2416, 0
        %v2484 = vmul.f32 %v2480, %v2483
        %v2485 = vmul.f32 %v2481, %v2483
        %v2486 = vmul.f32 %v2482, %v2483
        %v2487 = vperm.slane %v2416, 1
        %v2488 = vadd.f32 %v2484, %v2487
        %v2489 = vadd.f32 %v2485, %v2487
        %v2490 = vadd.f32 %v2486, %v2487
        %s2491 = scalar_lea.vmem %s5, 64
        %v2492 = vld [vmem:[%s2491] sm:$0xff]
        %v2493 = vld [vmem:[%s2491 + $0x8] sm:$0xff]
        %v2494 = vld [vmem:[%s2491 + $0x10] sm:$0xff]
        %v2495 = vld [vmem:[%s2491 + $0x18] sm:$0xff]
        %v2496 = vld [vmem:[%s2491 + $0x20] sm:$0xff]
        %v2497 = vld [vmem:[%s2491 + $0x28] sm:$0xff]
        %v2498 = vld [vmem:[%s2491 + $0x30] sm:$0xff]
        %v2499 = vld [vmem:[%s2491 + $0x38] sm:$0xff]
        %s2500 = scalar_lea.vmem %s6, 2
        %v2501 = vld [vmem:[%s2500] sm:$0x3]
        %s2502 = scalar_lea.vmem %s7, 32
        %v2503 = vld [vmem:[%s2502] sm:$0xf]
        %v2504 = vld [vmem:[%s2502 + $0x4] sm:$0xf]
        %v2505 = vld [vmem:[%s2502 + $0x8] sm:$0xf]
        %v2506 = vld [vmem:[%s2502 + $0xc] sm:$0xf]
        %v2507 = vld [vmem:[%s2502 + $0x10] sm:$0xf]
        %v2508 = vld [vmem:[%s2502 + $0x14] sm:$0xf]
        %v2509 = vld [vmem:[%s2502 + $0x18] sm:$0xf]
        %v2510 = vld [vmem:[%s2502 + $0x1c] sm:$0xf]
        %s2511 = scalar_lea.vmem [#allocation8], 1
        %v2512 = vld [vmem:[%s2511] sm:$0x1]
        %v2513 = vpack.c.bf16 %v2489, %v2488
        %v2514 = vpack.c.bf16 %v2490, %v2490
        %v2516 = vperm.slane %v2501, 0
        %v2517 = vperm.slane %v2501, 1
        %v2528 = vunpack.c.l.b16 %v2492
        %v2529 = vunpack.c.h.b16 %v2492
        %v2530 = vunpack.c.l.b16 %v2493
        %v2531 = vunpack.c.h.b16 %v2493
        %v2532 = vunpack.c.l.b16 %v2494
        %v2533 = vunpack.c.h.b16 %v2494
        %v2534 = vunpack.c.l.b16 %v2495
        %v2535 = vunpack.c.h.b16 %v2495
        %v2536 = vunpack.c.l.b16 %v2496
        %v2537 = vunpack.c.h.b16 %v2496
        %v2538 = vunpack.c.l.b16 %v2497
        %v2539 = vunpack.c.h.b16 %v2497
        %v2540 = vunpack.c.l.b16 %v2498
        %v2541 = vunpack.c.h.b16 %v2498
        %v2542 = vunpack.c.l.b16 %v2499
        %v2543 = vunpack.c.h.b16 %v2499
        %v2544 = vpack.c.b16 %v2530, %v2528
        %v2545 = vpack.c.b16 %v2531, %v2529
        %v2546 = vpack.c.b16 %v2534, %v2532
        %v2547 = vpack.c.b16 %v2535, %v2533
        %v2548 = vpack.c.b16 %v2538, %v2536
        %v2549 = vpack.c.b16 %v2539, %v2537
        %v2550 = vpack.c.b16 %v2542, %v2540
        %v2551 = vpack.c.b16 %v2543, %v2541
        %v2561 = vsel %vm1098, %v2513, 0
        %v2564 = vsel %vm1098, %v2514, 0
        %2566 = vmatpush.bf16.msra.mxu0 0
        %2567 = vmatpush.bf16.msra.mxu0 0
        %2568 = vmatpush.bf16.msra.mxu0 0
        %2569 = vmatpush.bf16.msra.mxu0 0
        %2570 = vmatpush.bf16.msra.mxu0 %v2550
        %2571 = vmatpush.bf16.msra.mxu0 %v2548
        %2572 = vmatpush.bf16.msra.mxu0 %v2546
        %2573 = vmatpush.bf16.msra.mxu0 %v2544
        %2574 = vmatmul.bf16.gmra.mxu0 %v2561
        %v2575 = vpop.f32.mrf.mxu0
        %v2576 = vadd.f32 %v2516, %v2575
        %v2577 = vpop.f32.mrf.mxu0
        %v2578 = vadd.f32 %v2516, %v2577
        %2579 = vmatmul.bf16.gmra.mxu0 %v2564
        %v2580 = vpop.f32.mrf.mxu0
        %v2581 = vadd.f32 %v2516, %v2580
        %v2582 = vpop.f32.mrf.mxu0
        %2583 = vdwg.mxu0
        %2584 = vmatpush.bf16.msra.mxu0 0
        %2585 = vmatpush.bf16.msra.mxu0 0
        %2586 = vmatpush.bf16.msra.mxu0 0
        %2587 = vmatpush.bf16.msra.mxu0 0
        %2588 = vmatpush.bf16.msra.mxu0 %v2551
        %2589 = vmatpush.bf16.msra.mxu0 %v2549
        %2590 = vmatpush.bf16.msra.mxu0 %v2547
        %2591 = vmatpush.bf16.msra.mxu0 %v2545
        %2592 = vmatmul.bf16.gmra.mxu0 %v2561
        %v2593 = vpop.f32.mrf.mxu0
        %v2594 = vadd.f32 %v2517, %v2593
        %v2595 = vpop.f32.mrf.mxu0
        %v2596 = vadd.f32 %v2517, %v2595
        %2597 = vmatmul.bf16.gmra.mxu0 %v2564
        %v2598 = vpop.f32.mrf.mxu0
        %v2599 = vadd.f32 %v2517, %v2598
        %v2600 = vpop.f32.mrf.mxu0
        %2601 = vdwg.mxu0
        %v2602 = vmul.f32 %v2576, 0.25
        %v2603 = vmul.f32 %v2578, 0.25
        %v2604 = vmul.f32 %v2581, 0.25
        %v2605 = vpack.c.bf16 %v2603, %v2602
        %v2606 = vpack.c.bf16 %v2604, %v2604
        %v2607 = vpack.c.bf16 %v2578, %v2576
        %v2608 = vpack.c.bf16 %v2581, %v2581
        %v2609 = vpack.c.bf16 %v2596, %v2594
        %v2610 = vpack.c.bf16 %v2599, %v2599
        %2613 = vrot.lane.b32.xlu0 %v2607, 64
        %v2614 = vpop.permute.xlu0 %2613
        %2615 = vrot.lane.b32.xlu0 %v2608, 64
        %v2616 = vpop.permute.xlu0 %2615
        %v2618 = vsel %vm1425, %v2605, 0
        %v2621 = vsel %vm1425, %v2606, 0
        %v2624 = vsel %vm1425, %v2614, 0
        %v2627 = vsel %vm1425, %v2616, 0
        %2629 = vmatpush.bf16.xpose.msra.mxu0 0
        %2630 = vmatpush.bf16.xpose.msra.mxu0 0
        %2631 = vmatpush.bf16.xpose.msra.mxu0 0
        %2632 = vmatpush.bf16.xpose.msra.mxu0 0
        %2633 = vmatpush.bf16.xpose.msra.mxu0 0
        %2634 = vmatpush.bf16.xpose.msra.mxu0 0
        %2635 = vmatpush.bf16.xpose.msra.mxu0 %v2627
        %2636 = vmatpush.bf16.xpose.msra.mxu0 %v2624
        %2637 = vmatmul.bf16.gmra.mxu0 %v2618
        %v2638 = vpop.f32.mrf.mxu0
        %v2639 = vadd.f32 %v1144, %v2638
        %v2640 = vpop.f32.mrf.mxu0
        %v2641 = vadd.f32 %v1144, %v2640
        %2642 = vmatmul.bf16.gmra.mxu0 %v2621
        %v2643 = vpop.f32.mrf.mxu0
        %v2644 = vadd.f32 %v1144, %v2643
        %v2645 = vpop.f32.mrf.mxu0
        %2646 = vdwg.mxu0
        %v2647 = vsel %vm1456, %v2639, -inf
        %2648 = vmax.xlane.f32.xlu0 %v2647
        %v2649 = vpop.xlane.xlu0 %2648
        %v2650 = vsel %vm1456, %v2641, -inf
        %2651 = vmax.xlane.f32.xlu0 %v2650
        %v2652 = vpop.xlane.xlu0 %2651
        %v2653 = vsel %vm1456, %v2644, -inf
        %2654 = vmax.xlane.f32.xlu0 %v2653
        %v2655 = vpop.xlane.xlu0 %2654
        %v2656 = vsub.f32 %v2639, %v2649
        %v2657 = vsub.f32 %v2641, %v2652
        %v2658 = vsub.f32 %v2644, %v2655
        %v2659 = vmul.f32 %v2656, 1.442695
        %v2660 = vpow.pop %v2659
        %v2661 = vmul.f32 %v2657, 1.442695
        %v2662 = vpow.pop %v2661
        %v2663 = vmul.f32 %v2658, 1.442695
        %v2664 = vpow.pop %v2663
        %v2665 = vsel %vm1456, %v2660, 0.0
        %2666 = vadd.xlane.f32.xlu0 %v2665
        %v2667 = vpop.xlane.xlu0 %2666
        %v2668 = vsel %vm1456, %v2662, 0.0
        %2669 = vadd.xlane.f32.xlu0 %v2668
        %v2670 = vpop.xlane.xlu0 %2669
        %v2671 = vsel %vm1456, %v2664, 0.0
        %2672 = vadd.xlane.f32.xlu0 %v2671
        %v2673 = vpop.xlane.xlu0 %2672
        %v2674 = vrcp.pop %v2667
        %v2675 = vrcp.pop %v2670
        %v2676 = vrcp.pop %v2673
        %v2677 = vmul.f32 %v2660, %v2674
        %v2678 = vmul.f32 %v2662, %v2675
        %v2679 = vmul.f32 %v2664, %v2676
        %v2680 = vpack.c.bf16 %v2678, %v2677
        %v2681 = vpack.c.bf16 %v2679, %v2679
        %v2683 = vsel %vm1456, %v2680, 0
        %v2686 = vsel %vm1456, %v2681, 0
        %v2689 = vsel %vm1498, %v2610, 0
        %2691 = vmatpush.bf16.msra.mxu0 0
        %2692 = vmatpush.bf16.msra.mxu0 0
        %2693 = vmatpush.bf16.msra.mxu0 0
        %2694 = vmatpush.bf16.msra.mxu0 0
        %2695 = vmatpush.bf16.msra.mxu0 0
        %2696 = vmatpush.bf16.msra.mxu0 0
        %2697 = vmatpush.bf16.msra.mxu0 %v2689
        %2698 = vmatpush.bf16.msra.mxu0 %v2609
        %2699 = vmatmul.bf16.gmra.mxu0 %v2683
        %v2700 = vpop.f32.mrf.mxu0
        %v2701 = vadd.f32 0.0, %v2700
        %v2702 = vpop.f32.mrf.mxu0
        %v2703 = vadd.f32 0.0, %v2702
        %2704 = vmatmul.bf16.gmra.mxu0 %v2686
        %v2705 = vpop.f32.mrf.mxu0
        %v2706 = vadd.f32 0.0, %v2705
        %v2707 = vpop.f32.mrf.mxu0
        %2708 = vdwg.mxu0
        %2711 = vrot.lane.b32.xlu0 %v2605, 112
        %v2712 = vpop.permute.xlu0 %2711
        %2713 = vrot.lane.b32.xlu0 %v2606, 112
        %v2714 = vpop.permute.xlu0 %2713
        %2715 = vrot.lane.b32.xlu0 %v2607, 48
        %v2716 = vpop.permute.xlu0 %2715
        %2717 = vrot.lane.b32.xlu0 %v2608, 48
        %v2718 = vpop.permute.xlu0 %2717
        %v2720 = vsel %vm1425, %v2712, 0
        %v2723 = vsel %vm1425, %v2714, 0
        %v2726 = vsel %vm1425, %v2716, 0
        %v2729 = vsel %vm1425, %v2718, 0
        %2731 = vmatpush.bf16.xpose.msra.mxu0 0
        %2732 = vmatpush.bf16.xpose.msra.mxu0 0
        %2733 = vmatpush.bf16.xpose.msra.mxu0 0
        %2734 = vmatpush.bf16.xpose.msra.mxu0 0
        %2735 = vmatpush.bf16.xpose.msra.mxu0 0
        %2736 = vmatpush.bf16.xpose.msra.mxu0 0
        %2737 = vmatpush.bf16.xpose.msra.mxu0 %v2729
        %2738 = vmatpush.bf16.xpose.msra.mxu0 %v2726
        %2739 = vmatmul.bf16.gmra.mxu0 %v2720
        %v2740 = vpop.f32.mrf.mxu0
        %v2741 = vadd.f32 %v1144, %v2740
        %v2742 = vpop.f32.mrf.mxu0
        %v2743 = vadd.f32 %v1144, %v2742
        %2744 = vmatmul.bf16.gmra.mxu0 %v2723
        %v2745 = vpop.f32.mrf.mxu0
        %v2746 = vadd.f32 %v1144, %v2745
        %v2747 = vpop.f32.mrf.mxu0
        %2748 = vdwg.mxu0
        %v2749 = vsel %vm1456, %v2741, -inf
        %2750 = vmax.xlane.f32.xlu0 %v2749
        %v2751 = vpop.xlane.xlu0 %2750
        %v2752 = vsel %vm1456, %v2743, -inf
        %2753 = vmax.xlane.f32.xlu0 %v2752
        %v2754 = vpop.xlane.xlu0 %2753
        %v2755 = vsel %vm1456, %v2746, -inf
        %2756 = vmax.xlane.f32.xlu0 %v2755
        %v2757 = vpop.xlane.xlu0 %2756
        %v2758 = vsub.f32 %v2741, %v2751
        %v2759 = vsub.f32 %v2743, %v2754
        %v2760 = vsub.f32 %v2746, %v2757
        %v2761 = vmul.f32 %v2758, 1.442695
        %v2762 = vpow.pop %v2761
        %v2763 = vmul.f32 %v2759, 1.442695
        %v2764 = vpow.pop %v2763
        %v2765 = vmul.f32 %v2760, 1.442695
        %v2766 = vpow.pop %v2765
        %v2767 = vsel %vm1456, %v2762, 0.0
        %2768 = vadd.xlane.f32.xlu0 %v2767
        %v2769 = vpop.xlane.xlu0 %2768
        %v2770 = vsel %vm1456, %v2764, 0.0
        %2771 = vadd.xlane.f32.xlu0 %v2770
        %v2772 = vpop.xlane.xlu0 %2771
        %v2773 = vsel %vm1456, %v2766, 0.0
        %2774 = vadd.xlane.f32.xlu0 %v2773
        %v2775 = vpop.xlane.xlu0 %2774
        %v2776 = vrcp.pop %v2769
        %v2777 = vrcp.pop %v2772
        %v2778 = vrcp.pop %v2775
        %v2779 = vmul.f32 %v2762, %v2776
        %v2780 = vmul.f32 %v2764, %v2777
        %v2781 = vmul.f32 %v2766, %v2778
        %v2782 = vpack.c.bf16 %v2780, %v2779
        %v2783 = vpack.c.bf16 %v2781, %v2781
        %2786 = vrot.lane.b32.xlu0 %v2609, 112
        %v2787 = vpop.permute.xlu0 %2786
        %2788 = vrot.lane.b32.xlu0 %v2610, 112
        %v2789 = vpop.permute.xlu0 %2788
        %v2792 = vsel %vm1456, %v2782, 0
        %v2795 = vsel %vm1456, %v2783, 0
        %v2798 = vsel %vm1498, %v2789, 0
        %2800 = vmatpush.bf16.msra.mxu0 0
        %2801 = vmatpush.bf16.msra.mxu0 0
        %2802 = vmatpush.bf16.msra.mxu0 0
        %2803 = vmatpush.bf16.msra.mxu0 0
        %2804 = vmatpush.bf16.msra.mxu0 0
        %2805 = vmatpush.bf16.msra.mxu0 0
        %2806 = vmatpush.bf16.msra.mxu0 %v2798
        %2807 = vmatpush.bf16.msra.mxu0 %v2787
        %2808 = vmatmul.bf16.gmra.mxu0 %v2792
        %v2809 = vpop.f32.mrf.mxu0
        %v2810 = vadd.f32 0.0, %v2809
        %v2811 = vpop.f32.mrf.mxu0
        %v2812 = vadd.f32 0.0, %v2811
        %2813 = vmatmul.bf16.gmra.mxu0 %v2795
        %v2814 = vpop.f32.mrf.mxu0
        %v2815 = vadd.f32 0.0, %v2814
        %v2816 = vpop.f32.mrf.mxu0
        %2817 = vdwg.mxu0
        %2818 = vrot.lane.b32.xlu0 %v2605, 96
        %v2819 = vpop.permute.xlu0 %2818
        %2820 = vrot.lane.b32.xlu0 %v2606, 96
        %v2821 = vpop.permute.xlu0 %2820
        %2822 = vrot.lane.b32.xlu0 %v2607, 32
        %v2823 = vpop.permute.xlu0 %2822
        %2824 = vrot.lane.b32.xlu0 %v2608, 32
        %v2825 = vpop.permute.xlu0 %2824
        %v2827 = vsel %vm1425, %v2819, 0
        %v2830 = vsel %vm1425, %v2821, 0
        %v2833 = vsel %vm1425, %v2823, 0
        %v2836 = vsel %vm1425, %v2825, 0
        %2838 = vmatpush.bf16.xpose.msra.mxu0 0
        %2839 = vmatpush.bf16.xpose.msra.mxu0 0
        %2840 = vmatpush.bf16.xpose.msra.mxu0 0
        %2841 = vmatpush.bf16.xpose.msra.mxu0 0
        %2842 = vmatpush.bf16.xpose.msra.mxu0 0
        %2843 = vmatpush.bf16.xpose.msra.mxu0 0
        %2844 = vmatpush.bf16.xpose.msra.mxu0 %v2836
        %2845 = vmatpush.bf16.xpose.msra.mxu0 %v2833
        %2846 = vmatmul.bf16.gmra.mxu0 %v2827
        %v2847 = vpop.f32.mrf.mxu0
        %v2848 = vadd.f32 %v1144, %v2847
        %v2849 = vpop.f32.mrf.mxu0
        %v2850 = vadd.f32 %v1144, %v2849
        %2851 = vmatmul.bf16.gmra.mxu0 %v2830
        %v2852 = vpop.f32.mrf.mxu0
        %v2853 = vadd.f32 %v1144, %v2852
        %v2854 = vpop.f32.mrf.mxu0
        %2855 = vdwg.mxu0
        %v2856 = vsel %vm1456, %v2848, -inf
        %2857 = vmax.xlane.f32.xlu0 %v2856
        %v2858 = vpop.xlane.xlu0 %2857
        %v2859 = vsel %vm1456, %v2850, -inf
        %2860 = vmax.xlane.f32.xlu0 %v2859
        %v2861 = vpop.xlane.xlu0 %2860
        %v2862 = vsel %vm1456, %v2853, -inf
        %2863 = vmax.xlane.f32.xlu0 %v2862
        %v2864 = vpop.xlane.xlu0 %2863
        %v2865 = vsub.f32 %v2848, %v2858
        %v2866 = vsub.f32 %v2850, %v2861
        %v2867 = vsub.f32 %v2853, %v2864
        %v2868 = vmul.f32 %v2865, 1.442695
        %v2869 = vpow.pop %v2868
        %v2870 = vmul.f32 %v2866, 1.442695
        %v2871 = vpow.pop %v2870
        %v2872 = vmul.f32 %v2867, 1.442695
        %v2873 = vpow.pop %v2872
        %v2874 = vsel %vm1456, %v2869, 0.0
        %2875 = vadd.xlane.f32.xlu0 %v2874
        %v2876 = vpop.xlane.xlu0 %2875
        %v2877 = vsel %vm1456, %v2871, 0.0
        %2878 = vadd.xlane.f32.xlu0 %v2877
        %v2879 = vpop.xlane.xlu0 %2878
        %v2880 = vsel %vm1456, %v2873, 0.0
        %2881 = vadd.xlane.f32.xlu0 %v2880
        %v2882 = vpop.xlane.xlu0 %2881
        %v2883 = vrcp.pop %v2876
        %v2884 = vrcp.pop %v2879
        %v2885 = vrcp.pop %v2882
        %v2886 = vmul.f32 %v2869, %v2883
        %v2887 = vmul.f32 %v2871, %v2884
        %v2888 = vmul.f32 %v2873, %v2885
        %v2889 = vpack.c.bf16 %v2887, %v2886
        %v2890 = vpack.c.bf16 %v2888, %v2888
        %2891 = vrot.lane.b32.xlu0 %v2609, 96
        %v2892 = vpop.permute.xlu0 %2891
        %2893 = vrot.lane.b32.xlu0 %v2610, 96
        %v2894 = vpop.permute.xlu0 %2893
        %v2897 = vsel %vm1456, %v2889, 0
        %v2900 = vsel %vm1456, %v2890, 0
        %v2903 = vsel %vm1498, %v2894, 0
        %2905 = vmatpush.bf16.msra.mxu0 0
        %2906 = vmatpush.bf16.msra.mxu0 0
        %2907 = vmatpush.bf16.msra.mxu0 0
        %2908 = vmatpush.bf16.msra.mxu0 0
        %2909 = vmatpush.bf16.msra.mxu0 0
        %2910 = vmatpush.bf16.msra.mxu0 0
        %2911 = vmatpush.bf16.msra.mxu0 %v2903
        %2912 = vmatpush.bf16.msra.mxu0 %v2892
        %2913 = vmatmul.bf16.gmra.mxu0 %v2897
        %v2914 = vpop.f32.mrf.mxu0
        %v2915 = vadd.f32 0.0, %v2914
        %v2916 = vpop.f32.mrf.mxu0
        %v2917 = vadd.f32 0.0, %v2916
        %2918 = vmatmul.bf16.gmra.mxu0 %v2900
        %v2919 = vpop.f32.mrf.mxu0
        %v2920 = vadd.f32 0.0, %v2919
        %v2921 = vpop.f32.mrf.mxu0
        %2922 = vdwg.mxu0
        %2923 = vrot.lane.b32.xlu0 %v2605, 80
        %v2924 = vpop.permute.xlu0 %2923
        %2925 = vrot.lane.b32.xlu0 %v2606, 80
        %v2926 = vpop.permute.xlu0 %2925
        %2927 = vrot.lane.b32.xlu0 %v2607, 16
        %v2928 = vpop.permute.xlu0 %2927
        %2929 = vrot.lane.b32.xlu0 %v2608, 16
        %v2930 = vpop.permute.xlu0 %2929
        %v2932 = vsel %vm1425, %v2924, 0
        %v2935 = vsel %vm1425, %v2926, 0
        %v2938 = vsel %vm1425, %v2928, 0
        %v2941 = vsel %vm1425, %v2930, 0
        %2943 = vmatpush.bf16.xpose.msra.mxu0 0
        %2944 = vmatpush.bf16.xpose.msra.mxu0 0
        %2945 = vmatpush.bf16.xpose.msra.mxu0 0
        %2946 = vmatpush.bf16.xpose.msra.mxu0 0
        %2947 = vmatpush.bf16.xpose.msra.mxu0 0
        %2948 = vmatpush.bf16.xpose.msra.mxu0 0
        %2949 = vmatpush.bf16.xpose.msra.mxu0 %v2941
        %2950 = vmatpush.bf16.xpose.msra.mxu0 %v2938
        %2951 = vmatmul.bf16.gmra.mxu0 %v2932
        %v2952 = vpop.f32.mrf.mxu0
        %v2953 = vadd.f32 %v1144, %v2952
        %v2954 = vpop.f32.mrf.mxu0
        %v2955 = vadd.f32 %v1144, %v2954
        %2956 = vmatmul.bf16.gmra.mxu0 %v2935
        %v2957 = vpop.f32.mrf.mxu0
        %v2958 = vadd.f32 %v1144, %v2957
        %v2959 = vpop.f32.mrf.mxu0
        %2960 = vdwg.mxu0
        %v2961 = vsel %vm1456, %v2953, -inf
        %2962 = vmax.xlane.f32.xlu0 %v2961
        %v2963 = vpop.xlane.xlu0 %2962
        %v2964 = vsel %vm1456, %v2955, -inf
        %2965 = vmax.xlane.f32.xlu0 %v2964
        %v2966 = vpop.xlane.xlu0 %2965
        %v2967 = vsel %vm1456, %v2958, -inf
        %2968 = vmax.xlane.f32.xlu0 %v2967
        %v2969 = vpop.xlane.xlu0 %2968
        %v2970 = vsub.f32 %v2953, %v2963
        %v2971 = vsub.f32 %v2955, %v2966
        %v2972 = vsub.f32 %v2958, %v2969
        %v2973 = vmul.f32 %v2970, 1.442695
        %v2974 = vpow.pop %v2973
        %v2975 = vmul.f32 %v2971, 1.442695
        %v2976 = vpow.pop %v2975
        %v2977 = vmul.f32 %v2972, 1.442695
        %v2978 = vpow.pop %v2977
        %v2979 = vsel %vm1456, %v2974, 0.0
        %2980 = vadd.xlane.f32.xlu0 %v2979
        %v2981 = vpop.xlane.xlu0 %2980
        %v2982 = vsel %vm1456, %v2976, 0.0
        %2983 = vadd.xlane.f32.xlu0 %v2982
        %v2984 = vpop.xlane.xlu0 %2983
        %v2985 = vsel %vm1456, %v2978, 0.0
        %2986 = vadd.xlane.f32.xlu0 %v2985
        %v2987 = vpop.xlane.xlu0 %2986
        %v2988 = vrcp.pop %v2981
        %v2989 = vrcp.pop %v2984
        %v2990 = vrcp.pop %v2987
        %v2991 = vmul.f32 %v2974, %v2988
        %v2992 = vmul.f32 %v2976, %v2989
        %v2993 = vmul.f32 %v2978, %v2990
        %v2994 = vpack.c.bf16 %v2992, %v2991
        %v2995 = vpack.c.bf16 %v2993, %v2993
        %2996 = vrot.lane.b32.xlu0 %v2609, 80
        %v2997 = vpop.permute.xlu0 %2996
        %2998 = vrot.lane.b32.xlu0 %v2610, 80
        %v2999 = vpop.permute.xlu0 %2998
        %v3002 = vsel %vm1456, %v2994, 0
        %v3005 = vsel %vm1456, %v2995, 0
        %v3008 = vsel %vm1498, %v2999, 0
        %3010 = vmatpush.bf16.msra.mxu0 0
        %3011 = vmatpush.bf16.msra.mxu0 0
        %3012 = vmatpush.bf16.msra.mxu0 0
        %3013 = vmatpush.bf16.msra.mxu0 0
        %3014 = vmatpush.bf16.msra.mxu0 0
        %3015 = vmatpush.bf16.msra.mxu0 0
        %3016 = vmatpush.bf16.msra.mxu0 %v3008
        %3017 = vmatpush.bf16.msra.mxu0 %v2997
        %3018 = vmatmul.bf16.gmra.mxu0 %v3002
        %v3019 = vpop.f32.mrf.mxu0
        %v3020 = vadd.f32 0.0, %v3019
        %v3021 = vpop.f32.mrf.mxu0
        %v3022 = vadd.f32 0.0, %v3021
        %3023 = vmatmul.bf16.gmra.mxu0 %v3005
        %v3024 = vpop.f32.mrf.mxu0
        %v3025 = vadd.f32 0.0, %v3024
        %v3026 = vpop.f32.mrf.mxu0
        %3027 = vdwg.mxu0
        %3031 = vrot.lane.b32.xlu0 %v2810, 16
        %v3032 = vpop.permute.xlu0 %3031
        %3033 = vrot.lane.b32.xlu0 %v2812, 16
        %v3034 = vpop.permute.xlu0 %3033
        %3035 = vrot.lane.b32.xlu0 %v2815, 16
        %v3036 = vpop.permute.xlu0 %3035
        %3043 = vrot.lane.b32.xlu0 %v2915, 32
        %v3044 = vpop.permute.xlu0 %3043
        %3045 = vrot.lane.b32.xlu0 %v2917, 32
        %v3046 = vpop.permute.xlu0 %3045
        %3047 = vrot.lane.b32.xlu0 %v2920, 32
        %v3048 = vpop.permute.xlu0 %3047
        %3055 = vrot.lane.b32.xlu0 %v3020, 48
        %v3056 = vpop.permute.xlu0 %3055
        %3057 = vrot.lane.b32.xlu0 %v3022, 48
        %v3058 = vpop.permute.xlu0 %3057
        %3059 = vrot.lane.b32.xlu0 %v3025, 48
        %v3060 = vpop.permute.xlu0 %3059
        %v3064 = vsel %vm1425, %v2701, %v3032
        %v3065 = vsel %vm1425, %v2703, %v3034
        %v3066 = vsel %vm1425, %v2706, %v3036
        %v3067 = vsel %vm1878, %v3064, %v3044
        %v3068 = vsel %vm1878, %v3065, %v3046
        %v3069 = vsel %vm1878, %v3066, %v3048
        %v3070 = vsel %vm1882, %v3067, %v3056
        %v3071 = vsel %vm1882, %v3068, %v3058
        %v3072 = vsel %vm1882, %v3069, %v3060
        %v3073 = vpack.c.bf16 %v3071, %v3070
        %v3074 = vpack.c.bf16 %v3072, %v3072
        %v3076 = vperm.slane %v2512, 0
        %v3086 = vunpack.c.l.b16 %v2503
        %v3087 = vunpack.c.l.b16 %v2504
        %v3088 = vunpack.c.l.b16 %v2505
        %v3089 = vunpack.c.l.b16 %v2506
        %v3090 = vunpack.c.l.b16 %v2507
        %v3091 = vunpack.c.l.b16 %v2508
        %v3092 = vunpack.c.l.b16 %v2509
        %v3093 = vunpack.c.l.b16 %v2510
        %v3094 = vpack.c.b16 %v3087, %v3086
        %v3095 = vpack.c.b16 %v3089, %v3088
        %v3096 = vpack.c.b16 %v3091, %v3090
        %v3097 = vpack.c.b16 %v3093, %v3092
        %v3103 = vsel %vm1098, %v3073, 0
        %v3106 = vsel %vm1098, %v3074, 0
        %3108 = vmatpush.bf16.msra.mxu0 0
        %3109 = vmatpush.bf16.msra.mxu0 0
        %3110 = vmatpush.bf16.msra.mxu0 0
        %3111 = vmatpush.bf16.msra.mxu0 0
        %3112 = vmatpush.bf16.msra.mxu0 %v3097
        %3113 = vmatpush.bf16.msra.mxu0 %v3096
        %3114 = vmatpush.bf16.msra.mxu0 %v3095
        %3115 = vmatpush.bf16.msra.mxu0 %v3094
        %3116 = vmatmul.bf16.gmra.mxu0 %v3103
        %v3117 = vpop.f32.mrf.mxu0
        %v3118 = vadd.f32 %v3076, %v3117
        %v3119 = vpop.f32.mrf.mxu0
        %v3120 = vadd.f32 %v3076, %v3119
        %3121 = vmatmul.bf16.gmra.mxu0 %v3106
        %v3122 = vpop.f32.mrf.mxu0
        %v3123 = vadd.f32 %v3076, %v3122
        %v3124 = vpop.f32.mrf.mxu0
        %3125 = vdwg.mxu0
        %v3126 = vadd.f32 %v2412, %v3118
        %v3127 = vadd.f32 %v2413, %v3120
        %v3128 = vadd.f32 %v2414, %v3123
        %v3129 = vsel %vm1098, %v3126, 0.0
        %3130 = vadd.xlane.f32.xlu0 %v3129
        %v3131 = vpop.xlane.xlu0 %3130
        %v3132 = vsel %vm1098, %v3127, 0.0
        %3133 = vadd.xlane.f32.xlu0 %v3132
        %v3134 = vpop.xlane.xlu0 %3133
        %v3135 = vsel %vm1098, %v3128, 0.0
        %3136 = vadd.xlane.f32.xlu0 %v3135
        %v3137 = vpop.xlane.xlu0 %3136
        %v3138 = vmul.f32 %v3131, %v1162
        %v3139 = vmul.f32 %v3134, %v1162
        %v3140 = vmul.f32 %v3137, %v1162
        %v3141 = vsub.f32 %v3126, %v3138
        %v3142 = vsub.f32 %v3127, %v3139
        %v3143 = vsub.f32 %v3128, %v3140
        %v3144 = vmul.f32 %v3141, %v3141
        %v3145 = vmul.f32 %v3142, %v3142
        %v3146 = vmul.f32 %v3143, %v3143
        %v3147 = vsel %vm1098, %v3144, 0.0
        %3148 = vadd.xlane.f32.xlu0 %v3147
        %v3149 = vpop.xlane.xlu0 %3148
        %v3150 = vsel %vm1098, %v3145, 0.0
        %3151 = vadd.xlane.f32.xlu0 %v3150
        %v3152 = vpop.xlane.xlu0 %3151
        %v3153 = vsel %vm1098, %v3146, 0.0
        %3154 = vadd.xlane.f32.xlu0 %v3153
        %v3155 = vpop.xlane.xlu0 %3154
        %v3156 = vmul.f32 %v3149, %v1162
        %v3157 = vmul.f32 %v3152, %v1162
        %v3158 = vmul.f32 %v3155, %v1162
        %v3159 = vadd.f32 %v3156, 1e-05
        %v3160 = vadd.f32 %v3157, 1e-05
        %v3161 = vadd.f32 %v3158, 1e-05
        %v3162 = vrsqrt.pop %v3159
        %v3163 = vmul.f32 %v3162, %v3159
        %v3164 = vmul.f32 %v3163, %v3162
        %v3165 = vmul.f32 0.5, %v3164
        %v3166 = vsub.f32 1.5, %v3165
        %v3167 = vmul.f32 %v3162, %v3166
        %vm3168 = vweird.f32 %v3159
        %vm3169 = vweird.f32 %v3162
        %vm3170 = vmor %vm3168, %vm3169
        %v3171 = vsel %vm3170, %v3162, %v3167
        %v3172 = vrsqrt.pop %v3160
        %v3173 = vmul.f32 %v3172, %v3160
        %v3174 = vmul.f32 %v3173, %v3172
        %v3175 = vmul.f32 0.5, %v3174
        %v3176 = vsub.f32 1.5, %v3175
        %v3177 = vmul.f32 %v3172, %v3176
        %vm3178 = vweird.f32 %v3160
        %vm3179 = vweird.f32 %v3172
        %vm3180 = vmor %vm3178, %vm3179
        %v3181 = vsel %vm3180, %v3172, %v3177
        %v3182 = vrsqrt.pop %v3161
        %v3183 = vmul.f32 %v3182, %v3161
        %v3184 = vmul.f32 %v3183, %v3182
        %v3185 = vmul.f32 0.5, %v3184
        %v3186 = vsub.f32 1.5, %v3185
        %v3187 = vmul.f32 %v3182, %v3186
        %vm3188 = vweird.f32 %v3161
        %vm3189 = vweird.f32 %v3182
        %vm3190 = vmor %vm3188, %vm3189
        %v3191 = vsel %vm3190, %v3182, %v3187
        %v3192 = vmul.f32 %v3141, %v3171
        %v3193 = vmul.f32 %v3142, %v3181
        %v3194 = vmul.f32 %v3143, %v3191
        %v3195 = vperm.slane %v2416, 2
        %v3196 = vmul.f32 %v3192, %v3195
        %v3197 = vmul.f32 %v3193, %v3195
        %v3198 = vmul.f32 %v3194, %v3195
        %v3199 = vperm.slane %v2416, 3
        %v3200 = vadd.f32 %v3196, %v3199
        %v3201 = vadd.f32 %v3197, %v3199
        %v3202 = vadd.f32 %v3198, %v3199
        %s3203 = scalar_lea.vmem %s9, 64
        %v3204 = vld [vmem:[%s3203] sm:$0xff]
        %v3205 = vld [vmem:[%s3203 + $0x8] sm:$0xff]
        %v3206 = vld [vmem:[%s3203 + $0x10] sm:$0xff]
        %v3207 = vld [vmem:[%s3203 + $0x18] sm:$0xff]
        %v3208 = vld [vmem:[%s3203 + $0x20] sm:$0xff]
        %v3209 = vld [vmem:[%s3203 + $0x28] sm:$0xff]
        %v3210 = vld [vmem:[%s3203 + $0x30] sm:$0xff]
        %v3211 = vld [vmem:[%s3203 + $0x38] sm:$0xff]
        %s3212 = scalar_lea.vmem [#allocation9], 2
        %v3213 = vld [vmem:[%s3212] sm:$0x3]
        %s3214 = scalar_lea.vmem %s11, 128
        %v3215 = vld [vmem:[%s3214] sm:$0xf]
        %v3216 = vld [vmem:[%s3214 + $0x4] sm:$0xf]
        %v3217 = vld [vmem:[%s3214 + $0x8] sm:$0xf]
        %v3218 = vld [vmem:[%s3214 + $0xc] sm:$0xf]
        %v3219 = vld [vmem:[%s3214 + $0x10] sm:$0xf]
        %v3220 = vld [vmem:[%s3214 + $0x14] sm:$0xf]
        %v3221 = vld [vmem:[%s3214 + $0x18] sm:$0xf]
        %v3222 = vld [vmem:[%s3214 + $0x1c] sm:$0xf]
        %v3223 = vld [vmem:[%s3214 + $0x20] sm:$0xf]
        %v3224 = vld [vmem:[%s3214 + $0x24] sm:$0xf]
        %v3225 = vld [vmem:[%s3214 + $0x28] sm:$0xf]
        %v3226 = vld [vmem:[%s3214 + $0x2c] sm:$0xf]
        %v3227 = vld [vmem:[%s3214 + $0x30] sm:$0xf]
        %v3228 = vld [vmem:[%s3214 + $0x34] sm:$0xf]
        %v3229 = vld [vmem:[%s3214 + $0x38] sm:$0xf]
        %v3230 = vld [vmem:[%s3214 + $0x3c] sm:$0xf]
        %v3231 = vld [vmem:[%s3214 + $0x40] sm:$0xf]
        %v3232 = vld [vmem:[%s3214 + $0x44] sm:$0xf]
        %v3233 = vld [vmem:[%s3214 + $0x48] sm:$0xf]
        %v3234 = vld [vmem:[%s3214 + $0x4c] sm:$0xf]
        %v3235 = vld [vmem:[%s3214 + $0x50] sm:$0xf]
        %v3236 = vld [vmem:[%s3214 + $0x54] sm:$0xf]
        %v3237 = vld [vmem:[%s3214 + $0x58] sm:$0xf]
        %v3238 = vld [vmem:[%s3214 + $0x5c] sm:$0xf]
        %v3239 = vld [vmem:[%s3214 + $0x60] sm:$0xf]
        %v3240 = vld [vmem:[%s3214 + $0x64] sm:$0xf]
        %v3241 = vld [vmem:[%s3214 + $0x68] sm:$0xf]
        %v3242 = vld [vmem:[%s3214 + $0x6c] sm:$0xf]
        %v3243 = vld [vmem:[%s3214 + $0x70] sm:$0xf]
        %v3244 = vld [vmem:[%s3214 + $0x74] sm:$0xf]
        %v3245 = vld [vmem:[%s3214 + $0x78] sm:$0xf]
        %v3246 = vld [vmem:[%s3214 + $0x7c] sm:$0xf]
        %s3247 = scalar_lea.vmem [#allocation11], 1
        %v3248 = vld [vmem:[%s3247] sm:$0x1]
        %v3249 = vpack.c.bf16 %v3201, %v3200
        %v3250 = vpack.c.bf16 %v3202, %v3202
        %v3252 = vperm.slane %v3213, 0
        %v3253 = vperm.slane %v3213, 1
        %v3264 = vunpack.c.l.b16 %v3204
        %v3265 = vunpack.c.h.b16 %v3204
        %v3266 = vunpack.c.l.b16 %v3205
        %v3267 = vunpack.c.h.b16 %v3205
        %v3268 = vunpack.c.l.b16 %v3206
        %v3269 = vunpack.c.h.b16 %v3206
        %v3270 = vunpack.c.l.b16 %v3207
        %v3271 = vunpack.c.h.b16 %v3207
        %v3272 = vunpack.c.l.b16 %v3208
        %v3273 = vunpack.c.h.b16 %v3208
        %v3274 = vunpack.c.l.b16 %v3209
        %v3275 = vunpack.c.h.b16 %v3209
        %v3276 = vunpack.c.l.b16 %v3210
        %v3277 = vunpack.c.h.b16 %v3210
        %v3278 = vunpack.c.l.b16 %v3211
        %v3279 = vunpack.c.h.b16 %v3211
        %v3280 = vpack.c.b16 %v3266, %v3264
        %v3281 = vpack.c.b16 %v3267, %v3265
        %v3282 = vpack.c.b16 %v3270, %v3268
        %v3283 = vpack.c.b16 %v3271, %v3269
        %v3284 = vpack.c.b16 %v3274, %v3272
        %v3285 = vpack.c.b16 %v3275, %v3273
        %v3286 = vpack.c.b16 %v3278, %v3276
        %v3287 = vpack.c.b16 %v3279, %v3277
        %v3297 = vsel %vm1098, %v3249, 0
        %v3300 = vsel %vm1098, %v3250, 0
        %3302 = vmatpush.bf16.msra.mxu0 0
        %3303 = vmatpush.bf16.msra.mxu0 0
        %3304 = vmatpush.bf16.msra.mxu0 0
        %3305 = vmatpush.bf16.msra.mxu0 0
        %3306 = vmatpush.bf16.msra.mxu0 %v3286
        %3307 = vmatpush.bf16.msra.mxu0 %v3284
        %3308 = vmatpush.bf16.msra.mxu0 %v3282
        %3309 = vmatpush.bf16.msra.mxu0 %v3280
        %3310 = vmatmul.bf16.gmra.mxu0 %v3297
        %v3311 = vpop.f32.mrf.mxu0
        %v3312 = vadd.f32 %v3252, %v3311
        %v3313 = vpop.f32.mrf.mxu0
        %v3314 = vadd.f32 %v3252, %v3313
        %3315 = vmatmul.bf16.gmra.mxu0 %v3300
        %v3316 = vpop.f32.mrf.mxu0
        %v3317 = vadd.f32 %v3252, %v3316
        %v3318 = vpop.f32.mrf.mxu0
        %3319 = vdwg.mxu0
        %3320 = vmatpush.bf16.msra.mxu0 0
        %3321 = vmatpush.bf16.msra.mxu0 0
        %3322 = vmatpush.bf16.msra.mxu0 0
        %3323 = vmatpush.bf16.msra.mxu0 0
        %3324 = vmatpush.bf16.msra.mxu0 %v3287
        %3325 = vmatpush.bf16.msra.mxu0 %v3285
        %3326 = vmatpush.bf16.msra.mxu0 %v3283
        %3327 = vmatpush.bf16.msra.mxu0 %v3281
        %3328 = vmatmul.bf16.gmra.mxu0 %v3297
        %v3329 = vpop.f32.mrf.mxu0
        %v3330 = vadd.f32 %v3253, %v3329
        %v3331 = vpop.f32.mrf.mxu0
        %v3332 = vadd.f32 %v3253, %v3331
        %3333 = vmatmul.bf16.gmra.mxu0 %v3300
        %v3334 = vpop.f32.mrf.mxu0
        %v3335 = vadd.f32 %v3253, %v3334
        %v3336 = vpop.f32.mrf.mxu0
        %3337 = vdwg.mxu0
        %v3338 = vmul.f32 %v3312, 1.702
        %v3339 = vmul.f32 %v3330, 1.702
        %v3340 = vmul.f32 %v3314, 1.702
        %v3341 = vmul.f32 %v3332, 1.702
        %v3342 = vmul.f32 %v3317, 1.702
        %v3343 = vmul.f32 %v3335, 1.702
        %v3344 = vxor.u32 %v3338, 2147483648
        %v3345 = vxor.u32 %v3339, 2147483648
        %v3346 = vxor.u32 %v3340, 2147483648
        %v3347 = vxor.u32 %v3341, 2147483648
        %v3348 = vxor.u32 %v3342, 2147483648
        %v3349 = vxor.u32 %v3343, 2147483648
        %v3350 = vmul.f32 %v3344, 1.442695
        %v3351 = vpow.pop %v3350
        %v3352 = vmul.f32 %v3345, 1.442695
        %v3353 = vpow.pop %v3352
        %v3354 = vmul.f32 %v3346, 1.442695
        %v3355 = vpow.pop %v3354
        %v3356 = vmul.f32 %v3347, 1.442695
        %v3357 = vpow.pop %v3356
        %v3358 = vmul.f32 %v3348, 1.442695
        %v3359 = vpow.pop %v3358
        %v3360 = vmul.f32 %v3349, 1.442695
        %v3361 = vpow.pop %v3360
        %v3362 = vadd.f32 %v3351, 1.0
        %v3363 = vadd.f32 %v3353, 1.0
        %v3364 = vadd.f32 %v3355, 1.0
        %v3365 = vadd.f32 %v3357, 1.0
        %v3366 = vadd.f32 %v3359, 1.0
        %v3367 = vadd.f32 %v3361, 1.0
        %v3368 = vrcp.pop %v3362
        %v3369 = vmul.f32 %v3362, %v3368
        %v3370 = vsub.f32 1.0, %v3369
        %v3371 = vmul.f32 %v3368, %v3370
        %v3372 = vadd.f32 %v3368, %v3371
        %vm3373 = vweird.f32 %v3362
        %vm3374 = vweird.f32 %v3368
        %vm3375 = vmor %vm3373, %vm3374
        %v3376 = vsel %vm3375, %v3368, %v3372
        %v3377 = vand.u32 2147483647, %v3362
        %vm3378 = vcmp.eq.f32.partialorder %v3377, 8.507059e+37
        %v3379 = vand.u32 %v3362, 2147483648
        %v3380 = vor.u32 1.1754944e-38, %v3379
        %v3381 = vsel %vm3378, %v3380, %v3376
        %v3382 = vmul.f32 1.0, %v3381
        %v3383 = vrcp.pop %v3363
        %v3384 = vmul.f32 %v3363, %v3383
        %v3385 = vsub.f32 1.0, %v3384
        %v3386 = vmul.f32 %v3383, %v3385
        %v3387 = vadd.f32 %v3383, %v3386
        %vm3388 = vweird.f32 %v3363
        %vm3389 = vweird.f32 %v3383
        %vm3390 = vmor %vm3388, %vm3389
        %v3391 = vsel %vm3390, %v3383, %v3387
        %v3392 = vand.u32 2147483647, %v3363
        %vm3393 = vcmp.eq.f32.partialorder %v3392, 8.507059e+37
        %v3394 = vand.u32 %v3363, 2147483648
        %v3395 = vor.u32 1.1754944e-38, %v3394
        %v3396 = vsel %vm3393, %v3395, %v3391
        %v3397 = vmul.f32 1.0, %v3396
        %v3398 = vrcp.pop %v3364
        %v3399 = vmul.f32 %v3364, %v3398
        %v3400 = vsub.f32 1.0, %v3399
        %v3401 = vmul.f32 %v3398, %v3400
        %v3402 = vadd.f32 %v3398, %v3401
        %vm3403 = vweird.f32 %v3364
        %vm3404 = vweird.f32 %v3398
        %vm3405 = vmor %vm3403, %vm3404
        %v3406 = vsel %vm3405, %v3398, %v3402
        %v3407 = vand.u32 2147483647, %v3364
        %vm3408 = vcmp.eq.f32.partialorder %v3407, 8.507059e+37
        %v3409 = vand.u32 %v3364, 2147483648
        %v3410 = vor.u32 1.1754944e-38, %v3409
        %v3411 = vsel %vm3408, %v3410, %v3406
        %v3412 = vmul.f32 1.0, %v3411
        %v3413 = vrcp.pop %v3365
        %v3414 = vmul.f32 %v3365, %v3413
        %v3415 = vsub.f32 1.0, %v3414
        %v3416 = vmul.f32 %v3413, %v3415
        %v3417 = vadd.f32 %v3413, %v3416
        %vm3418 = vweird.f32 %v3365
        %vm3419 = vweird.f32 %v3413
        %vm3420 = vmor %vm3418, %vm3419
        %v3421 = vsel %vm3420, %v3413, %v3417
        %v3422 = vand.u32 2147483647, %v3365
        %vm3423 = vcmp.eq.f32.partialorder %v3422, 8.507059e+37
        %v3424 = vand.u32 %v3365, 2147483648
        %v3425 = vor.u32 1.1754944e-38, %v3424
        %v3426 = vsel %vm3423, %v3425, %v3421
        %v3427 = vmul.f32 1.0, %v3426
        %v3428 = vrcp.pop %v3366
        %v3429 = vmul.f32 %v3366, %v3428
        %v3430 = vsub.f32 1.0, %v3429
        %v3431 = vmul.f32 %v3428, %v3430
        %v3432 = vadd.f32 %v3428, %v3431
        %vm3433 = vweird.f32 %v3366
        %vm3434 = vweird.f32 %v3428
        %vm3435 = vmor %vm3433, %vm3434
        %v3436 = vsel %vm3435, %v3428, %v3432
        %v3437 = vand.u32 2147483647, %v3366
        %vm3438 = vcmp.eq.f32.partialorder %v3437, 8.507059e+37
        %v3439 = vand.u32 %v3366, 2147483648
        %v3440 = vor.u32 1.1754944e-38, %v3439
        %v3441 = vsel %vm3438, %v3440, %v3436
        %v3442 = vmul.f32 1.0, %v3441
        %v3443 = vrcp.pop %v3367
        %v3444 = vmul.f32 %v3367, %v3443
        %v3445 = vsub.f32 1.0, %v3444
        %v3446 = vmul.f32 %v3443, %v3445
        %v3447 = vadd.f32 %v3443, %v3446
        %vm3448 = vweird.f32 %v3367
        %vm3449 = vweird.f32 %v3443
        %vm3450 = vmor %vm3448, %vm3449
        %v3451 = vsel %vm3450, %v3443, %v3447
        %v3452 = vand.u32 2147483647, %v3367
        %vm3453 = vcmp.eq.f32.partialorder %v3452, 8.507059e+37
        %v3454 = vand.u32 %v3367, 2147483648
        %v3455 = vor.u32 1.1754944e-38, %v3454
        %v3456 = vsel %vm3453, %v3455, %v3451
        %v3457 = vmul.f32 1.0, %v3456
        %v3458 = vmul.f32 %v3312, %v3382
        %v3459 = vmul.f32 %v3330, %v3397
        %v3460 = vmul.f32 %v3314, %v3412
        %v3461 = vmul.f32 %v3332, %v3427
        %v3462 = vmul.f32 %v3317, %v3442
        %v3463 = vmul.f32 %v3335, %v3457
        %v3464 = vpack.c.bf16 %v3460, %v3458
        %v3465 = vpack.c.bf16 %v3461, %v3459
        %v3466 = vpack.c.bf16 %v3462, %v3462
        %v3467 = vpack.c.bf16 %v3463, %v3463
        %v3469 = vperm.slane %v3248, 0
        %v3503 = vunpack.c.l.b16 %v3215
        %v3504 = vunpack.c.l.b16 %v3216
        %v3505 = vunpack.c.l.b16 %v3217
        %v3506 = vunpack.c.l.b16 %v3218
        %v3507 = vunpack.c.l.b16 %v3219
        %v3508 = vunpack.c.l.b16 %v3220
        %v3509 = vunpack.c.l.b16 %v3221
        %v3510 = vunpack.c.l.b16 %v3222
        %v3511 = vunpack.c.l.b16 %v3223
        %v3512 = vunpack.c.l.b16 %v3224
        %v3513 = vunpack.c.l.b16 %v3225
        %v3514 = vunpack.c.l.b16 %v3226
        %v3515 = vunpack.c.l.b16 %v3227
        %v3516 = vunpack.c.l.b16 %v3228
        %v3517 = vunpack.c.l.b16 %v3229
        %v3518 = vunpack.c.l.b16 %v3230
        %v3519 = vunpack.c.l.b16 %v3231
        %v3520 = vunpack.c.l.b16 %v3232
        %v3521 = vunpack.c.l.b16 %v3233
        %v3522 = vunpack.c.l.b16 %v3234
        %v3523 = vunpack.c.l.b16 %v3235
        %v3524 = vunpack.c.l.b16 %v3236
        %v3525 = vunpack.c.l.b16 %v3237
        %v3526 = vunpack.c.l.b16 %v3238
        %v3527 = vunpack.c.l.b16 %v3239
        %v3528 = vunpack.c.l.b16 %v3240
        %v3529 = vunpack.c.l.b16 %v3241
        %v3530 = vunpack.c.l.b16 %v3242
        %v3531 = vunpack.c.l.b16 %v3243
        %v3532 = vunpack.c.l.b16 %v3244
        %v3533 = vunpack.c.l.b16 %v3245
        %v3534 = vunpack.c.l.b16 %v3246
        %v3535 = vpack.c.b16 %v3504, %v3503
        %v3536 = vpack.c.b16 %v3506, %v3505
        %v3537 = vpack.c.b16 %v3508, %v3507
        %v3538 = vpack.c.b16 %v3510, %v3509
        %v3539 = vpack.c.b16 %v3512, %v3511
        %v3540 = vpack.c.b16 %v3514, %v3513
        %v3541 = vpack.c.b16 %v3516, %v3515
        %v3542 = vpack.c.b16 %v3518, %v3517
        %v3543 = vpack.c.b16 %v3520, %v3519
        %v3544 = vpack.c.b16 %v3522, %v3521
        %v3545 = vpack.c.b16 %v3524, %v3523
        %v3546 = vpack.c.b16 %v3526, %v3525
        %v3547 = vpack.c.b16 %v3528, %v3527
        %v3548 = vpack.c.b16 %v3530, %v3529
        %v3549 = vpack.c.b16 %v3532, %v3531
        %v3550 = vpack.c.b16 %v3534, %v3533
        %3567 = vmatpush.bf16.msra.mxu0 %v3542
        %3568 = vmatpush.bf16.msra.mxu0 %v3541
        %3569 = vmatpush.bf16.msra.mxu0 %v3540
        %3570 = vmatpush.bf16.msra.mxu0 %v3539
        %3571 = vmatpush.bf16.msra.mxu0 %v3538
        %3572 = vmatpush.bf16.msra.mxu0 %v3537
        %3573 = vmatpush.bf16.msra.mxu0 %v3536
        %3574 = vmatpush.bf16.msra.mxu0 %v3535
        %3575 = vmatmul.bf16.gmra.mxu0 %v3464
        %v3576 = vpop.f32.mrf.mxu0
        %v3577 = vadd.f32 %v3469, %v3576
        %v3578 = vpop.f32.mrf.mxu0
        %v3579 = vadd.f32 %v3469, %v3578
        %3580 = vmatmul.bf16.gmra.mxu0 %v3466
        %v3581 = vpop.f32.mrf.mxu0
        %v3582 = vadd.f32 %v3469, %v3581
        %v3583 = vpop.f32.mrf.mxu0
        %3584 = vdwg.mxu0
        %3585 = vmatpush.bf16.msra.mxu0 %v3550
        %3586 = vmatpush.bf16.msra.mxu0 %v3549
        %3587 = vmatpush.bf16.msra.mxu0 %v3548
        %3588 = vmatpush.bf16.msra.mxu0 %v3547
        %3589 = vmatpush.bf16.msra.mxu0 %v3546
        %3590 = vmatpush.bf16.msra.mxu0 %v3545
        %3591 = vmatpush.bf16.msra.mxu0 %v3544
        %3592 = vmatpush.bf16.msra.mxu0 %v3543
        %3593 = vmatmul.bf16.gmra.mxu0 %v3465
        %v3594 = vpop.f32.mrf.mxu0
        %v3595 = vadd.f32 %v3577, %v3594
        %v3596 = vpop.f32.mrf.mxu0
        %v3597 = vadd.f32 %v3579, %v3596
        %3598 = vmatmul.bf16.gmra.mxu0 %v3467
        %v3599 = vpop.f32.mrf.mxu0
        %v3600 = vadd.f32 %v3582, %v3599
        %v3601 = vpop.f32.mrf.mxu0
        %3602 = vdwg.mxu0
        %v3603 = vadd.f32 %v3126, %v3595
        %v3604 = vadd.f32 %v3127, %v3597
        %v3605 = vadd.f32 %v3128, %v3600
        %v3606 = vld [vmem:[#allocation12] sm:$0x1]
        %v3607 = vpack.c.bf16 %v3604, %v3603
        %v3608 = vpack.c.bf16 %v3605, %v3605
        %v3609 = vld [vmem:[#allocation2] sm:$0x1]
        %3611 = vset.pattern.permute.xlu0 0
        %3612 = vperm.xlu0 %3611, %v3609
        %v3613 = vpop.permute.xlu0 %3612
        %v3615 = vperm.slane %v3613, 0
        %v3617 = vsel %vm1456, %v3606, 0
        %v3620 = vsel %vm1498, %v3608, 0
        %3622 = vmatpush.bf16.msra.mxu0 0
        %3623 = vmatpush.bf16.msra.mxu0 0
        %3624 = vmatpush.bf16.msra.mxu0 0
        %3625 = vmatpush.bf16.msra.mxu0 0
        %3626 = vmatpush.bf16.msra.mxu0 0
        %3627 = vmatpush.bf16.msra.mxu0 0
        %3628 = vmatpush.bf16.msra.mxu0 %v3620
        %3629 = vmatpush.bf16.msra.mxu0 %v3607
        %3630 = vmatmul.bf16.gmra.mxu0 %v3617
        %v3631 = vpop.f32.mrf.mxu0
        %v3632 = vadd.f32 %v3615, %v3631
        %v3633 = vpop.f32.mrf.mxu0
        %3634 = vdwg.mxu0
        %v3635 = vld [vmem:[#allocation14] sm:$0xf]
        %vm3636 = vcmask 516096
        %v3637 = vsel %vm3636, %v3632, 0.0
        %3638 = vadd.xlane.f32.xlu0 %v3637
        %v3639 = vpop.xlane.xlu0 %3638
        %v3640 = vmul.f32 %v3639, %v1162
        %v3641 = vsub.f32 %v3632, %v3640
        %v3642 = vmul.f32 %v3641, %v3641
        %v3643 = vsel %vm3636, %v3642, 0.0
        %3644 = vadd.xlane.f32.xlu0 %v3643
        %v3645 = vpop.xlane.xlu0 %3644
        %v3646 = vmul.f32 %v3645, %v1162
        %v3647 = vadd.f32 %v3646, 1e-05
        %v3648 = vrsqrt.pop %v3647
        %v3649 = vmul.f32 %v3648, %v3647
        %v3650 = vmul.f32 %v3649, %v3648
        %v3651 = vmul.f32 0.5, %v3650
        %v3652 = vsub.f32 1.5, %v3651
        %v3653 = vmul.f32 %v3648, %v3652
        %vm3654 = vweird.f32 %v3647
        %vm3655 = vweird.f32 %v3648
        %vm3656 = vmor %vm3654, %vm3655
        %v3657 = vsel %vm3656, %v3648, %v3653
        %v3658 = vmul.f32 %v3641, %v3657
        %v3659 = vmul.f32 %v3658, %v3635
        %v3661 = vrot.slane %v3635, 1
        %v3663 = vadd.f32 %v3659, %v3661
        %v3664 = vpack.c.bf16 %v3663, %v3663
        %v3665 = vld [vmem:[%s16] sm:$0xf]
        %v3666 = vld [vmem:[%s16 + $0x4] sm:$0xf]
        %v3667 = vld [vmem:[%s16 + $0x8] sm:$0xf]
        %v3668 = vld [vmem:[%s16 + $0xc] sm:$0xf]
        %v3669 = vld [vmem:[%s16 + $0x10] sm:$0xf]
        %v3670 = vld [vmem:[%s16 + $0x14] sm:$0xf]
        %v3671 = vld [vmem:[%s16 + $0x18] sm:$0xf]
        %v3672 = vld [vmem:[%s16 + $0x1c] sm:$0xf]
        %v3673 = vld [vmem:[#allocation15] sm:$0x1]
        %v3682 = vunpack.c.l.b16 %v3665
        %v3683 = vunpack.c.l.b16 %v3666
        %v3684 = vunpack.c.l.b16 %v3667
        %v3685 = vunpack.c.l.b16 %v3668
        %v3686 = vunpack.c.l.b16 %v3669
        %v3687 = vunpack.c.l.b16 %v3670
        %v3688 = vunpack.c.l.b16 %v3671
        %v3689 = vunpack.c.l.b16 %v3672
        %v3690 = vpack.c.b16 %v3683, %v3682
        %v3691 = vpack.c.b16 %v3685, %v3684
        %v3692 = vpack.c.b16 %v3687, %v3686
        %v3693 = vpack.c.b16 %v3689, %v3688
        %v3699 = vsel %vm1098, %v3664, 0
        %3701 = vmatpush.bf16.msra.mxu0 0
        %3702 = vmatpush.bf16.msra.mxu0 0
        %3703 = vmatpush.bf16.msra.mxu0 0
        %3704 = vmatpush.bf16.msra.mxu0 0
        %3705 = vmatpush.bf16.msra.mxu0 %v3693
        %3706 = vmatpush.bf16.msra.mxu0 %v3692
        %3707 = vmatpush.bf16.msra.mxu0 %v3691
        %3708 = vmatpush.bf16.msra.mxu0 %v3690
        %3709 = vmatmul.bf16.gmra.mxu0 %v3699
        %v3710 = vpop.f32.mrf.mxu0
        %v3711 = vadd.f32 %v3673, %v3710
        %v3712 = vpop.f32.mrf.mxu0
        %3713 = vdwg.mxu0
        %v3714 = vpack.c.bf16 %v3711, %v3711
        %v3715 = vld [vmem:[%s18] sm:$0xf]
        %v3716 = vld [vmem:[%s18 + $0x4] sm:$0xf]
        %v3717 = vld [vmem:[%s18 + $0x8] sm:$0xf]
        %v3718 = vld [vmem:[%s18 + $0xc] sm:$0xf]
        %v3719 = vld [vmem:[%s18 + $0x10] sm:$0xf]
        %v3720 = vld [vmem:[%s18 + $0x14] sm:$0xf]
        %v3721 = vld [vmem:[%s18 + $0x18] sm:$0xf]
        %v3722 = vld [vmem:[%s18 + $0x1c] sm:$0xf]
        %v3723 = vld [vmem:[#allocation17] sm:$0x1]
        %v3732 = vunpack.c.l.b16 %v3715
        %v3733 = vunpack.c.l.b16 %v3716
        %v3734 = vunpack.c.l.b16 %v3717
        %v3735 = vunpack.c.l.b16 %v3718
        %v3736 = vunpack.c.l.b16 %v3719
        %v3737 = vunpack.c.l.b16 %v3720
        %v3738 = vunpack.c.l.b16 %v3721
        %v3739 = vunpack.c.l.b16 %v3722
        %v3740 = vpack.c.b16 %v3733, %v3732
        %v3741 = vpack.c.b16 %v3735, %v3734
        %v3742 = vpack.c.b16 %v3737, %v3736
        %v3743 = vpack.c.b16 %v3739, %v3738
        %v3749 = vsel %vm1098, %v3714, 0
        %3751 = vmatpush.bf16.msra.mxu0 0
        %3752 = vmatpush.bf16.msra.mxu0 0
        %3753 = vmatpush.bf16.msra.mxu0 0
        %3754 = vmatpush.bf16.msra.mxu0 0
        %3755 = vmatpush.bf16.msra.mxu0 %v3743
        %3756 = vmatpush.bf16.msra.mxu0 %v3742
        %3757 = vmatpush.bf16.msra.mxu0 %v3741
        %3758 = vmatpush.bf16.msra.mxu0 %v3740
        %3759 = vmatmul.bf16.gmra.mxu0 %v3749
        %v3760 = vpop.f32.mrf.mxu0
        %v3761 = vadd.f32 %v3723, %v3760
        %v3762 = vpop.f32.mrf.mxu0
        %3763 = vdwg.mxu0
        %v3764 = vadd.f32 %v3632, %v3761
        %v3765 = vsel %vm3636, %v3764, 0.0
        %3766 = vadd.xlane.f32.xlu0 %v3765
        %v3767 = vpop.xlane.xlu0 %3766
        %v3768 = vmul.f32 %v3767, %v1162
        %v3769 = vsub.f32 %v3764, %v3768
        %v3770 = vmul.f32 %v3769, %v3769
        %v3771 = vsel %vm3636, %v3770, 0.0
        %3772 = vadd.xlane.f32.xlu0 %v3771
        %v3773 = vpop.xlane.xlu0 %3772
        %v3774 = vmul.f32 %v3773, %v1162
        %v3775 = vadd.f32 %v3774, 1e-05
        %v3776 = vrsqrt.pop %v3775
        %v3777 = vmul.f32 %v3776, %v3775
        %v3778 = vmul.f32 %v3777, %v3776
        %v3779 = vmul.f32 0.5, %v3778
        %v3780 = vsub.f32 1.5, %v3779
        %v3781 = vmul.f32 %v3776, %v3780
        %vm3782 = vweird.f32 %v3775
        %vm3783 = vweird.f32 %v3776
        %vm3784 = vmor %vm3782, %vm3783
        %v3785 = vsel %vm3784, %v3776, %v3781
        %v3786 = vmul.f32 %v3769, %v3785
        %v3787 = vrot.slane %v3635, 2
        %v3789 = vmul.f32 %v3786, %v3787
        %v3790 = vrot.slane %v3635, 3
        %v3792 = vadd.f32 %v3789, %v3790
        %v3793 = vld [vmem:[%s20] sm:$0xff]
        %v3794 = vld [vmem:[%s20 + $0x8] sm:$0xff]
        %v3795 = vld [vmem:[%s20 + $0x10] sm:$0xff]
        %v3796 = vld [vmem:[%s20 + $0x18] sm:$0xff]
        %v3797 = vld [vmem:[%s20 + $0x20] sm:$0xff]
        %v3798 = vld [vmem:[%s20 + $0x28] sm:$0xff]
        %v3799 = vld [vmem:[%s20 + $0x30] sm:$0xff]
        %v3800 = vld [vmem:[%s20 + $0x38] sm:$0xff]
        %v3801 = vld [vmem:[#allocation18] sm:$0x3]
        %v3802 = vld [vmem:[%s22] sm:$0xf]
        %v3803 = vld [vmem:[%s22 + $0x4] sm:$0xf]
        %v3804 = vld [vmem:[%s22 + $0x8] sm:$0xf]
        %v3805 = vld [vmem:[%s22 + $0xc] sm:$0xf]
        %v3806 = vld [vmem:[%s22 + $0x10] sm:$0xf]
        %v3807 = vld [vmem:[%s22 + $0x14] sm:$0xf]
        %v3808 = vld [vmem:[%s22 + $0x18] sm:$0xf]
        %v3809 = vld [vmem:[%s22 + $0x1c] sm:$0xf]
        %v3810 = vld [vmem:[%s22 + $0x20] sm:$0xf]
        %v3811 = vld [vmem:[%s22 + $0x24] sm:$0xf]
        %v3812 = vld [vmem:[%s22 + $0x28] sm:$0xf]
        %v3813 = vld [vmem:[%s22 + $0x2c] sm:$0xf]
        %v3814 = vld [vmem:[%s22 + $0x30] sm:$0xf]
        %v3815 = vld [vmem:[%s22 + $0x34] sm:$0xf]
        %v3816 = vld [vmem:[%s22 + $0x38] sm:$0xf]
        %v3817 = vld [vmem:[%s22 + $0x3c] sm:$0xf]
        %v3818 = vld [vmem:[%s22 + $0x40] sm:$0xf]
        %v3819 = vld [vmem:[%s22 + $0x44] sm:$0xf]
        %v3820 = vld [vmem:[%s22 + $0x48] sm:$0xf]
        %v3821 = vld [vmem:[%s22 + $0x4c] sm:$0xf]
        %v3822 = vld [vmem:[%s22 + $0x50] sm:$0xf]
        %v3823 = vld [vmem:[%s22 + $0x54] sm:$0xf]
        %v3824 = vld [vmem:[%s22 + $0x58] sm:$0xf]
        %v3825 = vld [vmem:[%s22 + $0x5c] sm:$0xf]
        %v3826 = vld [vmem:[%s22 + $0x60] sm:$0xf]
        %v3827 = vld [vmem:[%s22 + $0x64] sm:$0xf]
        %v3828 = vld [vmem:[%s22 + $0x68] sm:$0xf]
        %v3829 = vld [vmem:[%s22 + $0x6c] sm:$0xf]
        %v3830 = vld [vmem:[%s22 + $0x70] sm:$0xf]
        %v3831 = vld [vmem:[%s22 + $0x74] sm:$0xf]
        %v3832 = vld [vmem:[%s22 + $0x78] sm:$0xf]
        %v3833 = vld [vmem:[%s22 + $0x7c] sm:$0xf]
        %v3834 = vld [vmem:[%s23] sm:$0x1]
        %v3835 = vpack.c.bf16 %v3792, %v3792
        %v3844 = vunpack.c.l.b16 %v3793
        %v3845 = vunpack.c.h.b16 %v3793
        %v3846 = vunpack.c.l.b16 %v3794
        %v3847 = vunpack.c.h.b16 %v3794
        %v3848 = vunpack.c.l.b16 %v3795
        %v3849 = vunpack.c.h.b16 %v3795
        %v3850 = vunpack.c.l.b16 %v3796
        %v3851 = vunpack.c.h.b16 %v3796
        %v3852 = vunpack.c.l.b16 %v3797
        %v3853 = vunpack.c.h.b16 %v3797
        %v3854 = vunpack.c.l.b16 %v3798
        %v3855 = vunpack.c.h.b16 %v3798
        %v3856 = vunpack.c.l.b16 %v3799
        %v3857 = vunpack.c.h.b16 %v3799
        %v3858 = vunpack.c.l.b16 %v3800
        %v3859 = vunpack.c.h.b16 %v3800
        %v3860 = vpack.c.b16 %v3846, %v3844
        %v3861 = vpack.c.b16 %v3847, %v3845
        %v3862 = vpack.c.b16 %v3850, %v3848
        %v3863 = vpack.c.b16 %v3851, %v3849
        %v3864 = vpack.c.b16 %v3854, %v3852
        %v3865 = vpack.c.b16 %v3855, %v3853
        %v3866 = vpack.c.b16 %v3858, %v3856
        %v3867 = vpack.c.b16 %v3859, %v3857
        %v3877 = vperm.slane %v3801, 0
        %v3878 = vperm.slane %v3801, 1
        %v3882 = vsel %vm1098, %v3835, 0
        %3884 = vmatpush.bf16.msra.mxu0 0
        %3885 = vmatpush.bf16.msra.mxu0 0
        %3886 = vmatpush.bf16.msra.mxu0 0
        %3887 = vmatpush.bf16.msra.mxu0 0
        %3888 = vmatpush.bf16.msra.mxu0 %v3866
        %3889 = vmatpush.bf16.msra.mxu0 %v3864
        %3890 = vmatpush.bf16.msra.mxu0 %v3862
        %3891 = vmatpush.bf16.msra.mxu0 %v3860
        %3892 = vmatmul.bf16.gmra.mxu0 %v3882
        %v3893 = vpop.f32.mrf.mxu0
        %v3894 = vadd.f32 %v3877, %v3893
        %v3895 = vpop.f32.mrf.mxu0
        %3896 = vdwg.mxu0
        %3897 = vmatpush.bf16.msra.mxu0 0
        %3898 = vmatpush.bf16.msra.mxu0 0
        %3899 = vmatpush.bf16.msra.mxu0 0
        %3900 = vmatpush.bf16.msra.mxu0 0
        %3901 = vmatpush.bf16.msra.mxu0 %v3867
        %3902 = vmatpush.bf16.msra.mxu0 %v3865
        %3903 = vmatpush.bf16.msra.mxu0 %v3863
        %3904 = vmatpush.bf16.msra.mxu0 %v3861
        %3905 = vmatmul.bf16.gmra.mxu0 %v3882
        %v3906 = vpop.f32.mrf.mxu0
        %v3907 = vadd.f32 %v3878, %v3906
        %v3908 = vpop.f32.mrf.mxu0
        %3909 = vdwg.mxu0
        %v3910 = vmul.f32 %v3894, 0.5
        %v3911 = vmul.f32 %v3907, 0.5
        %v3912 = vmul.f32 %v3894, 0.70710677
        %v3913 = vmul.f32 %v3907, 0.70710677
        %v3914 = vand.u32 2147483647, %v3912
        %v3915 = vand.u32 2147483647, %v3913
        %v3916 = vmul.f32 %v3914, 0.3275911
        %v3917 = vmul.f32 %v3915, 0.3275911
        %v3918 = vadd.f32 %v3916, 1.0
        %v3919 = vadd.f32 %v3917, 1.0
        %v3920 = vrcp.pop %v3918
        %v3921 = vmul.f32 %v3918, %v3920
        %v3922 = vsub.f32 1.0, %v3921
        %v3923 = vmul.f32 %v3920, %v3922
        %v3924 = vadd.f32 %v3920, %v3923
        %vm3925 = vweird.f32 %v3918
        %vm3926 = vweird.f32 %v3920
        %vm3927 = vmor %vm3925, %vm3926
        %v3928 = vsel %vm3927, %v3920, %v3924
        %v3929 = vand.u32 2147483647, %v3918
        %vm3930 = vcmp.eq.f32.partialorder %v3929, 8.507059e+37
        %v3931 = vand.u32 %v3918, 2147483648
        %v3932 = vor.u32 1.1754944e-38, %v3931
        %v3933 = vsel %vm3930, %v3932, %v3928
        %v3934 = vmul.f32 1.0, %v3933
        %v3935 = vrcp.pop %v3919
        %v3936 = vmul.f32 %v3919, %v3935
        %v3937 = vsub.f32 1.0, %v3936
        %v3938 = vmul.f32 %v3935, %v3937
        %v3939 = vadd.f32 %v3935, %v3938
        %vm3940 = vweird.f32 %v3919
        %vm3941 = vweird.f32 %v3935
        %vm3942 = vmor %vm3940, %vm3941
        %v3943 = vsel %vm3942, %v3935, %v3939
        %v3944 = vand.u32 2147483647, %v3919
        %vm3945 = vcmp.eq.f32.partialorder %v3944, 8.507059e+37
        %v3946 = vand.u32 %v3919, 2147483648
        %v3947 = vor.u32 1.1754944e-38, %v3946
        %v3948 = vsel %vm3945, %v3947, %v3943
        %v3949 = vmul.f32 1.0, %v3948
        %v3950 = vmul.f32 %v3934, 1.0614054
        %v3951 = vmul.f32 %v3949, 1.0614054
        %v3952 = vadd.f32 %v3950, -1.4531521
        %v3953 = vadd.f32 %v3951, -1.4531521
        %v3954 = vmul.f32 %v3952, %v3934
        %v3955 = vmul.f32 %v3953, %v3949
        %v3956 = vadd.f32 %v3954, 1.4214138
        %v3957 = vadd.f32 %v3955, 1.4214138
        %v3958 = vmul.f32 %v3956, %v3934
        %v3959 = vmul.f32 %v3957, %v3949
        %v3960 = vadd.f32 %v3958, -0.28449672
        %v3961 = vadd.f32 %v3959, -0.28449672
        %v3962 = vmul.f32 %v3960, %v3934
        %v3963 = vmul.f32 %v3961, %v3949
        %v3964 = vadd.f32 %v3962, 0.2548296
        %v3965 = vadd.f32 %v3963, 0.2548296
        %v3966 = vmul.f32 %v3964, %v3934
        %v3967 = vmul.f32 %v3965, %v3949
        %v3968 = vsub.f32 0.0, %v3914
        %v3969 = vsub.f32 0.0, %v3915
        %v3970 = vmul.f32 %v3968, %v3914
        %v3971 = vmul.f32 %v3969, %v3915
        %v3972 = vmul.f32 %v3970, 1.442695
        %v3973 = vpow.pop %v3972
        %v3974 = vmul.f32 %v3971, 1.442695
        %v3975 = vpow.pop %v3974
        %v3976 = vmul.f32 %v3966, %v3973
        %v3977 = vmul.f32 %v3967, %v3975
        %v3978 = vsub.f32 1.0, %v3976
        %v3979 = vsub.f32 1.0, %v3977
        %vm3980 = vcmp.ge.f32.partialorder %v3912, 0.0
        %vm3981 = vcmp.ge.f32.partialorder %v3913, 0.0
        %v3982 = vsub.f32 0.0, %v3978
        %v3983 = vsub.f32 0.0, %v3979
        %v3984 = vsel %vm3980, %v3978, %v3982
        %v3985 = vsel %vm3981, %v3979, %v3983
        %v3986 = vadd.f32 %v3984, 1.0
        %v3987 = vadd.f32 %v3985, 1.0
        %v3988 = vmul.f32 %v3910, %v3986
        %v3989 = vmul.f32 %v3911, %v3987
        %v3990 = vpack.c.bf16 %v3988, %v3988
        %v3991 = vpack.c.bf16 %v3989, %v3989
        %v4024 = vunpack.c.l.b16 %v3802
        %v4025 = vunpack.c.l.b16 %v3803
        %v4026 = vunpack.c.l.b16 %v3804
        %v4027 = vunpack.c.l.b16 %v3805
        %v4028 = vunpack.c.l.b16 %v3806
        %v4029 = vunpack.c.l.b16 %v3807
        %v4030 = vunpack.c.l.b16 %v3808
        %v4031 = vunpack.c.l.b16 %v3809
        %v4032 = vunpack.c.l.b16 %v3810
        %v4033 = vunpack.c.l.b16 %v3811
        %v4034 = vunpack.c.l.b16 %v3812
        %v4035 = vunpack.c.l.b16 %v3813
        %v4036 = vunpack.c.l.b16 %v3814
        %v4037 = vunpack.c.l.b16 %v3815
        %v4038 = vunpack.c.l.b16 %v3816
        %v4039 = vunpack.c.l.b16 %v3817
        %v4040 = vunpack.c.l.b16 %v3818
        %v4041 = vunpack.c.l.b16 %v3819
        %v4042 = vunpack.c.l.b16 %v3820
        %v4043 = vunpack.c.l.b16 %v3821
        %v4044 = vunpack.c.l.b16 %v3822
        %v4045 = vunpack.c.l.b16 %v3823
        %v4046 = vunpack.c.l.b16 %v3824
        %v4047 = vunpack.c.l.b16 %v3825
        %v4048 = vunpack.c.l.b16 %v3826
        %v4049 = vunpack.c.l.b16 %v3827
        %v4050 = vunpack.c.l.b16 %v3828
        %v4051 = vunpack.c.l.b16 %v3829
        %v4052 = vunpack.c.l.b16 %v3830
        %v4053 = vunpack.c.l.b16 %v3831
        %v4054 = vunpack.c.l.b16 %v3832
        %v4055 = vunpack.c.l.b16 %v3833
        %v4056 = vpack.c.b16 %v4025, %v4024
        %v4057 = vpack.c.b16 %v4027, %v4026
        %v4058 = vpack.c.b16 %v4029, %v4028
        %v4059 = vpack.c.b16 %v4031, %v4030
        %v4060 = vpack.c.b16 %v4033, %v4032
        %v4061 = vpack.c.b16 %v4035, %v4034
        %v4062 = vpack.c.b16 %v4037, %v4036
        %v4063 = vpack.c.b16 %v4039, %v4038
        %v4064 = vpack.c.b16 %v4041, %v4040
        %v4065 = vpack.c.b16 %v4043, %v4042
        %v4066 = vpack.c.b16 %v4045, %v4044
        %v4067 = vpack.c.b16 %v4047, %v4046
        %v4068 = vpack.c.b16 %v4049, %v4048
        %v4069 = vpack.c.b16 %v4051, %v4050
        %v4070 = vpack.c.b16 %v4053, %v4052
        %v4071 = vpack.c.b16 %v4055, %v4054
        %4088 = vmatpush.bf16.msra.mxu0 %v4063
        %4089 = vmatpush.bf16.msra.mxu0 %v4062
        %4090 = vmatpush.bf16.msra.mxu0 %v4061
        %4091 = vmatpush.bf16.msra.mxu0 %v4060
        %4092 = vmatpush.bf16.msra.mxu0 %v4059
        %4093 = vmatpush.bf16.msra.mxu0 %v4058
        %4094 = vmatpush.bf16.msra.mxu0 %v4057
        %4095 = vmatpush.bf16.msra.mxu0 %v4056
        %4096 = vmatmul.bf16.gmra.mxu0 %v3990
        %v4097 = vpop.f32.mrf.mxu0
        %v4098 = vadd.f32 %v3834, %v4097
        %v4099 = vpop.f32.mrf.mxu0
        %4100 = vdwg.mxu0
        %4101 = vmatpush.bf16.msra.mxu0 %v4071
        %4102 = vmatpush.bf16.msra.mxu0 %v4070
        %4103 = vmatpush.bf16.msra.mxu0 %v4069
        %4104 = vmatpush.bf16.msra.mxu0 %v4068
        %4105 = vmatpush.bf16.msra.mxu0 %v4067
        %4106 = vmatpush.bf16.msra.mxu0 %v4066
        %4107 = vmatpush.bf16.msra.mxu0 %v4065
        %4108 = vmatpush.bf16.msra.mxu0 %v4064
        %4109 = vmatmul.bf16.gmra.mxu0 %v3991
        %v4110 = vpop.f32.mrf.mxu0
        %v4111 = vadd.f32 %v4098, %v4110
        %v4112 = vpop.f32.mrf.mxu0
        %4113 = vdwg.mxu0
        %v4114 = vadd.f32 %v3764, %v4111
        %s4115 = scalar_lea.vmem [#allocation14], 4
        %v4116 = vld [vmem:[%s4115] sm:$0xf]
        %v4117 = vsel %vm3636, %v4114, 0.0
        %4118 = vadd.xlane.f32.xlu0 %v4117
        %v4119 = vpop.xlane.xlu0 %4118
        %v4120 = vmul.f32 %v4119, %v1162
        %v4121 = vsub.f32 %v4114, %v4120
        %v4122 = vmul.f32 %v4121, %v4121
        %v4123 = vsel %vm3636, %v4122, 0.0
        %4124 = vadd.xlane.f32.xlu0 %v4123
        %v4125 = vpop.xlane.xlu0 %4124
        %v4126 = vmul.f32 %v4125, %v1162
        %v4127 = vadd.f32 %v4126, 1e-05
        %v4128 = vrsqrt.pop %v4127
        %v4129 = vmul.f32 %v4128, %v4127
        %v4130 = vmul.f32 %v4129, %v4128
        %v4131 = vmul.f32 0.5, %v4130
        %v4132 = vsub.f32 1.5, %v4131
        %v4133 = vmul.f32 %v4128, %v4132
        %vm4134 = vweird.f32 %v4127
        %vm4135 = vweird.f32 %v4128
        %vm4136 = vmor %vm4134, %vm4135
        %v4137 = vsel %vm4136, %v4128, %v4133
        %v4138 = vmul.f32 %v4121, %v4137
        %v4139 = vmul.f32 %v4138, %v4116
        %v4141 = vrot.slane %v4116, 1
        %v4143 = vadd.f32 %v4139, %v4141
        %v4144 = vpack.c.bf16 %v4143, %v4143
        %s4145 = scalar_lea.vmem %s16, 32
        %v4146 = vld [vmem:[%s4145] sm:$0xf]
        %v4147 = vld [vmem:[%s4145 + $0x4] sm:$0xf]
        %v4148 = vld [vmem:[%s4145 + $0x8] sm:$0xf]
        %v4149 = vld [vmem:[%s4145 + $0xc] sm:$0xf]
        %v4150 = vld [vmem:[%s4145 + $0x10] sm:$0xf]
        %v4151 = vld [vmem:[%s4145 + $0x14] sm:$0xf]
        %v4152 = vld [vmem:[%s4145 + $0x18] sm:$0xf]
        %v4153 = vld [vmem:[%s4145 + $0x1c] sm:$0xf]
        %s4154 = scalar_lea.vmem [#allocation15], 1
        %v4155 = vld [vmem:[%s4154] sm:$0x1]
        %v4164 = vunpack.c.l.b16 %v4146
        %v4165 = vunpack.c.l.b16 %v4147
        %v4166 = vunpack.c.l.b16 %v4148
        %v4167 = vunpack.c.l.b16 %v4149
        %v4168 = vunpack.c.l.b16 %v4150
        %v4169 = vunpack.c.l.b16 %v4151
        %v4170 = vunpack.c.l.b16 %v4152
        %v4171 = vunpack.c.l.b16 %v4153
        %v4172 = vpack.c.b16 %v4165, %v4164
        %v4173 = vpack.c.b16 %v4167, %v4166
        %v4174 = vpack.c.b16 %v4169, %v4168
        %v4175 = vpack.c.b16 %v4171, %v4170
        %v4181 = vsel %vm1098, %v4144, 0
        %4183 = vmatpush.bf16.msra.mxu0 0
        %4184 = vmatpush.bf16.msra.mxu0 0
        %4185 = vmatpush.bf16.msra.mxu0 0
        %4186 = vmatpush.bf16.msra.mxu0 0
        %4187 = vmatpush.bf16.msra.mxu0 %v4175
        %4188 = vmatpush.bf16.msra.mxu0 %v4174
        %4189 = vmatpush.bf16.msra.mxu0 %v4173
        %4190 = vmatpush.bf16.msra.mxu0 %v4172
        %4191 = vmatmul.bf16.gmra.mxu0 %v4181
        %v4192 = vpop.f32.mrf.mxu0
        %v4193 = vadd.f32 %v4155, %v4192
        %v4194 = vpop.f32.mrf.mxu0
        %4195 = vdwg.mxu0
        %v4196 = vpack.c.bf16 %v4193, %v4193
        %s4197 = scalar_lea.vmem %s18, 32
        %v4198 = vld [vmem:[%s4197] sm:$0xf]
        %v4199 = vld [vmem:[%s4197 + $0x4] sm:$0xf]
        %v4200 = vld [vmem:[%s4197 + $0x8] sm:$0xf]
        %v4201 = vld [vmem:[%s4197 + $0xc] sm:$0xf]
        %v4202 = vld [vmem:[%s4197 + $0x10] sm:$0xf]
        %v4203 = vld [vmem:[%s4197 + $0x14] sm:$0xf]
        %v4204 = vld [vmem:[%s4197 + $0x18] sm:$0xf]
        %v4205 = vld [vmem:[%s4197 + $0x1c] sm:$0xf]
        %s4206 = scalar_lea.vmem [#allocation17], 1
        %v4207 = vld [vmem:[%s4206] sm:$0x1]
        %v4216 = vunpack.c.l.b16 %v4198
        %v4217 = vunpack.c.l.b16 %v4199
        %v4218 = vunpack.c.l.b16 %v4200
        %v4219 = vunpack.c.l.b16 %v4201
        %v4220 = vunpack.c.l.b16 %v4202
        %v4221 = vunpack.c.l.b16 %v4203
        %v4222 = vunpack.c.l.b16 %v4204
        %v4223 = vunpack.c.l.b16 %v4205
        %v4224 = vpack.c.b16 %v4217, %v4216
        %v4225 = vpack.c.b16 %v4219, %v4218
        %v4226 = vpack.c.b16 %v4221, %v4220
        %v4227 = vpack.c.b16 %v4223, %v4222
        %v4233 = vsel %vm1098, %v4196, 0
        %4235 = vmatpush.bf16.msra.mxu0 0
        %4236 = vmatpush.bf16.msra.mxu0 0
        %4237 = vmatpush.bf16.msra.mxu0 0
        %4238 = vmatpush.bf16.msra.mxu0 0
        %4239 = vmatpush.bf16.msra.mxu0 %v4227
        %4240 = vmatpush.bf16.msra.mxu0 %v4226
        %4241 = vmatpush.bf16.msra.mxu0 %v4225
        %4242 = vmatpush.bf16.msra.mxu0 %v4224
        %4243 = vmatmul.bf16.gmra.mxu0 %v4233
        %v4244 = vpop.f32.mrf.mxu0
        %v4245 = vadd.f32 %v4207, %v4244
        %v4246 = vpop.f32.mrf.mxu0
        %4247 = vdwg.mxu0
        %v4248 = vadd.f32 %v4114, %v4245
        %v4249 = vsel %vm3636, %v4248, 0.0
        %4250 = vadd.xlane.f32.xlu0 %v4249
        %v4251 = vpop.xlane.xlu0 %4250
        %v4252 = vmul.f32 %v4251, %v1162
        %v4253 = vsub.f32 %v4248, %v4252
        %v4254 = vmul.f32 %v4253, %v4253
        %v4255 = vsel %vm3636, %v4254, 0.0
        %4256 = vadd.xlane.f32.xlu0 %v4255
        %v4257 = vpop.xlane.xlu0 %4256
        %v4258 = vmul.f32 %v4257, %v1162
        %v4259 = vadd.f32 %v4258, 1e-05
        %v4260 = vrsqrt.pop %v4259
        %v4261 = vmul.f32 %v4260, %v4259
        %v4262 = vmul.f32 %v4261, %v4260
        %v4263 = vmul.f32 0.5, %v4262
        %v4264 = vsub.f32 1.5, %v4263
        %v4265 = vmul.f32 %v4260, %v4264
        %vm4266 = vweird.f32 %v4259
        %vm4267 = vweird.f32 %v4260
        %vm4268 = vmor %vm4266, %vm4267
        %v4269 = vsel %vm4268, %v4260, %v4265
        %v4270 = vmul.f32 %v4253, %v4269
        %v4271 = vrot.slane %v4116, 2
        %v4273 = vmul.f32 %v4270, %v4271
        %v4274 = vrot.slane %v4116, 3
        %v4276 = vadd.f32 %v4273, %v4274
        %s4277 = scalar_lea.vmem %s20, 64
        %v4278 = vld [vmem:[%s4277] sm:$0xff]
        %v4279 = vld [vmem:[%s4277 + $0x8] sm:$0xff]
        %v4280 = vld [vmem:[%s4277 + $0x10] sm:$0xff]
        %v4281 = vld [vmem:[%s4277 + $0x18] sm:$0xff]
        %v4282 = vld [vmem:[%s4277 + $0x20] sm:$0xff]
        %v4283 = vld [vmem:[%s4277 + $0x28] sm:$0xff]
        %v4284 = vld [vmem:[%s4277 + $0x30] sm:$0xff]
        %v4285 = vld [vmem:[%s4277 + $0x38] sm:$0xff]
        %s4286 = scalar_lea.vmem [#allocation18], 2
        %v4287 = vld [vmem:[%s4286] sm:$0x3]
        %s4288 = scalar_lea.vmem %s22, 128
        %v4289 = vld [vmem:[%s4288] sm:$0xf]
        %v4290 = vld [vmem:[%s4288 + $0x4] sm:$0xf]
        %v4291 = vld [vmem:[%s4288 + $0x8] sm:$0xf]
        %v4292 = vld [vmem:[%s4288 + $0xc] sm:$0xf]
        %v4293 = vld [vmem:[%s4288 + $0x10] sm:$0xf]
        %v4294 = vld [vmem:[%s4288 + $0x14] sm:$0xf]
        %v4295 = vld [vmem:[%s4288 + $0x18] sm:$0xf]
        %v4296 = vld [vmem:[%s4288 + $0x1c] sm:$0xf]
        %v4297 = vld [vmem:[%s4288 + $0x20] sm:$0xf]
        %v4298 = vld [vmem:[%s4288 + $0x24] sm:$0xf]
        %v4299 = vld [vmem:[%s4288 + $0x28] sm:$0xf]
        %v4300 = vld [vmem:[%s4288 + $0x2c] sm:$0xf]
        %v4301 = vld [vmem:[%s4288 + $0x30] sm:$0xf]
        %v4302 = vld [vmem:[%s4288 + $0x34] sm:$0xf]
        %v4303 = vld [vmem:[%s4288 + $0x38] sm:$0xf]
        %v4304 = vld [vmem:[%s4288 + $0x3c] sm:$0xf]
        %v4305 = vld [vmem:[%s4288 + $0x40] sm:$0xf]
        %v4306 = vld [vmem:[%s4288 + $0x44] sm:$0xf]
        %v4307 = vld [vmem:[%s4288 + $0x48] sm:$0xf]
        %v4308 = vld [vmem:[%s4288 + $0x4c] sm:$0xf]
        %v4309 = vld [vmem:[%s4288 + $0x50] sm:$0xf]
        %v4310 = vld [vmem:[%s4288 + $0x54] sm:$0xf]
        %v4311 = vld [vmem:[%s4288 + $0x58] sm:$0xf]
        %v4312 = vld [vmem:[%s4288 + $0x5c] sm:$0xf]
        %v4313 = vld [vmem:[%s4288 + $0x60] sm:$0xf]
        %v4314 = vld [vmem:[%s4288 + $0x64] sm:$0xf]
        %v4315 = vld [vmem:[%s4288 + $0x68] sm:$0xf]
        %v4316 = vld [vmem:[%s4288 + $0x6c] sm:$0xf]
        %v4317 = vld [vmem:[%s4288 + $0x70] sm:$0xf]
        %v4318 = vld [vmem:[%s4288 + $0x74] sm:$0xf]
        %v4319 = vld [vmem:[%s4288 + $0x78] sm:$0xf]
        %v4320 = vld [vmem:[%s4288 + $0x7c] sm:$0xf]
        %s4321 = scalar_lea.vmem %s23, 1
        %v4322 = vld [vmem:[%s4321] sm:$0x1]
        %v4323 = vpack.c.bf16 %v4276, %v4276
        %v4332 = vunpack.c.l.b16 %v4278
        %v4333 = vunpack.c.h.b16 %v4278
        %v4334 = vunpack.c.l.b16 %v4279
        %v4335 = vunpack.c.h.b16 %v4279
        %v4336 = vunpack.c.l.b16 %v4280
        %v4337 = vunpack.c.h.b16 %v4280
        %v4338 = vunpack.c.l.b16 %v4281
        %v4339 = vunpack.c.h.b16 %v4281
        %v4340 = vunpack.c.l.b16 %v4282
        %v4341 = vunpack.c.h.b16 %v4282
        %v4342 = vunpack.c.l.b16 %v4283
        %v4343 = vunpack.c.h.b16 %v4283
        %v4344 = vunpack.c.l.b16 %v4284
        %v4345 = vunpack.c.h.b16 %v4284
        %v4346 = vunpack.c.l.b16 %v4285
        %v4347 = vunpack.c.h.b16 %v4285
        %v4348 = vpack.c.b16 %v4334, %v4332
        %v4349 = vpack.c.b16 %v4335, %v4333
        %v4350 = vpack.c.b16 %v4338, %v4336
        %v4351 = vpack.c.b16 %v4339, %v4337
        %v4352 = vpack.c.b16 %v4342, %v4340
        %v4353 = vpack.c.b16 %v4343, %v4341
        %v4354 = vpack.c.b16 %v4346, %v4344
        %v4355 = vpack.c.b16 %v4347, %v4345
        %v4365 = vperm.slane %v4287, 0
        %v4366 = vperm.slane %v4287, 1
        %v4370 = vsel %vm1098, %v4323, 0
        %4372 = vmatpush.bf16.msra.mxu0 0
        %4373 = vmatpush.bf16.msra.mxu0 0
        %4374 = vmatpush.bf16.msra.mxu0 0
        %4375 = vmatpush.bf16.msra.mxu0 0
        %4376 = vmatpush.bf16.msra.mxu0 %v4354
        %4377 = vmatpush.bf16.msra.mxu0 %v4352
        %4378 = vmatpush.bf16.msra.mxu0 %v4350
        %4379 = vmatpush.bf16.msra.mxu0 %v4348
        %4380 = vmatmul.bf16.gmra.mxu0 %v4370
        %v4381 = vpop.f32.mrf.mxu0
        %v4382 = vadd.f32 %v4365, %v4381
        %v4383 = vpop.f32.mrf.mxu0
        %4384 = vdwg.mxu0
        %4385 = vmatpush.bf16.msra.mxu0 0
        %4386 = vmatpush.bf16.msra.mxu0 0
        %4387 = vmatpush.bf16.msra.mxu0 0
        %4388 = vmatpush.bf16.msra.mxu0 0
        %4389 = vmatpush.bf16.msra.mxu0 %v4355
        %4390 = vmatpush.bf16.msra.mxu0 %v4353
        %4391 = vmatpush.bf16.msra.mxu0 %v4351
        %4392 = vmatpush.bf16.msra.mxu0 %v4349
        %4393 = vmatmul.bf16.gmra.mxu0 %v4370
        %v4394 = vpop.f32.mrf.mxu0
        %v4395 = vadd.f32 %v4366, %v4394
        %v4396 = vpop.f32.mrf.mxu0
        %4397 = vdwg.mxu0
        %v4398 = vmul.f32 %v4382, 0.5
        %v4399 = vmul.f32 %v4395, 0.5
        %v4400 = vmul.f32 %v4382, 0.70710677
        %v4401 = vmul.f32 %v4395, 0.70710677
        %v4402 = vand.u32 2147483647, %v4400
        %v4403 = vand.u32 2147483647, %v4401
        %v4404 = vmul.f32 %v4402, 0.3275911
        %v4405 = vmul.f32 %v4403, 0.3275911
        %v4406 = vadd.f32 %v4404, 1.0
        %v4407 = vadd.f32 %v4405, 1.0
        %v4408 = vrcp.pop %v4406
        %v4409 = vmul.f32 %v4406, %v4408
        %v4410 = vsub.f32 1.0, %v4409
        %v4411 = vmul.f32 %v4408, %v4410
        %v4412 = vadd.f32 %v4408, %v4411
        %vm4413 = vweird.f32 %v4406
        %vm4414 = vweird.f32 %v4408
        %vm4415 = vmor %vm4413, %vm4414
        %v4416 = vsel %vm4415, %v4408, %v4412
        %v4417 = vand.u32 2147483647, %v4406
        %vm4418 = vcmp.eq.f32.partialorder %v4417, 8.507059e+37
        %v4419 = vand.u32 %v4406, 2147483648
        %v4420 = vor.u32 1.1754944e-38, %v4419
        %v4421 = vsel %vm4418, %v4420, %v4416
        %v4422 = vmul.f32 1.0, %v4421
        %v4423 = vrcp.pop %v4407
        %v4424 = vmul.f32 %v4407, %v4423
        %v4425 = vsub.f32 1.0, %v4424
        %v4426 = vmul.f32 %v4423, %v4425
        %v4427 = vadd.f32 %v4423, %v4426
        %vm4428 = vweird.f32 %v4407
        %vm4429 = vweird.f32 %v4423
        %vm4430 = vmor %vm4428, %vm4429
        %v4431 = vsel %vm4430, %v4423, %v4427
        %v4432 = vand.u32 2147483647, %v4407
        %vm4433 = vcmp.eq.f32.partialorder %v4432, 8.507059e+37
        %v4434 = vand.u32 %v4407, 2147483648
        %v4435 = vor.u32 1.1754944e-38, %v4434
        %v4436 = vsel %vm4433, %v4435, %v4431
        %v4437 = vmul.f32 1.0, %v4436
        %v4438 = vmul.f32 %v4422, 1.0614054
        %v4439 = vmul.f32 %v4437, 1.0614054
        %v4440 = vadd.f32 %v4438, -1.4531521
        %v4441 = vadd.f32 %v4439, -1.4531521
        %v4442 = vmul.f32 %v4440, %v4422
        %v4443 = vmul.f32 %v4441, %v4437
        %v4444 = vadd.f32 %v4442, 1.4214138
        %v4445 = vadd.f32 %v4443, 1.4214138
        %v4446 = vmul.f32 %v4444, %v4422
        %v4447 = vmul.f32 %v4445, %v4437
        %v4448 = vadd.f32 %v4446, -0.28449672
        %v4449 = vadd.f32 %v4447, -0.28449672
        %v4450 = vmul.f32 %v4448, %v4422
        %v4451 = vmul.f32 %v4449, %v4437
        %v4452 = vadd.f32 %v4450, 0.2548296
        %v4453 = vadd.f32 %v4451, 0.2548296
        %v4454 = vmul.f32 %v4452, %v4422
        %v4455 = vmul.f32 %v4453, %v4437
        %v4456 = vsub.f32 0.0, %v4402
        %v4457 = vsub.f32 0.0, %v4403
        %v4458 = vmul.f32 %v4456, %v4402
        %v4459 = vmul.f32 %v4457, %v4403
        %v4460 = vmul.f32 %v4458, 1.442695
        %v4461 = vpow.pop %v4460
        %v4462 = vmul.f32 %v4459, 1.442695
        %v4463 = vpow.pop %v4462
        %v4464 = vmul.f32 %v4454, %v4461
        %v4465 = vmul.f32 %v4455, %v4463
        %v4466 = vsub.f32 1.0, %v4464
        %v4467 = vsub.f32 1.0, %v4465
        %vm4468 = vcmp.ge.f32.partialorder %v4400, 0.0
        %vm4469 = vcmp.ge.f32.partialorder %v4401, 0.0
        %v4470 = vsub.f32 0.0, %v4466
        %v4471 = vsub.f32 0.0, %v4467
        %v4472 = vsel %vm4468, %v4466, %v4470
        %v4473 = vsel %vm4469, %v4467, %v4471
        %v4474 = vadd.f32 %v4472, 1.0
        %v4475 = vadd.f32 %v4473, 1.0
        %v4476 = vmul.f32 %v4398, %v4474
        %v4477 = vmul.f32 %v4399, %v4475
        %v4478 = vpack.c.bf16 %v4476, %v4476
        %v4479 = vpack.c.bf16 %v4477, %v4477
        %v4512 = vunpack.c.l.b16 %v4289
        %v4513 = vunpack.c.l.b16 %v4290
        %v4514 = vunpack.c.l.b16 %v4291
        %v4515 = vunpack.c.l.b16 %v4292
        %v4516 = vunpack.c.l.b16 %v4293
        %v4517 = vunpack.c.l.b16 %v4294
        %v4518 = vunpack.c.l.b16 %v4295
        %v4519 = vunpack.c.l.b16 %v4296
        %v4520 = vunpack.c.l.b16 %v4297
        %v4521 = vunpack.c.l.b16 %v4298
        %v4522 = vunpack.c.l.b16 %v4299
        %v4523 = vunpack.c.l.b16 %v4300
        %v4524 = vunpack.c.l.b16 %v4301
        %v4525 = vunpack.c.l.b16 %v4302
        %v4526 = vunpack.c.l.b16 %v4303
        %v4527 = vunpack.c.l.b16 %v4304
        %v4528 = vunpack.c.l.b16 %v4305
        %v4529 = vunpack.c.l.b16 %v4306
        %v4530 = vunpack.c.l.b16 %v4307
        %v4531 = vunpack.c.l.b16 %v4308
        %v4532 = vunpack.c.l.b16 %v4309
        %v4533 = vunpack.c.l.b16 %v4310
        %v4534 = vunpack.c.l.b16 %v4311
        %v4535 = vunpack.c.l.b16 %v4312
        %v4536 = vunpack.c.l.b16 %v4313
        %v4537 = vunpack.c.l.b16 %v4314
        %v4538 = vunpack.c.l.b16 %v4315
        %v4539 = vunpack.c.l.b16 %v4316
        %v4540 = vunpack.c.l.b16 %v4317
        %v4541 = vunpack.c.l.b16 %v4318
        %v4542 = vunpack.c.l.b16 %v4319
        %v4543 = vunpack.c.l.b16 %v4320
        %v4544 = vpack.c.b16 %v4513, %v4512
        %v4545 = vpack.c.b16 %v4515, %v4514
        %v4546 = vpack.c.b16 %v4517, %v4516
        %v4547 = vpack.c.b16 %v4519, %v4518
        %v4548 = vpack.c.b16 %v4521, %v4520
        %v4549 = vpack.c.b16 %v4523, %v4522
        %v4550 = vpack.c.b16 %v4525, %v4524
        %v4551 = vpack.c.b16 %v4527, %v4526
        %v4552 = vpack.c.b16 %v4529, %v4528
        %v4553 = vpack.c.b16 %v4531, %v4530
        %v4554 = vpack.c.b16 %v4533, %v4532
        %v4555 = vpack.c.b16 %v4535, %v4534
        %v4556 = vpack.c.b16 %v4537, %v4536
        %v4557 = vpack.c.b16 %v4539, %v4538
        %v4558 = vpack.c.b16 %v4541, %v4540
        %v4559 = vpack.c.b16 %v4543, %v4542
        %4576 = vmatpush.bf16.msra.mxu0 %v4551
        %4577 = vmatpush.bf16.msra.mxu0 %v4550
        %4578 = vmatpush.bf16.msra.mxu0 %v4549
        %4579 = vmatpush.bf16.msra.mxu0 %v4548
        %4580 = vmatpush.bf16.msra.mxu0 %v4547
        %4581 = vmatpush.bf16.msra.mxu0 %v4546
        %4582 = vmatpush.bf16.msra.mxu0 %v4545
        %4583 = vmatpush.bf16.msra.mxu0 %v4544
        %4584 = vmatmul.bf16.gmra.mxu0 %v4478
        %v4585 = vpop.f32.mrf.mxu0
        %v4586 = vadd.f32 %v4322, %v4585
        %v4587 = vpop.f32.mrf.mxu0
        %4588 = vdwg.mxu0
        %4589 = vmatpush.bf16.msra.mxu0 %v4559
        %4590 = vmatpush.bf16.msra.mxu0 %v4558
        %4591 = vmatpush.bf16.msra.mxu0 %v4557
        %4592 = vmatpush.bf16.msra.mxu0 %v4556
        %4593 = vmatpush.bf16.msra.mxu0 %v4555
        %4594 = vmatpush.bf16.msra.mxu0 %v4554
        %4595 = vmatpush.bf16.msra.mxu0 %v4553
        %4596 = vmatpush.bf16.msra.mxu0 %v4552
        %4597 = vmatmul.bf16.gmra.mxu0 %v4479
        %v4598 = vpop.f32.mrf.mxu0
        %v4599 = vadd.f32 %v4586, %v4598
        %v4600 = vpop.f32.mrf.mxu0
        %4601 = vdwg.mxu0
        %v4602 = vadd.f32 %v4248, %v4599
        %s4603 = scalar_lea.vmem [#allocation14], 8
        %v4604 = vld [vmem:[%s4603] sm:$0xf]
        %v4605 = vsel %vm3636, %v4602, 0.0
        %4606 = vadd.xlane.f32.xlu0 %v4605
        %v4607 = vpop.xlane.xlu0 %4606
        %v4608 = vmul.f32 %v4607, %v1162
        %v4609 = vsub.f32 %v4602, %v4608
        %v4610 = vmul.f32 %v4609, %v4609
        %v4611 = vsel %vm3636, %v4610, 0.0
        %4612 = vadd.xlane.f32.xlu0 %v4611
        %v4613 = vpop.xlane.xlu0 %4612
        %v4614 = vmul.f32 %v4613, %v1162
        %v4615 = vadd.f32 %v4614, 1e-05
        %v4616 = vrsqrt.pop %v4615
        %v4617 = vmul.f32 %v4616, %v4615
        %v4618 = vmul.f32 %v4617, %v4616
        %v4619 = vmul.f32 0.5, %v4618
        %v4620 = vsub.f32 1.5, %v4619
        %v4621 = vmul.f32 %v4616, %v4620
        %vm4622 = vweird.f32 %v4615
        %vm4623 = vweird.f32 %v4616
        %vm4624 = vmor %vm4622, %vm4623
        %v4625 = vsel %vm4624, %v4616, %v4621
        %v4626 = vmul.f32 %v4609, %v4625
        %v4627 = vmul.f32 %v4626, %v4604
        %v4629 = vrot.slane %v4604, 1
        %v4631 = vadd.f32 %v4627, %v4629
        %v4632 = vpack.c.bf16 %v4631, %v4631
        %s4633 = scalar_lea.vmem %s16, 64
        %v4634 = vld [vmem:[%s4633] sm:$0xf]
        %v4635 = vld [vmem:[%s4633 + $0x4] sm:$0xf]
        %v4636 = vld [vmem:[%s4633 + $0x8] sm:$0xf]
        %v4637 = vld [vmem:[%s4633 + $0xc] sm:$0xf]
        %v4638 = vld [vmem:[%s4633 + $0x10] sm:$0xf]
        %v4639 = vld [vmem:[%s4633 + $0x14] sm:$0xf]
        %v4640 = vld [vmem:[%s4633 + $0x18] sm:$0xf]
        %v4641 = vld [vmem:[%s4633 + $0x1c] sm:$0xf]
        %s4642 = scalar_lea.vmem [#allocation15], 2
        %v4643 = vld [vmem:[%s4642] sm:$0x1]
        %v4652 = vunpack.c.l.b16 %v4634
        %v4653 = vunpack.c.l.b16 %v4635
        %v4654 = vunpack.c.l.b16 %v4636
        %v4655 = vunpack.c.l.b16 %v4637
        %v4656 = vunpack.c.l.b16 %v4638
        %v4657 = vunpack.c.l.b16 %v4639
        %v4658 = vunpack.c.l.b16 %v4640
        %v4659 = vunpack.c.l.b16 %v4641
        %v4660 = vpack.c.b16 %v4653, %v4652
        %v4661 = vpack.c.b16 %v4655, %v4654
        %v4662 = vpack.c.b16 %v4657, %v4656
        %v4663 = vpack.c.b16 %v4659, %v4658
        %v4669 = vsel %vm1098, %v4632, 0
        %4671 = vmatpush.bf16.msra.mxu0 0
        %4672 = vmatpush.bf16.msra.mxu0 0
        %4673 = vmatpush.bf16.msra.mxu0 0
        %4674 = vmatpush.bf16.msra.mxu0 0
        %4675 = vmatpush.bf16.msra.mxu0 %v4663
        %4676 = vmatpush.bf16.msra.mxu0 %v4662
        %4677 = vmatpush.bf16.msra.mxu0 %v4661
        %4678 = vmatpush.bf16.msra.mxu0 %v4660
        %4679 = vmatmul.bf16.gmra.mxu0 %v4669
        %v4680 = vpop.f32.mrf.mxu0
        %v4681 = vadd.f32 %v4643, %v4680
        %v4682 = vpop.f32.mrf.mxu0
        %4683 = vdwg.mxu0
        %v4684 = vpack.c.bf16 %v4681, %v4681
        %s4685 = scalar_lea.vmem %s18, 64
        %v4686 = vld [vmem:[%s4685] sm:$0xf]
        %v4687 = vld [vmem:[%s4685 + $0x4] sm:$0xf]
        %v4688 = vld [vmem:[%s4685 + $0x8] sm:$0xf]
        %v4689 = vld [vmem:[%s4685 + $0xc] sm:$0xf]
        %v4690 = vld [vmem:[%s4685 + $0x10] sm:$0xf]
        %v4691 = vld [vmem:[%s4685 + $0x14] sm:$0xf]
        %v4692 = vld [vmem:[%s4685 + $0x18] sm:$0xf]
        %v4693 = vld [vmem:[%s4685 + $0x1c] sm:$0xf]
        %s4694 = scalar_lea.vmem [#allocation17], 2
        %v4695 = vld [vmem:[%s4694] sm:$0x1]
        %v4704 = vunpack.c.l.b16 %v4686
        %v4705 = vunpack.c.l.b16 %v4687
        %v4706 = vunpack.c.l.b16 %v4688
        %v4707 = vunpack.c.l.b16 %v4689
        %v4708 = vunpack.c.l.b16 %v4690
        %v4709 = vunpack.c.l.b16 %v4691
        %v4710 = vunpack.c.l.b16 %v4692
        %v4711 = vunpack.c.l.b16 %v4693
        %v4712 = vpack.c.b16 %v4705, %v4704
        %v4713 = vpack.c.b16 %v4707, %v4706
        %v4714 = vpack.c.b16 %v4709, %v4708
        %v4715 = vpack.c.b16 %v4711, %v4710
        %v4721 = vsel %vm1098, %v4684, 0
        %4723 = vmatpush.bf16.msra.mxu0 0
        %4724 = vmatpush.bf16.msra.mxu0 0
        %4725 = vmatpush.bf16.msra.mxu0 0
        %4726 = vmatpush.bf16.msra.mxu0 0
        %4727 = vmatpush.bf16.msra.mxu0 %v4715
        %4728 = vmatpush.bf16.msra.mxu0 %v4714
        %4729 = vmatpush.bf16.msra.mxu0 %v4713
        %4730 = vmatpush.bf16.msra.mxu0 %v4712
        %4731 = vmatmul.bf16.gmra.mxu0 %v4721
        %v4732 = vpop.f32.mrf.mxu0
        %v4733 = vadd.f32 %v4695, %v4732
        %v4734 = vpop.f32.mrf.mxu0
        %4735 = vdwg.mxu0
        %v4736 = vadd.f32 %v4602, %v4733
        %v4737 = vsel %vm3636, %v4736, 0.0
        %4738 = vadd.xlane.f32.xlu0 %v4737
        %v4739 = vpop.xlane.xlu0 %4738
        %v4740 = vmul.f32 %v4739, %v1162
        %v4741 = vsub.f32 %v4736, %v4740
        %v4742 = vmul.f32 %v4741, %v4741
        %v4743 = vsel %vm3636, %v4742, 0.0
        %4744 = vadd.xlane.f32.xlu0 %v4743
        %v4745 = vpop.xlane.xlu0 %4744
        %v4746 = vmul.f32 %v4745, %v1162
        %v4747 = vadd.f32 %v4746, 1e-05
        %v4748 = vrsqrt.pop %v4747
        %v4749 = vmul.f32 %v4748, %v4747
        %v4750 = vmul.f32 %v4749, %v4748
        %v4751 = vmul.f32 0.5, %v4750
        %v4752 = vsub.f32 1.5, %v4751
        %v4753 = vmul.f32 %v4748, %v4752
        %vm4754 = vweird.f32 %v4747
        %vm4755 = vweird.f32 %v4748
        %vm4756 = vmor %vm4754, %vm4755
        %v4757 = vsel %vm4756, %v4748, %v4753
        %v4758 = vmul.f32 %v4741, %v4757
        %v4759 = vrot.slane %v4604, 2
        %v4761 = vmul.f32 %v4758, %v4759
        %v4762 = vrot.slane %v4604, 3
        %v4764 = vadd.f32 %v4761, %v4762
        %s4765 = scalar_lea.vmem %s20, 128
        %v4766 = vld [vmem:[%s4765] sm:$0xff]
        %v4767 = vld [vmem:[%s4765 + $0x8] sm:$0xff]
        %v4768 = vld [vmem:[%s4765 + $0x10] sm:$0xff]
        %v4769 = vld [vmem:[%s4765 + $0x18] sm:$0xff]
        %v4770 = vld [vmem:[%s4765 + $0x20] sm:$0xff]
        %v4771 = vld [vmem:[%s4765 + $0x28] sm:$0xff]
        %v4772 = vld [vmem:[%s4765 + $0x30] sm:$0xff]
        %v4773 = vld [vmem:[%s4765 + $0x38] sm:$0xff]
        %s4774 = scalar_lea.vmem [#allocation18], 4
        %v4775 = vld [vmem:[%s4774] sm:$0x3]
        %s4776 = scalar_lea.vmem %s22, 256
        %v4777 = vld [vmem:[%s4776] sm:$0xf]
        %v4778 = vld [vmem:[%s4776 + $0x4] sm:$0xf]
        %v4779 = vld [vmem:[%s4776 + $0x8] sm:$0xf]
        %v4780 = vld [vmem:[%s4776 + $0xc] sm:$0xf]
        %v4781 = vld [vmem:[%s4776 + $0x10] sm:$0xf]
        %v4782 = vld [vmem:[%s4776 + $0x14] sm:$0xf]
        %v4783 = vld [vmem:[%s4776 + $0x18] sm:$0xf]
        %v4784 = vld [vmem:[%s4776 + $0x1c] sm:$0xf]
        %v4785 = vld [vmem:[%s4776 + $0x20] sm:$0xf]
        %v4786 = vld [vmem:[%s4776 + $0x24] sm:$0xf]
        %v4787 = vld [vmem:[%s4776 + $0x28] sm:$0xf]
        %v4788 = vld [vmem:[%s4776 + $0x2c] sm:$0xf]
        %v4789 = vld [vmem:[%s4776 + $0x30] sm:$0xf]
        %v4790 = vld [vmem:[%s4776 + $0x34] sm:$0xf]
        %v4791 = vld [vmem:[%s4776 + $0x38] sm:$0xf]
        %v4792 = vld [vmem:[%s4776 + $0x3c] sm:$0xf]
        %v4793 = vld [vmem:[%s4776 + $0x40] sm:$0xf]
        %v4794 = vld [vmem:[%s4776 + $0x44] sm:$0xf]
        %v4795 = vld [vmem:[%s4776 + $0x48] sm:$0xf]
        %v4796 = vld [vmem:[%s4776 + $0x4c] sm:$0xf]
        %v4797 = vld [vmem:[%s4776 + $0x50] sm:$0xf]
        %v4798 = vld [vmem:[%s4776 + $0x54] sm:$0xf]
        %v4799 = vld [vmem:[%s4776 + $0x58] sm:$0xf]
        %v4800 = vld [vmem:[%s4776 + $0x5c] sm:$0xf]
        %v4801 = vld [vmem:[%s4776 + $0x60] sm:$0xf]
        %v4802 = vld [vmem:[%s4776 + $0x64] sm:$0xf]
        %v4803 = vld [vmem:[%s4776 + $0x68] sm:$0xf]
        %v4804 = vld [vmem:[%s4776 + $0x6c] sm:$0xf]
        %v4805 = vld [vmem:[%s4776 + $0x70] sm:$0xf]
        %v4806 = vld [vmem:[%s4776 + $0x74] sm:$0xf]
        %v4807 = vld [vmem:[%s4776 + $0x78] sm:$0xf]
        %v4808 = vld [vmem:[%s4776 + $0x7c] sm:$0xf]
        %s4809 = scalar_lea.vmem %s23, 2
        %v4810 = vld [vmem:[%s4809] sm:$0x1]
        %v4811 = vpack.c.bf16 %v4764, %v4764
        %v4820 = vunpack.c.l.b16 %v4766
        %v4821 = vunpack.c.h.b16 %v4766
        %v4822 = vunpack.c.l.b16 %v4767
        %v4823 = vunpack.c.h.b16 %v4767
        %v4824 = vunpack.c.l.b16 %v4768
        %v4825 = vunpack.c.h.b16 %v4768
        %v4826 = vunpack.c.l.b16 %v4769
        %v4827 = vunpack.c.h.b16 %v4769
        %v4828 = vunpack.c.l.b16 %v4770
        %v4829 = vunpack.c.h.b16 %v4770
        %v4830 = vunpack.c.l.b16 %v4771
        %v4831 = vunpack.c.h.b16 %v4771
        %v4832 = vunpack.c.l.b16 %v4772
        %v4833 = vunpack.c.h.b16 %v4772
        %v4834 = vunpack.c.l.b16 %v4773
        %v4835 = vunpack.c.h.b16 %v4773
        %v4836 = vpack.c.b16 %v4822, %v4820
        %v4837 = vpack.c.b16 %v4823, %v4821
        %v4838 = vpack.c.b16 %v4826, %v4824
        %v4839 = vpack.c.b16 %v4827, %v4825
        %v4840 = vpack.c.b16 %v4830, %v4828
        %v4841 = vpack.c.b16 %v4831, %v4829
        %v4842 = vpack.c.b16 %v4834, %v4832
        %v4843 = vpack.c.b16 %v4835, %v4833
        %v4853 = vperm.slane %v4775, 0
        %v4854 = vperm.slane %v4775, 1
        %v4858 = vsel %vm1098, %v4811, 0
        %4860 = vmatpush.bf16.msra.mxu0 0
        %4861 = vmatpush.bf16.msra.mxu0 0
        %4862 = vmatpush.bf16.msra.mxu0 0
        %4863 = vmatpush.bf16.msra.mxu0 0
        %4864 = vmatpush.bf16.msra.mxu0 %v4842
        %4865 = vmatpush.bf16.msra.mxu0 %v4840
        %4866 = vmatpush.bf16.msra.mxu0 %v4838
        %4867 = vmatpush.bf16.msra.mxu0 %v4836
        %4868 = vmatmul.bf16.gmra.mxu0 %v4858
        %v4869 = vpop.f32.mrf.mxu0
        %v4870 = vadd.f32 %v4853, %v4869
        %v4871 = vpop.f32.mrf.mxu0
        %4872 = vdwg.mxu0
        %4873 = vmatpush.bf16.msra.mxu0 0
        %4874 = vmatpush.bf16.msra.mxu0 0
        %4875 = vmatpush.bf16.msra.mxu0 0
        %4876 = vmatpush.bf16.msra.mxu0 0
        %4877 = vmatpush.bf16.msra.mxu0 %v4843
        %4878 = vmatpush.bf16.msra.mxu0 %v4841
        %4879 = vmatpush.bf16.msra.mxu0 %v4839
        %4880 = vmatpush.bf16.msra.mxu0 %v4837
        %4881 = vmatmul.bf16.gmra.mxu0 %v4858
        %v4882 = vpop.f32.mrf.mxu0
        %v4883 = vadd.f32 %v4854, %v4882
        %v4884 = vpop.f32.mrf.mxu0
        %4885 = vdwg.mxu0
        %v4886 = vmul.f32 %v4870, 0.5
        %v4887 = vmul.f32 %v4883, 0.5
        %v4888 = vmul.f32 %v4870, 0.70710677
        %v4889 = vmul.f32 %v4883, 0.70710677
        %v4890 = vand.u32 2147483647, %v4888
        %v4891 = vand.u32 2147483647, %v4889
        %v4892 = vmul.f32 %v4890, 0.3275911
        %v4893 = vmul.f32 %v4891, 0.3275911
        %v4894 = vadd.f32 %v4892, 1.0
        %v4895 = vadd.f32 %v4893, 1.0
        %v4896 = vrcp.pop %v4894
        %v4897 = vmul.f32 %v4894, %v4896
        %v4898 = vsub.f32 1.0, %v4897
        %v4899 = vmul.f32 %v4896, %v4898
        %v4900 = vadd.f32 %v4896, %v4899
        %vm4901 = vweird.f32 %v4894
        %vm4902 = vweird.f32 %v4896
        %vm4903 = vmor %vm4901, %vm4902
        %v4904 = vsel %vm4903, %v4896, %v4900
        %v4905 = vand.u32 2147483647, %v4894
        %vm4906 = vcmp.eq.f32.partialorder %v4905, 8.507059e+37
        %v4907 = vand.u32 %v4894, 2147483648
        %v4908 = vor.u32 1.1754944e-38, %v4907
        %v4909 = vsel %vm4906, %v4908, %v4904
        %v4910 = vmul.f32 1.0, %v4909
        %v4911 = vrcp.pop %v4895
        %v4912 = vmul.f32 %v4895, %v4911
        %v4913 = vsub.f32 1.0, %v4912
        %v4914 = vmul.f32 %v4911, %v4913
        %v4915 = vadd.f32 %v4911, %v4914
        %vm4916 = vweird.f32 %v4895
        %vm4917 = vweird.f32 %v4911
        %vm4918 = vmor %vm4916, %vm4917
        %v4919 = vsel %vm4918, %v4911, %v4915
        %v4920 = vand.u32 2147483647, %v4895
        %vm4921 = vcmp.eq.f32.partialorder %v4920, 8.507059e+37
        %v4922 = vand.u32 %v4895, 2147483648
        %v4923 = vor.u32 1.1754944e-38, %v4922
        %v4924 = vsel %vm4921, %v4923, %v4919
        %v4925 = vmul.f32 1.0, %v4924
        %v4926 = vmul.f32 %v4910, 1.0614054
        %v4927 = vmul.f32 %v4925, 1.0614054
        %v4928 = vadd.f32 %v4926, -1.4531521
        %v4929 = vadd.f32 %v4927, -1.4531521
        %v4930 = vmul.f32 %v4928, %v4910
        %v4931 = vmul.f32 %v4929, %v4925
        %v4932 = vadd.f32 %v4930, 1.4214138
        %v4933 = vadd.f32 %v4931, 1.4214138
        %v4934 = vmul.f32 %v4932, %v4910
        %v4935 = vmul.f32 %v4933, %v4925
        %v4936 = vadd.f32 %v4934, -0.28449672
        %v4937 = vadd.f32 %v4935, -0.28449672
        %v4938 = vmul.f32 %v4936, %v4910
        %v4939 = vmul.f32 %v4937, %v4925
        %v4940 = vadd.f32 %v4938, 0.2548296
        %v4941 = vadd.f32 %v4939, 0.2548296
        %v4942 = vmul.f32 %v4940, %v4910
        %v4943 = vmul.f32 %v4941, %v4925
        %v4944 = vsub.f32 0.0, %v4890
        %v4945 = vsub.f32 0.0, %v4891
        %v4946 = vmul.f32 %v4944, %v4890
        %v4947 = vmul.f32 %v4945, %v4891
        %v4948 = vmul.f32 %v4946, 1.442695
        %v4949 = vpow.pop %v4948
        %v4950 = vmul.f32 %v4947, 1.442695
        %v4951 = vpow.pop %v4950
        %v4952 = vmul.f32 %v4942, %v4949
        %v4953 = vmul.f32 %v4943, %v4951
        %v4954 = vsub.f32 1.0, %v4952
        %v4955 = vsub.f32 1.0, %v4953
        %vm4956 = vcmp.ge.f32.partialorder %v4888, 0.0
        %vm4957 = vcmp.ge.f32.partialorder %v4889, 0.0
        %v4958 = vsub.f32 0.0, %v4954
        %v4959 = vsub.f32 0.0, %v4955
        %v4960 = vsel %vm4956, %v4954, %v4958
        %v4961 = vsel %vm4957, %v4955, %v4959
        %v4962 = vadd.f32 %v4960, 1.0
        %v4963 = vadd.f32 %v4961, 1.0
        %v4964 = vmul.f32 %v4886, %v4962
        %v4965 = vmul.f32 %v4887, %v4963
        %v4966 = vpack.c.bf16 %v4964, %v4964
        %v4967 = vpack.c.bf16 %v4965, %v4965
        %v5000 = vunpack.c.l.b16 %v4777
        %v5001 = vunpack.c.l.b16 %v4778
        %v5002 = vunpack.c.l.b16 %v4779
        %v5003 = vunpack.c.l.b16 %v4780
        %v5004 = vunpack.c.l.b16 %v4781
        %v5005 = vunpack.c.l.b16 %v4782
        %v5006 = vunpack.c.l.b16 %v4783
        %v5007 = vunpack.c.l.b16 %v4784
        %v5008 = vunpack.c.l.b16 %v4785
        %v5009 = vunpack.c.l.b16 %v4786
        %v5010 = vunpack.c.l.b16 %v4787
        %v5011 = vunpack.c.l.b16 %v4788
        %v5012 = vunpack.c.l.b16 %v4789
        %v5013 = vunpack.c.l.b16 %v4790
        %v5014 = vunpack.c.l.b16 %v4791
        %v5015 = vunpack.c.l.b16 %v4792
        %v5016 = vunpack.c.l.b16 %v4793
        %v5017 = vunpack.c.l.b16 %v4794
        %v5018 = vunpack.c.l.b16 %v4795
        %v5019 = vunpack.c.l.b16 %v4796
        %v5020 = vunpack.c.l.b16 %v4797
        %v5021 = vunpack.c.l.b16 %v4798
        %v5022 = vunpack.c.l.b16 %v4799
        %v5023 = vunpack.c.l.b16 %v4800
        %v5024 = vunpack.c.l.b16 %v4801
        %v5025 = vunpack.c.l.b16 %v4802
        %v5026 = vunpack.c.l.b16 %v4803
        %v5027 = vunpack.c.l.b16 %v4804
        %v5028 = vunpack.c.l.b16 %v4805
        %v5029 = vunpack.c.l.b16 %v4806
        %v5030 = vunpack.c.l.b16 %v4807
        %v5031 = vunpack.c.l.b16 %v4808
        %v5032 = vpack.c.b16 %v5001, %v5000
        %v5033 = vpack.c.b16 %v5003, %v5002
        %v5034 = vpack.c.b16 %v5005, %v5004
        %v5035 = vpack.c.b16 %v5007, %v5006
        %v5036 = vpack.c.b16 %v5009, %v5008
        %v5037 = vpack.c.b16 %v5011, %v5010
        %v5038 = vpack.c.b16 %v5013, %v5012
        %v5039 = vpack.c.b16 %v5015, %v5014
        %v5040 = vpack.c.b16 %v5017, %v5016
        %v5041 = vpack.c.b16 %v5019, %v5018
        %v5042 = vpack.c.b16 %v5021, %v5020
        %v5043 = vpack.c.b16 %v5023, %v5022
        %v5044 = vpack.c.b16 %v5025, %v5024
        %v5045 = vpack.c.b16 %v5027, %v5026
        %v5046 = vpack.c.b16 %v5029, %v5028
        %v5047 = vpack.c.b16 %v5031, %v5030
        %5064 = vmatpush.bf16.msra.mxu0 %v5039
        %5065 = vmatpush.bf16.msra.mxu0 %v5038
        %5066 = vmatpush.bf16.msra.mxu0 %v5037
        %5067 = vmatpush.bf16.msra.mxu0 %v5036
        %5068 = vmatpush.bf16.msra.mxu0 %v5035
        %5069 = vmatpush.bf16.msra.mxu0 %v5034
        %5070 = vmatpush.bf16.msra.mxu0 %v5033
        %5071 = vmatpush.bf16.msra.mxu0 %v5032
        %5072 = vmatmul.bf16.gmra.mxu0 %v4966
        %v5073 = vpop.f32.mrf.mxu0
        %v5074 = vadd.f32 %v4810, %v5073
        %v5075 = vpop.f32.mrf.mxu0
        %5076 = vdwg.mxu0
        %5077 = vmatpush.bf16.msra.mxu0 %v5047
        %5078 = vmatpush.bf16.msra.mxu0 %v5046
        %5079 = vmatpush.bf16.msra.mxu0 %v5045
        %5080 = vmatpush.bf16.msra.mxu0 %v5044
        %5081 = vmatpush.bf16.msra.mxu0 %v5043
        %5082 = vmatpush.bf16.msra.mxu0 %v5042
        %5083 = vmatpush.bf16.msra.mxu0 %v5041
        %5084 = vmatpush.bf16.msra.mxu0 %v5040
        %5085 = vmatmul.bf16.gmra.mxu0 %v4967
        %v5086 = vpop.f32.mrf.mxu0
        %v5087 = vadd.f32 %v5074, %v5086
        %v5088 = vpop.f32.mrf.mxu0
        %5089 = vdwg.mxu0
        %v5090 = vadd.f32 %v4736, %v5087
        %v5091 = vld [vmem:[%s24] sm:$0x1]
        %v5092 = vld [vmem:[%s24 + $0x1] sm:$0x1]
        %v5093 = vsel %vm3636, %v5090, 0.0
        %5094 = vadd.xlane.f32.xlu0 %v5093
        %v5095 = vpop.xlane.xlu0 %5094
        %v5096 = vmul.f32 %v5095, %v1162
        %v5097 = vsub.f32 %v5090, %v5096
        %v5098 = vmul.f32 %v5097, %v5097
        %v5099 = vsel %vm3636, %v5098, 0.0
        %5100 = vadd.xlane.f32.xlu0 %v5099
        %v5101 = vpop.xlane.xlu0 %5100
        %v5102 = vmul.f32 %v5101, %v1162
        %v5103 = vadd.f32 %v5102, 1e-05
        %v5104 = vrsqrt.pop %v5103
        %v5105 = vmul.f32 %v5104, %v5103
        %v5106 = vmul.f32 %v5105, %v5104
        %v5107 = vmul.f32 0.5, %v5106
        %v5108 = vsub.f32 1.5, %v5107
        %v5109 = vmul.f32 %v5104, %v5108
        %vm5110 = vweird.f32 %v5103
        %vm5111 = vweird.f32 %v5104
        %vm5112 = vmor %vm5110, %vm5111
        %v5113 = vsel %vm5112, %v5104, %v5109
        %v5114 = vmul.f32 %v5097, %v5113
        %v5115 = vmul.f32 %v5114, %v5091
        %v5116 = vadd.f32 %v5115, %v5092
        %v5117 = vpack.c.bf16 %v5116, %v5116
        %v5118 = vld [vmem:[%s25] sm:$0xf]
        %v5119 = vld [vmem:[%s25 + $0x4] sm:$0xf]
        %v5120 = vld [vmem:[%s25 + $0x8] sm:$0xf]
        %v5121 = vld [vmem:[%s25 + $0xc] sm:$0xf]
        %v5122 = vld [vmem:[%s25 + $0x10] sm:$0xf]
        %v5123 = vld [vmem:[%s25 + $0x14] sm:$0xf]
        %v5124 = vld [vmem:[%s25 + $0x18] sm:$0xf]
        %v5125 = vld [vmem:[%s25 + $0x1c] sm:$0xf]
        %v5126 = vld [vmem:[%s26] sm:$0x1]
        %v5135 = vunpack.c.l.b16 %v5118
        %v5136 = vunpack.c.l.b16 %v5119
        %v5137 = vunpack.c.l.b16 %v5120
        %v5138 = vunpack.c.l.b16 %v5121
        %v5139 = vunpack.c.l.b16 %v5122
        %v5140 = vunpack.c.l.b16 %v5123
        %v5141 = vunpack.c.l.b16 %v5124
        %v5142 = vunpack.c.l.b16 %v5125
        %v5143 = vpack.c.b16 %v5136, %v5135
        %v5144 = vpack.c.b16 %v5138, %v5137
        %v5145 = vpack.c.b16 %v5140, %v5139
        %v5146 = vpack.c.b16 %v5142, %v5141
        %v5152 = vsel %vm1098, %v5117, 0
        %5154 = vmatpush.bf16.msra.mxu0 0
        %5155 = vmatpush.bf16.msra.mxu0 0
        %5156 = vmatpush.bf16.msra.mxu0 0
        %5157 = vmatpush.bf16.msra.mxu0 0
        %5158 = vmatpush.bf16.msra.mxu0 %v5146
        %5159 = vmatpush.bf16.msra.mxu0 %v5145
        %5160 = vmatpush.bf16.msra.mxu0 %v5144
        %5161 = vmatpush.bf16.msra.mxu0 %v5143
        %5162 = vmatmul.bf16.gmra.mxu0 %v5152
        %v5163 = vpop.f32.mrf.mxu0
        %v5164 = vadd.f32 %v5126, %v5163
        %v5165 = vpop.f32.mrf.mxu0
        %5166 = vdwg.mxu0
        %5167 = vst [vmem:[%s974] sm:$0x1] %v5164
        %s5168 = sand.u32 %s629, 1
        %s5169 = scalar_lea.sflag [#allocation5], %s5168
        %s5170 = sand.u32 %s629, 1
        %s5171 = scalar_lea.vmem [#allocation20], %s5170
        // Predicated region
        $region169: #{tpu_custom_call.1} parent=127 // pred_check
          %p5172 = pneg %p639
        $region170: #{tpu_custom_call.1} parent=127 // pred_check_branch
          %5174 = sbr.rel (%p5172) target = $region172
        $region171: #{tpu_custom_call.1} parent=127 // pred_region
          %5176 = vsyncadd %s5169, 0
          %s5177 = scalar_lea.hbm %s27, %s49
          %s5179 = sshll.u32 %s5171, 4
          %s5180 = int_to_ptr.vmem [resolvable:$true] %s5179
          %s5181 = sshll.u32 %s5177, 4
          %s5182 = int_to_ptr.hbm [resolvable:$true] %s5181
          %5184 = dma.vmem_to_hbm [thread:$0]  %s5180, 16, %s5182, %s5169
        $region172: #{tpu_custom_call.1} parent=127 // pred_fallthru
          _
      $region128: #{tpu_custom_call.1} parent=5 // pred_fallthru
        _
      %p5185 = scmp.le.s32.totalorder 2, %s44
      // Predicated region
      $region173: #{tpu_custom_call.1} parent=5 // pred_check
        %p5186 = pneg %p5185
      $region174: #{tpu_custom_call.1} parent=5 // pred_check_branch
        %5188 = sbr.rel (%p5186) target = $region176
      $region175: #{tpu_custom_call.1} parent=5 // pred_region
        %s5189 = ssub.s32 %s44, 2
        // Predicated region
        $region177: #{tpu_custom_call.1} parent=175 // pred_check
          %p5190 = pneg %p645
        $region178: #{tpu_custom_call.1} parent=175 // pred_check_branch
          %5192 = sbr.rel (%p5190) target = $region180
        $region179: #{tpu_custom_call.1} parent=175 // pred_region
          %s5193 = sand.u32 %s630, 1
          %s5194 = scalar_lea.sflag [#allocation5], %s5193
          %s5195 = sand.u32 %s630, 1
          %s5196 = scalar_lea.vmem [#allocation20], %s5195
          %5198 = dma.done %s5194, 16
        $region180: #{tpu_custom_call.1} parent=175 // pred_fallthru
          _
      $region176: #{tpu_custom_call.1} parent=5 // pred_fallthru
        _
    $region6: #{tpu_custom_call.1} parent=1 // loop_footer
      %s48 = sadd.s32 1, %s44
    $region7: #{tpu_custom_call.1} parent=1 // loop_footer_branch
      %43 = sbr.rel target = $region3
    $region8: #{tpu_custom_call.1} parent=1 // loop_exit
      _
    %5199 = vsyncpa [#allocation4], 1
    %s5200 = scalar_lea.sflag [#allocation4], 1
    %5201 = vsyncpa %s5200, 1
    %5202 = vsyncpa [#allocation7], 1
    %5203 = vsyncpa [#allocation10], 1
    %5204 = vsyncpa [#allocation13], 1
    %5205 = vsyncpa [#allocation16], 1
    %5206 = vsyncpa [#allocation19], 1
    %5207 = vsyncpa [#allocation5], 1
    %s5208 = scalar_lea.sflag [#allocation5], 1
    %5209 = vsyncpa %s5208, 1

</llo_original>
